<compile_context>
chip_gen: v7x
topology: tpu7x:2x2x1
jax: 0.10.0
libtpu: 0.0.40
codegen_flags: <defaults>
</compile_context>

<pallas_src>
import numpy as np

import jax
import jax.numpy as jnp
from jax import lax
from jax.experimental import pallas as pl
from jax.experimental.pallas import tpu as pltpu


def _gelu(x):
    # tanh-form GELU (EUP transcendental + ~6 VALU ops).  |err| <= ~3e-4 vs the
    # exact erf form; validated against the 2e-2 tolerance below.
    c0 = 0.7978845608028654  # sqrt(2/pi)
    c1 = 0.044715
    return 0.5 * x * (1.0 + jnp.tanh(c0 * (x + c1 * x * x * x)))


def _upsample_matrix(out_size, in_size):
    """(out, in) bilinear matrix matching F.interpolate(align_corners=False)."""
    m = np.zeros((out_size, in_size), np.float32)
    scale = in_size / out_size
    for o in range(out_size):
        src = max((o + 0.5) * scale - 0.5, 0.0)
        i0 = min(int(np.floor(src)), in_size - 1)
        i1 = min(i0 + 1, in_size - 1)
        f = src - i0
        m[o, i0] += 1.0 - f
        m[o, i1] += f
    return m


# ----------------------------------------------------------------------------
# The single fused kernel
# ----------------------------------------------------------------------------
def _make_frm_kernel(H, W, C, Cout, K, S, eps):
    pad = K // 2                     # down-conv halo (>= 1, also hosts the 3x3 ring)
    Hp, Wp = H + 2 * pad, W + 2 * pad
    Ho = (H + 2 * pad - K) // S + 1
    Wo = (W + 2 * pad - K) // S + 1
    hp = pad - 1                     # start of the 1-px halo used by the 3x3 convs
    ry = _upsample_matrix(H, Ho)     # static H-direction bilinear weights (H, Ho)
    w_scale = Wo / W
    RS = 4                           # image rows per strip (bounds vreg live ranges)
    assert H % RS == 0 and W % 8 == 0 and pad >= 1
    n_strips = H // RS

    def kernel(x_ref, dw_ref, cw_ref, vecs_ref, pw_ref, pb_ref,
               o_ref, padA_ref, padB_ref):
        f32 = jnp.float32

        # ---- phase 0: zero only the border ring that the convs actually read ----
        zr = jnp.zeros((pad, Wp, C), f32)
        zc = jnp.zeros((Hp - 2 * pad, pad, C), f32)
        for pref in (padA_ref, padB_ref):
            pref[0:pad, :, :] = zr
            pref[Hp - pad:Hp, :, :] = zr
            pref[pad:Hp - pad, 0:pad, :] = zc
            pref[pad:Hp - pad, Wp - pad:Wp, :] = zc

        # ---- phase 1: x -> padA interior (strip-wise, bounded live ranges) ----
        for s in range(n_strips):
            padA_ref[pad + RS * s:pad + RS * (s + 1), pad:pad + W, :] = \
                x_ref[0, RS * s:RS * (s + 1), :, :]

        # ---- phase 2: depthwise KxK stride-S down conv + W-direction upsample ----
        # The strided column selection is folded into the (hoisted) bilinear hat
        # weights, so every ref read is a unit-stride slice.
        vecs = vecs_ref[...]                  # (8, C) packed bias / affine vectors
        db = vecs[0:1, :]
        wd = dw_ref[...]                      # (K, K, C)

        xw = lax.broadcasted_iota(jnp.int32, (W, 1), 0).astype(f32)
        srcw = jnp.clip((xw + 0.5) * w_scale - 0.5, 0.0, Wo - 1.0)
        wjs = [jnp.maximum(1.0 - jnp.abs(srcw - float(j)), 0.0) for j in range(Wo)]

        urows = []                            # per dx-row, already W-upsampled (W, C)
        for oh in range(Ho):
            # full-width W-direction conv for this output row (only every S-th
            # column is used; the hat weights below pick those out).
            fsum = jnp.zeros((W, C), f32)
            for kh in range(K):
                r = S * oh + kh
                for kw in range(K):
                    fsum = fsum + wd[kh, kw:kw + 1, :] * padA_ref[r, kw:kw + W, :]
            u = jnp.zeros((W, C), f32)
            for ow in range(Wo):
                u = u + wjs[ow] * fsum[S * ow:S * ow + 1, :]
            urows.append(u)

        # ---- phase 3: H-direction blend + the two GELU branches, strip-wise ----
        # t_mul/t_sub go straight into the zero-bordered padded planes so that
        # x / udx / t_* are never simultaneously live as full planes.
        for s in range(n_strips):
            rows = []
            for yy in range(RS):
                y = RS * s + yy
                taps = [(i, float(ry[y, i])) for i in range(Ho) if ry[y, i] != 0.0]
                r = taps[0][1] * urows[taps[0][0]]
                for i, wgt in taps[1:]:
                    r = r + wgt * urows[i]
                rows.append(r)
            udx_s = jnp.concatenate(rows, axis=0) + db            # (RS*W, C)
            xs = x_ref[0, RS * s:RS * (s + 1), :, :].reshape(RS * W, C)
            tm = _gelu(xs * udx_s)
            ts = _gelu(xs - udx_s)
            padA_ref[pad + RS * s:pad + RS * (s + 1), pad:pad + W, :] = \
                tm.reshape(RS, W, C)
            padB_ref[pad + RS * s:pad + RS * (s + 1), pad:pad + W, :] = \
                ts.reshape(RS, W, C)

        # ---- phase 4: 3x3 depthwise conv + channel LayerNorm + fused proj ----
        bl, g1, b1 = vecs[1:2, :], vecs[2:3, :], vecs[3:4, :]
        bh, g2, b2 = vecs[4:5, :], vecs[5:6, :], vecs[6:7, :]
        inv_c = 1.0 / C

        def conv_ln(pref, r0, widx, bc, g, bt):
            wc = cw_ref[widx]                                      # (3, 3, C)
            acc = jnp.zeros((RS, W, C), f32)
            for kw in range(3):
                slab = pref[r0:r0 + RS + 2, hp + kw:hp + kw + W, :]  # (RS+2, W, C)
                for kh in range(3):
                    acc = acc + wc[kh:kh + 1, kw:kw + 1, :] * slab[kh:kh + RS]
            conv = acc + bc
            # channels_first LayerNorm == normalize over C (lane axis), one pass.
            s1 = jnp.sum(conv, axis=-1, keepdims=True)
            s2 = jnp.sum(conv * conv, axis=-1, keepdims=True)
            mu = s1 * inv_c
            var = s2 * inv_c - mu * mu
            return (conv - mu) * lax.rsqrt(var + eps) * g + bt

        for s in range(n_strips):
            r0 = hp + RS * s
            lx = conv_ln(padA_ref, r0, 0, bl, g1, b1)              # (RS, W, C)
            hx = conv_ln(padB_ref, r0, 1, bh, g2, b2)
            # fused 1x1 proj: one K=2C MXU matmul per strip + output GELU
            lhs = jnp.concatenate(
                [lx.reshape(RS * W, C), hx.reshape(RS * W, C)], axis=1)  # (RS*W, 2C)
            pre = jnp.dot(lhs, pw_ref[...], preferred_element_type=f32) + pb_ref[...]
            o_ref[0, RS * s:RS * (s + 1), :, :] = _gelu(pre).reshape(RS, W, Cout)

    return kernel, Hp, Wp


def frm_forward(x_nhwc, p, down_kernel=5, down_stride=4, eps=1e-6):
    B, H, W, C = x_nhwc.shape
    Cout = p["proj_w1"].shape[1]
    K, S = down_kernel, down_stride
    kernel, Hp, Wp = _make_frm_kernel(H, W, C, Cout, K, S, eps)

    # Pack the small per-channel vectors / conv weights to cut the DMA count.
    conv_w = jnp.stack([p["lconv_w"], p["hconv_w"]], axis=0)            # (2,3,3,C)
    vecs = jnp.stack([p["down_b"], p["lconv_b"], p["norm1_w"], p["norm1_b"],
                      p["hconv_b"], p["norm2_w"], p["norm2_b"],
                      jnp.zeros((C,), jnp.float32)], axis=0)             # (8, C)
    pw = jnp.concatenate([p["proj_w1"], p["proj_w2"]], axis=0)           # (2C, Cout)
    pb = p["proj_b"].reshape(1, Cout)

    def rep(shape):                      # broadcast (grid-invariant) block
        zeros = (0,) * len(shape)
        return pl.BlockSpec(shape, lambda b: zeros)

    grid_spec = pltpu.PrefetchScalarGridSpec(
        num_scalar_prefetch=0,
        grid=(B,),
        in_specs=[
            pl.BlockSpec((1, H, W, C), lambda b: (b, 0, 0, 0)),   # x
            rep((K, K, C)),                                       # down conv weight
            rep((2, 3, 3, C)),                                    # lconv / hconv weights
            rep((8, C)),                                          # packed bias/affine vecs
            rep((2 * C, Cout)),                                   # fused proj weight
            rep((1, Cout)),                                       # proj bias
        ],
        out_specs=pl.BlockSpec((1, H, W, Cout), lambda b: (b, 0, 0, 0)),
        scratch_shapes=[
            pltpu.VMEM((Hp, Wp, C), jnp.float32),   # padded plane A (x, then t_mul)
            pltpu.VMEM((Hp, Wp, C), jnp.float32),   # padded plane B (t_sub)
        ],
    )
    return pl.pallas_call(
        kernel,
        out_shape=jax.ShapeDtypeStruct((B, H, W, Cout), jnp.float32),
        grid_spec=grid_spec,
        compiler_params=pltpu.CompilerParams(dimension_semantics=("parallel",)),
    )(x_nhwc, p["down_w"], conv_w, vecs, pw, pb)


# ----------------------------------------------------------------------------
# Pure-JAX reference (correctness sanity check, runs in plain XLA)
# ----------------------------------------------------------------------------
def _gelu_exact(x):
    return jax.nn.gelu(x, approximate=False)     # matches torch.nn.GELU()


def bilinear_resize_nhwc(dx, out_h, out_w):
    B, in_h, in_w, C = dx.shape

    def src_idx(out_size, in_size):
        scale = in_size / out_size
        i = jnp.arange(out_size, dtype=jnp.float32)
        src = jnp.maximum((i + 0.5) * scale - 0.5, 0.0)
        i0 = jnp.floor(src).astype(jnp.int32)
        i1 = jnp.minimum(i0 + 1, in_size - 1)
        w1 = src - i0.astype(jnp.float32)
        return i0, i1, w1

    r0, r1, rw = src_idx(out_h, in_h)
    c0, c1, cw = src_idx(out_w, in_w)
    rows0 = dx[:, r0]
    rows1 = dx[:, r1]
    cw_ = cw[None, None, :, None]
    rw_ = rw[None, :, None, None]
    top = rows0[:, :, c0] * (1.0 - cw_) + rows0[:, :, c1] * cw_
    bot = rows1[:, :, c0] * (1.0 - cw_) + rows1[:, :, c1] * cw_
    return top * (1.0 - rw_) + bot * rw_


def _ref_dwconv(x, w, b, stride, pad):
    C = x.shape[-1]
    out = lax.conv_general_dilated(
        x, w[:, :, None, :],
        window_strides=(stride, stride),
        padding=((pad, pad), (pad, pad)),
        dimension_numbers=("NHWC", "HWIO", "NHWC"),
        feature_group_count=C,
        precision=lax.Precision.HIGHEST,
    )
    return out + b.reshape(1, 1, 1, C)


def _ref_layernorm(x, g, b, eps=1e-6):
    mu = jnp.mean(x, axis=-1, keepdims=True)
    d = x - mu
    var = jnp.mean(d * d, axis=-1, keepdims=True)
    return d / jnp.sqrt(var + eps) * g.reshape(1, 1, 1, -1) + b.reshape(1, 1, 1, -1)


def reference_forward(x, p, down_kernel, down_stride):
    dx = _ref_dwconv(x, p["down_w"], p["down_b"], down_stride, down_kernel // 2)
    udx = bilinear_resize_nhwc(dx, x.shape[1], x.shape[2])
    lx = _ref_layernorm(
        _ref_dwconv(_gelu_exact(x * udx), p["lconv_w"], p["lconv_b"], 1, 1),
        p["norm1_w"], p["norm1_b"])
    hx = _ref_layernorm(
        _ref_dwconv(_gelu_exact(x - udx), p["hconv_w"], p["hconv_b"], 1, 1),
        p["norm2_w"], p["norm2_b"])
    hp = lax.Precision.HIGHEST
    pre = (jnp.einsum("bhwc,cd->bhwd", lx, p["proj_w1"], precision=hp)
           + jnp.einsum("bhwc,cd->bhwd", hx, p["proj_w2"], precision=hp)
           + p["proj_b"].reshape(1, 1, 1, -1))
    return _gelu_exact(pre)


# ----------------------------------------------------------------------------
def init_params(key, C, C_out, down_kernel):
    ks = jax.random.split(key, 12)

    def trunc_normal(k, shape, std=0.02):
        return jax.random.truncated_normal(k, -2.0, 2.0, shape, jnp.float32) * std

    return {
        "down_w": trunc_normal(ks[0], (down_kernel, down_kernel, C)),
        "down_b": trunc_normal(ks[1], (C,)),
        "lconv_w": trunc_normal(ks[2], (3, 3, C)),
        "lconv_b": trunc_normal(ks[3], (C,)),
        "hconv_w": trunc_normal(ks[4], (3, 3, C)),
        "hconv_b": trunc_normal(ks[5], (C,)),
        "norm1_w": 1.0 + trunc_normal(ks[6], (C,)),
        "norm1_b": trunc_normal(ks[7], (C,)),
        "norm2_w": 1.0 + trunc_normal(ks[8], (C,)),
        "norm2_b": trunc_normal(ks[9], (C,)),
        # proj (1x1 conv, 2C -> C_out) split into the lx- and hx-parts of the
        # concatenated channel axis: pre = lx @ W1 + hx @ W2 + b
        "proj_w1": trunc_normal(ks[10], (C, C_out)),
        "proj_w2": trunc_normal(ks[11], (C, C_out)),
        "proj_b": jnp.zeros((C_out,), jnp.float32),
    }


if __name__ == "__main__":
    B, C, H, W = 2, 128, 16, 16          # module defaults: in_dim = out_dim = 128
    C_out = 128
    DOWN_K, DOWN_S = 5, 4

    key = jax.random.PRNGKey(0)
    kx, kp = jax.random.split(key)
    x_nchw = jax.random.normal(kx, (B, C, H, W), jnp.float32)   # PyTorch-style NCHW
    x_nhwc = jnp.transpose(x_nchw, (0, 2, 3, 1))                # kernel layout: NHWC

    params = init_params(kp, C, C_out, DOWN_K)

    out = frm_forward(x_nhwc, params, DOWN_K, DOWN_S)
    out = jax.block_until_ready(out)

    assert out.shape == (B, H, W, C_out), out.shape
    assert bool(jnp.isfinite(out).all())

    ref = reference_forward(x_nhwc, params, DOWN_K, DOWN_S)
    err = float(jnp.max(jnp.abs(out - ref)))
    if err > 2e-2:
        raise RuntimeError(f"Pallas output mismatch vs reference, max abs err = {err}")

    print("KERNEL_OK")
</pallas_src>

<mosaic_0001>
module attributes {stable_mosaic.version = 11 : i64} {
  func.func @kernel(%arg0: i32, %arg1: memref<1x16x16x128xf32, #tpu.memory_space<vmem>>, %arg2: memref<5x5x128xf32, #tpu.memory_space<vmem>>, %arg3: memref<2x3x3x128xf32, #tpu.memory_space<vmem>>, %arg4: memref<8x128xf32, #tpu.memory_space<vmem>>, %arg5: memref<256x128xf32, #tpu.memory_space<vmem>>, %arg6: memref<1x128xf32, #tpu.memory_space<vmem>>, %arg7: memref<1x16x16x128xf32, #tpu.memory_space<vmem>>, %arg8: memref<20x20x128xf32, #tpu.memory_space<vmem>>, %arg9: memref<20x20x128xf32, #tpu.memory_space<vmem>>) attributes {dimension_semantics = [#tpu.dimension_semantics<parallel>], iteration_bounds = array<i64: 2>, scalar_prefetch = 0 : i64, scratch_operands = 2 : i64, tpu.core_type = #tpu.core_type<tc>, window_params = [{transform_indices = @transform_0, window_bounds = array<i64: 1, 16, 16, 128>}, {pipeline_mode = #tpu.pipeline_mode<synchronous>, transform_indices = @transform_1, window_bounds = array<i64: 5, 5, 128>}, {pipeline_mode = #tpu.pipeline_mode<synchronous>, transform_indices = @transform_2, window_bounds = array<i64: 2, 3, 3, 128>}, {pipeline_mode = #tpu.pipeline_mode<synchronous>, transform_indices = @transform_3, window_bounds = array<i64: 8, 128>}, {pipeline_mode = #tpu.pipeline_mode<synchronous>, transform_indices = @transform_4, window_bounds = array<i64: 256, 128>}, {pipeline_mode = #tpu.pipeline_mode<synchronous>, transform_indices = @transform_5, window_bounds = array<i64: 1, 128>}, {transform_indices = @transform_6, window_bounds = array<i64: 1, 16, 16, 128>}]} {
    %cst = arith.constant 0.000000e+00 : f32
    %0 = vector.broadcast %cst : f32 to vector<2x20x128xf32>
    %cst_0 = arith.constant 0.000000e+00 : f32
    %1 = vector.broadcast %cst_0 : f32 to vector<16x2x128xf32>
    %c0 = arith.constant 0 : index
    %c0_1 = arith.constant 0 : index
    %c0_2 = arith.constant 0 : index
    %2 = vector.load %arg8[%c0, %c0_1, %c0_2] : memref<20x20x128xf32, #tpu.memory_space<vmem>>, vector<2x20x128xf32>
    tpu.vector_store %arg8[%c0, %c0_1, %c0_2], %0 {strides = array<i32>} : memref<20x20x128xf32, #tpu.memory_space<vmem>>, vector<2x20x128xf32>,
    %c18 = arith.constant 18 : index
    %c0_3 = arith.constant 0 : index
    %c0_4 = arith.constant 0 : index
    %3 = vector.load %arg8[%c18, %c0_3, %c0_4] : memref<20x20x128xf32, #tpu.memory_space<vmem>>, vector<2x20x128xf32>
    tpu.vector_store %arg8[%c18, %c0_3, %c0_4], %0 {strides = array<i32>} : memref<20x20x128xf32, #tpu.memory_space<vmem>>, vector<2x20x128xf32>,
    %c2 = arith.constant 2 : index
    %c0_5 = arith.constant 0 : index
    %c0_6 = arith.constant 0 : index
    %4 = vector.load %arg8[%c2, %c0_5, %c0_6] : memref<20x20x128xf32, #tpu.memory_space<vmem>>, vector<16x2x128xf32>
    tpu.vector_store %arg8[%c2, %c0_5, %c0_6], %1 {strides = array<i32>} : memref<20x20x128xf32, #tpu.memory_space<vmem>>, vector<16x2x128xf32>,
    %c2_7 = arith.constant 2 : index
    %c18_8 = arith.constant 18 : index
    %c0_9 = arith.constant 0 : index
    %5 = vector.load %arg8[%c2_7, %c18_8, %c0_9] : memref<20x20x128xf32, #tpu.memory_space<vmem>>, vector<16x2x128xf32>
    tpu.vector_store %arg8[%c2_7, %c18_8, %c0_9], %1 {strides = array<i32>} : memref<20x20x128xf32, #tpu.memory_space<vmem>>, vector<16x2x128xf32>,
    %c0_10 = arith.constant 0 : index
    %c0_11 = arith.constant 0 : index
    %c0_12 = arith.constant 0 : index
    %6 = vector.load %arg9[%c0_10, %c0_11, %c0_12] : memref<20x20x128xf32, #tpu.memory_space<vmem>>, vector<2x20x128xf32>
    tpu.vector_store %arg9[%c0_10, %c0_11, %c0_12], %0 {strides = array<i32>} : memref<20x20x128xf32, #tpu.memory_space<vmem>>, vector<2x20x128xf32>,
    %c18_13 = arith.constant 18 : index
    %c0_14 = arith.constant 0 : index
    %c0_15 = arith.constant 0 : index
    %7 = vector.load %arg9[%c18_13, %c0_14, %c0_15] : memref<20x20x128xf32, #tpu.memory_space<vmem>>, vector<2x20x128xf32>
    tpu.vector_store %arg9[%c18_13, %c0_14, %c0_15], %0 {strides = array<i32>} : memref<20x20x128xf32, #tpu.memory_space<vmem>>, vector<2x20x128xf32>,
    %c2_16 = arith.constant 2 : index
    %c0_17 = arith.constant 0 : index
    %c0_18 = arith.constant 0 : index
    %8 = vector.load %arg9[%c2_16, %c0_17, %c0_18] : memref<20x20x128xf32, #tpu.memory_space<vmem>>, vector<16x2x128xf32>
    tpu.vector_store %arg9[%c2_16, %c0_17, %c0_18], %1 {strides = array<i32>} : memref<20x20x128xf32, #tpu.memory_space<vmem>>, vector<16x2x128xf32>,
    %c2_19 = arith.constant 2 : index
    %c18_20 = arith.constant 18 : index
    %c0_21 = arith.constant 0 : index
    %9 = vector.load %arg9[%c2_19, %c18_20, %c0_21] : memref<20x20x128xf32, #tpu.memory_space<vmem>>, vector<16x2x128xf32>
    tpu.vector_store %arg9[%c2_19, %c18_20, %c0_21], %1 {strides = array<i32>} : memref<20x20x128xf32, #tpu.memory_space<vmem>>, vector<16x2x128xf32>,
    %c0_22 = arith.constant 0 : index
    %c0_23 = arith.constant 0 : index
    %c0_24 = arith.constant 0 : index
    %c0_25 = arith.constant 0 : index
    %10 = vector.load %arg1[%c0_22, %c0_23, %c0_24, %c0_25] : memref<1x16x16x128xf32, #tpu.memory_space<vmem>>, vector<1x4x16x128xf32>
    %11 = vector.shape_cast %10 : vector<1x4x16x128xf32> to vector<4x16x128xf32>
    %c2_26 = arith.constant 2 : index
    %c2_27 = arith.constant 2 : index
    %c0_28 = arith.constant 0 : index
    %12 = vector.load %arg8[%c2_26, %c2_27, %c0_28] : memref<20x20x128xf32, #tpu.memory_space<vmem>>, vector<4x16x128xf32>
    tpu.vector_store %arg8[%c2_26, %c2_27, %c0_28], %11 {strides = array<i32>} : memref<20x20x128xf32, #tpu.memory_space<vmem>>, vector<4x16x128xf32>,
    %c0_29 = arith.constant 0 : index
    %c4 = arith.constant 4 : index
    %c0_30 = arith.constant 0 : index
    %c0_31 = arith.constant 0 : index
    %13 = vector.load %arg1[%c0_29, %c4, %c0_30, %c0_31] : memref<1x16x16x128xf32, #tpu.memory_space<vmem>>, vector<1x4x16x128xf32>
    %14 = vector.shape_cast %13 : vector<1x4x16x128xf32> to vector<4x16x128xf32>
    %c6 = arith.constant 6 : index
    %c2_32 = arith.constant 2 : index
    %c0_33 = arith.constant 0 : index
    %15 = vector.load %arg8[%c6, %c2_32, %c0_33] : memref<20x20x128xf32, #tpu.memory_space<vmem>>, vector<4x16x128xf32>
    tpu.vector_store %arg8[%c6, %c2_32, %c0_33], %14 {strides = array<i32>} : memref<20x20x128xf32, #tpu.memory_space<vmem>>, vector<4x16x128xf32>,
    %c0_34 = arith.constant 0 : index
    %c8 = arith.constant 8 : index
    %c0_35 = arith.constant 0 : index
    %c0_36 = arith.constant 0 : index
    %16 = vector.load %arg1[%c0_34, %c8, %c0_35, %c0_36] : memref<1x16x16x128xf32, #tpu.memory_space<vmem>>, vector<1x4x16x128xf32>
    %17 = vector.shape_cast %16 : vector<1x4x16x128xf32> to vector<4x16x128xf32>
    %c10 = arith.constant 10 : index
    %c2_37 = arith.constant 2 : index
    %c0_38 = arith.constant 0 : index
    %18 = vector.load %arg8[%c10, %c2_37, %c0_38] : memref<20x20x128xf32, #tpu.memory_space<vmem>>, vector<4x16x128xf32>
    tpu.vector_store %arg8[%c10, %c2_37, %c0_38], %17 {strides = array<i32>} : memref<20x20x128xf32, #tpu.memory_space<vmem>>, vector<4x16x128xf32>,
    %c0_39 = arith.constant 0 : index
    %c12 = arith.constant 12 : index
    %c0_40 = arith.constant 0 : index
    %c0_41 = arith.constant 0 : index
    %19 = vector.load %arg1[%c0_39, %c12, %c0_40, %c0_41] : memref<1x16x16x128xf32, #tpu.memory_space<vmem>>, vector<1x4x16x128xf32>
    %20 = vector.shape_cast %19 : vector<1x4x16x128xf32> to vector<4x16x128xf32>
    %c14 = arith.constant 14 : index
    %c2_42 = arith.constant 2 : index
    %c0_43 = arith.constant 0 : index
    %21 = vector.load %arg8[%c14, %c2_42, %c0_43] : memref<20x20x128xf32, #tpu.memory_space<vmem>>, vector<4x16x128xf32>
    tpu.vector_store %arg8[%c14, %c2_42, %c0_43], %20 {strides = array<i32>} : memref<20x20x128xf32, #tpu.memory_space<vmem>>, vector<4x16x128xf32>,
    %c0_44 = arith.constant 0 : index
    %c0_45 = arith.constant 0 : index
    %22 = vector.load %arg4[%c0_44, %c0_45] : memref<8x128xf32, #tpu.memory_space<vmem>>, vector<8x128xf32>
    %23 = vector.extract_strided_slice %22 {offsets = [0, 0], sizes = [1, 128], strides = [1, 1]} : vector<8x128xf32> to vector<1x128xf32>
    %c0_46 = arith.constant 0 : index
    %c0_47 = arith.constant 0 : index
    %c0_48 = arith.constant 0 : index
    %24 = vector.load %arg2[%c0_46, %c0_47, %c0_48] : memref<5x5x128xf32, #tpu.memory_space<vmem>>, vector<5x5x128xf32>
    %25 = tpu.iota {dimensions = array<i32: 0>} : vector<16x1xi32>
    %26 = arith.sitofp %25 : vector<16x1xi32> to vector<16x1xf32>
    %cst_49 = arith.constant 5.000000e-01 : f32
    %27 = vector.broadcast %cst_49 : f32 to vector<16x1xf32>
    %28 = arith.addf %26, %27 : vector<16x1xf32>
    %cst_50 = arith.constant 2.500000e-01 : f32
    %29 = vector.broadcast %cst_50 : f32 to vector<16x1xf32>
    %30 = arith.mulf %28, %29 : vector<16x1xf32>
    %cst_51 = arith.constant 5.000000e-01 : f32
    %31 = vector.broadcast %cst_51 : f32 to vector<16x1xf32>
    %32 = arith.subf %30, %31 : vector<16x1xf32>
    %cst_52 = arith.constant 0.000000e+00 : f32
    %cst_53 = arith.constant 3.000000e+00 : f32
    %33 = vector.broadcast %cst_52 : f32 to vector<16x1xf32>
    %34 = arith.maximumf %33, %32 : vector<16x1xf32>
    %35 = vector.broadcast %cst_53 : f32 to vector<16x1xf32>
    %36 = arith.minimumf %35, %34 : vector<16x1xf32>
    %cst_54 = arith.constant 0.000000e+00 : f32
    %37 = vector.broadcast %cst_54 : f32 to vector<16x1xf32>
    %38 = arith.subf %36, %37 : vector<16x1xf32>
    %39 = math.absf %38 : vector<16x1xf32>
    %cst_55 = arith.constant 1.000000e+00 : f32
    %40 = vector.broadcast %cst_55 : f32 to vector<16x1xf32>
    %41 = arith.subf %40, %39 : vector<16x1xf32>
    %cst_56 = arith.constant 0.000000e+00 : f32
    %42 = vector.broadcast %cst_56 : f32 to vector<16x1xf32>
    %43 = arith.maximumf %41, %42 : vector<16x1xf32>
    %cst_57 = arith.constant 1.000000e+00 : f32
    %44 = vector.broadcast %cst_57 : f32 to vector<16x1xf32>
    %45 = arith.subf %36, %44 : vector<16x1xf32>
    %46 = math.absf %45 : vector<16x1xf32>
    %cst_58 = arith.constant 1.000000e+00 : f32
    %47 = vector.broadcast %cst_58 : f32 to vector<16x1xf32>
    %48 = arith.subf %47, %46 : vector<16x1xf32>
    %cst_59 = arith.constant 0.000000e+00 : f32
    %49 = vector.broadcast %cst_59 : f32 to vector<16x1xf32>
    %50 = arith.maximumf %48, %49 : vector<16x1xf32>
    %cst_60 = arith.constant 2.000000e+00 : f32
    %51 = vector.broadcast %cst_60 : f32 to vector<16x1xf32>
    %52 = arith.subf %36, %51 : vector<16x1xf32>
    %53 = math.absf %52 : vector<16x1xf32>
    %cst_61 = arith.constant 1.000000e+00 : f32
    %54 = vector.broadcast %cst_61 : f32 to vector<16x1xf32>
    %55 = arith.subf %54, %53 : vector<16x1xf32>
    %cst_62 = arith.constant 0.000000e+00 : f32
    %56 = vector.broadcast %cst_62 : f32 to vector<16x1xf32>
    %57 = arith.maximumf %55, %56 : vector<16x1xf32>
    %cst_63 = arith.constant 3.000000e+00 : f32
    %58 = vector.broadcast %cst_63 : f32 to vector<16x1xf32>
    %59 = arith.subf %36, %58 : vector<16x1xf32>
    %60 = math.absf %59 : vector<16x1xf32>
    %cst_64 = arith.constant 1.000000e+00 : f32
    %61 = vector.broadcast %cst_64 : f32 to vector<16x1xf32>
    %62 = arith.subf %61, %60 : vector<16x1xf32>
    %cst_65 = arith.constant 0.000000e+00 : f32
    %63 = vector.broadcast %cst_65 : f32 to vector<16x1xf32>
    %64 = arith.maximumf %62, %63 : vector<16x1xf32>
    %cst_66 = arith.constant 0.000000e+00 : f32
    %65 = vector.broadcast %cst_66 : f32 to vector<16x128xf32>
    %66 = vector.extract_strided_slice %24 {offsets = [0, 0, 0], sizes = [1, 1, 128], strides = [1, 1, 1]} : vector<5x5x128xf32> to vector<1x1x128xf32>
    %67 = vector.shape_cast %66 : vector<1x1x128xf32> to vector<1x128xf32>
    %c0_67 = arith.constant 0 : index
    %c0_68 = arith.constant 0 : index
    %c0_69 = arith.constant 0 : index
    %68 = vector.load %arg8[%c0_67, %c0_68, %c0_69] : memref<20x20x128xf32, #tpu.memory_space<vmem>>, vector<1x16x128xf32>
    %69 = vector.shape_cast %68 : vector<1x16x128xf32> to vector<16x128xf32>
    %70 = vector.broadcast %67 : vector<1x128xf32> to vector<16x128xf32>
    %71 = arith.mulf %70, %69 : vector<16x128xf32>
    %72 = arith.addf %65, %71 : vector<16x128xf32>
    %73 = vector.extract_strided_slice %24 {offsets = [0, 1, 0], sizes = [1, 1, 128], strides = [1, 1, 1]} : vector<5x5x128xf32> to vector<1x1x128xf32>
    %74 = vector.shape_cast %73 : vector<1x1x128xf32> to vector<1x128xf32>
    %c0_70 = arith.constant 0 : index
    %c1 = arith.constant 1 : index
    %c0_71 = arith.constant 0 : index
    %75 = vector.load %arg8[%c0_70, %c1, %c0_71] : memref<20x20x128xf32, #tpu.memory_space<vmem>>, vector<1x16x128xf32>
    %76 = vector.shape_cast %75 : vector<1x16x128xf32> to vector<16x128xf32>
    %77 = vector.broadcast %74 : vector<1x128xf32> to vector<16x128xf32>
    %78 = arith.mulf %77, %76 : vector<16x128xf32>
    %79 = arith.addf %72, %78 : vector<16x128xf32>
    %80 = vector.extract_strided_slice %24 {offsets = [0, 2, 0], sizes = [1, 1, 128], strides = [1, 1, 1]} : vector<5x5x128xf32> to vector<1x1x128xf32>
    %81 = vector.shape_cast %80 : vector<1x1x128xf32> to vector<1x128xf32>
    %c0_72 = arith.constant 0 : index
    %c2_73 = arith.constant 2 : index
    %c0_74 = arith.constant 0 : index
    %82 = vector.load %arg8[%c0_72, %c2_73, %c0_74] : memref<20x20x128xf32, #tpu.memory_space<vmem>>, vector<1x16x128xf32>
    %83 = vector.shape_cast %82 : vector<1x16x128xf32> to vector<16x128xf32>
    %84 = vector.broadcast %81 : vector<1x128xf32> to vector<16x128xf32>
    %85 = arith.mulf %84, %83 : vector<16x128xf32>
    %86 = arith.addf %79, %85 : vector<16x128xf32>
    %87 = vector.extract_strided_slice %24 {offsets = [0, 3, 0], sizes = [1, 1, 128], strides = [1, 1, 1]} : vector<5x5x128xf32> to vector<1x1x128xf32>
    %88 = vector.shape_cast %87 : vector<1x1x128xf32> to vector<1x128xf32>
    %c0_75 = arith.constant 0 : index
    %c3 = arith.constant 3 : index
    %c0_76 = arith.constant 0 : index
    %89 = vector.load %arg8[%c0_75, %c3, %c0_76] : memref<20x20x128xf32, #tpu.memory_space<vmem>>, vector<1x16x128xf32>
    %90 = vector.shape_cast %89 : vector<1x16x128xf32> to vector<16x128xf32>
    %91 = vector.broadcast %88 : vector<1x128xf32> to vector<16x128xf32>
    %92 = arith.mulf %91, %90 : vector<16x128xf32>
    %93 = arith.addf %86, %92 : vector<16x128xf32>
    %94 = vector.extract_strided_slice %24 {offsets = [0, 4, 0], sizes = [1, 1, 128], strides = [1, 1, 1]} : vector<5x5x128xf32> to vector<1x1x128xf32>
    %95 = vector.shape_cast %94 : vector<1x1x128xf32> to vector<1x128xf32>
    %c0_77 = arith.constant 0 : index
    %c4_78 = arith.constant 4 : index
    %c0_79 = arith.constant 0 : index
    %96 = vector.load %arg8[%c0_77, %c4_78, %c0_79] : memref<20x20x128xf32, #tpu.memory_space<vmem>>, vector<1x16x128xf32>
    %97 = vector.shape_cast %96 : vector<1x16x128xf32> to vector<16x128xf32>
    %98 = vector.broadcast %95 : vector<1x128xf32> to vector<16x128xf32>
    %99 = arith.mulf %98, %97 : vector<16x128xf32>
    %100 = arith.addf %93, %99 : vector<16x128xf32>
    %101 = vector.extract_strided_slice %24 {offsets = [1, 0, 0], sizes = [1, 1, 128], strides = [1, 1, 1]} : vector<5x5x128xf32> to vector<1x1x128xf32>
    %102 = vector.shape_cast %101 : vector<1x1x128xf32> to vector<1x128xf32>
    %c1_80 = arith.constant 1 : index
    %c0_81 = arith.constant 0 : index
    %c0_82 = arith.constant 0 : index
    %103 = vector.load %arg8[%c1_80, %c0_81, %c0_82] : memref<20x20x128xf32, #tpu.memory_space<vmem>>, vector<1x16x128xf32>
    %104 = vector.shape_cast %103 : vector<1x16x128xf32> to vector<16x128xf32>
    %105 = vector.broadcast %102 : vector<1x128xf32> to vector<16x128xf32>
    %106 = arith.mulf %105, %104 : vector<16x128xf32>
    %107 = arith.addf %100, %106 : vector<16x128xf32>
    %108 = vector.extract_strided_slice %24 {offsets = [1, 1, 0], sizes = [1, 1, 128], strides = [1, 1, 1]} : vector<5x5x128xf32> to vector<1x1x128xf32>
    %109 = vector.shape_cast %108 : vector<1x1x128xf32> to vector<1x128xf32>
    %c1_83 = arith.constant 1 : index
    %c1_84 = arith.constant 1 : index
    %c0_85 = arith.constant 0 : index
    %110 = vector.load %arg8[%c1_83, %c1_84, %c0_85] : memref<20x20x128xf32, #tpu.memory_space<vmem>>, vector<1x16x128xf32>
    %111 = vector.shape_cast %110 : vector<1x16x128xf32> to vector<16x128xf32>
    %112 = vector.broadcast %109 : vector<1x128xf32> to vector<16x128xf32>
    %113 = arith.mulf %112, %111 : vector<16x128xf32>
    %114 = arith.addf %107, %113 : vector<16x128xf32>
    %115 = vector.extract_strided_slice %24 {offsets = [1, 2, 0], sizes = [1, 1, 128], strides = [1, 1, 1]} : vector<5x5x128xf32> to vector<1x1x128xf32>
    %116 = vector.shape_cast %115 : vector<1x1x128xf32> to vector<1x128xf32>
    %c1_86 = arith.constant 1 : index
    %c2_87 = arith.constant 2 : index
    %c0_88 = arith.constant 0 : index
    %117 = vector.load %arg8[%c1_86, %c2_87, %c0_88] : memref<20x20x128xf32, #tpu.memory_space<vmem>>, vector<1x16x128xf32>
    %118 = vector.shape_cast %117 : vector<1x16x128xf32> to vector<16x128xf32>
    %119 = vector.broadcast %116 : vector<1x128xf32> to vector<16x128xf32>
    %120 = arith.mulf %119, %118 : vector<16x128xf32>
    %121 = arith.addf %114, %120 : vector<16x128xf32>
    %122 = vector.extract_strided_slice %24 {offsets = [1, 3, 0], sizes = [1, 1, 128], strides = [1, 1, 1]} : vector<5x5x128xf32> to vector<1x1x128xf32>
    %123 = vector.shape_cast %122 : vector<1x1x128xf32> to vector<1x128xf32>
    %c1_89 = arith.constant 1 : index
    %c3_90 = arith.constant 3 : index
    %c0_91 = arith.constant 0 : index
    %124 = vector.load %arg8[%c1_89, %c3_90, %c0_91] : memref<20x20x128xf32, #tpu.memory_space<vmem>>, vector<1x16x128xf32>
    %125 = vector.shape_cast %124 : vector<1x16x128xf32> to vector<16x128xf32>
    %126 = vector.broadcast %123 : vector<1x128xf32> to vector<16x128xf32>
    %127 = arith.mulf %126, %125 : vector<16x128xf32>
    %128 = arith.addf %121, %127 : vector<16x128xf32>
    %129 = vector.extract_strided_slice %24 {offsets = [1, 4, 0], sizes = [1, 1, 128], strides = [1, 1, 1]} : vector<5x5x128xf32> to vector<1x1x128xf32>
    %130 = vector.shape_cast %129 : vector<1x1x128xf32> to vector<1x128xf32>
    %c1_92 = arith.constant 1 : index
    %c4_93 = arith.constant 4 : index
    %c0_94 = arith.constant 0 : index
    %131 = vector.load %arg8[%c1_92, %c4_93, %c0_94] : memref<20x20x128xf32, #tpu.memory_space<vmem>>, vector<1x16x128xf32>
    %132 = vector.shape_cast %131 : vector<1x16x128xf32> to vector<16x128xf32>
    %133 = vector.broadcast %130 : vector<1x128xf32> to vector<16x128xf32>
    %134 = arith.mulf %133, %132 : vector<16x128xf32>
    %135 = arith.addf %128, %134 : vector<16x128xf32>
    %136 = vector.extract_strided_slice %24 {offsets = [2, 0, 0], sizes = [1, 1, 128], strides = [1, 1, 1]} : vector<5x5x128xf32> to vector<1x1x128xf32>
    %137 = vector.shape_cast %136 : vector<1x1x128xf32> to vector<1x128xf32>
    %c2_95 = arith.constant 2 : index
    %c0_96 = arith.constant 0 : index
    %c0_97 = arith.constant 0 : index
    %138 = vector.load %arg8[%c2_95, %c0_96, %c0_97] : memref<20x20x128xf32, #tpu.memory_space<vmem>>, vector<1x16x128xf32>
    %139 = vector.shape_cast %138 : vector<1x16x128xf32> to vector<16x128xf32>
    %140 = vector.broadcast %137 : vector<1x128xf32> to vector<16x128xf32>
    %141 = arith.mulf %140, %139 : vector<16x128xf32>
    %142 = arith.addf %135, %141 : vector<16x128xf32>
    %143 = vector.extract_strided_slice %24 {offsets = [2, 1, 0], sizes = [1, 1, 128], strides = [1, 1, 1]} : vector<5x5x128xf32> to vector<1x1x128xf32>
    %144 = vector.shape_cast %143 : vector<1x1x128xf32> to vector<1x128xf32>
    %c2_98 = arith.constant 2 : index
    %c1_99 = arith.constant 1 : index
    %c0_100 = arith.constant 0 : index
    %145 = vector.load %arg8[%c2_98, %c1_99, %c0_100] : memref<20x20x128xf32, #tpu.memory_space<vmem>>, vector<1x16x128xf32>
    %146 = vector.shape_cast %145 : vector<1x16x128xf32> to vector<16x128xf32>
    %147 = vector.broadcast %144 : vector<1x128xf32> to vector<16x128xf32>
    %148 = arith.mulf %147, %146 : vector<16x128xf32>
    %149 = arith.addf %142, %148 : vector<16x128xf32>
    %150 = vector.extract_strided_slice %24 {offsets = [2, 2, 0], sizes = [1, 1, 128], strides = [1, 1, 1]} : vector<5x5x128xf32> to vector<1x1x128xf32>
    %151 = vector.shape_cast %150 : vector<1x1x128xf32> to vector<1x128xf32>
    %c2_101 = arith.constant 2 : index
    %c2_102 = arith.constant 2 : index
    %c0_103 = arith.constant 0 : index
    %152 = vector.load %arg8[%c2_101, %c2_102, %c0_103] : memref<20x20x128xf32, #tpu.memory_space<vmem>>, vector<1x16x128xf32>
    %153 = vector.shape_cast %152 : vector<1x16x128xf32> to vector<16x128xf32>
    %154 = vector.broadcast %151 : vector<1x128xf32> to vector<16x128xf32>
    %155 = arith.mulf %154, %153 : vector<16x128xf32>
    %156 = arith.addf %149, %155 : vector<16x128xf32>
    %157 = vector.extract_strided_slice %24 {offsets = [2, 3, 0], sizes = [1, 1, 128], strides = [1, 1, 1]} : vector<5x5x128xf32> to vector<1x1x128xf32>
    %158 = vector.shape_cast %157 : vector<1x1x128xf32> to vector<1x128xf32>
    %c2_104 = arith.constant 2 : index
    %c3_105 = arith.constant 3 : index
    %c0_106 = arith.constant 0 : index
    %159 = vector.load %arg8[%c2_104, %c3_105, %c0_106] : memref<20x20x128xf32, #tpu.memory_space<vmem>>, vector<1x16x128xf32>
    %160 = vector.shape_cast %159 : vector<1x16x128xf32> to vector<16x128xf32>
    %161 = vector.broadcast %158 : vector<1x128xf32> to vector<16x128xf32>
    %162 = arith.mulf %161, %160 : vector<16x128xf32>
    %163 = arith.addf %156, %162 : vector<16x128xf32>
    %164 = vector.extract_strided_slice %24 {offsets = [2, 4, 0], sizes = [1, 1, 128], strides = [1, 1, 1]} : vector<5x5x128xf32> to vector<1x1x128xf32>
    %165 = vector.shape_cast %164 : vector<1x1x128xf32> to vector<1x128xf32>
    %c2_107 = arith.constant 2 : index
    %c4_108 = arith.constant 4 : index
    %c0_109 = arith.constant 0 : index
    %166 = vector.load %arg8[%c2_107, %c4_108, %c0_109] : memref<20x20x128xf32, #tpu.memory_space<vmem>>, vector<1x16x128xf32>
    %167 = vector.shape_cast %166 : vector<1x16x128xf32> to vector<16x128xf32>
    %168 = vector.broadcast %165 : vector<1x128xf32> to vector<16x128xf32>
    %169 = arith.mulf %168, %167 : vector<16x128xf32>
    %170 = arith.addf %163, %169 : vector<16x128xf32>
    %171 = vector.extract_strided_slice %24 {offsets = [3, 0, 0], sizes = [1, 1, 128], strides = [1, 1, 1]} : vector<5x5x128xf32> to vector<1x1x128xf32>
    %172 = vector.shape_cast %171 : vector<1x1x128xf32> to vector<1x128xf32>
    %c3_110 = arith.constant 3 : index
    %c0_111 = arith.constant 0 : index
    %c0_112 = arith.constant 0 : index
    %173 = vector.load %arg8[%c3_110, %c0_111, %c0_112] : memref<20x20x128xf32, #tpu.memory_space<vmem>>, vector<1x16x128xf32>
    %174 = vector.shape_cast %173 : vector<1x16x128xf32> to vector<16x128xf32>
    %175 = vector.broadcast %172 : vector<1x128xf32> to vector<16x128xf32>
    %176 = arith.mulf %175, %174 : vector<16x128xf32>
    %177 = arith.addf %170, %176 : vector<16x128xf32>
    %178 = vector.extract_strided_slice %24 {offsets = [3, 1, 0], sizes = [1, 1, 128], strides = [1, 1, 1]} : vector<5x5x128xf32> to vector<1x1x128xf32>
    %179 = vector.shape_cast %178 : vector<1x1x128xf32> to vector<1x128xf32>
    %c3_113 = arith.constant 3 : index
    %c1_114 = arith.constant 1 : index
    %c0_115 = arith.constant 0 : index
    %180 = vector.load %arg8[%c3_113, %c1_114, %c0_115] : memref<20x20x128xf32, #tpu.memory_space<vmem>>, vector<1x16x128xf32>
    %181 = vector.shape_cast %180 : vector<1x16x128xf32> to vector<16x128xf32>
    %182 = vector.broadcast %179 : vector<1x128xf32> to vector<16x128xf32>
    %183 = arith.mulf %182, %181 : vector<16x128xf32>
    %184 = arith.addf %177, %183 : vector<16x128xf32>
    %185 = vector.extract_strided_slice %24 {offsets = [3, 2, 0], sizes = [1, 1, 128], strides = [1, 1, 1]} : vector<5x5x128xf32> to vector<1x1x128xf32>
    %186 = vector.shape_cast %185 : vector<1x1x128xf32> to vector<1x128xf32>
    %c3_116 = arith.constant 3 : index
    %c2_117 = arith.constant 2 : index
    %c0_118 = arith.constant 0 : index
    %187 = vector.load %arg8[%c3_116, %c2_117, %c0_118] : memref<20x20x128xf32, #tpu.memory_space<vmem>>, vector<1x16x128xf32>
    %188 = vector.shape_cast %187 : vector<1x16x128xf32> to vector<16x128xf32>
    %189 = vector.broadcast %186 : vector<1x128xf32> to vector<16x128xf32>
    %190 = arith.mulf %189, %188 : vector<16x128xf32>
    %191 = arith.addf %184, %190 : vector<16x128xf32>
    %192 = vector.extract_strided_slice %24 {offsets = [3, 3, 0], sizes = [1, 1, 128], strides = [1, 1, 1]} : vector<5x5x128xf32> to vector<1x1x128xf32>
    %193 = vector.shape_cast %192 : vector<1x1x128xf32> to vector<1x128xf32>
    %c3_119 = arith.constant 3 : index
    %c3_120 = arith.constant 3 : index
    %c0_121 = arith.constant 0 : index
    %194 = vector.load %arg8[%c3_119, %c3_120, %c0_121] : memref<20x20x128xf32, #tpu.memory_space<vmem>>, vector<1x16x128xf32>
    %195 = vector.shape_cast %194 : vector<1x16x128xf32> to vector<16x128xf32>
    %196 = vector.broadcast %193 : vector<1x128xf32> to vector<16x128xf32>
    %197 = arith.mulf %196, %195 : vector<16x128xf32>
    %198 = arith.addf %191, %197 : vector<16x128xf32>
    %199 = vector.extract_strided_slice %24 {offsets = [3, 4, 0], sizes = [1, 1, 128], strides = [1, 1, 1]} : vector<5x5x128xf32> to vector<1x1x128xf32>
    %200 = vector.shape_cast %199 : vector<1x1x128xf32> to vector<1x128xf32>
    %c3_122 = arith.constant 3 : index
    %c4_123 = arith.constant 4 : index
    %c0_124 = arith.constant 0 : index
    %201 = vector.load %arg8[%c3_122, %c4_123, %c0_124] : memref<20x20x128xf32, #tpu.memory_space<vmem>>, vector<1x16x128xf32>
    %202 = vector.shape_cast %201 : vector<1x16x128xf32> to vector<16x128xf32>
    %203 = vector.broadcast %200 : vector<1x128xf32> to vector<16x128xf32>
    %204 = arith.mulf %203, %202 : vector<16x128xf32>
    %205 = arith.addf %198, %204 : vector<16x128xf32>
    %206 = vector.extract_strided_slice %24 {offsets = [4, 0, 0], sizes = [1, 1, 128], strides = [1, 1, 1]} : vector<5x5x128xf32> to vector<1x1x128xf32>
    %207 = vector.shape_cast %206 : vector<1x1x128xf32> to vector<1x128xf32>
    %c4_125 = arith.constant 4 : index
    %c0_126 = arith.constant 0 : index
    %c0_127 = arith.constant 0 : index
    %208 = vector.load %arg8[%c4_125, %c0_126, %c0_127] : memref<20x20x128xf32, #tpu.memory_space<vmem>>, vector<1x16x128xf32>
    %209 = vector.shape_cast %208 : vector<1x16x128xf32> to vector<16x128xf32>
    %210 = vector.broadcast %207 : vector<1x128xf32> to vector<16x128xf32>
    %211 = arith.mulf %210, %209 : vector<16x128xf32>
    %212 = arith.addf %205, %211 : vector<16x128xf32>
    %213 = vector.extract_strided_slice %24 {offsets = [4, 1, 0], sizes = [1, 1, 128], strides = [1, 1, 1]} : vector<5x5x128xf32> to vector<1x1x128xf32>
    %214 = vector.shape_cast %213 : vector<1x1x128xf32> to vector<1x128xf32>
    %c4_128 = arith.constant 4 : index
    %c1_129 = arith.constant 1 : index
    %c0_130 = arith.constant 0 : index
    %215 = vector.load %arg8[%c4_128, %c1_129, %c0_130] : memref<20x20x128xf32, #tpu.memory_space<vmem>>, vector<1x16x128xf32>
    %216 = vector.shape_cast %215 : vector<1x16x128xf32> to vector<16x128xf32>
    %217 = vector.broadcast %214 : vector<1x128xf32> to vector<16x128xf32>
    %218 = arith.mulf %217, %216 : vector<16x128xf32>
    %219 = arith.addf %212, %218 : vector<16x128xf32>
    %220 = vector.extract_strided_slice %24 {offsets = [4, 2, 0], sizes = [1, 1, 128], strides = [1, 1, 1]} : vector<5x5x128xf32> to vector<1x1x128xf32>
    %221 = vector.shape_cast %220 : vector<1x1x128xf32> to vector<1x128xf32>
    %c4_131 = arith.constant 4 : index
    %c2_132 = arith.constant 2 : index
    %c0_133 = arith.constant 0 : index
    %222 = vector.load %arg8[%c4_131, %c2_132, %c0_133] : memref<20x20x128xf32, #tpu.memory_space<vmem>>, vector<1x16x128xf32>
    %223 = vector.shape_cast %222 : vector<1x16x128xf32> to vector<16x128xf32>
    %224 = vector.broadcast %221 : vector<1x128xf32> to vector<16x128xf32>
    %225 = arith.mulf %224, %223 : vector<16x128xf32>
    %226 = arith.addf %219, %225 : vector<16x128xf32>
    %227 = vector.extract_strided_slice %24 {offsets = [4, 3, 0], sizes = [1, 1, 128], strides = [1, 1, 1]} : vector<5x5x128xf32> to vector<1x1x128xf32>
    %228 = vector.shape_cast %227 : vector<1x1x128xf32> to vector<1x128xf32>
    %c4_134 = arith.constant 4 : index
    %c3_135 = arith.constant 3 : index
    %c0_136 = arith.constant 0 : index
    %229 = vector.load %arg8[%c4_134, %c3_135, %c0_136] : memref<20x20x128xf32, #tpu.memory_space<vmem>>, vector<1x16x128xf32>
    %230 = vector.shape_cast %229 : vector<1x16x128xf32> to vector<16x128xf32>
    %231 = vector.broadcast %228 : vector<1x128xf32> to vector<16x128xf32>
    %232 = arith.mulf %231, %230 : vector<16x128xf32>
    %233 = arith.addf %226, %232 : vector<16x128xf32>
    %234 = vector.extract_strided_slice %24 {offsets = [4, 4, 0], sizes = [1, 1, 128], strides = [1, 1, 1]} : vector<5x5x128xf32> to vector<1x1x128xf32>
    %235 = vector.shape_cast %234 : vector<1x1x128xf32> to vector<1x128xf32>
    %c4_137 = arith.constant 4 : index
    %c4_138 = arith.constant 4 : index
    %c0_139 = arith.constant 0 : index
    %236 = vector.load %arg8[%c4_137, %c4_138, %c0_139] : memref<20x20x128xf32, #tpu.memory_space<vmem>>, vector<1x16x128xf32>
    %237 = vector.shape_cast %236 : vector<1x16x128xf32> to vector<16x128xf32>
    %238 = vector.broadcast %235 : vector<1x128xf32> to vector<16x128xf32>
    %239 = arith.mulf %238, %237 : vector<16x128xf32>
    %240 = arith.addf %233, %239 : vector<16x128xf32>
    %cst_140 = arith.constant 0.000000e+00 : f32
    %241 = vector.broadcast %cst_140 : f32 to vector<16x128xf32>
    %242 = vector.extract_strided_slice %240 {offsets = [0, 0], sizes = [1, 128], strides = [1, 1]} : vector<16x128xf32> to vector<1x128xf32>
    %243 = vector.broadcast %43 : vector<16x1xf32> to vector<16x128xf32>
    %244 = vector.broadcast %242 : vector<1x128xf32> to vector<16x128xf32>
    %245 = arith.mulf %243, %244 : vector<16x128xf32>
    %246 = arith.addf %241, %245 : vector<16x128xf32>
    %247 = vector.extract_strided_slice %240 {offsets = [4, 0], sizes = [1, 128], strides = [1, 1]} : vector<16x128xf32> to vector<1x128xf32>
    %248 = vector.broadcast %50 : vector<16x1xf32> to vector<16x128xf32>
    %249 = vector.broadcast %247 : vector<1x128xf32> to vector<16x128xf32>
    %250 = arith.mulf %248, %249 : vector<16x128xf32>
    %251 = arith.addf %246, %250 : vector<16x128xf32>
    %252 = vector.extract_strided_slice %240 {offsets = [8, 0], sizes = [1, 128], strides = [1, 1]} : vector<16x128xf32> to vector<1x128xf32>
    %253 = vector.broadcast %57 : vector<16x1xf32> to vector<16x128xf32>
    %254 = vector.broadcast %252 : vector<1x128xf32> to vector<16x128xf32>
    %255 = arith.mulf %253, %254 : vector<16x128xf32>
    %256 = arith.addf %251, %255 : vector<16x128xf32>
    %257 = vector.extract_strided_slice %240 {offsets = [12, 0], sizes = [1, 128], strides = [1, 1]} : vector<16x128xf32> to vector<1x128xf32>
    %258 = vector.broadcast %64 : vector<16x1xf32> to vector<16x128xf32>
    %259 = vector.broadcast %257 : vector<1x128xf32> to vector<16x128xf32>
    %260 = arith.mulf %258, %259 : vector<16x128xf32>
    %261 = arith.addf %256, %260 : vector<16x128xf32>
    %cst_141 = arith.constant 0.000000e+00 : f32
    %262 = vector.broadcast %cst_141 : f32 to vector<16x128xf32>
    %263 = vector.extract_strided_slice %24 {offsets = [0, 0, 0], sizes = [1, 1, 128], strides = [1, 1, 1]} : vector<5x5x128xf32> to vector<1x1x128xf32>
    %264 = vector.shape_cast %263 : vector<1x1x128xf32> to vector<1x128xf32>
    %c4_142 = arith.constant 4 : index
    %c0_143 = arith.constant 0 : index
    %c0_144 = arith.constant 0 : index
    %265 = vector.load %arg8[%c4_142, %c0_143, %c0_144] : memref<20x20x128xf32, #tpu.memory_space<vmem>>, vector<1x16x128xf32>
    %266 = vector.shape_cast %265 : vector<1x16x128xf32> to vector<16x128xf32>
    %267 = vector.broadcast %264 : vector<1x128xf32> to vector<16x128xf32>
    %268 = arith.mulf %267, %266 : vector<16x128xf32>
    %269 = arith.addf %262, %268 : vector<16x128xf32>
    %270 = vector.extract_strided_slice %24 {offsets = [0, 1, 0], sizes = [1, 1, 128], strides = [1, 1, 1]} : vector<5x5x128xf32> to vector<1x1x128xf32>
    %271 = vector.shape_cast %270 : vector<1x1x128xf32> to vector<1x128xf32>
    %c4_145 = arith.constant 4 : index
    %c1_146 = arith.constant 1 : index
    %c0_147 = arith.constant 0 : index
    %272 = vector.load %arg8[%c4_145, %c1_146, %c0_147] : memref<20x20x128xf32, #tpu.memory_space<vmem>>, vector<1x16x128xf32>
    %273 = vector.shape_cast %272 : vector<1x16x128xf32> to vector<16x128xf32>
    %274 = vector.broadcast %271 : vector<1x128xf32> to vector<16x128xf32>
    %275 = arith.mulf %274, %273 : vector<16x128xf32>
    %276 = arith.addf %269, %275 : vector<16x128xf32>
    %277 = vector.extract_strided_slice %24 {offsets = [0, 2, 0], sizes = [1, 1, 128], strides = [1, 1, 1]} : vector<5x5x128xf32> to vector<1x1x128xf32>
    %278 = vector.shape_cast %277 : vector<1x1x128xf32> to vector<1x128xf32>
    %c4_148 = arith.constant 4 : index
    %c2_149 = arith.constant 2 : index
    %c0_150 = arith.constant 0 : index
    %279 = vector.load %arg8[%c4_148, %c2_149, %c0_150] : memref<20x20x128xf32, #tpu.memory_space<vmem>>, vector<1x16x128xf32>
    %280 = vector.shape_cast %279 : vector<1x16x128xf32> to vector<16x128xf32>
    %281 = vector.broadcast %278 : vector<1x128xf32> to vector<16x128xf32>
    %282 = arith.mulf %281, %280 : vector<16x128xf32>
    %283 = arith.addf %276, %282 : vector<16x128xf32>
    %284 = vector.extract_strided_slice %24 {offsets = [0, 3, 0], sizes = [1, 1, 128], strides = [1, 1, 1]} : vector<5x5x128xf32> to vector<1x1x128xf32>
    %285 = vector.shape_cast %284 : vector<1x1x128xf32> to vector<1x128xf32>
    %c4_151 = arith.constant 4 : index
    %c3_152 = arith.constant 3 : index
    %c0_153 = arith.constant 0 : index
    %286 = vector.load %arg8[%c4_151, %c3_152, %c0_153] : memref<20x20x128xf32, #tpu.memory_space<vmem>>, vector<1x16x128xf32>
    %287 = vector.shape_cast %286 : vector<1x16x128xf32> to vector<16x128xf32>
    %288 = vector.broadcast %285 : vector<1x128xf32> to vector<16x128xf32>
    %289 = arith.mulf %288, %287 : vector<16x128xf32>
    %290 = arith.addf %283, %289 : vector<16x128xf32>
    %291 = vector.extract_strided_slice %24 {offsets = [0, 4, 0], sizes = [1, 1, 128], strides = [1, 1, 1]} : vector<5x5x128xf32> to vector<1x1x128xf32>
    %292 = vector.shape_cast %291 : vector<1x1x128xf32> to vector<1x128xf32>
    %c4_154 = arith.constant 4 : index
    %c4_155 = arith.constant 4 : index
    %c0_156 = arith.constant 0 : index
    %293 = vector.load %arg8[%c4_154, %c4_155, %c0_156] : memref<20x20x128xf32, #tpu.memory_space<vmem>>, vector<1x16x128xf32>
    %294 = vector.shape_cast %293 : vector<1x16x128xf32> to vector<16x128xf32>
    %295 = vector.broadcast %292 : vector<1x128xf32> to vector<16x128xf32>
    %296 = arith.mulf %295, %294 : vector<16x128xf32>
    %297 = arith.addf %290, %296 : vector<16x128xf32>
    %298 = vector.extract_strided_slice %24 {offsets = [1, 0, 0], sizes = [1, 1, 128], strides = [1, 1, 1]} : vector<5x5x128xf32> to vector<1x1x128xf32>
    %299 = vector.shape_cast %298 : vector<1x1x128xf32> to vector<1x128xf32>
    %c5 = arith.constant 5 : index
    %c0_157 = arith.constant 0 : index
    %c0_158 = arith.constant 0 : index
    %300 = vector.load %arg8[%c5, %c0_157, %c0_158] : memref<20x20x128xf32, #tpu.memory_space<vmem>>, vector<1x16x128xf32>
    %301 = vector.shape_cast %300 : vector<1x16x128xf32> to vector<16x128xf32>
    %302 = vector.broadcast %299 : vector<1x128xf32> to vector<16x128xf32>
    %303 = arith.mulf %302, %301 : vector<16x128xf32>
    %304 = arith.addf %297, %303 : vector<16x128xf32>
    %305 = vector.extract_strided_slice %24 {offsets = [1, 1, 0], sizes = [1, 1, 128], strides = [1, 1, 1]} : vector<5x5x128xf32> to vector<1x1x128xf32>
    %306 = vector.shape_cast %305 : vector<1x1x128xf32> to vector<1x128xf32>
    %c5_159 = arith.constant 5 : index
    %c1_160 = arith.constant 1 : index
    %c0_161 = arith.constant 0 : index
    %307 = vector.load %arg8[%c5_159, %c1_160, %c0_161] : memref<20x20x128xf32, #tpu.memory_space<vmem>>, vector<1x16x128xf32>
    %308 = vector.shape_cast %307 : vector<1x16x128xf32> to vector<16x128xf32>
    %309 = vector.broadcast %306 : vector<1x128xf32> to vector<16x128xf32>
    %310 = arith.mulf %309, %308 : vector<16x128xf32>
    %311 = arith.addf %304, %310 : vector<16x128xf32>
    %312 = vector.extract_strided_slice %24 {offsets = [1, 2, 0], sizes = [1, 1, 128], strides = [1, 1, 1]} : vector<5x5x128xf32> to vector<1x1x128xf32>
    %313 = vector.shape_cast %312 : vector<1x1x128xf32> to vector<1x128xf32>
    %c5_162 = arith.constant 5 : index
    %c2_163 = arith.constant 2 : index
    %c0_164 = arith.constant 0 : index
    %314 = vector.load %arg8[%c5_162, %c2_163, %c0_164] : memref<20x20x128xf32, #tpu.memory_space<vmem>>, vector<1x16x128xf32>
    %315 = vector.shape_cast %314 : vector<1x16x128xf32> to vector<16x128xf32>
    %316 = vector.broadcast %313 : vector<1x128xf32> to vector<16x128xf32>
    %317 = arith.mulf %316, %315 : vector<16x128xf32>
    %318 = arith.addf %311, %317 : vector<16x128xf32>
    %319 = vector.extract_strided_slice %24 {offsets = [1, 3, 0], sizes = [1, 1, 128], strides = [1, 1, 1]} : vector<5x5x128xf32> to vector<1x1x128xf32>
    %320 = vector.shape_cast %319 : vector<1x1x128xf32> to vector<1x128xf32>
    %c5_165 = arith.constant 5 : index
    %c3_166 = arith.constant 3 : index
    %c0_167 = arith.constant 0 : index
    %321 = vector.load %arg8[%c5_165, %c3_166, %c0_167] : memref<20x20x128xf32, #tpu.memory_space<vmem>>, vector<1x16x128xf32>
    %322 = vector.shape_cast %321 : vector<1x16x128xf32> to vector<16x128xf32>
    %323 = vector.broadcast %320 : vector<1x128xf32> to vector<16x128xf32>
    %324 = arith.mulf %323, %322 : vector<16x128xf32>
    %325 = arith.addf %318, %324 : vector<16x128xf32>
    %326 = vector.extract_strided_slice %24 {offsets = [1, 4, 0], sizes = [1, 1, 128], strides = [1, 1, 1]} : vector<5x5x128xf32> to vector<1x1x128xf32>
    %327 = vector.shape_cast %326 : vector<1x1x128xf32> to vector<1x128xf32>
    %c5_168 = arith.constant 5 : index
    %c4_169 = arith.constant 4 : index
    %c0_170 = arith.constant 0 : index
    %328 = vector.load %arg8[%c5_168, %c4_169, %c0_170] : memref<20x20x128xf32, #tpu.memory_space<vmem>>, vector<1x16x128xf32>
    %329 = vector.shape_cast %328 : vector<1x16x128xf32> to vector<16x128xf32>
    %330 = vector.broadcast %327 : vector<1x128xf32> to vector<16x128xf32>
    %331 = arith.mulf %330, %329 : vector<16x128xf32>
    %332 = arith.addf %325, %331 : vector<16x128xf32>
    %333 = vector.extract_strided_slice %24 {offsets = [2, 0, 0], sizes = [1, 1, 128], strides = [1, 1, 1]} : vector<5x5x128xf32> to vector<1x1x128xf32>
    %334 = vector.shape_cast %333 : vector<1x1x128xf32> to vector<1x128xf32>
    %c6_171 = arith.constant 6 : index
    %c0_172 = arith.constant 0 : index
    %c0_173 = arith.constant 0 : index
    %335 = vector.load %arg8[%c6_171, %c0_172, %c0_173] : memref<20x20x128xf32, #tpu.memory_space<vmem>>, vector<1x16x128xf32>
    %336 = vector.shape_cast %335 : vector<1x16x128xf32> to vector<16x128xf32>
    %337 = vector.broadcast %334 : vector<1x128xf32> to vector<16x128xf32>
    %338 = arith.mulf %337, %336 : vector<16x128xf32>
    %339 = arith.addf %332, %338 : vector<16x128xf32>
    %340 = vector.extract_strided_slice %24 {offsets = [2, 1, 0], sizes = [1, 1, 128], strides = [1, 1, 1]} : vector<5x5x128xf32> to vector<1x1x128xf32>
    %341 = vector.shape_cast %340 : vector<1x1x128xf32> to vector<1x128xf32>
    %c6_174 = arith.constant 6 : index
    %c1_175 = arith.constant 1 : index
    %c0_176 = arith.constant 0 : index
    %342 = vector.load %arg8[%c6_174, %c1_175, %c0_176] : memref<20x20x128xf32, #tpu.memory_space<vmem>>, vector<1x16x128xf32>
    %343 = vector.shape_cast %342 : vector<1x16x128xf32> to vector<16x128xf32>
    %344 = vector.broadcast %341 : vector<1x128xf32> to vector<16x128xf32>
    %345 = arith.mulf %344, %343 : vector<16x128xf32>
    %346 = arith.addf %339, %345 : vector<16x128xf32>
    %347 = vector.extract_strided_slice %24 {offsets = [2, 2, 0], sizes = [1, 1, 128], strides = [1, 1, 1]} : vector<5x5x128xf32> to vector<1x1x128xf32>
    %348 = vector.shape_cast %347 : vector<1x1x128xf32> to vector<1x128xf32>
    %c6_177 = arith.constant 6 : index
    %c2_178 = arith.constant 2 : index
    %c0_179 = arith.constant 0 : index
    %349 = vector.load %arg8[%c6_177, %c2_178, %c0_179] : memref<20x20x128xf32, #tpu.memory_space<vmem>>, vector<1x16x128xf32>
    %350 = vector.shape_cast %349 : vector<1x16x128xf32> to vector<16x128xf32>
    %351 = vector.broadcast %348 : vector<1x128xf32> to vector<16x128xf32>
    %352 = arith.mulf %351, %350 : vector<16x128xf32>
    %353 = arith.addf %346, %352 : vector<16x128xf32>
    %354 = vector.extract_strided_slice %24 {offsets = [2, 3, 0], sizes = [1, 1, 128], strides = [1, 1, 1]} : vector<5x5x128xf32> to vector<1x1x128xf32>
    %355 = vector.shape_cast %354 : vector<1x1x128xf32> to vector<1x128xf32>
    %c6_180 = arith.constant 6 : index
    %c3_181 = arith.constant 3 : index
    %c0_182 = arith.constant 0 : index
    %356 = vector.load %arg8[%c6_180, %c3_181, %c0_182] : memref<20x20x128xf32, #tpu.memory_space<vmem>>, vector<1x16x128xf32>
    %357 = vector.shape_cast %356 : vector<1x16x128xf32> to vector<16x128xf32>
    %358 = vector.broadcast %355 : vector<1x128xf32> to vector<16x128xf32>
    %359 = arith.mulf %358, %357 : vector<16x128xf32>
    %360 = arith.addf %353, %359 : vector<16x128xf32>
    %361 = vector.extract_strided_slice %24 {offsets = [2, 4, 0], sizes = [1, 1, 128], strides = [1, 1, 1]} : vector<5x5x128xf32> to vector<1x1x128xf32>
    %362 = vector.shape_cast %361 : vector<1x1x128xf32> to vector<1x128xf32>
    %c6_183 = arith.constant 6 : index
    %c4_184 = arith.constant 4 : index
    %c0_185 = arith.constant 0 : index
    %363 = vector.load %arg8[%c6_183, %c4_184, %c0_185] : memref<20x20x128xf32, #tpu.memory_space<vmem>>, vector<1x16x128xf32>
    %364 = vector.shape_cast %363 : vector<1x16x128xf32> to vector<16x128xf32>
    %365 = vector.broadcast %362 : vector<1x128xf32> to vector<16x128xf32>
    %366 = arith.mulf %365, %364 : vector<16x128xf32>
    %367 = arith.addf %360, %366 : vector<16x128xf32>
    %368 = vector.extract_strided_slice %24 {offsets = [3, 0, 0], sizes = [1, 1, 128], strides = [1, 1, 1]} : vector<5x5x128xf32> to vector<1x1x128xf32>
    %369 = vector.shape_cast %368 : vector<1x1x128xf32> to vector<1x128xf32>
    %c7 = arith.constant 7 : index
    %c0_186 = arith.constant 0 : index
    %c0_187 = arith.constant 0 : index
    %370 = vector.load %arg8[%c7, %c0_186, %c0_187] : memref<20x20x128xf32, #tpu.memory_space<vmem>>, vector<1x16x128xf32>
    %371 = vector.shape_cast %370 : vector<1x16x128xf32> to vector<16x128xf32>
    %372 = vector.broadcast %369 : vector<1x128xf32> to vector<16x128xf32>
    %373 = arith.mulf %372, %371 : vector<16x128xf32>
    %374 = arith.addf %367, %373 : vector<16x128xf32>
    %375 = vector.extract_strided_slice %24 {offsets = [3, 1, 0], sizes = [1, 1, 128], strides = [1, 1, 1]} : vector<5x5x128xf32> to vector<1x1x128xf32>
    %376 = vector.shape_cast %375 : vector<1x1x128xf32> to vector<1x128xf32>
    %c7_188 = arith.constant 7 : index
    %c1_189 = arith.constant 1 : index
    %c0_190 = arith.constant 0 : index
    %377 = vector.load %arg8[%c7_188, %c1_189, %c0_190] : memref<20x20x128xf32, #tpu.memory_space<vmem>>, vector<1x16x128xf32>
    %378 = vector.shape_cast %377 : vector<1x16x128xf32> to vector<16x128xf32>
    %379 = vector.broadcast %376 : vector<1x128xf32> to vector<16x128xf32>
    %380 = arith.mulf %379, %378 : vector<16x128xf32>
    %381 = arith.addf %374, %380 : vector<16x128xf32>
    %382 = vector.extract_strided_slice %24 {offsets = [3, 2, 0], sizes = [1, 1, 128], strides = [1, 1, 1]} : vector<5x5x128xf32> to vector<1x1x128xf32>
    %383 = vector.shape_cast %382 : vector<1x1x128xf32> to vector<1x128xf32>
    %c7_191 = arith.constant 7 : index
    %c2_192 = arith.constant 2 : index
    %c0_193 = arith.constant 0 : index
    %384 = vector.load %arg8[%c7_191, %c2_192, %c0_193] : memref<20x20x128xf32, #tpu.memory_space<vmem>>, vector<1x16x128xf32>
    %385 = vector.shape_cast %384 : vector<1x16x128xf32> to vector<16x128xf32>
    %386 = vector.broadcast %383 : vector<1x128xf32> to vector<16x128xf32>
    %387 = arith.mulf %386, %385 : vector<16x128xf32>
    %388 = arith.addf %381, %387 : vector<16x128xf32>
    %389 = vector.extract_strided_slice %24 {offsets = [3, 3, 0], sizes = [1, 1, 128], strides = [1, 1, 1]} : vector<5x5x128xf32> to vector<1x1x128xf32>
    %390 = vector.shape_cast %389 : vector<1x1x128xf32> to vector<1x128xf32>
    %c7_194 = arith.constant 7 : index
    %c3_195 = arith.constant 3 : index
    %c0_196 = arith.constant 0 : index
    %391 = vector.load %arg8[%c7_194, %c3_195, %c0_196] : memref<20x20x128xf32, #tpu.memory_space<vmem>>, vector<1x16x128xf32>
    %392 = vector.shape_cast %391 : vector<1x16x128xf32> to vector<16x128xf32>
    %393 = vector.broadcast %390 : vector<1x128xf32> to vector<16x128xf32>
    %394 = arith.mulf %393, %392 : vector<16x128xf32>
    %395 = arith.addf %388, %394 : vector<16x128xf32>
    %396 = vector.extract_strided_slice %24 {offsets = [3, 4, 0], sizes = [1, 1, 128], strides = [1, 1, 1]} : vector<5x5x128xf32> to vector<1x1x128xf32>
    %397 = vector.shape_cast %396 : vector<1x1x128xf32> to vector<1x128xf32>
    %c7_197 = arith.constant 7 : index
    %c4_198 = arith.constant 4 : index
    %c0_199 = arith.constant 0 : index
    %398 = vector.load %arg8[%c7_197, %c4_198, %c0_199] : memref<20x20x128xf32, #tpu.memory_space<vmem>>, vector<1x16x128xf32>
    %399 = vector.shape_cast %398 : vector<1x16x128xf32> to vector<16x128xf32>
    %400 = vector.broadcast %397 : vector<1x128xf32> to vector<16x128xf32>
    %401 = arith.mulf %400, %399 : vector<16x128xf32>
    %402 = arith.addf %395, %401 : vector<16x128xf32>
    %403 = vector.extract_strided_slice %24 {offsets = [4, 0, 0], sizes = [1, 1, 128], strides = [1, 1, 1]} : vector<5x5x128xf32> to vector<1x1x128xf32>
    %404 = vector.shape_cast %403 : vector<1x1x128xf32> to vector<1x128xf32>
    %c8_200 = arith.constant 8 : index
    %c0_201 = arith.constant 0 : index
    %c0_202 = arith.constant 0 : index
    %405 = vector.load %arg8[%c8_200, %c0_201, %c0_202] : memref<20x20x128xf32, #tpu.memory_space<vmem>>, vector<1x16x128xf32>
    %406 = vector.shape_cast %405 : vector<1x16x128xf32> to vector<16x128xf32>
    %407 = vector.broadcast %404 : vector<1x128xf32> to vector<16x128xf32>
    %408 = arith.mulf %407, %406 : vector<16x128xf32>
    %409 = arith.addf %402, %408 : vector<16x128xf32>
    %410 = vector.extract_strided_slice %24 {offsets = [4, 1, 0], sizes = [1, 1, 128], strides = [1, 1, 1]} : vector<5x5x128xf32> to vector<1x1x128xf32>
    %411 = vector.shape_cast %410 : vector<1x1x128xf32> to vector<1x128xf32>
    %c8_203 = arith.constant 8 : index
    %c1_204 = arith.constant 1 : index
    %c0_205 = arith.constant 0 : index
    %412 = vector.load %arg8[%c8_203, %c1_204, %c0_205] : memref<20x20x128xf32, #tpu.memory_space<vmem>>, vector<1x16x128xf32>
    %413 = vector.shape_cast %412 : vector<1x16x128xf32> to vector<16x128xf32>
    %414 = vector.broadcast %411 : vector<1x128xf32> to vector<16x128xf32>
    %415 = arith.mulf %414, %413 : vector<16x128xf32>
    %416 = arith.addf %409, %415 : vector<16x128xf32>
    %417 = vector.extract_strided_slice %24 {offsets = [4, 2, 0], sizes = [1, 1, 128], strides = [1, 1, 1]} : vector<5x5x128xf32> to vector<1x1x128xf32>
    %418 = vector.shape_cast %417 : vector<1x1x128xf32> to vector<1x128xf32>
    %c8_206 = arith.constant 8 : index
    %c2_207 = arith.constant 2 : index
    %c0_208 = arith.constant 0 : index
    %419 = vector.load %arg8[%c8_206, %c2_207, %c0_208] : memref<20x20x128xf32, #tpu.memory_space<vmem>>, vector<1x16x128xf32>
    %420 = vector.shape_cast %419 : vector<1x16x128xf32> to vector<16x128xf32>
    %421 = vector.broadcast %418 : vector<1x128xf32> to vector<16x128xf32>
    %422 = arith.mulf %421, %420 : vector<16x128xf32>
    %423 = arith.addf %416, %422 : vector<16x128xf32>
    %424 = vector.extract_strided_slice %24 {offsets = [4, 3, 0], sizes = [1, 1, 128], strides = [1, 1, 1]} : vector<5x5x128xf32> to vector<1x1x128xf32>
    %425 = vector.shape_cast %424 : vector<1x1x128xf32> to vector<1x128xf32>
    %c8_209 = arith.constant 8 : index
    %c3_210 = arith.constant 3 : index
    %c0_211 = arith.constant 0 : index
    %426 = vector.load %arg8[%c8_209, %c3_210, %c0_211] : memref<20x20x128xf32, #tpu.memory_space<vmem>>, vector<1x16x128xf32>
    %427 = vector.shape_cast %426 : vector<1x16x128xf32> to vector<16x128xf32>
    %428 = vector.broadcast %425 : vector<1x128xf32> to vector<16x128xf32>
    %429 = arith.mulf %428, %427 : vector<16x128xf32>
    %430 = arith.addf %423, %429 : vector<16x128xf32>
    %431 = vector.extract_strided_slice %24 {offsets = [4, 4, 0], sizes = [1, 1, 128], strides = [1, 1, 1]} : vector<5x5x128xf32> to vector<1x1x128xf32>
    %432 = vector.shape_cast %431 : vector<1x1x128xf32> to vector<1x128xf32>
    %c8_212 = arith.constant 8 : index
    %c4_213 = arith.constant 4 : index
    %c0_214 = arith.constant 0 : index
    %433 = vector.load %arg8[%c8_212, %c4_213, %c0_214] : memref<20x20x128xf32, #tpu.memory_space<vmem>>, vector<1x16x128xf32>
    %434 = vector.shape_cast %433 : vector<1x16x128xf32> to vector<16x128xf32>
    %435 = vector.broadcast %432 : vector<1x128xf32> to vector<16x128xf32>
    %436 = arith.mulf %435, %434 : vector<16x128xf32>
    %437 = arith.addf %430, %436 : vector<16x128xf32>
    %cst_215 = arith.constant 0.000000e+00 : f32
    %438 = vector.broadcast %cst_215 : f32 to vector<16x128xf32>
    %439 = vector.extract_strided_slice %437 {offsets = [0, 0], sizes = [1, 128], strides = [1, 1]} : vector<16x128xf32> to vector<1x128xf32>
    %440 = vector.broadcast %43 : vector<16x1xf32> to vector<16x128xf32>
    %441 = vector.broadcast %439 : vector<1x128xf32> to vector<16x128xf32>
    %442 = arith.mulf %440, %441 : vector<16x128xf32>
    %443 = arith.addf %438, %442 : vector<16x128xf32>
    %444 = vector.extract_strided_slice %437 {offsets = [4, 0], sizes = [1, 128], strides = [1, 1]} : vector<16x128xf32> to vector<1x128xf32>
    %445 = vector.broadcast %50 : vector<16x1xf32> to vector<16x128xf32>
    %446 = vector.broadcast %444 : vector<1x128xf32> to vector<16x128xf32>
    %447 = arith.mulf %445, %446 : vector<16x128xf32>
    %448 = arith.addf %443, %447 : vector<16x128xf32>
    %449 = vector.extract_strided_slice %437 {offsets = [8, 0], sizes = [1, 128], strides = [1, 1]} : vector<16x128xf32> to vector<1x128xf32>
    %450 = vector.broadcast %57 : vector<16x1xf32> to vector<16x128xf32>
    %451 = vector.broadcast %449 : vector<1x128xf32> to vector<16x128xf32>
    %452 = arith.mulf %450, %451 : vector<16x128xf32>
    %453 = arith.addf %448, %452 : vector<16x128xf32>
    %454 = vector.extract_strided_slice %437 {offsets = [12, 0], sizes = [1, 128], strides = [1, 1]} : vector<16x128xf32> to vector<1x128xf32>
    %455 = vector.broadcast %64 : vector<16x1xf32> to vector<16x128xf32>
    %456 = vector.broadcast %454 : vector<1x128xf32> to vector<16x128xf32>
    %457 = arith.mulf %455, %456 : vector<16x128xf32>
    %458 = arith.addf %453, %457 : vector<16x128xf32>
    %cst_216 = arith.constant 0.000000e+00 : f32
    %459 = vector.broadcast %cst_216 : f32 to vector<16x128xf32>
    %460 = vector.extract_strided_slice %24 {offsets = [0, 0, 0], sizes = [1, 1, 128], strides = [1, 1, 1]} : vector<5x5x128xf32> to vector<1x1x128xf32>
    %461 = vector.shape_cast %460 : vector<1x1x128xf32> to vector<1x128xf32>
    %c8_217 = arith.constant 8 : index
    %c0_218 = arith.constant 0 : index
    %c0_219 = arith.constant 0 : index
    %462 = vector.load %arg8[%c8_217, %c0_218, %c0_219] : memref<20x20x128xf32, #tpu.memory_space<vmem>>, vector<1x16x128xf32>
    %463 = vector.shape_cast %462 : vector<1x16x128xf32> to vector<16x128xf32>
    %464 = vector.broadcast %461 : vector<1x128xf32> to vector<16x128xf32>
    %465 = arith.mulf %464, %463 : vector<16x128xf32>
    %466 = arith.addf %459, %465 : vector<16x128xf32>
    %467 = vector.extract_strided_slice %24 {offsets = [0, 1, 0], sizes = [1, 1, 128], strides = [1, 1, 1]} : vector<5x5x128xf32> to vector<1x1x128xf32>
    %468 = vector.shape_cast %467 : vector<1x1x128xf32> to vector<1x128xf32>
    %c8_220 = arith.constant 8 : index
    %c1_221 = arith.constant 1 : index
    %c0_222 = arith.constant 0 : index
    %469 = vector.load %arg8[%c8_220, %c1_221, %c0_222] : memref<20x20x128xf32, #tpu.memory_space<vmem>>, vector<1x16x128xf32>
    %470 = vector.shape_cast %469 : vector<1x16x128xf32> to vector<16x128xf32>
    %471 = vector.broadcast %468 : vector<1x128xf32> to vector<16x128xf32>
    %472 = arith.mulf %471, %470 : vector<16x128xf32>
    %473 = arith.addf %466, %472 : vector<16x128xf32>
    %474 = vector.extract_strided_slice %24 {offsets = [0, 2, 0], sizes = [1, 1, 128], strides = [1, 1, 1]} : vector<5x5x128xf32> to vector<1x1x128xf32>
    %475 = vector.shape_cast %474 : vector<1x1x128xf32> to vector<1x128xf32>
    %c8_223 = arith.constant 8 : index
    %c2_224 = arith.constant 2 : index
    %c0_225 = arith.constant 0 : index
    %476 = vector.load %arg8[%c8_223, %c2_224, %c0_225] : memref<20x20x128xf32, #tpu.memory_space<vmem>>, vector<1x16x128xf32>
    %477 = vector.shape_cast %476 : vector<1x16x128xf32> to vector<16x128xf32>
    %478 = vector.broadcast %475 : vector<1x128xf32> to vector<16x128xf32>
    %479 = arith.mulf %478, %477 : vector<16x128xf32>
    %480 = arith.addf %473, %479 : vector<16x128xf32>
    %481 = vector.extract_strided_slice %24 {offsets = [0, 3, 0], sizes = [1, 1, 128], strides = [1, 1, 1]} : vector<5x5x128xf32> to vector<1x1x128xf32>
    %482 = vector.shape_cast %481 : vector<1x1x128xf32> to vector<1x128xf32>
    %c8_226 = arith.constant 8 : index
    %c3_227 = arith.constant 3 : index
    %c0_228 = arith.constant 0 : index
    %483 = vector.load %arg8[%c8_226, %c3_227, %c0_228] : memref<20x20x128xf32, #tpu.memory_space<vmem>>, vector<1x16x128xf32>
    %484 = vector.shape_cast %483 : vector<1x16x128xf32> to vector<16x128xf32>
    %485 = vector.broadcast %482 : vector<1x128xf32> to vector<16x128xf32>
    %486 = arith.mulf %485, %484 : vector<16x128xf32>
    %487 = arith.addf %480, %486 : vector<16x128xf32>
    %488 = vector.extract_strided_slice %24 {offsets = [0, 4, 0], sizes = [1, 1, 128], strides = [1, 1, 1]} : vector<5x5x128xf32> to vector<1x1x128xf32>
    %489 = vector.shape_cast %488 : vector<1x1x128xf32> to vector<1x128xf32>
    %c8_229 = arith.constant 8 : index
    %c4_230 = arith.constant 4 : index
    %c0_231 = arith.constant 0 : index
    %490 = vector.load %arg8[%c8_229, %c4_230, %c0_231] : memref<20x20x128xf32, #tpu.memory_space<vmem>>, vector<1x16x128xf32>
    %491 = vector.shape_cast %490 : vector<1x16x128xf32> to vector<16x128xf32>
    %492 = vector.broadcast %489 : vector<1x128xf32> to vector<16x128xf32>
    %493 = arith.mulf %492, %491 : vector<16x128xf32>
    %494 = arith.addf %487, %493 : vector<16x128xf32>
    %495 = vector.extract_strided_slice %24 {offsets = [1, 0, 0], sizes = [1, 1, 128], strides = [1, 1, 1]} : vector<5x5x128xf32> to vector<1x1x128xf32>
    %496 = vector.shape_cast %495 : vector<1x1x128xf32> to vector<1x128xf32>
    %c9 = arith.constant 9 : index
    %c0_232 = arith.constant 0 : index
    %c0_233 = arith.constant 0 : index
    %497 = vector.load %arg8[%c9, %c0_232, %c0_233] : memref<20x20x128xf32, #tpu.memory_space<vmem>>, vector<1x16x128xf32>
    %498 = vector.shape_cast %497 : vector<1x16x128xf32> to vector<16x128xf32>
    %499 = vector.broadcast %496 : vector<1x128xf32> to vector<16x128xf32>
    %500 = arith.mulf %499, %498 : vector<16x128xf32>
    %501 = arith.addf %494, %500 : vector<16x128xf32>
    %502 = vector.extract_strided_slice %24 {offsets = [1, 1, 0], sizes = [1, 1, 128], strides = [1, 1, 1]} : vector<5x5x128xf32> to vector<1x1x128xf32>
    %503 = vector.shape_cast %502 : vector<1x1x128xf32> to vector<1x128xf32>
    %c9_234 = arith.constant 9 : index
    %c1_235 = arith.constant 1 : index
    %c0_236 = arith.constant 0 : index
    %504 = vector.load %arg8[%c9_234, %c1_235, %c0_236] : memref<20x20x128xf32, #tpu.memory_space<vmem>>, vector<1x16x128xf32>
    %505 = vector.shape_cast %504 : vector<1x16x128xf32> to vector<16x128xf32>
    %506 = vector.broadcast %503 : vector<1x128xf32> to vector<16x128xf32>
    %507 = arith.mulf %506, %505 : vector<16x128xf32>
    %508 = arith.addf %501, %507 : vector<16x128xf32>
    %509 = vector.extract_strided_slice %24 {offsets = [1, 2, 0], sizes = [1, 1, 128], strides = [1, 1, 1]} : vector<5x5x128xf32> to vector<1x1x128xf32>
    %510 = vector.shape_cast %509 : vector<1x1x128xf32> to vector<1x128xf32>
    %c9_237 = arith.constant 9 : index
    %c2_238 = arith.constant 2 : index
    %c0_239 = arith.constant 0 : index
    %511 = vector.load %arg8[%c9_237, %c2_238, %c0_239] : memref<20x20x128xf32, #tpu.memory_space<vmem>>, vector<1x16x128xf32>
    %512 = vector.shape_cast %511 : vector<1x16x128xf32> to vector<16x128xf32>
    %513 = vector.broadcast %510 : vector<1x128xf32> to vector<16x128xf32>
    %514 = arith.mulf %513, %512 : vector<16x128xf32>
    %515 = arith.addf %508, %514 : vector<16x128xf32>
    %516 = vector.extract_strided_slice %24 {offsets = [1, 3, 0], sizes = [1, 1, 128], strides = [1, 1, 1]} : vector<5x5x128xf32> to vector<1x1x128xf32>
    %517 = vector.shape_cast %516 : vector<1x1x128xf32> to vector<1x128xf32>
    %c9_240 = arith.constant 9 : index
    %c3_241 = arith.constant 3 : index
    %c0_242 = arith.constant 0 : index
    %518 = vector.load %arg8[%c9_240, %c3_241, %c0_242] : memref<20x20x128xf32, #tpu.memory_space<vmem>>, vector<1x16x128xf32>
    %519 = vector.shape_cast %518 : vector<1x16x128xf32> to vector<16x128xf32>
    %520 = vector.broadcast %517 : vector<1x128xf32> to vector<16x128xf32>
    %521 = arith.mulf %520, %519 : vector<16x128xf32>
    %522 = arith.addf %515, %521 : vector<16x128xf32>
    %523 = vector.extract_strided_slice %24 {offsets = [1, 4, 0], sizes = [1, 1, 128], strides = [1, 1, 1]} : vector<5x5x128xf32> to vector<1x1x128xf32>
    %524 = vector.shape_cast %523 : vector<1x1x128xf32> to vector<1x128xf32>
    %c9_243 = arith.constant 9 : index
    %c4_244 = arith.constant 4 : index
    %c0_245 = arith.constant 0 : index
    %525 = vector.load %arg8[%c9_243, %c4_244, %c0_245] : memref<20x20x128xf32, #tpu.memory_space<vmem>>, vector<1x16x128xf32>
    %526 = vector.shape_cast %525 : vector<1x16x128xf32> to vector<16x128xf32>
    %527 = vector.broadcast %524 : vector<1x128xf32> to vector<16x128xf32>
    %528 = arith.mulf %527, %526 : vector<16x128xf32>
    %529 = arith.addf %522, %528 : vector<16x128xf32>
    %530 = vector.extract_strided_slice %24 {offsets = [2, 0, 0], sizes = [1, 1, 128], strides = [1, 1, 1]} : vector<5x5x128xf32> to vector<1x1x128xf32>
    %531 = vector.shape_cast %530 : vector<1x1x128xf32> to vector<1x128xf32>
    %c10_246 = arith.constant 10 : index
    %c0_247 = arith.constant 0 : index
    %c0_248 = arith.constant 0 : index
    %532 = vector.load %arg8[%c10_246, %c0_247, %c0_248] : memref<20x20x128xf32, #tpu.memory_space<vmem>>, vector<1x16x128xf32>
    %533 = vector.shape_cast %532 : vector<1x16x128xf32> to vector<16x128xf32>
    %534 = vector.broadcast %531 : vector<1x128xf32> to vector<16x128xf32>
    %535 = arith.mulf %534, %533 : vector<16x128xf32>
    %536 = arith.addf %529, %535 : vector<16x128xf32>
    %537 = vector.extract_strided_slice %24 {offsets = [2, 1, 0], sizes = [1, 1, 128], strides = [1, 1, 1]} : vector<5x5x128xf32> to vector<1x1x128xf32>
    %538 = vector.shape_cast %537 : vector<1x1x128xf32> to vector<1x128xf32>
    %c10_249 = arith.constant 10 : index
    %c1_250 = arith.constant 1 : index
    %c0_251 = arith.constant 0 : index
    %539 = vector.load %arg8[%c10_249, %c1_250, %c0_251] : memref<20x20x128xf32, #tpu.memory_space<vmem>>, vector<1x16x128xf32>
    %540 = vector.shape_cast %539 : vector<1x16x128xf32> to vector<16x128xf32>
    %541 = vector.broadcast %538 : vector<1x128xf32> to vector<16x128xf32>
    %542 = arith.mulf %541, %540 : vector<16x128xf32>
    %543 = arith.addf %536, %542 : vector<16x128xf32>
    %544 = vector.extract_strided_slice %24 {offsets = [2, 2, 0], sizes = [1, 1, 128], strides = [1, 1, 1]} : vector<5x5x128xf32> to vector<1x1x128xf32>
    %545 = vector.shape_cast %544 : vector<1x1x128xf32> to vector<1x128xf32>
    %c10_252 = arith.constant 10 : index
    %c2_253 = arith.constant 2 : index
    %c0_254 = arith.constant 0 : index
    %546 = vector.load %arg8[%c10_252, %c2_253, %c0_254] : memref<20x20x128xf32, #tpu.memory_space<vmem>>, vector<1x16x128xf32>
    %547 = vector.shape_cast %546 : vector<1x16x128xf32> to vector<16x128xf32>
    %548 = vector.broadcast %545 : vector<1x128xf32> to vector<16x128xf32>
    %549 = arith.mulf %548, %547 : vector<16x128xf32>
    %550 = arith.addf %543, %549 : vector<16x128xf32>
    %551 = vector.extract_strided_slice %24 {offsets = [2, 3, 0], sizes = [1, 1, 128], strides = [1, 1, 1]} : vector<5x5x128xf32> to vector<1x1x128xf32>
    %552 = vector.shape_cast %551 : vector<1x1x128xf32> to vector<1x128xf32>
    %c10_255 = arith.constant 10 : index
    %c3_256 = arith.constant 3 : index
    %c0_257 = arith.constant 0 : index
    %553 = vector.load %arg8[%c10_255, %c3_256, %c0_257] : memref<20x20x128xf32, #tpu.memory_space<vmem>>, vector<1x16x128xf32>
    %554 = vector.shape_cast %553 : vector<1x16x128xf32> to vector<16x128xf32>
    %555 = vector.broadcast %552 : vector<1x128xf32> to vector<16x128xf32>
    %556 = arith.mulf %555, %554 : vector<16x128xf32>
    %557 = arith.addf %550, %556 : vector<16x128xf32>
    %558 = vector.extract_strided_slice %24 {offsets = [2, 4, 0], sizes = [1, 1, 128], strides = [1, 1, 1]} : vector<5x5x128xf32> to vector<1x1x128xf32>
    %559 = vector.shape_cast %558 : vector<1x1x128xf32> to vector<1x128xf32>
    %c10_258 = arith.constant 10 : index
    %c4_259 = arith.constant 4 : index
    %c0_260 = arith.constant 0 : index
    %560 = vector.load %arg8[%c10_258, %c4_259, %c0_260] : memref<20x20x128xf32, #tpu.memory_space<vmem>>, vector<1x16x128xf32>
    %561 = vector.shape_cast %560 : vector<1x16x128xf32> to vector<16x128xf32>
    %562 = vector.broadcast %559 : vector<1x128xf32> to vector<16x128xf32>
    %563 = arith.mulf %562, %561 : vector<16x128xf32>
    %564 = arith.addf %557, %563 : vector<16x128xf32>
    %565 = vector.extract_strided_slice %24 {offsets = [3, 0, 0], sizes = [1, 1, 128], strides = [1, 1, 1]} : vector<5x5x128xf32> to vector<1x1x128xf32>
    %566 = vector.shape_cast %565 : vector<1x1x128xf32> to vector<1x128xf32>
    %c11 = arith.constant 11 : index
    %c0_261 = arith.constant 0 : index
    %c0_262 = arith.constant 0 : index
    %567 = vector.load %arg8[%c11, %c0_261, %c0_262] : memref<20x20x128xf32, #tpu.memory_space<vmem>>, vector<1x16x128xf32>
    %568 = vector.shape_cast %567 : vector<1x16x128xf32> to vector<16x128xf32>
    %569 = vector.broadcast %566 : vector<1x128xf32> to vector<16x128xf32>
    %570 = arith.mulf %569, %568 : vector<16x128xf32>
    %571 = arith.addf %564, %570 : vector<16x128xf32>
    %572 = vector.extract_strided_slice %24 {offsets = [3, 1, 0], sizes = [1, 1, 128], strides = [1, 1, 1]} : vector<5x5x128xf32> to vector<1x1x128xf32>
    %573 = vector.shape_cast %572 : vector<1x1x128xf32> to vector<1x128xf32>
    %c11_263 = arith.constant 11 : index
    %c1_264 = arith.constant 1 : index
    %c0_265 = arith.constant 0 : index
    %574 = vector.load %arg8[%c11_263, %c1_264, %c0_265] : memref<20x20x128xf32, #tpu.memory_space<vmem>>, vector<1x16x128xf32>
    %575 = vector.shape_cast %574 : vector<1x16x128xf32> to vector<16x128xf32>
    %576 = vector.broadcast %573 : vector<1x128xf32> to vector<16x128xf32>
    %577 = arith.mulf %576, %575 : vector<16x128xf32>
    %578 = arith.addf %571, %577 : vector<16x128xf32>
    %579 = vector.extract_strided_slice %24 {offsets = [3, 2, 0], sizes = [1, 1, 128], strides = [1, 1, 1]} : vector<5x5x128xf32> to vector<1x1x128xf32>
    %580 = vector.shape_cast %579 : vector<1x1x128xf32> to vector<1x128xf32>
    %c11_266 = arith.constant 11 : index
    %c2_267 = arith.constant 2 : index
    %c0_268 = arith.constant 0 : index
    %581 = vector.load %arg8[%c11_266, %c2_267, %c0_268] : memref<20x20x128xf32, #tpu.memory_space<vmem>>, vector<1x16x128xf32>
    %582 = vector.shape_cast %581 : vector<1x16x128xf32> to vector<16x128xf32>
    %583 = vector.broadcast %580 : vector<1x128xf32> to vector<16x128xf32>
    %584 = arith.mulf %583, %582 : vector<16x128xf32>
    %585 = arith.addf %578, %584 : vector<16x128xf32>
    %586 = vector.extract_strided_slice %24 {offsets = [3, 3, 0], sizes = [1, 1, 128], strides = [1, 1, 1]} : vector<5x5x128xf32> to vector<1x1x128xf32>
    %587 = vector.shape_cast %586 : vector<1x1x128xf32> to vector<1x128xf32>
    %c11_269 = arith.constant 11 : index
    %c3_270 = arith.constant 3 : index
    %c0_271 = arith.constant 0 : index
    %588 = vector.load %arg8[%c11_269, %c3_270, %c0_271] : memref<20x20x128xf32, #tpu.memory_space<vmem>>, vector<1x16x128xf32>
    %589 = vector.shape_cast %588 : vector<1x16x128xf32> to vector<16x128xf32>
    %590 = vector.broadcast %587 : vector<1x128xf32> to vector<16x128xf32>
    %591 = arith.mulf %590, %589 : vector<16x128xf32>
    %592 = arith.addf %585, %591 : vector<16x128xf32>
    %593 = vector.extract_strided_slice %24 {offsets = [3, 4, 0], sizes = [1, 1, 128], strides = [1, 1, 1]} : vector<5x5x128xf32> to vector<1x1x128xf32>
    %594 = vector.shape_cast %593 : vector<1x1x128xf32> to vector<1x128xf32>
    %c11_272 = arith.constant 11 : index
    %c4_273 = arith.constant 4 : index
    %c0_274 = arith.constant 0 : index
    %595 = vector.load %arg8[%c11_272, %c4_273, %c0_274] : memref<20x20x128xf32, #tpu.memory_space<vmem>>, vector<1x16x128xf32>
    %596 = vector.shape_cast %595 : vector<1x16x128xf32> to vector<16x128xf32>
    %597 = vector.broadcast %594 : vector<1x128xf32> to vector<16x128xf32>
    %598 = arith.mulf %597, %596 : vector<16x128xf32>
    %599 = arith.addf %592, %598 : vector<16x128xf32>
    %600 = vector.extract_strided_slice %24 {offsets = [4, 0, 0], sizes = [1, 1, 128], strides = [1, 1, 1]} : vector<5x5x128xf32> to vector<1x1x128xf32>
    %601 = vector.shape_cast %600 : vector<1x1x128xf32> to vector<1x128xf32>
    %c12_275 = arith.constant 12 : index
    %c0_276 = arith.constant 0 : index
    %c0_277 = arith.constant 0 : index
    %602 = vector.load %arg8[%c12_275, %c0_276, %c0_277] : memref<20x20x128xf32, #tpu.memory_space<vmem>>, vector<1x16x128xf32>
    %603 = vector.shape_cast %602 : vector<1x16x128xf32> to vector<16x128xf32>
    %604 = vector.broadcast %601 : vector<1x128xf32> to vector<16x128xf32>
    %605 = arith.mulf %604, %603 : vector<16x128xf32>
    %606 = arith.addf %599, %605 : vector<16x128xf32>
    %607 = vector.extract_strided_slice %24 {offsets = [4, 1, 0], sizes = [1, 1, 128], strides = [1, 1, 1]} : vector<5x5x128xf32> to vector<1x1x128xf32>
    %608 = vector.shape_cast %607 : vector<1x1x128xf32> to vector<1x128xf32>
    %c12_278 = arith.constant 12 : index
    %c1_279 = arith.constant 1 : index
    %c0_280 = arith.constant 0 : index
    %609 = vector.load %arg8[%c12_278, %c1_279, %c0_280] : memref<20x20x128xf32, #tpu.memory_space<vmem>>, vector<1x16x128xf32>
    %610 = vector.shape_cast %609 : vector<1x16x128xf32> to vector<16x128xf32>
    %611 = vector.broadcast %608 : vector<1x128xf32> to vector<16x128xf32>
    %612 = arith.mulf %611, %610 : vector<16x128xf32>
    %613 = arith.addf %606, %612 : vector<16x128xf32>
    %614 = vector.extract_strided_slice %24 {offsets = [4, 2, 0], sizes = [1, 1, 128], strides = [1, 1, 1]} : vector<5x5x128xf32> to vector<1x1x128xf32>
    %615 = vector.shape_cast %614 : vector<1x1x128xf32> to vector<1x128xf32>
    %c12_281 = arith.constant 12 : index
    %c2_282 = arith.constant 2 : index
    %c0_283 = arith.constant 0 : index
    %616 = vector.load %arg8[%c12_281, %c2_282, %c0_283] : memref<20x20x128xf32, #tpu.memory_space<vmem>>, vector<1x16x128xf32>
    %617 = vector.shape_cast %616 : vector<1x16x128xf32> to vector<16x128xf32>
    %618 = vector.broadcast %615 : vector<1x128xf32> to vector<16x128xf32>
    %619 = arith.mulf %618, %617 : vector<16x128xf32>
    %620 = arith.addf %613, %619 : vector<16x128xf32>
    %621 = vector.extract_strided_slice %24 {offsets = [4, 3, 0], sizes = [1, 1, 128], strides = [1, 1, 1]} : vector<5x5x128xf32> to vector<1x1x128xf32>
    %622 = vector.shape_cast %621 : vector<1x1x128xf32> to vector<1x128xf32>
    %c12_284 = arith.constant 12 : index
    %c3_285 = arith.constant 3 : index
    %c0_286 = arith.constant 0 : index
    %623 = vector.load %arg8[%c12_284, %c3_285, %c0_286] : memref<20x20x128xf32, #tpu.memory_space<vmem>>, vector<1x16x128xf32>
    %624 = vector.shape_cast %623 : vector<1x16x128xf32> to vector<16x128xf32>
    %625 = vector.broadcast %622 : vector<1x128xf32> to vector<16x128xf32>
    %626 = arith.mulf %625, %624 : vector<16x128xf32>
    %627 = arith.addf %620, %626 : vector<16x128xf32>
    %628 = vector.extract_strided_slice %24 {offsets = [4, 4, 0], sizes = [1, 1, 128], strides = [1, 1, 1]} : vector<5x5x128xf32> to vector<1x1x128xf32>
    %629 = vector.shape_cast %628 : vector<1x1x128xf32> to vector<1x128xf32>
    %c12_287 = arith.constant 12 : index
    %c4_288 = arith.constant 4 : index
    %c0_289 = arith.constant 0 : index
    %630 = vector.load %arg8[%c12_287, %c4_288, %c0_289] : memref<20x20x128xf32, #tpu.memory_space<vmem>>, vector<1x16x128xf32>
    %631 = vector.shape_cast %630 : vector<1x16x128xf32> to vector<16x128xf32>
    %632 = vector.broadcast %629 : vector<1x128xf32> to vector<16x128xf32>
    %633 = arith.mulf %632, %631 : vector<16x128xf32>
    %634 = arith.addf %627, %633 : vector<16x128xf32>
    %cst_290 = arith.constant 0.000000e+00 : f32
    %635 = vector.broadcast %cst_290 : f32 to vector<16x128xf32>
    %636 = vector.extract_strided_slice %634 {offsets = [0, 0], sizes = [1, 128], strides = [1, 1]} : vector<16x128xf32> to vector<1x128xf32>
    %637 = vector.broadcast %43 : vector<16x1xf32> to vector<16x128xf32>
    %638 = vector.broadcast %636 : vector<1x128xf32> to vector<16x128xf32>
    %639 = arith.mulf %637, %638 : vector<16x128xf32>
    %640 = arith.addf %635, %639 : vector<16x128xf32>
    %641 = vector.extract_strided_slice %634 {offsets = [4, 0], sizes = [1, 128], strides = [1, 1]} : vector<16x128xf32> to vector<1x128xf32>
    %642 = vector.broadcast %50 : vector<16x1xf32> to vector<16x128xf32>
    %643 = vector.broadcast %641 : vector<1x128xf32> to vector<16x128xf32>
    %644 = arith.mulf %642, %643 : vector<16x128xf32>
    %645 = arith.addf %640, %644 : vector<16x128xf32>
    %646 = vector.extract_strided_slice %634 {offsets = [8, 0], sizes = [1, 128], strides = [1, 1]} : vector<16x128xf32> to vector<1x128xf32>
    %647 = vector.broadcast %57 : vector<16x1xf32> to vector<16x128xf32>
    %648 = vector.broadcast %646 : vector<1x128xf32> to vector<16x128xf32>
    %649 = arith.mulf %647, %648 : vector<16x128xf32>
    %650 = arith.addf %645, %649 : vector<16x128xf32>
    %651 = vector.extract_strided_slice %634 {offsets = [12, 0], sizes = [1, 128], strides = [1, 1]} : vector<16x128xf32> to vector<1x128xf32>
    %652 = vector.broadcast %64 : vector<16x1xf32> to vector<16x128xf32>
    %653 = vector.broadcast %651 : vector<1x128xf32> to vector<16x128xf32>
    %654 = arith.mulf %652, %653 : vector<16x128xf32>
    %655 = arith.addf %650, %654 : vector<16x128xf32>
    %cst_291 = arith.constant 0.000000e+00 : f32
    %656 = vector.broadcast %cst_291 : f32 to vector<16x128xf32>
    %657 = vector.extract_strided_slice %24 {offsets = [0, 0, 0], sizes = [1, 1, 128], strides = [1, 1, 1]} : vector<5x5x128xf32> to vector<1x1x128xf32>
    %658 = vector.shape_cast %657 : vector<1x1x128xf32> to vector<1x128xf32>
    %c12_292 = arith.constant 12 : index
    %c0_293 = arith.constant 0 : index
    %c0_294 = arith.constant 0 : index
    %659 = vector.load %arg8[%c12_292, %c0_293, %c0_294] : memref<20x20x128xf32, #tpu.memory_space<vmem>>, vector<1x16x128xf32>
    %660 = vector.shape_cast %659 : vector<1x16x128xf32> to vector<16x128xf32>
    %661 = vector.broadcast %658 : vector<1x128xf32> to vector<16x128xf32>
    %662 = arith.mulf %661, %660 : vector<16x128xf32>
    %663 = arith.addf %656, %662 : vector<16x128xf32>
    %664 = vector.extract_strided_slice %24 {offsets = [0, 1, 0], sizes = [1, 1, 128], strides = [1, 1, 1]} : vector<5x5x128xf32> to vector<1x1x128xf32>
    %665 = vector.shape_cast %664 : vector<1x1x128xf32> to vector<1x128xf32>
    %c12_295 = arith.constant 12 : index
    %c1_296 = arith.constant 1 : index
    %c0_297 = arith.constant 0 : index
    %666 = vector.load %arg8[%c12_295, %c1_296, %c0_297] : memref<20x20x128xf32, #tpu.memory_space<vmem>>, vector<1x16x128xf32>
    %667 = vector.shape_cast %666 : vector<1x16x128xf32> to vector<16x128xf32>
    %668 = vector.broadcast %665 : vector<1x128xf32> to vector<16x128xf32>
    %669 = arith.mulf %668, %667 : vector<16x128xf32>
    %670 = arith.addf %663, %669 : vector<16x128xf32>
    %671 = vector.extract_strided_slice %24 {offsets = [0, 2, 0], sizes = [1, 1, 128], strides = [1, 1, 1]} : vector<5x5x128xf32> to vector<1x1x128xf32>
    %672 = vector.shape_cast %671 : vector<1x1x128xf32> to vector<1x128xf32>
    %c12_298 = arith.constant 12 : index
    %c2_299 = arith.constant 2 : index
    %c0_300 = arith.constant 0 : index
    %673 = vector.load %arg8[%c12_298, %c2_299, %c0_300] : memref<20x20x128xf32, #tpu.memory_space<vmem>>, vector<1x16x128xf32>
    %674 = vector.shape_cast %673 : vector<1x16x128xf32> to vector<16x128xf32>
    %675 = vector.broadcast %672 : vector<1x128xf32> to vector<16x128xf32>
    %676 = arith.mulf %675, %674 : vector<16x128xf32>
    %677 = arith.addf %670, %676 : vector<16x128xf32>
    %678 = vector.extract_strided_slice %24 {offsets = [0, 3, 0], sizes = [1, 1, 128], strides = [1, 1, 1]} : vector<5x5x128xf32> to vector<1x1x128xf32>
    %679 = vector.shape_cast %678 : vector<1x1x128xf32> to vector<1x128xf32>
    %c12_301 = arith.constant 12 : index
    %c3_302 = arith.constant 3 : index
    %c0_303 = arith.constant 0 : index
    %680 = vector.load %arg8[%c12_301, %c3_302, %c0_303] : memref<20x20x128xf32, #tpu.memory_space<vmem>>, vector<1x16x128xf32>
    %681 = vector.shape_cast %680 : vector<1x16x128xf32> to vector<16x128xf32>
    %682 = vector.broadcast %679 : vector<1x128xf32> to vector<16x128xf32>
    %683 = arith.mulf %682, %681 : vector<16x128xf32>
    %684 = arith.addf %677, %683 : vector<16x128xf32>
    %685 = vector.extract_strided_slice %24 {offsets = [0, 4, 0], sizes = [1, 1, 128], strides = [1, 1, 1]} : vector<5x5x128xf32> to vector<1x1x128xf32>
    %686 = vector.shape_cast %685 : vector<1x1x128xf32> to vector<1x128xf32>
    %c12_304 = arith.constant 12 : index
    %c4_305 = arith.constant 4 : index
    %c0_306 = arith.constant 0 : index
    %687 = vector.load %arg8[%c12_304, %c4_305, %c0_306] : memref<20x20x128xf32, #tpu.memory_space<vmem>>, vector<1x16x128xf32>
    %688 = vector.shape_cast %687 : vector<1x16x128xf32> to vector<16x128xf32>
    %689 = vector.broadcast %686 : vector<1x128xf32> to vector<16x128xf32>
    %690 = arith.mulf %689, %688 : vector<16x128xf32>
    %691 = arith.addf %684, %690 : vector<16x128xf32>
    %692 = vector.extract_strided_slice %24 {offsets = [1, 0, 0], sizes = [1, 1, 128], strides = [1, 1, 1]} : vector<5x5x128xf32> to vector<1x1x128xf32>
    %693 = vector.shape_cast %692 : vector<1x1x128xf32> to vector<1x128xf32>
    %c13 = arith.constant 13 : index
    %c0_307 = arith.constant 0 : index
    %c0_308 = arith.constant 0 : index
    %694 = vector.load %arg8[%c13, %c0_307, %c0_308] : memref<20x20x128xf32, #tpu.memory_space<vmem>>, vector<1x16x128xf32>
    %695 = vector.shape_cast %694 : vector<1x16x128xf32> to vector<16x128xf32>
    %696 = vector.broadcast %693 : vector<1x128xf32> to vector<16x128xf32>
    %697 = arith.mulf %696, %695 : vector<16x128xf32>
    %698 = arith.addf %691, %697 : vector<16x128xf32>
    %699 = vector.extract_strided_slice %24 {offsets = [1, 1, 0], sizes = [1, 1, 128], strides = [1, 1, 1]} : vector<5x5x128xf32> to vector<1x1x128xf32>
    %700 = vector.shape_cast %699 : vector<1x1x128xf32> to vector<1x128xf32>
    %c13_309 = arith.constant 13 : index
    %c1_310 = arith.constant 1 : index
    %c0_311 = arith.constant 0 : index
    %701 = vector.load %arg8[%c13_309, %c1_310, %c0_311] : memref<20x20x128xf32, #tpu.memory_space<vmem>>, vector<1x16x128xf32>
    %702 = vector.shape_cast %701 : vector<1x16x128xf32> to vector<16x128xf32>
    %703 = vector.broadcast %700 : vector<1x128xf32> to vector<16x128xf32>
    %704 = arith.mulf %703, %702 : vector<16x128xf32>
    %705 = arith.addf %698, %704 : vector<16x128xf32>
    %706 = vector.extract_strided_slice %24 {offsets = [1, 2, 0], sizes = [1, 1, 128], strides = [1, 1, 1]} : vector<5x5x128xf32> to vector<1x1x128xf32>
    %707 = vector.shape_cast %706 : vector<1x1x128xf32> to vector<1x128xf32>
    %c13_312 = arith.constant 13 : index
    %c2_313 = arith.constant 2 : index
    %c0_314 = arith.constant 0 : index
    %708 = vector.load %arg8[%c13_312, %c2_313, %c0_314] : memref<20x20x128xf32, #tpu.memory_space<vmem>>, vector<1x16x128xf32>
    %709 = vector.shape_cast %708 : vector<1x16x128xf32> to vector<16x128xf32>
    %710 = vector.broadcast %707 : vector<1x128xf32> to vector<16x128xf32>
    %711 = arith.mulf %710, %709 : vector<16x128xf32>
    %712 = arith.addf %705, %711 : vector<16x128xf32>
    %713 = vector.extract_strided_slice %24 {offsets = [1, 3, 0], sizes = [1, 1, 128], strides = [1, 1, 1]} : vector<5x5x128xf32> to vector<1x1x128xf32>
    %714 = vector.shape_cast %713 : vector<1x1x128xf32> to vector<1x128xf32>
    %c13_315 = arith.constant 13 : index
    %c3_316 = arith.constant 3 : index
    %c0_317 = arith.constant 0 : index
    %715 = vector.load %arg8[%c13_315, %c3_316, %c0_317] : memref<20x20x128xf32, #tpu.memory_space<vmem>>, vector<1x16x128xf32>
    %716 = vector.shape_cast %715 : vector<1x16x128xf32> to vector<16x128xf32>
    %717 = vector.broadcast %714 : vector<1x128xf32> to vector<16x128xf32>
    %718 = arith.mulf %717, %716 : vector<16x128xf32>
    %719 = arith.addf %712, %718 : vector<16x128xf32>
    %720 = vector.extract_strided_slice %24 {offsets = [1, 4, 0], sizes = [1, 1, 128], strides = [1, 1, 1]} : vector<5x5x128xf32> to vector<1x1x128xf32>
    %721 = vector.shape_cast %720 : vector<1x1x128xf32> to vector<1x128xf32>
    %c13_318 = arith.constant 13 : index
    %c4_319 = arith.constant 4 : index
    %c0_320 = arith.constant 0 : index
    %722 = vector.load %arg8[%c13_318, %c4_319, %c0_320] : memref<20x20x128xf32, #tpu.memory_space<vmem>>, vector<1x16x128xf32>
    %723 = vector.shape_cast %722 : vector<1x16x128xf32> to vector<16x128xf32>
    %724 = vector.broadcast %721 : vector<1x128xf32> to vector<16x128xf32>
    %725 = arith.mulf %724, %723 : vector<16x128xf32>
    %726 = arith.addf %719, %725 : vector<16x128xf32>
    %727 = vector.extract_strided_slice %24 {offsets = [2, 0, 0], sizes = [1, 1, 128], strides = [1, 1, 1]} : vector<5x5x128xf32> to vector<1x1x128xf32>
    %728 = vector.shape_cast %727 : vector<1x1x128xf32> to vector<1x128xf32>
    %c14_321 = arith.constant 14 : index
    %c0_322 = arith.constant 0 : index
    %c0_323 = arith.constant 0 : index
    %729 = vector.load %arg8[%c14_321, %c0_322, %c0_323] : memref<20x20x128xf32, #tpu.memory_space<vmem>>, vector<1x16x128xf32>
    %730 = vector.shape_cast %729 : vector<1x16x128xf32> to vector<16x128xf32>
    %731 = vector.broadcast %728 : vector<1x128xf32> to vector<16x128xf32>
    %732 = arith.mulf %731, %730 : vector<16x128xf32>
    %733 = arith.addf %726, %732 : vector<16x128xf32>
    %734 = vector.extract_strided_slice %24 {offsets = [2, 1, 0], sizes = [1, 1, 128], strides = [1, 1, 1]} : vector<5x5x128xf32> to vector<1x1x128xf32>
    %735 = vector.shape_cast %734 : vector<1x1x128xf32> to vector<1x128xf32>
    %c14_324 = arith.constant 14 : index
    %c1_325 = arith.constant 1 : index
    %c0_326 = arith.constant 0 : index
    %736 = vector.load %arg8[%c14_324, %c1_325, %c0_326] : memref<20x20x128xf32, #tpu.memory_space<vmem>>, vector<1x16x128xf32>
    %737 = vector.shape_cast %736 : vector<1x16x128xf32> to vector<16x128xf32>
    %738 = vector.broadcast %735 : vector<1x128xf32> to vector<16x128xf32>
    %739 = arith.mulf %738, %737 : vector<16x128xf32>
    %740 = arith.addf %733, %739 : vector<16x128xf32>
    %741 = vector.extract_strided_slice %24 {offsets = [2, 2, 0], sizes = [1, 1, 128], strides = [1, 1, 1]} : vector<5x5x128xf32> to vector<1x1x128xf32>
    %742 = vector.shape_cast %741 : vector<1x1x128xf32> to vector<1x128xf32>
    %c14_327 = arith.constant 14 : index
    %c2_328 = arith.constant 2 : index
    %c0_329 = arith.constant 0 : index
    %743 = vector.load %arg8[%c14_327, %c2_328, %c0_329] : memref<20x20x128xf32, #tpu.memory_space<vmem>>, vector<1x16x128xf32>
    %744 = vector.shape_cast %743 : vector<1x16x128xf32> to vector<16x128xf32>
    %745 = vector.broadcast %742 : vector<1x128xf32> to vector<16x128xf32>
    %746 = arith.mulf %745, %744 : vector<16x128xf32>
    %747 = arith.addf %740, %746 : vector<16x128xf32>
    %748 = vector.extract_strided_slice %24 {offsets = [2, 3, 0], sizes = [1, 1, 128], strides = [1, 1, 1]} : vector<5x5x128xf32> to vector<1x1x128xf32>
    %749 = vector.shape_cast %748 : vector<1x1x128xf32> to vector<1x128xf32>
    %c14_330 = arith.constant 14 : index
    %c3_331 = arith.constant 3 : index
    %c0_332 = arith.constant 0 : index
    %750 = vector.load %arg8[%c14_330, %c3_331, %c0_332] : memref<20x20x128xf32, #tpu.memory_space<vmem>>, vector<1x16x128xf32>
    %751 = vector.shape_cast %750 : vector<1x16x128xf32> to vector<16x128xf32>
    %752 = vector.broadcast %749 : vector<1x128xf32> to vector<16x128xf32>
    %753 = arith.mulf %752, %751 : vector<16x128xf32>
    %754 = arith.addf %747, %753 : vector<16x128xf32>
    %755 = vector.extract_strided_slice %24 {offsets = [2, 4, 0], sizes = [1, 1, 128], strides = [1, 1, 1]} : vector<5x5x128xf32> to vector<1x1x128xf32>
    %756 = vector.shape_cast %755 : vector<1x1x128xf32> to vector<1x128xf32>
    %c14_333 = arith.constant 14 : index
    %c4_334 = arith.constant 4 : index
    %c0_335 = arith.constant 0 : index
    %757 = vector.load %arg8[%c14_333, %c4_334, %c0_335] : memref<20x20x128xf32, #tpu.memory_space<vmem>>, vector<1x16x128xf32>
    %758 = vector.shape_cast %757 : vector<1x16x128xf32> to vector<16x128xf32>
    %759 = vector.broadcast %756 : vector<1x128xf32> to vector<16x128xf32>
    %760 = arith.mulf %759, %758 : vector<16x128xf32>
    %761 = arith.addf %754, %760 : vector<16x128xf32>
    %762 = vector.extract_strided_slice %24 {offsets = [3, 0, 0], sizes = [1, 1, 128], strides = [1, 1, 1]} : vector<5x5x128xf32> to vector<1x1x128xf32>
    %763 = vector.shape_cast %762 : vector<1x1x128xf32> to vector<1x128xf32>
    %c15 = arith.constant 15 : index
    %c0_336 = arith.constant 0 : index
    %c0_337 = arith.constant 0 : index
    %764 = vector.load %arg8[%c15, %c0_336, %c0_337] : memref<20x20x128xf32, #tpu.memory_space<vmem>>, vector<1x16x128xf32>
    %765 = vector.shape_cast %764 : vector<1x16x128xf32> to vector<16x128xf32>
    %766 = vector.broadcast %763 : vector<1x128xf32> to vector<16x128xf32>
    %767 = arith.mulf %766, %765 : vector<16x128xf32>
    %768 = arith.addf %761, %767 : vector<16x128xf32>
    %769 = vector.extract_strided_slice %24 {offsets = [3, 1, 0], sizes = [1, 1, 128], strides = [1, 1, 1]} : vector<5x5x128xf32> to vector<1x1x128xf32>
    %770 = vector.shape_cast %769 : vector<1x1x128xf32> to vector<1x128xf32>
    %c15_338 = arith.constant 15 : index
    %c1_339 = arith.constant 1 : index
    %c0_340 = arith.constant 0 : index
    %771 = vector.load %arg8[%c15_338, %c1_339, %c0_340] : memref<20x20x128xf32, #tpu.memory_space<vmem>>, vector<1x16x128xf32>
    %772 = vector.shape_cast %771 : vector<1x16x128xf32> to vector<16x128xf32>
    %773 = vector.broadcast %770 : vector<1x128xf32> to vector<16x128xf32>
    %774 = arith.mulf %773, %772 : vector<16x128xf32>
    %775 = arith.addf %768, %774 : vector<16x128xf32>
    %776 = vector.extract_strided_slice %24 {offsets = [3, 2, 0], sizes = [1, 1, 128], strides = [1, 1, 1]} : vector<5x5x128xf32> to vector<1x1x128xf32>
    %777 = vector.shape_cast %776 : vector<1x1x128xf32> to vector<1x128xf32>
    %c15_341 = arith.constant 15 : index
    %c2_342 = arith.constant 2 : index
    %c0_343 = arith.constant 0 : index
    %778 = vector.load %arg8[%c15_341, %c2_342, %c0_343] : memref<20x20x128xf32, #tpu.memory_space<vmem>>, vector<1x16x128xf32>
    %779 = vector.shape_cast %778 : vector<1x16x128xf32> to vector<16x128xf32>
    %780 = vector.broadcast %777 : vector<1x128xf32> to vector<16x128xf32>
    %781 = arith.mulf %780, %779 : vector<16x128xf32>
    %782 = arith.addf %775, %781 : vector<16x128xf32>
    %783 = vector.extract_strided_slice %24 {offsets = [3, 3, 0], sizes = [1, 1, 128], strides = [1, 1, 1]} : vector<5x5x128xf32> to vector<1x1x128xf32>
    %784 = vector.shape_cast %783 : vector<1x1x128xf32> to vector<1x128xf32>
    %c15_344 = arith.constant 15 : index
    %c3_345 = arith.constant 3 : index
    %c0_346 = arith.constant 0 : index
    %785 = vector.load %arg8[%c15_344, %c3_345, %c0_346] : memref<20x20x128xf32, #tpu.memory_space<vmem>>, vector<1x16x128xf32>
    %786 = vector.shape_cast %785 : vector<1x16x128xf32> to vector<16x128xf32>
    %787 = vector.broadcast %784 : vector<1x128xf32> to vector<16x128xf32>
    %788 = arith.mulf %787, %786 : vector<16x128xf32>
    %789 = arith.addf %782, %788 : vector<16x128xf32>
    %790 = vector.extract_strided_slice %24 {offsets = [3, 4, 0], sizes = [1, 1, 128], strides = [1, 1, 1]} : vector<5x5x128xf32> to vector<1x1x128xf32>
    %791 = vector.shape_cast %790 : vector<1x1x128xf32> to vector<1x128xf32>
    %c15_347 = arith.constant 15 : index
    %c4_348 = arith.constant 4 : index
    %c0_349 = arith.constant 0 : index
    %792 = vector.load %arg8[%c15_347, %c4_348, %c0_349] : memref<20x20x128xf32, #tpu.memory_space<vmem>>, vector<1x16x128xf32>
    %793 = vector.shape_cast %792 : vector<1x16x128xf32> to vector<16x128xf32>
    %794 = vector.broadcast %791 : vector<1x128xf32> to vector<16x128xf32>
    %795 = arith.mulf %794, %793 : vector<16x128xf32>
    %796 = arith.addf %789, %795 : vector<16x128xf32>
    %797 = vector.extract_strided_slice %24 {offsets = [4, 0, 0], sizes = [1, 1, 128], strides = [1, 1, 1]} : vector<5x5x128xf32> to vector<1x1x128xf32>
    %798 = vector.shape_cast %797 : vector<1x1x128xf32> to vector<1x128xf32>
    %c16 = arith.constant 16 : index
    %c0_350 = arith.constant 0 : index
    %c0_351 = arith.constant 0 : index
    %799 = vector.load %arg8[%c16, %c0_350, %c0_351] : memref<20x20x128xf32, #tpu.memory_space<vmem>>, vector<1x16x128xf32>
    %800 = vector.shape_cast %799 : vector<1x16x128xf32> to vector<16x128xf32>
    %801 = vector.broadcast %798 : vector<1x128xf32> to vector<16x128xf32>
    %802 = arith.mulf %801, %800 : vector<16x128xf32>
    %803 = arith.addf %796, %802 : vector<16x128xf32>
    %804 = vector.extract_strided_slice %24 {offsets = [4, 1, 0], sizes = [1, 1, 128], strides = [1, 1, 1]} : vector<5x5x128xf32> to vector<1x1x128xf32>
    %805 = vector.shape_cast %804 : vector<1x1x128xf32> to vector<1x128xf32>
    %c16_352 = arith.constant 16 : index
    %c1_353 = arith.constant 1 : index
    %c0_354 = arith.constant 0 : index
    %806 = vector.load %arg8[%c16_352, %c1_353, %c0_354] : memref<20x20x128xf32, #tpu.memory_space<vmem>>, vector<1x16x128xf32>
    %807 = vector.shape_cast %806 : vector<1x16x128xf32> to vector<16x128xf32>
    %808 = vector.broadcast %805 : vector<1x128xf32> to vector<16x128xf32>
    %809 = arith.mulf %808, %807 : vector<16x128xf32>
    %810 = arith.addf %803, %809 : vector<16x128xf32>
    %811 = vector.extract_strided_slice %24 {offsets = [4, 2, 0], sizes = [1, 1, 128], strides = [1, 1, 1]} : vector<5x5x128xf32> to vector<1x1x128xf32>
    %812 = vector.shape_cast %811 : vector<1x1x128xf32> to vector<1x128xf32>
    %c16_355 = arith.constant 16 : index
    %c2_356 = arith.constant 2 : index
    %c0_357 = arith.constant 0 : index
    %813 = vector.load %arg8[%c16_355, %c2_356, %c0_357] : memref<20x20x128xf32, #tpu.memory_space<vmem>>, vector<1x16x128xf32>
    %814 = vector.shape_cast %813 : vector<1x16x128xf32> to vector<16x128xf32>
    %815 = vector.broadcast %812 : vector<1x128xf32> to vector<16x128xf32>
    %816 = arith.mulf %815, %814 : vector<16x128xf32>
    %817 = arith.addf %810, %816 : vector<16x128xf32>
    %818 = vector.extract_strided_slice %24 {offsets = [4, 3, 0], sizes = [1, 1, 128], strides = [1, 1, 1]} : vector<5x5x128xf32> to vector<1x1x128xf32>
    %819 = vector.shape_cast %818 : vector<1x1x128xf32> to vector<1x128xf32>
    %c16_358 = arith.constant 16 : index
    %c3_359 = arith.constant 3 : index
    %c0_360 = arith.constant 0 : index
    %820 = vector.load %arg8[%c16_358, %c3_359, %c0_360] : memref<20x20x128xf32, #tpu.memory_space<vmem>>, vector<1x16x128xf32>
    %821 = vector.shape_cast %820 : vector<1x16x128xf32> to vector<16x128xf32>
    %822 = vector.broadcast %819 : vector<1x128xf32> to vector<16x128xf32>
    %823 = arith.mulf %822, %821 : vector<16x128xf32>
    %824 = arith.addf %817, %823 : vector<16x128xf32>
    %825 = vector.extract_strided_slice %24 {offsets = [4, 4, 0], sizes = [1, 1, 128], strides = [1, 1, 1]} : vector<5x5x128xf32> to vector<1x1x128xf32>
    %826 = vector.shape_cast %825 : vector<1x1x128xf32> to vector<1x128xf32>
    %c16_361 = arith.constant 16 : index
    %c4_362 = arith.constant 4 : index
    %c0_363 = arith.constant 0 : index
    %827 = vector.load %arg8[%c16_361, %c4_362, %c0_363] : memref<20x20x128xf32, #tpu.memory_space<vmem>>, vector<1x16x128xf32>
    %828 = vector.shape_cast %827 : vector<1x16x128xf32> to vector<16x128xf32>
    %829 = vector.broadcast %826 : vector<1x128xf32> to vector<16x128xf32>
    %830 = arith.mulf %829, %828 : vector<16x128xf32>
    %831 = arith.addf %824, %830 : vector<16x128xf32>
    %cst_364 = arith.constant 0.000000e+00 : f32
    %832 = vector.broadcast %cst_364 : f32 to vector<16x128xf32>
    %833 = vector.extract_strided_slice %831 {offsets = [0, 0], sizes = [1, 128], strides = [1, 1]} : vector<16x128xf32> to vector<1x128xf32>
    %834 = vector.broadcast %43 : vector<16x1xf32> to vector<16x128xf32>
    %835 = vector.broadcast %833 : vector<1x128xf32> to vector<16x128xf32>
    %836 = arith.mulf %834, %835 : vector<16x128xf32>
    %837 = arith.addf %832, %836 : vector<16x128xf32>
    %838 = vector.extract_strided_slice %831 {offsets = [4, 0], sizes = [1, 128], strides = [1, 1]} : vector<16x128xf32> to vector<1x128xf32>
    %839 = vector.broadcast %50 : vector<16x1xf32> to vector<16x128xf32>
    %840 = vector.broadcast %838 : vector<1x128xf32> to vector<16x128xf32>
    %841 = arith.mulf %839, %840 : vector<16x128xf32>
    %842 = arith.addf %837, %841 : vector<16x128xf32>
    %843 = vector.extract_strided_slice %831 {offsets = [8, 0], sizes = [1, 128], strides = [1, 1]} : vector<16x128xf32> to vector<1x128xf32>
    %844 = vector.broadcast %57 : vector<16x1xf32> to vector<16x128xf32>
    %845 = vector.broadcast %843 : vector<1x128xf32> to vector<16x128xf32>
    %846 = arith.mulf %844, %845 : vector<16x128xf32>
    %847 = arith.addf %842, %846 : vector<16x128xf32>
    %848 = vector.extract_strided_slice %831 {offsets = [12, 0], sizes = [1, 128], strides = [1, 1]} : vector<16x128xf32> to vector<1x128xf32>
    %849 = vector.broadcast %64 : vector<16x1xf32> to vector<16x128xf32>
    %850 = vector.broadcast %848 : vector<1x128xf32> to vector<16x128xf32>
    %851 = arith.mulf %849, %850 : vector<16x128xf32>
    %852 = arith.addf %847, %851 : vector<16x128xf32>
    %cst_365 = arith.constant 1.000000e+00 : f32
    %853 = vector.broadcast %cst_365 : f32 to vector<16x128xf32>
    %854 = arith.mulf %853, %261 : vector<16x128xf32>
    %cst_366 = arith.constant 1.000000e+00 : f32
    %855 = vector.broadcast %cst_366 : f32 to vector<16x128xf32>
    %856 = arith.mulf %855, %261 : vector<16x128xf32>
    %cst_367 = arith.constant 8.750000e-01 : f32
    %857 = vector.broadcast %cst_367 : f32 to vector<16x128xf32>
    %858 = arith.mulf %857, %261 : vector<16x128xf32>
    %cst_368 = arith.constant 1.250000e-01 : f32
    %859 = vector.broadcast %cst_368 : f32 to vector<16x128xf32>
    %860 = arith.mulf %859, %458 : vector<16x128xf32>
    %861 = arith.addf %858, %860 : vector<16x128xf32>
    %cst_369 = arith.constant 6.250000e-01 : f32
    %862 = vector.broadcast %cst_369 : f32 to vector<16x128xf32>
    %863 = arith.mulf %862, %261 : vector<16x128xf32>
    %cst_370 = arith.constant 3.750000e-01 : f32
    %864 = vector.broadcast %cst_370 : f32 to vector<16x128xf32>
    %865 = arith.mulf %864, %458 : vector<16x128xf32>
    %866 = arith.addf %863, %865 : vector<16x128xf32>
    %867 = tpu.concatenate %854, %856, %861, %866 in 0 : vector<16x128xf32>, vector<16x128xf32>, vector<16x128xf32>, vector<16x128xf32> -> vector<64x128xf32>
    %868 = vector.broadcast %23 : vector<1x128xf32> to vector<64x128xf32>
    %869 = arith.addf %867, %868 : vector<64x128xf32>
    %c0_371 = arith.constant 0 : index
    %c0_372 = arith.constant 0 : index
    %c0_373 = arith.constant 0 : index
    %c0_374 = arith.constant 0 : index
    %870 = vector.load %arg1[%c0_371, %c0_372, %c0_373, %c0_374] : memref<1x16x16x128xf32, #tpu.memory_space<vmem>>, vector<1x4x16x128xf32>
    %871 = vector.shape_cast %870 : vector<1x4x16x128xf32> to vector<4x16x128xf32>
    %872 = vector.shape_cast %871 : vector<4x16x128xf32> to vector<64x128xf32>
    %873 = arith.mulf %872, %869 : vector<64x128xf32>
    %cst_375 = arith.constant 5.000000e-01 : f32
    %874 = vector.broadcast %cst_375 : f32 to vector<64x128xf32>
    %875 = arith.mulf %874, %873 : vector<64x128xf32>
    %cst_376 = arith.constant 4.471500e-02 : f32
    %876 = vector.broadcast %cst_376 : f32 to vector<64x128xf32>
    %877 = arith.mulf %876, %873 : vector<64x128xf32>
    %878 = arith.mulf %877, %873 : vector<64x128xf32>
    %879 = arith.mulf %878, %873 : vector<64x128xf32>
    %880 = arith.addf %873, %879 : vector<64x128xf32>
    %cst_377 = arith.constant 0.797884583 : f32
    %881 = vector.broadcast %cst_377 : f32 to vector<64x128xf32>
    %882 = arith.mulf %881, %880 : vector<64x128xf32>
    %883 = math.tanh %882 : vector<64x128xf32>
    %cst_378 = arith.constant 1.000000e+00 : f32
    %884 = vector.broadcast %cst_378 : f32 to vector<64x128xf32>
    %885 = arith.addf %884, %883 : vector<64x128xf32>
    %886 = arith.mulf %875, %885 : vector<64x128xf32>
    %887 = arith.subf %872, %869 : vector<64x128xf32>
    %cst_379 = arith.constant 5.000000e-01 : f32
    %888 = vector.broadcast %cst_379 : f32 to vector<64x128xf32>
    %889 = arith.mulf %888, %887 : vector<64x128xf32>
    %cst_380 = arith.constant 4.471500e-02 : f32
    %890 = vector.broadcast %cst_380 : f32 to vector<64x128xf32>
    %891 = arith.mulf %890, %887 : vector<64x128xf32>
    %892 = arith.mulf %891, %887 : vector<64x128xf32>
    %893 = arith.mulf %892, %887 : vector<64x128xf32>
    %894 = arith.addf %887, %893 : vector<64x128xf32>
    %cst_381 = arith.constant 0.797884583 : f32
    %895 = vector.broadcast %cst_381 : f32 to vector<64x128xf32>
    %896 = arith.mulf %895, %894 : vector<64x128xf32>
    %897 = math.tanh %896 : vector<64x128xf32>
    %cst_382 = arith.constant 1.000000e+00 : f32
    %898 = vector.broadcast %cst_382 : f32 to vector<64x128xf32>
    %899 = arith.addf %898, %897 : vector<64x128xf32>
    %900 = arith.mulf %889, %899 : vector<64x128xf32>
    %901 = vector.shape_cast %886 : vector<64x128xf32> to vector<4x16x128xf32>
    %c2_383 = arith.constant 2 : index
    %c2_384 = arith.constant 2 : index
    %c0_385 = arith.constant 0 : index
    %902 = vector.load %arg8[%c2_383, %c2_384, %c0_385] : memref<20x20x128xf32, #tpu.memory_space<vmem>>, vector<4x16x128xf32>
    tpu.vector_store %arg8[%c2_383, %c2_384, %c0_385], %901 {strides = array<i32>} : memref<20x20x128xf32, #tpu.memory_space<vmem>>, vector<4x16x128xf32>,
    %903 = vector.shape_cast %900 : vector<64x128xf32> to vector<4x16x128xf32>
    %c2_386 = arith.constant 2 : index
    %c2_387 = arith.constant 2 : index
    %c0_388 = arith.constant 0 : index
    %904 = vector.load %arg9[%c2_386, %c2_387, %c0_388] : memref<20x20x128xf32, #tpu.memory_space<vmem>>, vector<4x16x128xf32>
    tpu.vector_store %arg9[%c2_386, %c2_387, %c0_388], %903 {strides = array<i32>} : memref<20x20x128xf32, #tpu.memory_space<vmem>>, vector<4x16x128xf32>,
    %cst_389 = arith.constant 3.750000e-01 : f32
    %905 = vector.broadcast %cst_389 : f32 to vector<16x128xf32>
    %906 = arith.mulf %905, %261 : vector<16x128xf32>
    %cst_390 = arith.constant 6.250000e-01 : f32
    %907 = vector.broadcast %cst_390 : f32 to vector<16x128xf32>
    %908 = arith.mulf %907, %458 : vector<16x128xf32>
    %909 = arith.addf %906, %908 : vector<16x128xf32>
    %cst_391 = arith.constant 1.250000e-01 : f32
    %910 = vector.broadcast %cst_391 : f32 to vector<16x128xf32>
    %911 = arith.mulf %910, %261 : vector<16x128xf32>
    %cst_392 = arith.constant 8.750000e-01 : f32
    %912 = vector.broadcast %cst_392 : f32 to vector<16x128xf32>
    %913 = arith.mulf %912, %458 : vector<16x128xf32>
    %914 = arith.addf %911, %913 : vector<16x128xf32>
    %cst_393 = arith.constant 8.750000e-01 : f32
    %915 = vector.broadcast %cst_393 : f32 to vector<16x128xf32>
    %916 = arith.mulf %915, %458 : vector<16x128xf32>
    %cst_394 = arith.constant 1.250000e-01 : f32
    %917 = vector.broadcast %cst_394 : f32 to vector<16x128xf32>
    %918 = arith.mulf %917, %655 : vector<16x128xf32>
    %919 = arith.addf %916, %918 : vector<16x128xf32>
    %cst_395 = arith.constant 6.250000e-01 : f32
    %920 = vector.broadcast %cst_395 : f32 to vector<16x128xf32>
    %921 = arith.mulf %920, %458 : vector<16x128xf32>
    %cst_396 = arith.constant 3.750000e-01 : f32
    %922 = vector.broadcast %cst_396 : f32 to vector<16x128xf32>
    %923 = arith.mulf %922, %655 : vector<16x128xf32>
    %924 = arith.addf %921, %923 : vector<16x128xf32>
    %925 = tpu.concatenate %909, %914, %919, %924 in 0 : vector<16x128xf32>, vector<16x128xf32>, vector<16x128xf32>, vector<16x128xf32> -> vector<64x128xf32>
    %926 = vector.broadcast %23 : vector<1x128xf32> to vector<64x128xf32>
    %927 = arith.addf %925, %926 : vector<64x128xf32>
    %c0_397 = arith.constant 0 : index
    %c4_398 = arith.constant 4 : index
    %c0_399 = arith.constant 0 : index
    %c0_400 = arith.constant 0 : index
    %928 = vector.load %arg1[%c0_397, %c4_398, %c0_399, %c0_400] : memref<1x16x16x128xf32, #tpu.memory_space<vmem>>, vector<1x4x16x128xf32>
    %929 = vector.shape_cast %928 : vector<1x4x16x128xf32> to vector<4x16x128xf32>
    %930 = vector.shape_cast %929 : vector<4x16x128xf32> to vector<64x128xf32>
    %931 = arith.mulf %930, %927 : vector<64x128xf32>
    %cst_401 = arith.constant 5.000000e-01 : f32
    %932 = vector.broadcast %cst_401 : f32 to vector<64x128xf32>
    %933 = arith.mulf %932, %931 : vector<64x128xf32>
    %cst_402 = arith.constant 4.471500e-02 : f32
    %934 = vector.broadcast %cst_402 : f32 to vector<64x128xf32>
    %935 = arith.mulf %934, %931 : vector<64x128xf32>
    %936 = arith.mulf %935, %931 : vector<64x128xf32>
    %937 = arith.mulf %936, %931 : vector<64x128xf32>
    %938 = arith.addf %931, %937 : vector<64x128xf32>
    %cst_403 = arith.constant 0.797884583 : f32
    %939 = vector.broadcast %cst_403 : f32 to vector<64x128xf32>
    %940 = arith.mulf %939, %938 : vector<64x128xf32>
    %941 = math.tanh %940 : vector<64x128xf32>
    %cst_404 = arith.constant 1.000000e+00 : f32
    %942 = vector.broadcast %cst_404 : f32 to vector<64x128xf32>
    %943 = arith.addf %942, %941 : vector<64x128xf32>
    %944 = arith.mulf %933, %943 : vector<64x128xf32>
    %945 = arith.subf %930, %927 : vector<64x128xf32>
    %cst_405 = arith.constant 5.000000e-01 : f32
    %946 = vector.broadcast %cst_405 : f32 to vector<64x128xf32>
    %947 = arith.mulf %946, %945 : vector<64x128xf32>
    %cst_406 = arith.constant 4.471500e-02 : f32
    %948 = vector.broadcast %cst_406 : f32 to vector<64x128xf32>
    %949 = arith.mulf %948, %945 : vector<64x128xf32>
    %950 = arith.mulf %949, %945 : vector<64x128xf32>
    %951 = arith.mulf %950, %945 : vector<64x128xf32>
    %952 = arith.addf %945, %951 : vector<64x128xf32>
    %cst_407 = arith.constant 0.797884583 : f32
    %953 = vector.broadcast %cst_407 : f32 to vector<64x128xf32>
    %954 = arith.mulf %953, %952 : vector<64x128xf32>
    %955 = math.tanh %954 : vector<64x128xf32>
    %cst_408 = arith.constant 1.000000e+00 : f32
    %956 = vector.broadcast %cst_408 : f32 to vector<64x128xf32>
    %957 = arith.addf %956, %955 : vector<64x128xf32>
    %958 = arith.mulf %947, %957 : vector<64x128xf32>
    %959 = vector.shape_cast %944 : vector<64x128xf32> to vector<4x16x128xf32>
    %c6_409 = arith.constant 6 : index
    %c2_410 = arith.constant 2 : index
    %c0_411 = arith.constant 0 : index
    %960 = vector.load %arg8[%c6_409, %c2_410, %c0_411] : memref<20x20x128xf32, #tpu.memory_space<vmem>>, vector<4x16x128xf32>
    tpu.vector_store %arg8[%c6_409, %c2_410, %c0_411], %959 {strides = array<i32>} : memref<20x20x128xf32, #tpu.memory_space<vmem>>, vector<4x16x128xf32>,
    %961 = vector.shape_cast %958 : vector<64x128xf32> to vector<4x16x128xf32>
    %c6_412 = arith.constant 6 : index
    %c2_413 = arith.constant 2 : index
    %c0_414 = arith.constant 0 : index
    %962 = vector.load %arg9[%c6_412, %c2_413, %c0_414] : memref<20x20x128xf32, #tpu.memory_space<vmem>>, vector<4x16x128xf32>
    tpu.vector_store %arg9[%c6_412, %c2_413, %c0_414], %961 {strides = array<i32>} : memref<20x20x128xf32, #tpu.memory_space<vmem>>, vector<4x16x128xf32>,
    %cst_415 = arith.constant 3.750000e-01 : f32
    %963 = vector.broadcast %cst_415 : f32 to vector<16x128xf32>
    %964 = arith.mulf %963, %458 : vector<16x128xf32>
    %cst_416 = arith.constant 6.250000e-01 : f32
    %965 = vector.broadcast %cst_416 : f32 to vector<16x128xf32>
    %966 = arith.mulf %965, %655 : vector<16x128xf32>
    %967 = arith.addf %964, %966 : vector<16x128xf32>
    %cst_417 = arith.constant 1.250000e-01 : f32
    %968 = vector.broadcast %cst_417 : f32 to vector<16x128xf32>
    %969 = arith.mulf %968, %458 : vector<16x128xf32>
    %cst_418 = arith.constant 8.750000e-01 : f32
    %970 = vector.broadcast %cst_418 : f32 to vector<16x128xf32>
    %971 = arith.mulf %970, %655 : vector<16x128xf32>
    %972 = arith.addf %969, %971 : vector<16x128xf32>
    %cst_419 = arith.constant 8.750000e-01 : f32
    %973 = vector.broadcast %cst_419 : f32 to vector<16x128xf32>
    %974 = arith.mulf %973, %655 : vector<16x128xf32>
    %cst_420 = arith.constant 1.250000e-01 : f32
    %975 = vector.broadcast %cst_420 : f32 to vector<16x128xf32>
    %976 = arith.mulf %975, %852 : vector<16x128xf32>
    %977 = arith.addf %974, %976 : vector<16x128xf32>
    %cst_421 = arith.constant 6.250000e-01 : f32
    %978 = vector.broadcast %cst_421 : f32 to vector<16x128xf32>
    %979 = arith.mulf %978, %655 : vector<16x128xf32>
    %cst_422 = arith.constant 3.750000e-01 : f32
    %980 = vector.broadcast %cst_422 : f32 to vector<16x128xf32>
    %981 = arith.mulf %980, %852 : vector<16x128xf32>
    %982 = arith.addf %979, %981 : vector<16x128xf32>
    %983 = tpu.concatenate %967, %972, %977, %982 in 0 : vector<16x128xf32>, vector<16x128xf32>, vector<16x128xf32>, vector<16x128xf32> -> vector<64x128xf32>
    %984 = vector.broadcast %23 : vector<1x128xf32> to vector<64x128xf32>
    %985 = arith.addf %983, %984 : vector<64x128xf32>
    %c0_423 = arith.constant 0 : index
    %c8_424 = arith.constant 8 : index
    %c0_425 = arith.constant 0 : index
    %c0_426 = arith.constant 0 : index
    %986 = vector.load %arg1[%c0_423, %c8_424, %c0_425, %c0_426] : memref<1x16x16x128xf32, #tpu.memory_space<vmem>>, vector<1x4x16x128xf32>
    %987 = vector.shape_cast %986 : vector<1x4x16x128xf32> to vector<4x16x128xf32>
    %988 = vector.shape_cast %987 : vector<4x16x128xf32> to vector<64x128xf32>
    %989 = arith.mulf %988, %985 : vector<64x128xf32>
    %cst_427 = arith.constant 5.000000e-01 : f32
    %990 = vector.broadcast %cst_427 : f32 to vector<64x128xf32>
    %991 = arith.mulf %990, %989 : vector<64x128xf32>
    %cst_428 = arith.constant 4.471500e-02 : f32
    %992 = vector.broadcast %cst_428 : f32 to vector<64x128xf32>
    %993 = arith.mulf %992, %989 : vector<64x128xf32>
    %994 = arith.mulf %993, %989 : vector<64x128xf32>
    %995 = arith.mulf %994, %989 : vector<64x128xf32>
    %996 = arith.addf %989, %995 : vector<64x128xf32>
    %cst_429 = arith.constant 0.797884583 : f32
    %997 = vector.broadcast %cst_429 : f32 to vector<64x128xf32>
    %998 = arith.mulf %997, %996 : vector<64x128xf32>
    %999 = math.tanh %998 : vector<64x128xf32>
    %cst_430 = arith.constant 1.000000e+00 : f32
    %1000 = vector.broadcast %cst_430 : f32 to vector<64x128xf32>
    %1001 = arith.addf %1000, %999 : vector<64x128xf32>
    %1002 = arith.mulf %991, %1001 : vector<64x128xf32>
    %1003 = arith.subf %988, %985 : vector<64x128xf32>
    %cst_431 = arith.constant 5.000000e-01 : f32
    %1004 = vector.broadcast %cst_431 : f32 to vector<64x128xf32>
    %1005 = arith.mulf %1004, %1003 : vector<64x128xf32>
    %cst_432 = arith.constant 4.471500e-02 : f32
    %1006 = vector.broadcast %cst_432 : f32 to vector<64x128xf32>
    %1007 = arith.mulf %1006, %1003 : vector<64x128xf32>
    %1008 = arith.mulf %1007, %1003 : vector<64x128xf32>
    %1009 = arith.mulf %1008, %1003 : vector<64x128xf32>
    %1010 = arith.addf %1003, %1009 : vector<64x128xf32>
    %cst_433 = arith.constant 0.797884583 : f32
    %1011 = vector.broadcast %cst_433 : f32 to vector<64x128xf32>
    %1012 = arith.mulf %1011, %1010 : vector<64x128xf32>
    %1013 = math.tanh %1012 : vector<64x128xf32>
    %cst_434 = arith.constant 1.000000e+00 : f32
    %1014 = vector.broadcast %cst_434 : f32 to vector<64x128xf32>
    %1015 = arith.addf %1014, %1013 : vector<64x128xf32>
    %1016 = arith.mulf %1005, %1015 : vector<64x128xf32>
    %1017 = vector.shape_cast %1002 : vector<64x128xf32> to vector<4x16x128xf32>
    %c10_435 = arith.constant 10 : index
    %c2_436 = arith.constant 2 : index
    %c0_437 = arith.constant 0 : index
    %1018 = vector.load %arg8[%c10_435, %c2_436, %c0_437] : memref<20x20x128xf32, #tpu.memory_space<vmem>>, vector<4x16x128xf32>
    tpu.vector_store %arg8[%c10_435, %c2_436, %c0_437], %1017 {strides = array<i32>} : memref<20x20x128xf32, #tpu.memory_space<vmem>>, vector<4x16x128xf32>,
    %1019 = vector.shape_cast %1016 : vector<64x128xf32> to vector<4x16x128xf32>
    %c10_438 = arith.constant 10 : index
    %c2_439 = arith.constant 2 : index
    %c0_440 = arith.constant 0 : index
    %1020 = vector.load %arg9[%c10_438, %c2_439, %c0_440] : memref<20x20x128xf32, #tpu.memory_space<vmem>>, vector<4x16x128xf32>
    tpu.vector_store %arg9[%c10_438, %c2_439, %c0_440], %1019 {strides = array<i32>} : memref<20x20x128xf32, #tpu.memory_space<vmem>>, vector<4x16x128xf32>,
    %cst_441 = arith.constant 3.750000e-01 : f32
    %1021 = vector.broadcast %cst_441 : f32 to vector<16x128xf32>
    %1022 = arith.mulf %1021, %655 : vector<16x128xf32>
    %cst_442 = arith.constant 6.250000e-01 : f32
    %1023 = vector.broadcast %cst_442 : f32 to vector<16x128xf32>
    %1024 = arith.mulf %1023, %852 : vector<16x128xf32>
    %1025 = arith.addf %1022, %1024 : vector<16x128xf32>
    %cst_443 = arith.constant 1.250000e-01 : f32
    %1026 = vector.broadcast %cst_443 : f32 to vector<16x128xf32>
    %1027 = arith.mulf %1026, %655 : vector<16x128xf32>
    %cst_444 = arith.constant 8.750000e-01 : f32
    %1028 = vector.broadcast %cst_444 : f32 to vector<16x128xf32>
    %1029 = arith.mulf %1028, %852 : vector<16x128xf32>
    %1030 = arith.addf %1027, %1029 : vector<16x128xf32>
    %cst_445 = arith.constant 1.000000e+00 : f32
    %1031 = vector.broadcast %cst_445 : f32 to vector<16x128xf32>
    %1032 = arith.mulf %1031, %852 : vector<16x128xf32>
    %cst_446 = arith.constant 1.000000e+00 : f32
    %1033 = vector.broadcast %cst_446 : f32 to vector<16x128xf32>
    %1034 = arith.mulf %1033, %852 : vector<16x128xf32>
    %1035 = tpu.concatenate %1025, %1030, %1032, %1034 in 0 : vector<16x128xf32>, vector<16x128xf32>, vector<16x128xf32>, vector<16x128xf32> -> vector<64x128xf32>
    %1036 = vector.broadcast %23 : vector<1x128xf32> to vector<64x128xf32>
    %1037 = arith.addf %1035, %1036 : vector<64x128xf32>
    %c0_447 = arith.constant 0 : index
    %c12_448 = arith.constant 12 : index
    %c0_449 = arith.constant 0 : index
    %c0_450 = arith.constant 0 : index
    %1038 = vector.load %arg1[%c0_447, %c12_448, %c0_449, %c0_450] : memref<1x16x16x128xf32, #tpu.memory_space<vmem>>, vector<1x4x16x128xf32>
    %1039 = vector.shape_cast %1038 : vector<1x4x16x128xf32> to vector<4x16x128xf32>
    %1040 = vector.shape_cast %1039 : vector<4x16x128xf32> to vector<64x128xf32>
    %1041 = arith.mulf %1040, %1037 : vector<64x128xf32>
    %cst_451 = arith.constant 5.000000e-01 : f32
    %1042 = vector.broadcast %cst_451 : f32 to vector<64x128xf32>
    %1043 = arith.mulf %1042, %1041 : vector<64x128xf32>
    %cst_452 = arith.constant 4.471500e-02 : f32
    %1044 = vector.broadcast %cst_452 : f32 to vector<64x128xf32>
    %1045 = arith.mulf %1044, %1041 : vector<64x128xf32>
    %1046 = arith.mulf %1045, %1041 : vector<64x128xf32>
    %1047 = arith.mulf %1046, %1041 : vector<64x128xf32>
    %1048 = arith.addf %1041, %1047 : vector<64x128xf32>
    %cst_453 = arith.constant 0.797884583 : f32
    %1049 = vector.broadcast %cst_453 : f32 to vector<64x128xf32>
    %1050 = arith.mulf %1049, %1048 : vector<64x128xf32>
    %1051 = math.tanh %1050 : vector<64x128xf32>
    %cst_454 = arith.constant 1.000000e+00 : f32
    %1052 = vector.broadcast %cst_454 : f32 to vector<64x128xf32>
    %1053 = arith.addf %1052, %1051 : vector<64x128xf32>
    %1054 = arith.mulf %1043, %1053 : vector<64x128xf32>
    %1055 = arith.subf %1040, %1037 : vector<64x128xf32>
    %cst_455 = arith.constant 5.000000e-01 : f32
    %1056 = vector.broadcast %cst_455 : f32 to vector<64x128xf32>
    %1057 = arith.mulf %1056, %1055 : vector<64x128xf32>
    %cst_456 = arith.constant 4.471500e-02 : f32
    %1058 = vector.broadcast %cst_456 : f32 to vector<64x128xf32>
    %1059 = arith.mulf %1058, %1055 : vector<64x128xf32>
    %1060 = arith.mulf %1059, %1055 : vector<64x128xf32>
    %1061 = arith.mulf %1060, %1055 : vector<64x128xf32>
    %1062 = arith.addf %1055, %1061 : vector<64x128xf32>
    %cst_457 = arith.constant 0.797884583 : f32
    %1063 = vector.broadcast %cst_457 : f32 to vector<64x128xf32>
    %1064 = arith.mulf %1063, %1062 : vector<64x128xf32>
    %1065 = math.tanh %1064 : vector<64x128xf32>
    %cst_458 = arith.constant 1.000000e+00 : f32
    %1066 = vector.broadcast %cst_458 : f32 to vector<64x128xf32>
    %1067 = arith.addf %1066, %1065 : vector<64x128xf32>
    %1068 = arith.mulf %1057, %1067 : vector<64x128xf32>
    %1069 = vector.shape_cast %1054 : vector<64x128xf32> to vector<4x16x128xf32>
    %c14_459 = arith.constant 14 : index
    %c2_460 = arith.constant 2 : index
    %c0_461 = arith.constant 0 : index
    %1070 = vector.load %arg8[%c14_459, %c2_460, %c0_461] : memref<20x20x128xf32, #tpu.memory_space<vmem>>, vector<4x16x128xf32>
    tpu.vector_store %arg8[%c14_459, %c2_460, %c0_461], %1069 {strides = array<i32>} : memref<20x20x128xf32, #tpu.memory_space<vmem>>, vector<4x16x128xf32>,
    %1071 = vector.shape_cast %1068 : vector<64x128xf32> to vector<4x16x128xf32>
    %c14_462 = arith.constant 14 : index
    %c2_463 = arith.constant 2 : index
    %c0_464 = arith.constant 0 : index
    %1072 = vector.load %arg9[%c14_462, %c2_463, %c0_464] : memref<20x20x128xf32, #tpu.memory_space<vmem>>, vector<4x16x128xf32>
    tpu.vector_store %arg9[%c14_462, %c2_463, %c0_464], %1071 {strides = array<i32>} : memref<20x20x128xf32, #tpu.memory_space<vmem>>, vector<4x16x128xf32>,
    %1073 = vector.extract_strided_slice %22 {offsets = [1, 0], sizes = [1, 128], strides = [1, 1]} : vector<8x128xf32> to vector<1x128xf32>
    %1074 = vector.extract_strided_slice %22 {offsets = [2, 0], sizes = [1, 128], strides = [1, 1]} : vector<8x128xf32> to vector<1x128xf32>
    %1075 = vector.extract_strided_slice %22 {offsets = [3, 0], sizes = [1, 128], strides = [1, 1]} : vector<8x128xf32> to vector<1x128xf32>
    %1076 = vector.extract_strided_slice %22 {offsets = [4, 0], sizes = [1, 128], strides = [1, 1]} : vector<8x128xf32> to vector<1x128xf32>
    %1077 = vector.extract_strided_slice %22 {offsets = [5, 0], sizes = [1, 128], strides = [1, 1]} : vector<8x128xf32> to vector<1x128xf32>
    %1078 = vector.extract_strided_slice %22 {offsets = [6, 0], sizes = [1, 128], strides = [1, 1]} : vector<8x128xf32> to vector<1x128xf32>
    %c0_465 = arith.constant 0 : index
    %c0_466 = arith.constant 0 : index
    %c0_467 = arith.constant 0 : index
    %c0_468 = arith.constant 0 : index
    %1079 = vector.load %arg3[%c0_465, %c0_466, %c0_467, %c0_468] : memref<2x3x3x128xf32, #tpu.memory_space<vmem>>, vector<1x3x3x128xf32>
    %1080 = vector.shape_cast %1079 : vector<1x3x3x128xf32> to vector<3x3x128xf32>
    %cst_469 = arith.constant 0.000000e+00 : f32
    %1081 = vector.broadcast %cst_469 : f32 to vector<4x16x128xf32>
    %c1_470 = arith.constant 1 : index
    %c1_471 = arith.constant 1 : index
    %c0_472 = arith.constant 0 : index
    %1082 = vector.load %arg8[%c1_470, %c1_471, %c0_472] : memref<20x20x128xf32, #tpu.memory_space<vmem>>, vector<6x16x128xf32>
    %1083 = vector.extract_strided_slice %1080 {offsets = [0, 0, 0], sizes = [1, 1, 128], strides = [1, 1, 1]} : vector<3x3x128xf32> to vector<1x1x128xf32>
    %1084 = vector.extract_strided_slice %1082 {offsets = [0, 0, 0], sizes = [4, 16, 128], strides = [1, 1, 1]} : vector<6x16x128xf32> to vector<4x16x128xf32>
    %1085 = vector.broadcast %1083 : vector<1x1x128xf32> to vector<4x16x128xf32>
    %1086 = arith.mulf %1085, %1084 : vector<4x16x128xf32>
    %1087 = arith.addf %1081, %1086 : vector<4x16x128xf32>
    %1088 = vector.extract_strided_slice %1080 {offsets = [1, 0, 0], sizes = [1, 1, 128], strides = [1, 1, 1]} : vector<3x3x128xf32> to vector<1x1x128xf32>
    %1089 = vector.extract_strided_slice %1082 {offsets = [1, 0, 0], sizes = [4, 16, 128], strides = [1, 1, 1]} : vector<6x16x128xf32> to vector<4x16x128xf32>
    %1090 = vector.broadcast %1088 : vector<1x1x128xf32> to vector<4x16x128xf32>
    %1091 = arith.mulf %1090, %1089 : vector<4x16x128xf32>
    %1092 = arith.addf %1087, %1091 : vector<4x16x128xf32>
    %1093 = vector.extract_strided_slice %1080 {offsets = [2, 0, 0], sizes = [1, 1, 128], strides = [1, 1, 1]} : vector<3x3x128xf32> to vector<1x1x128xf32>
    %1094 = vector.extract_strided_slice %1082 {offsets = [2, 0, 0], sizes = [4, 16, 128], strides = [1, 1, 1]} : vector<6x16x128xf32> to vector<4x16x128xf32>
    %1095 = vector.broadcast %1093 : vector<1x1x128xf32> to vector<4x16x128xf32>
    %1096 = arith.mulf %1095, %1094 : vector<4x16x128xf32>
    %1097 = arith.addf %1092, %1096 : vector<4x16x128xf32>
    %c1_473 = arith.constant 1 : index
    %c2_474 = arith.constant 2 : index
    %c0_475 = arith.constant 0 : index
    %1098 = vector.load %arg8[%c1_473, %c2_474, %c0_475] : memref<20x20x128xf32, #tpu.memory_space<vmem>>, vector<6x16x128xf32>
    %1099 = vector.extract_strided_slice %1080 {offsets = [0, 1, 0], sizes = [1, 1, 128], strides = [1, 1, 1]} : vector<3x3x128xf32> to vector<1x1x128xf32>
    %1100 = vector.extract_strided_slice %1098 {offsets = [0, 0, 0], sizes = [4, 16, 128], strides = [1, 1, 1]} : vector<6x16x128xf32> to vector<4x16x128xf32>
    %1101 = vector.broadcast %1099 : vector<1x1x128xf32> to vector<4x16x128xf32>
    %1102 = arith.mulf %1101, %1100 : vector<4x16x128xf32>
    %1103 = arith.addf %1097, %1102 : vector<4x16x128xf32>
    %1104 = vector.extract_strided_slice %1080 {offsets = [1, 1, 0], sizes = [1, 1, 128], strides = [1, 1, 1]} : vector<3x3x128xf32> to vector<1x1x128xf32>
    %1105 = vector.extract_strided_slice %1098 {offsets = [1, 0, 0], sizes = [4, 16, 128], strides = [1, 1, 1]} : vector<6x16x128xf32> to vector<4x16x128xf32>
    %1106 = vector.broadcast %1104 : vector<1x1x128xf32> to vector<4x16x128xf32>
    %1107 = arith.mulf %1106, %1105 : vector<4x16x128xf32>
    %1108 = arith.addf %1103, %1107 : vector<4x16x128xf32>
    %1109 = vector.extract_strided_slice %1080 {offsets = [2, 1, 0], sizes = [1, 1, 128], strides = [1, 1, 1]} : vector<3x3x128xf32> to vector<1x1x128xf32>
    %1110 = vector.extract_strided_slice %1098 {offsets = [2, 0, 0], sizes = [4, 16, 128], strides = [1, 1, 1]} : vector<6x16x128xf32> to vector<4x16x128xf32>
    %1111 = vector.broadcast %1109 : vector<1x1x128xf32> to vector<4x16x128xf32>
    %1112 = arith.mulf %1111, %1110 : vector<4x16x128xf32>
    %1113 = arith.addf %1108, %1112 : vector<4x16x128xf32>
    %c1_476 = arith.constant 1 : index
    %c3_477 = arith.constant 3 : index
    %c0_478 = arith.constant 0 : index
    %1114 = vector.load %arg8[%c1_476, %c3_477, %c0_478] : memref<20x20x128xf32, #tpu.memory_space<vmem>>, vector<6x16x128xf32>
    %1115 = vector.extract_strided_slice %1080 {offsets = [0, 2, 0], sizes = [1, 1, 128], strides = [1, 1, 1]} : vector<3x3x128xf32> to vector<1x1x128xf32>
    %1116 = vector.extract_strided_slice %1114 {offsets = [0, 0, 0], sizes = [4, 16, 128], strides = [1, 1, 1]} : vector<6x16x128xf32> to vector<4x16x128xf32>
    %1117 = vector.broadcast %1115 : vector<1x1x128xf32> to vector<4x16x128xf32>
    %1118 = arith.mulf %1117, %1116 : vector<4x16x128xf32>
    %1119 = arith.addf %1113, %1118 : vector<4x16x128xf32>
    %1120 = vector.extract_strided_slice %1080 {offsets = [1, 2, 0], sizes = [1, 1, 128], strides = [1, 1, 1]} : vector<3x3x128xf32> to vector<1x1x128xf32>
    %1121 = vector.extract_strided_slice %1114 {offsets = [1, 0, 0], sizes = [4, 16, 128], strides = [1, 1, 1]} : vector<6x16x128xf32> to vector<4x16x128xf32>
    %1122 = vector.broadcast %1120 : vector<1x1x128xf32> to vector<4x16x128xf32>
    %1123 = arith.mulf %1122, %1121 : vector<4x16x128xf32>
    %1124 = arith.addf %1119, %1123 : vector<4x16x128xf32>
    %1125 = vector.extract_strided_slice %1080 {offsets = [2, 2, 0], sizes = [1, 1, 128], strides = [1, 1, 1]} : vector<3x3x128xf32> to vector<1x1x128xf32>
    %1126 = vector.extract_strided_slice %1114 {offsets = [2, 0, 0], sizes = [4, 16, 128], strides = [1, 1, 1]} : vector<6x16x128xf32> to vector<4x16x128xf32>
    %1127 = vector.broadcast %1125 : vector<1x1x128xf32> to vector<4x16x128xf32>
    %1128 = arith.mulf %1127, %1126 : vector<4x16x128xf32>
    %1129 = arith.addf %1124, %1128 : vector<4x16x128xf32>
    %1130 = vector.shape_cast %1073 : vector<1x128xf32> to vector<1x1x128xf32>
    %1131 = vector.broadcast %1130 : vector<1x1x128xf32> to vector<4x16x128xf32>
    %1132 = arith.addf %1129, %1131 : vector<4x16x128xf32>
    %cst_479 = arith.constant dense<0.000000e+00> : vector<4x16xf32>
    %1133 = vector.multi_reduction <add>, %1132, %cst_479 [2] : vector<4x16x128xf32> to vector<4x16xf32>
    %1134 = vector.shape_cast %1133 : vector<4x16xf32> to vector<4x16x1xf32>
    %1135 = arith.mulf %1132, %1132 : vector<4x16x128xf32>
    %cst_480 = arith.constant dense<0.000000e+00> : vector<4x16xf32>
    %1136 = vector.multi_reduction <add>, %1135, %cst_480 [2] : vector<4x16x128xf32> to vector<4x16xf32>
    %1137 = vector.shape_cast %1136 : vector<4x16xf32> to vector<4x16x1xf32>
    %cst_481 = arith.constant 7.812500e-03 : f32
    %1138 = vector.broadcast %cst_481 : f32 to vector<4x16x1xf32>
    %1139 = arith.mulf %1134, %1138 : vector<4x16x1xf32>
    %cst_482 = arith.constant 7.812500e-03 : f32
    %1140 = vector.broadcast %cst_482 : f32 to vector<4x16x1xf32>
    %1141 = arith.mulf %1137, %1140 : vector<4x16x1xf32>
    %1142 = arith.mulf %1139, %1139 : vector<4x16x1xf32>
    %1143 = arith.subf %1141, %1142 : vector<4x16x1xf32>
    %1144 = vector.broadcast %1139 : vector<4x16x1xf32> to vector<4x16x128xf32>
    %1145 = arith.subf %1132, %1144 : vector<4x16x128xf32>
    %cst_483 = arith.constant 9.99999997E-7 : f32
    %1146 = vector.broadcast %cst_483 : f32 to vector<4x16x1xf32>
    %1147 = arith.addf %1143, %1146 : vector<4x16x1xf32>
    %1148 = math.rsqrt %1147 : vector<4x16x1xf32>
    %1149 = vector.broadcast %1148 : vector<4x16x1xf32> to vector<4x16x128xf32>
    %1150 = arith.mulf %1145, %1149 : vector<4x16x128xf32>
    %1151 = vector.shape_cast %1074 : vector<1x128xf32> to vector<1x1x128xf32>
    %1152 = vector.broadcast %1151 : vector<1x1x128xf32> to vector<4x16x128xf32>
    %1153 = arith.mulf %1150, %1152 : vector<4x16x128xf32>
    %1154 = vector.shape_cast %1075 : vector<1x128xf32> to vector<1x1x128xf32>
    %1155 = vector.broadcast %1154 : vector<1x1x128xf32> to vector<4x16x128xf32>
    %1156 = arith.addf %1153, %1155 : vector<4x16x128xf32>
    %c1_484 = arith.constant 1 : index
    %c0_485 = arith.constant 0 : index
    %c0_486 = arith.constant 0 : index
    %c0_487 = arith.constant 0 : index
    %1157 = vector.load %arg3[%c1_484, %c0_485, %c0_486, %c0_487] : memref<2x3x3x128xf32, #tpu.memory_space<vmem>>, vector<1x3x3x128xf32>
    %1158 = vector.shape_cast %1157 : vector<1x3x3x128xf32> to vector<3x3x128xf32>
    %cst_488 = arith.constant 0.000000e+00 : f32
    %1159 = vector.broadcast %cst_488 : f32 to vector<4x16x128xf32>
    %c1_489 = arith.constant 1 : index
    %c1_490 = arith.constant 1 : index
    %c0_491 = arith.constant 0 : index
    %1160 = vector.load %arg9[%c1_489, %c1_490, %c0_491] : memref<20x20x128xf32, #tpu.memory_space<vmem>>, vector<6x16x128xf32>
    %1161 = vector.extract_strided_slice %1158 {offsets = [0, 0, 0], sizes = [1, 1, 128], strides = [1, 1, 1]} : vector<3x3x128xf32> to vector<1x1x128xf32>
    %1162 = vector.extract_strided_slice %1160 {offsets = [0, 0, 0], sizes = [4, 16, 128], strides = [1, 1, 1]} : vector<6x16x128xf32> to vector<4x16x128xf32>
    %1163 = vector.broadcast %1161 : vector<1x1x128xf32> to vector<4x16x128xf32>
    %1164 = arith.mulf %1163, %1162 : vector<4x16x128xf32>
    %1165 = arith.addf %1159, %1164 : vector<4x16x128xf32>
    %1166 = vector.extract_strided_slice %1158 {offsets = [1, 0, 0], sizes = [1, 1, 128], strides = [1, 1, 1]} : vector<3x3x128xf32> to vector<1x1x128xf32>
    %1167 = vector.extract_strided_slice %1160 {offsets = [1, 0, 0], sizes = [4, 16, 128], strides = [1, 1, 1]} : vector<6x16x128xf32> to vector<4x16x128xf32>
    %1168 = vector.broadcast %1166 : vector<1x1x128xf32> to vector<4x16x128xf32>
    %1169 = arith.mulf %1168, %1167 : vector<4x16x128xf32>
    %1170 = arith.addf %1165, %1169 : vector<4x16x128xf32>
    %1171 = vector.extract_strided_slice %1158 {offsets = [2, 0, 0], sizes = [1, 1, 128], strides = [1, 1, 1]} : vector<3x3x128xf32> to vector<1x1x128xf32>
    %1172 = vector.extract_strided_slice %1160 {offsets = [2, 0, 0], sizes = [4, 16, 128], strides = [1, 1, 1]} : vector<6x16x128xf32> to vector<4x16x128xf32>
    %1173 = vector.broadcast %1171 : vector<1x1x128xf32> to vector<4x16x128xf32>
    %1174 = arith.mulf %1173, %1172 : vector<4x16x128xf32>
    %1175 = arith.addf %1170, %1174 : vector<4x16x128xf32>
    %c1_492 = arith.constant 1 : index
    %c2_493 = arith.constant 2 : index
    %c0_494 = arith.constant 0 : index
    %1176 = vector.load %arg9[%c1_492, %c2_493, %c0_494] : memref<20x20x128xf32, #tpu.memory_space<vmem>>, vector<6x16x128xf32>
    %1177 = vector.extract_strided_slice %1158 {offsets = [0, 1, 0], sizes = [1, 1, 128], strides = [1, 1, 1]} : vector<3x3x128xf32> to vector<1x1x128xf32>
    %1178 = vector.extract_strided_slice %1176 {offsets = [0, 0, 0], sizes = [4, 16, 128], strides = [1, 1, 1]} : vector<6x16x128xf32> to vector<4x16x128xf32>
    %1179 = vector.broadcast %1177 : vector<1x1x128xf32> to vector<4x16x128xf32>
    %1180 = arith.mulf %1179, %1178 : vector<4x16x128xf32>
    %1181 = arith.addf %1175, %1180 : vector<4x16x128xf32>
    %1182 = vector.extract_strided_slice %1158 {offsets = [1, 1, 0], sizes = [1, 1, 128], strides = [1, 1, 1]} : vector<3x3x128xf32> to vector<1x1x128xf32>
    %1183 = vector.extract_strided_slice %1176 {offsets = [1, 0, 0], sizes = [4, 16, 128], strides = [1, 1, 1]} : vector<6x16x128xf32> to vector<4x16x128xf32>
    %1184 = vector.broadcast %1182 : vector<1x1x128xf32> to vector<4x16x128xf32>
    %1185 = arith.mulf %1184, %1183 : vector<4x16x128xf32>
    %1186 = arith.addf %1181, %1185 : vector<4x16x128xf32>
    %1187 = vector.extract_strided_slice %1158 {offsets = [2, 1, 0], sizes = [1, 1, 128], strides = [1, 1, 1]} : vector<3x3x128xf32> to vector<1x1x128xf32>
    %1188 = vector.extract_strided_slice %1176 {offsets = [2, 0, 0], sizes = [4, 16, 128], strides = [1, 1, 1]} : vector<6x16x128xf32> to vector<4x16x128xf32>
    %1189 = vector.broadcast %1187 : vector<1x1x128xf32> to vector<4x16x128xf32>
    %1190 = arith.mulf %1189, %1188 : vector<4x16x128xf32>
    %1191 = arith.addf %1186, %1190 : vector<4x16x128xf32>
    %c1_495 = arith.constant 1 : index
    %c3_496 = arith.constant 3 : index
    %c0_497 = arith.constant 0 : index
    %1192 = vector.load %arg9[%c1_495, %c3_496, %c0_497] : memref<20x20x128xf32, #tpu.memory_space<vmem>>, vector<6x16x128xf32>
    %1193 = vector.extract_strided_slice %1158 {offsets = [0, 2, 0], sizes = [1, 1, 128], strides = [1, 1, 1]} : vector<3x3x128xf32> to vector<1x1x128xf32>
    %1194 = vector.extract_strided_slice %1192 {offsets = [0, 0, 0], sizes = [4, 16, 128], strides = [1, 1, 1]} : vector<6x16x128xf32> to vector<4x16x128xf32>
    %1195 = vector.broadcast %1193 : vector<1x1x128xf32> to vector<4x16x128xf32>
    %1196 = arith.mulf %1195, %1194 : vector<4x16x128xf32>
    %1197 = arith.addf %1191, %1196 : vector<4x16x128xf32>
    %1198 = vector.extract_strided_slice %1158 {offsets = [1, 2, 0], sizes = [1, 1, 128], strides = [1, 1, 1]} : vector<3x3x128xf32> to vector<1x1x128xf32>
    %1199 = vector.extract_strided_slice %1192 {offsets = [1, 0, 0], sizes = [4, 16, 128], strides = [1, 1, 1]} : vector<6x16x128xf32> to vector<4x16x128xf32>
    %1200 = vector.broadcast %1198 : vector<1x1x128xf32> to vector<4x16x128xf32>
    %1201 = arith.mulf %1200, %1199 : vector<4x16x128xf32>
    %1202 = arith.addf %1197, %1201 : vector<4x16x128xf32>
    %1203 = vector.extract_strided_slice %1158 {offsets = [2, 2, 0], sizes = [1, 1, 128], strides = [1, 1, 1]} : vector<3x3x128xf32> to vector<1x1x128xf32>
    %1204 = vector.extract_strided_slice %1192 {offsets = [2, 0, 0], sizes = [4, 16, 128], strides = [1, 1, 1]} : vector<6x16x128xf32> to vector<4x16x128xf32>
    %1205 = vector.broadcast %1203 : vector<1x1x128xf32> to vector<4x16x128xf32>
    %1206 = arith.mulf %1205, %1204 : vector<4x16x128xf32>
    %1207 = arith.addf %1202, %1206 : vector<4x16x128xf32>
    %1208 = vector.shape_cast %1076 : vector<1x128xf32> to vector<1x1x128xf32>
    %1209 = vector.broadcast %1208 : vector<1x1x128xf32> to vector<4x16x128xf32>
    %1210 = arith.addf %1207, %1209 : vector<4x16x128xf32>
    %cst_498 = arith.constant dense<0.000000e+00> : vector<4x16xf32>
    %1211 = vector.multi_reduction <add>, %1210, %cst_498 [2] : vector<4x16x128xf32> to vector<4x16xf32>
    %1212 = vector.shape_cast %1211 : vector<4x16xf32> to vector<4x16x1xf32>
    %1213 = arith.mulf %1210, %1210 : vector<4x16x128xf32>
    %cst_499 = arith.constant dense<0.000000e+00> : vector<4x16xf32>
    %1214 = vector.multi_reduction <add>, %1213, %cst_499 [2] : vector<4x16x128xf32> to vector<4x16xf32>
    %1215 = vector.shape_cast %1214 : vector<4x16xf32> to vector<4x16x1xf32>
    %cst_500 = arith.constant 7.812500e-03 : f32
    %1216 = vector.broadcast %cst_500 : f32 to vector<4x16x1xf32>
    %1217 = arith.mulf %1212, %1216 : vector<4x16x1xf32>
    %cst_501 = arith.constant 7.812500e-03 : f32
    %1218 = vector.broadcast %cst_501 : f32 to vector<4x16x1xf32>
    %1219 = arith.mulf %1215, %1218 : vector<4x16x1xf32>
    %1220 = arith.mulf %1217, %1217 : vector<4x16x1xf32>
    %1221 = arith.subf %1219, %1220 : vector<4x16x1xf32>
    %1222 = vector.broadcast %1217 : vector<4x16x1xf32> to vector<4x16x128xf32>
    %1223 = arith.subf %1210, %1222 : vector<4x16x128xf32>
    %cst_502 = arith.constant 9.99999997E-7 : f32
    %1224 = vector.broadcast %cst_502 : f32 to vector<4x16x1xf32>
    %1225 = arith.addf %1221, %1224 : vector<4x16x1xf32>
    %1226 = math.rsqrt %1225 : vector<4x16x1xf32>
    %1227 = vector.broadcast %1226 : vector<4x16x1xf32> to vector<4x16x128xf32>
    %1228 = arith.mulf %1223, %1227 : vector<4x16x128xf32>
    %1229 = vector.shape_cast %1077 : vector<1x128xf32> to vector<1x1x128xf32>
    %1230 = vector.broadcast %1229 : vector<1x1x128xf32> to vector<4x16x128xf32>
    %1231 = arith.mulf %1228, %1230 : vector<4x16x128xf32>
    %1232 = vector.shape_cast %1078 : vector<1x128xf32> to vector<1x1x128xf32>
    %1233 = vector.broadcast %1232 : vector<1x1x128xf32> to vector<4x16x128xf32>
    %1234 = arith.addf %1231, %1233 : vector<4x16x128xf32>
    %1235 = vector.shape_cast %1156 : vector<4x16x128xf32> to vector<64x128xf32>
    %1236 = vector.shape_cast %1234 : vector<4x16x128xf32> to vector<64x128xf32>
    %1237 = tpu.concatenate %1235, %1236 in 1 : vector<64x128xf32>, vector<64x128xf32> -> vector<64x256xf32>
    %c0_503 = arith.constant 0 : index
    %c0_504 = arith.constant 0 : index
    %1238 = vector.load %arg5[%c0_503, %c0_504] : memref<256x128xf32, #tpu.memory_space<vmem>>, vector<256x128xf32>
    %cst_505 = arith.constant dense<0.000000e+00> : vector<64x128xf32>
    %1239 = tpu.matmul %1237, %1238, %cst_505 {dimension_numbers = #tpu.dot_dimension_numbers<[1], [0], [0], [1], [0, 0, 1, 1], [], []>} : vector<64x256xf32>, vector<256x128xf32>, vector<64x128xf32> -> vector<64x128xf32>
    %c0_506 = arith.constant 0 : index
    %c0_507 = arith.constant 0 : index
    %1240 = vector.load %arg6[%c0_506, %c0_507] : memref<1x128xf32, #tpu.memory_space<vmem>>, vector<1x128xf32>
    %1241 = vector.broadcast %1240 : vector<1x128xf32> to vector<64x128xf32>
    %1242 = arith.addf %1239, %1241 : vector<64x128xf32>
    %cst_508 = arith.constant 5.000000e-01 : f32
    %1243 = vector.broadcast %cst_508 : f32 to vector<64x128xf32>
    %1244 = arith.mulf %1243, %1242 : vector<64x128xf32>
    %cst_509 = arith.constant 4.471500e-02 : f32
    %1245 = vector.broadcast %cst_509 : f32 to vector<64x128xf32>
    %1246 = arith.mulf %1245, %1242 : vector<64x128xf32>
    %1247 = arith.mulf %1246, %1242 : vector<64x128xf32>
    %1248 = arith.mulf %1247, %1242 : vector<64x128xf32>
    %1249 = arith.addf %1242, %1248 : vector<64x128xf32>
    %cst_510 = arith.constant 0.797884583 : f32
    %1250 = vector.broadcast %cst_510 : f32 to vector<64x128xf32>
    %1251 = arith.mulf %1250, %1249 : vector<64x128xf32>
    %1252 = math.tanh %1251 : vector<64x128xf32>
    %cst_511 = arith.constant 1.000000e+00 : f32
    %1253 = vector.broadcast %cst_511 : f32 to vector<64x128xf32>
    %1254 = arith.addf %1253, %1252 : vector<64x128xf32>
    %1255 = arith.mulf %1244, %1254 : vector<64x128xf32>
    %1256 = vector.shape_cast %1255 : vector<64x128xf32> to vector<4x16x128xf32>
    %c0_512 = arith.constant 0 : index
    %c0_513 = arith.constant 0 : index
    %c0_514 = arith.constant 0 : index
    %c0_515 = arith.constant 0 : index
    %1257 = vector.load %arg7[%c0_512, %c0_513, %c0_514, %c0_515] : memref<1x16x16x128xf32, #tpu.memory_space<vmem>>, vector<1x4x16x128xf32>
    %1258 = vector.shape_cast %1257 : vector<1x4x16x128xf32> to vector<4x16x128xf32>
    %1259 = vector.shape_cast %1256 : vector<4x16x128xf32> to vector<1x4x16x128xf32>
    tpu.vector_store %arg7[%c0_512, %c0_513, %c0_514, %c0_515], %1259 {strides = array<i32>} : memref<1x16x16x128xf32, #tpu.memory_space<vmem>>, vector<1x4x16x128xf32>,
    %c0_516 = arith.constant 0 : index
    %c0_517 = arith.constant 0 : index
    %c0_518 = arith.constant 0 : index
    %c0_519 = arith.constant 0 : index
    %1260 = vector.load %arg3[%c0_516, %c0_517, %c0_518, %c0_519] : memref<2x3x3x128xf32, #tpu.memory_space<vmem>>, vector<1x3x3x128xf32>
    %1261 = vector.shape_cast %1260 : vector<1x3x3x128xf32> to vector<3x3x128xf32>
    %cst_520 = arith.constant 0.000000e+00 : f32
    %1262 = vector.broadcast %cst_520 : f32 to vector<4x16x128xf32>
    %c5_521 = arith.constant 5 : index
    %c1_522 = arith.constant 1 : index
    %c0_523 = arith.constant 0 : index
    %1263 = vector.load %arg8[%c5_521, %c1_522, %c0_523] : memref<20x20x128xf32, #tpu.memory_space<vmem>>, vector<6x16x128xf32>
    %1264 = vector.extract_strided_slice %1261 {offsets = [0, 0, 0], sizes = [1, 1, 128], strides = [1, 1, 1]} : vector<3x3x128xf32> to vector<1x1x128xf32>
    %1265 = vector.extract_strided_slice %1263 {offsets = [0, 0, 0], sizes = [4, 16, 128], strides = [1, 1, 1]} : vector<6x16x128xf32> to vector<4x16x128xf32>
    %1266 = vector.broadcast %1264 : vector<1x1x128xf32> to vector<4x16x128xf32>
    %1267 = arith.mulf %1266, %1265 : vector<4x16x128xf32>
    %1268 = arith.addf %1262, %1267 : vector<4x16x128xf32>
    %1269 = vector.extract_strided_slice %1261 {offsets = [1, 0, 0], sizes = [1, 1, 128], strides = [1, 1, 1]} : vector<3x3x128xf32> to vector<1x1x128xf32>
    %1270 = vector.extract_strided_slice %1263 {offsets = [1, 0, 0], sizes = [4, 16, 128], strides = [1, 1, 1]} : vector<6x16x128xf32> to vector<4x16x128xf32>
    %1271 = vector.broadcast %1269 : vector<1x1x128xf32> to vector<4x16x128xf32>
    %1272 = arith.mulf %1271, %1270 : vector<4x16x128xf32>
    %1273 = arith.addf %1268, %1272 : vector<4x16x128xf32>
    %1274 = vector.extract_strided_slice %1261 {offsets = [2, 0, 0], sizes = [1, 1, 128], strides = [1, 1, 1]} : vector<3x3x128xf32> to vector<1x1x128xf32>
    %1275 = vector.extract_strided_slice %1263 {offsets = [2, 0, 0], sizes = [4, 16, 128], strides = [1, 1, 1]} : vector<6x16x128xf32> to vector<4x16x128xf32>
    %1276 = vector.broadcast %1274 : vector<1x1x128xf32> to vector<4x16x128xf32>
    %1277 = arith.mulf %1276, %1275 : vector<4x16x128xf32>
    %1278 = arith.addf %1273, %1277 : vector<4x16x128xf32>
    %c5_524 = arith.constant 5 : index
    %c2_525 = arith.constant 2 : index
    %c0_526 = arith.constant 0 : index
    %1279 = vector.load %arg8[%c5_524, %c2_525, %c0_526] : memref<20x20x128xf32, #tpu.memory_space<vmem>>, vector<6x16x128xf32>
    %1280 = vector.extract_strided_slice %1261 {offsets = [0, 1, 0], sizes = [1, 1, 128], strides = [1, 1, 1]} : vector<3x3x128xf32> to vector<1x1x128xf32>
    %1281 = vector.extract_strided_slice %1279 {offsets = [0, 0, 0], sizes = [4, 16, 128], strides = [1, 1, 1]} : vector<6x16x128xf32> to vector<4x16x128xf32>
    %1282 = vector.broadcast %1280 : vector<1x1x128xf32> to vector<4x16x128xf32>
    %1283 = arith.mulf %1282, %1281 : vector<4x16x128xf32>
    %1284 = arith.addf %1278, %1283 : vector<4x16x128xf32>
    %1285 = vector.extract_strided_slice %1261 {offsets = [1, 1, 0], sizes = [1, 1, 128], strides = [1, 1, 1]} : vector<3x3x128xf32> to vector<1x1x128xf32>
    %1286 = vector.extract_strided_slice %1279 {offsets = [1, 0, 0], sizes = [4, 16, 128], strides = [1, 1, 1]} : vector<6x16x128xf32> to vector<4x16x128xf32>
    %1287 = vector.broadcast %1285 : vector<1x1x128xf32> to vector<4x16x128xf32>
    %1288 = arith.mulf %1287, %1286 : vector<4x16x128xf32>
    %1289 = arith.addf %1284, %1288 : vector<4x16x128xf32>
    %1290 = vector.extract_strided_slice %1261 {offsets = [2, 1, 0], sizes = [1, 1, 128], strides = [1, 1, 1]} : vector<3x3x128xf32> to vector<1x1x128xf32>
    %1291 = vector.extract_strided_slice %1279 {offsets = [2, 0, 0], sizes = [4, 16, 128], strides = [1, 1, 1]} : vector<6x16x128xf32> to vector<4x16x128xf32>
    %1292 = vector.broadcast %1290 : vector<1x1x128xf32> to vector<4x16x128xf32>
    %1293 = arith.mulf %1292, %1291 : vector<4x16x128xf32>
    %1294 = arith.addf %1289, %1293 : vector<4x16x128xf32>
    %c5_527 = arith.constant 5 : index
    %c3_528 = arith.constant 3 : index
    %c0_529 = arith.constant 0 : index
    %1295 = vector.load %arg8[%c5_527, %c3_528, %c0_529] : memref<20x20x128xf32, #tpu.memory_space<vmem>>, vector<6x16x128xf32>
    %1296 = vector.extract_strided_slice %1261 {offsets = [0, 2, 0], sizes = [1, 1, 128], strides = [1, 1, 1]} : vector<3x3x128xf32> to vector<1x1x128xf32>
    %1297 = vector.extract_strided_slice %1295 {offsets = [0, 0, 0], sizes = [4, 16, 128], strides = [1, 1, 1]} : vector<6x16x128xf32> to vector<4x16x128xf32>
    %1298 = vector.broadcast %1296 : vector<1x1x128xf32> to vector<4x16x128xf32>
    %1299 = arith.mulf %1298, %1297 : vector<4x16x128xf32>
    %1300 = arith.addf %1294, %1299 : vector<4x16x128xf32>
    %1301 = vector.extract_strided_slice %1261 {offsets = [1, 2, 0], sizes = [1, 1, 128], strides = [1, 1, 1]} : vector<3x3x128xf32> to vector<1x1x128xf32>
    %1302 = vector.extract_strided_slice %1295 {offsets = [1, 0, 0], sizes = [4, 16, 128], strides = [1, 1, 1]} : vector<6x16x128xf32> to vector<4x16x128xf32>
    %1303 = vector.broadcast %1301 : vector<1x1x128xf32> to vector<4x16x128xf32>
    %1304 = arith.mulf %1303, %1302 : vector<4x16x128xf32>
    %1305 = arith.addf %1300, %1304 : vector<4x16x128xf32>
    %1306 = vector.extract_strided_slice %1261 {offsets = [2, 2, 0], sizes = [1, 1, 128], strides = [1, 1, 1]} : vector<3x3x128xf32> to vector<1x1x128xf32>
    %1307 = vector.extract_strided_slice %1295 {offsets = [2, 0, 0], sizes = [4, 16, 128], strides = [1, 1, 1]} : vector<6x16x128xf32> to vector<4x16x128xf32>
    %1308 = vector.broadcast %1306 : vector<1x1x128xf32> to vector<4x16x128xf32>
    %1309 = arith.mulf %1308, %1307 : vector<4x16x128xf32>
    %1310 = arith.addf %1305, %1309 : vector<4x16x128xf32>
    %1311 = vector.shape_cast %1073 : vector<1x128xf32> to vector<1x1x128xf32>
    %1312 = vector.broadcast %1311 : vector<1x1x128xf32> to vector<4x16x128xf32>
    %1313 = arith.addf %1310, %1312 : vector<4x16x128xf32>
    %cst_530 = arith.constant dense<0.000000e+00> : vector<4x16xf32>
    %1314 = vector.multi_reduction <add>, %1313, %cst_530 [2] : vector<4x16x128xf32> to vector<4x16xf32>
    %1315 = vector.shape_cast %1314 : vector<4x16xf32> to vector<4x16x1xf32>
    %1316 = arith.mulf %1313, %1313 : vector<4x16x128xf32>
    %cst_531 = arith.constant dense<0.000000e+00> : vector<4x16xf32>
    %1317 = vector.multi_reduction <add>, %1316, %cst_531 [2] : vector<4x16x128xf32> to vector<4x16xf32>
    %1318 = vector.shape_cast %1317 : vector<4x16xf32> to vector<4x16x1xf32>
    %cst_532 = arith.constant 7.812500e-03 : f32
    %1319 = vector.broadcast %cst_532 : f32 to vector<4x16x1xf32>
    %1320 = arith.mulf %1315, %1319 : vector<4x16x1xf32>
    %cst_533 = arith.constant 7.812500e-03 : f32
    %1321 = vector.broadcast %cst_533 : f32 to vector<4x16x1xf32>
    %1322 = arith.mulf %1318, %1321 : vector<4x16x1xf32>
    %1323 = arith.mulf %1320, %1320 : vector<4x16x1xf32>
    %1324 = arith.subf %1322, %1323 : vector<4x16x1xf32>
    %1325 = vector.broadcast %1320 : vector<4x16x1xf32> to vector<4x16x128xf32>
    %1326 = arith.subf %1313, %1325 : vector<4x16x128xf32>
    %cst_534 = arith.constant 9.99999997E-7 : f32
    %1327 = vector.broadcast %cst_534 : f32 to vector<4x16x1xf32>
    %1328 = arith.addf %1324, %1327 : vector<4x16x1xf32>
    %1329 = math.rsqrt %1328 : vector<4x16x1xf32>
    %1330 = vector.broadcast %1329 : vector<4x16x1xf32> to vector<4x16x128xf32>
    %1331 = arith.mulf %1326, %1330 : vector<4x16x128xf32>
    %1332 = vector.shape_cast %1074 : vector<1x128xf32> to vector<1x1x128xf32>
    %1333 = vector.broadcast %1332 : vector<1x1x128xf32> to vector<4x16x128xf32>
    %1334 = arith.mulf %1331, %1333 : vector<4x16x128xf32>
    %1335 = vector.shape_cast %1075 : vector<1x128xf32> to vector<1x1x128xf32>
    %1336 = vector.broadcast %1335 : vector<1x1x128xf32> to vector<4x16x128xf32>
    %1337 = arith.addf %1334, %1336 : vector<4x16x128xf32>
    %c1_535 = arith.constant 1 : index
    %c0_536 = arith.constant 0 : index
    %c0_537 = arith.constant 0 : index
    %c0_538 = arith.constant 0 : index
    %1338 = vector.load %arg3[%c1_535, %c0_536, %c0_537, %c0_538] : memref<2x3x3x128xf32, #tpu.memory_space<vmem>>, vector<1x3x3x128xf32>
    %1339 = vector.shape_cast %1338 : vector<1x3x3x128xf32> to vector<3x3x128xf32>
    %cst_539 = arith.constant 0.000000e+00 : f32
    %1340 = vector.broadcast %cst_539 : f32 to vector<4x16x128xf32>
    %c5_540 = arith.constant 5 : index
    %c1_541 = arith.constant 1 : index
    %c0_542 = arith.constant 0 : index
    %1341 = vector.load %arg9[%c5_540, %c1_541, %c0_542] : memref<20x20x128xf32, #tpu.memory_space<vmem>>, vector<6x16x128xf32>
    %1342 = vector.extract_strided_slice %1339 {offsets = [0, 0, 0], sizes = [1, 1, 128], strides = [1, 1, 1]} : vector<3x3x128xf32> to vector<1x1x128xf32>
    %1343 = vector.extract_strided_slice %1341 {offsets = [0, 0, 0], sizes = [4, 16, 128], strides = [1, 1, 1]} : vector<6x16x128xf32> to vector<4x16x128xf32>
    %1344 = vector.broadcast %1342 : vector<1x1x128xf32> to vector<4x16x128xf32>
    %1345 = arith.mulf %1344, %1343 : vector<4x16x128xf32>
    %1346 = arith.addf %1340, %1345 : vector<4x16x128xf32>
    %1347 = vector.extract_strided_slice %1339 {offsets = [1, 0, 0], sizes = [1, 1, 128], strides = [1, 1, 1]} : vector<3x3x128xf32> to vector<1x1x128xf32>
    %1348 = vector.extract_strided_slice %1341 {offsets = [1, 0, 0], sizes = [4, 16, 128], strides = [1, 1, 1]} : vector<6x16x128xf32> to vector<4x16x128xf32>
    %1349 = vector.broadcast %1347 : vector<1x1x128xf32> to vector<4x16x128xf32>
    %1350 = arith.mulf %1349, %1348 : vector<4x16x128xf32>
    %1351 = arith.addf %1346, %1350 : vector<4x16x128xf32>
    %1352 = vector.extract_strided_slice %1339 {offsets = [2, 0, 0], sizes = [1, 1, 128], strides = [1, 1, 1]} : vector<3x3x128xf32> to vector<1x1x128xf32>
    %1353 = vector.extract_strided_slice %1341 {offsets = [2, 0, 0], sizes = [4, 16, 128], strides = [1, 1, 1]} : vector<6x16x128xf32> to vector<4x16x128xf32>
    %1354 = vector.broadcast %1352 : vector<1x1x128xf32> to vector<4x16x128xf32>
    %1355 = arith.mulf %1354, %1353 : vector<4x16x128xf32>
    %1356 = arith.addf %1351, %1355 : vector<4x16x128xf32>
    %c5_543 = arith.constant 5 : index
    %c2_544 = arith.constant 2 : index
    %c0_545 = arith.constant 0 : index
    %1357 = vector.load %arg9[%c5_543, %c2_544, %c0_545] : memref<20x20x128xf32, #tpu.memory_space<vmem>>, vector<6x16x128xf32>
    %1358 = vector.extract_strided_slice %1339 {offsets = [0, 1, 0], sizes = [1, 1, 128], strides = [1, 1, 1]} : vector<3x3x128xf32> to vector<1x1x128xf32>
    %1359 = vector.extract_strided_slice %1357 {offsets = [0, 0, 0], sizes = [4, 16, 128], strides = [1, 1, 1]} : vector<6x16x128xf32> to vector<4x16x128xf32>
    %1360 = vector.broadcast %1358 : vector<1x1x128xf32> to vector<4x16x128xf32>
    %1361 = arith.mulf %1360, %1359 : vector<4x16x128xf32>
    %1362 = arith.addf %1356, %1361 : vector<4x16x128xf32>
    %1363 = vector.extract_strided_slice %1339 {offsets = [1, 1, 0], sizes = [1, 1, 128], strides = [1, 1, 1]} : vector<3x3x128xf32> to vector<1x1x128xf32>
    %1364 = vector.extract_strided_slice %1357 {offsets = [1, 0, 0], sizes = [4, 16, 128], strides = [1, 1, 1]} : vector<6x16x128xf32> to vector<4x16x128xf32>
    %1365 = vector.broadcast %1363 : vector<1x1x128xf32> to vector<4x16x128xf32>
    %1366 = arith.mulf %1365, %1364 : vector<4x16x128xf32>
    %1367 = arith.addf %1362, %1366 : vector<4x16x128xf32>
    %1368 = vector.extract_strided_slice %1339 {offsets = [2, 1, 0], sizes = [1, 1, 128], strides = [1, 1, 1]} : vector<3x3x128xf32> to vector<1x1x128xf32>
    %1369 = vector.extract_strided_slice %1357 {offsets = [2, 0, 0], sizes = [4, 16, 128], strides = [1, 1, 1]} : vector<6x16x128xf32> to vector<4x16x128xf32>
    %1370 = vector.broadcast %1368 : vector<1x1x128xf32> to vector<4x16x128xf32>
    %1371 = arith.mulf %1370, %1369 : vector<4x16x128xf32>
    %1372 = arith.addf %1367, %1371 : vector<4x16x128xf32>
    %c5_546 = arith.constant 5 : index
    %c3_547 = arith.constant 3 : index
    %c0_548 = arith.constant 0 : index
    %1373 = vector.load %arg9[%c5_546, %c3_547, %c0_548] : memref<20x20x128xf32, #tpu.memory_space<vmem>>, vector<6x16x128xf32>
    %1374 = vector.extract_strided_slice %1339 {offsets = [0, 2, 0], sizes = [1, 1, 128], strides = [1, 1, 1]} : vector<3x3x128xf32> to vector<1x1x128xf32>
    %1375 = vector.extract_strided_slice %1373 {offsets = [0, 0, 0], sizes = [4, 16, 128], strides = [1, 1, 1]} : vector<6x16x128xf32> to vector<4x16x128xf32>
    %1376 = vector.broadcast %1374 : vector<1x1x128xf32> to vector<4x16x128xf32>
    %1377 = arith.mulf %1376, %1375 : vector<4x16x128xf32>
    %1378 = arith.addf %1372, %1377 : vector<4x16x128xf32>
    %1379 = vector.extract_strided_slice %1339 {offsets = [1, 2, 0], sizes = [1, 1, 128], strides = [1, 1, 1]} : vector<3x3x128xf32> to vector<1x1x128xf32>
    %1380 = vector.extract_strided_slice %1373 {offsets = [1, 0, 0], sizes = [4, 16, 128], strides = [1, 1, 1]} : vector<6x16x128xf32> to vector<4x16x128xf32>
    %1381 = vector.broadcast %1379 : vector<1x1x128xf32> to vector<4x16x128xf32>
    %1382 = arith.mulf %1381, %1380 : vector<4x16x128xf32>
    %1383 = arith.addf %1378, %1382 : vector<4x16x128xf32>
    %1384 = vector.extract_strided_slice %1339 {offsets = [2, 2, 0], sizes = [1, 1, 128], strides = [1, 1, 1]} : vector<3x3x128xf32> to vector<1x1x128xf32>
    %1385 = vector.extract_strided_slice %1373 {offsets = [2, 0, 0], sizes = [4, 16, 128], strides = [1, 1, 1]} : vector<6x16x128xf32> to vector<4x16x128xf32>
    %1386 = vector.broadcast %1384 : vector<1x1x128xf32> to vector<4x16x128xf32>
    %1387 = arith.mulf %1386, %1385 : vector<4x16x128xf32>
    %1388 = arith.addf %1383, %1387 : vector<4x16x128xf32>
    %1389 = vector.shape_cast %1076 : vector<1x128xf32> to vector<1x1x128xf32>
    %1390 = vector.broadcast %1389 : vector<1x1x128xf32> to vector<4x16x128xf32>
    %1391 = arith.addf %1388, %1390 : vector<4x16x128xf32>
    %cst_549 = arith.constant dense<0.000000e+00> : vector<4x16xf32>
    %1392 = vector.multi_reduction <add>, %1391, %cst_549 [2] : vector<4x16x128xf32> to vector<4x16xf32>
    %1393 = vector.shape_cast %1392 : vector<4x16xf32> to vector<4x16x1xf32>
    %1394 = arith.mulf %1391, %1391 : vector<4x16x128xf32>
    %cst_550 = arith.constant dense<0.000000e+00> : vector<4x16xf32>
    %1395 = vector.multi_reduction <add>, %1394, %cst_550 [2] : vector<4x16x128xf32> to vector<4x16xf32>
    %1396 = vector.shape_cast %1395 : vector<4x16xf32> to vector<4x16x1xf32>
    %cst_551 = arith.constant 7.812500e-03 : f32
    %1397 = vector.broadcast %cst_551 : f32 to vector<4x16x1xf32>
    %1398 = arith.mulf %1393, %1397 : vector<4x16x1xf32>
    %cst_552 = arith.constant 7.812500e-03 : f32
    %1399 = vector.broadcast %cst_552 : f32 to vector<4x16x1xf32>
    %1400 = arith.mulf %1396, %1399 : vector<4x16x1xf32>
    %1401 = arith.mulf %1398, %1398 : vector<4x16x1xf32>
    %1402 = arith.subf %1400, %1401 : vector<4x16x1xf32>
    %1403 = vector.broadcast %1398 : vector<4x16x1xf32> to vector<4x16x128xf32>
    %1404 = arith.subf %1391, %1403 : vector<4x16x128xf32>
    %cst_553 = arith.constant 9.99999997E-7 : f32
    %1405 = vector.broadcast %cst_553 : f32 to vector<4x16x1xf32>
    %1406 = arith.addf %1402, %1405 : vector<4x16x1xf32>
    %1407 = math.rsqrt %1406 : vector<4x16x1xf32>
    %1408 = vector.broadcast %1407 : vector<4x16x1xf32> to vector<4x16x128xf32>
    %1409 = arith.mulf %1404, %1408 : vector<4x16x128xf32>
    %1410 = vector.shape_cast %1077 : vector<1x128xf32> to vector<1x1x128xf32>
    %1411 = vector.broadcast %1410 : vector<1x1x128xf32> to vector<4x16x128xf32>
    %1412 = arith.mulf %1409, %1411 : vector<4x16x128xf32>
    %1413 = vector.shape_cast %1078 : vector<1x128xf32> to vector<1x1x128xf32>
    %1414 = vector.broadcast %1413 : vector<1x1x128xf32> to vector<4x16x128xf32>
    %1415 = arith.addf %1412, %1414 : vector<4x16x128xf32>
    %1416 = vector.shape_cast %1337 : vector<4x16x128xf32> to vector<64x128xf32>
    %1417 = vector.shape_cast %1415 : vector<4x16x128xf32> to vector<64x128xf32>
    %1418 = tpu.concatenate %1416, %1417 in 1 : vector<64x128xf32>, vector<64x128xf32> -> vector<64x256xf32>
    %c0_554 = arith.constant 0 : index
    %c0_555 = arith.constant 0 : index
    %1419 = vector.load %arg5[%c0_554, %c0_555] : memref<256x128xf32, #tpu.memory_space<vmem>>, vector<256x128xf32>
    %cst_556 = arith.constant dense<0.000000e+00> : vector<64x128xf32>
    %1420 = tpu.matmul %1418, %1419, %cst_556 {dimension_numbers = #tpu.dot_dimension_numbers<[1], [0], [0], [1], [0, 0, 1, 1], [], []>} : vector<64x256xf32>, vector<256x128xf32>, vector<64x128xf32> -> vector<64x128xf32>
    %c0_557 = arith.constant 0 : index
    %c0_558 = arith.constant 0 : index
    %1421 = vector.load %arg6[%c0_557, %c0_558] : memref<1x128xf32, #tpu.memory_space<vmem>>, vector<1x128xf32>
    %1422 = vector.broadcast %1421 : vector<1x128xf32> to vector<64x128xf32>
    %1423 = arith.addf %1420, %1422 : vector<64x128xf32>
    %cst_559 = arith.constant 5.000000e-01 : f32
    %1424 = vector.broadcast %cst_559 : f32 to vector<64x128xf32>
    %1425 = arith.mulf %1424, %1423 : vector<64x128xf32>
    %cst_560 = arith.constant 4.471500e-02 : f32
    %1426 = vector.broadcast %cst_560 : f32 to vector<64x128xf32>
    %1427 = arith.mulf %1426, %1423 : vector<64x128xf32>
    %1428 = arith.mulf %1427, %1423 : vector<64x128xf32>
    %1429 = arith.mulf %1428, %1423 : vector<64x128xf32>
    %1430 = arith.addf %1423, %1429 : vector<64x128xf32>
    %cst_561 = arith.constant 0.797884583 : f32
    %1431 = vector.broadcast %cst_561 : f32 to vector<64x128xf32>
    %1432 = arith.mulf %1431, %1430 : vector<64x128xf32>
    %1433 = math.tanh %1432 : vector<64x128xf32>
    %cst_562 = arith.constant 1.000000e+00 : f32
    %1434 = vector.broadcast %cst_562 : f32 to vector<64x128xf32>
    %1435 = arith.addf %1434, %1433 : vector<64x128xf32>
    %1436 = arith.mulf %1425, %1435 : vector<64x128xf32>
    %1437 = vector.shape_cast %1436 : vector<64x128xf32> to vector<4x16x128xf32>
    %c0_563 = arith.constant 0 : index
    %c4_564 = arith.constant 4 : index
    %c0_565 = arith.constant 0 : index
    %c0_566 = arith.constant 0 : index
    %1438 = vector.load %arg7[%c0_563, %c4_564, %c0_565, %c0_566] : memref<1x16x16x128xf32, #tpu.memory_space<vmem>>, vector<1x4x16x128xf32>
    %1439 = vector.shape_cast %1438 : vector<1x4x16x128xf32> to vector<4x16x128xf32>
    %1440 = vector.shape_cast %1437 : vector<4x16x128xf32> to vector<1x4x16x128xf32>
    tpu.vector_store %arg7[%c0_563, %c4_564, %c0_565, %c0_566], %1440 {strides = array<i32>} : memref<1x16x16x128xf32, #tpu.memory_space<vmem>>, vector<1x4x16x128xf32>,
    %c0_567 = arith.constant 0 : index
    %c0_568 = arith.constant 0 : index
    %c0_569 = arith.constant 0 : index
    %c0_570 = arith.constant 0 : index
    %1441 = vector.load %arg3[%c0_567, %c0_568, %c0_569, %c0_570] : memref<2x3x3x128xf32, #tpu.memory_space<vmem>>, vector<1x3x3x128xf32>
    %1442 = vector.shape_cast %1441 : vector<1x3x3x128xf32> to vector<3x3x128xf32>
    %cst_571 = arith.constant 0.000000e+00 : f32
    %1443 = vector.broadcast %cst_571 : f32 to vector<4x16x128xf32>
    %c9_572 = arith.constant 9 : index
    %c1_573 = arith.constant 1 : index
    %c0_574 = arith.constant 0 : index
    %1444 = vector.load %arg8[%c9_572, %c1_573, %c0_574] : memref<20x20x128xf32, #tpu.memory_space<vmem>>, vector<6x16x128xf32>
    %1445 = vector.extract_strided_slice %1442 {offsets = [0, 0, 0], sizes = [1, 1, 128], strides = [1, 1, 1]} : vector<3x3x128xf32> to vector<1x1x128xf32>
    %1446 = vector.extract_strided_slice %1444 {offsets = [0, 0, 0], sizes = [4, 16, 128], strides = [1, 1, 1]} : vector<6x16x128xf32> to vector<4x16x128xf32>
    %1447 = vector.broadcast %1445 : vector<1x1x128xf32> to vector<4x16x128xf32>
    %1448 = arith.mulf %1447, %1446 : vector<4x16x128xf32>
    %1449 = arith.addf %1443, %1448 : vector<4x16x128xf32>
    %1450 = vector.extract_strided_slice %1442 {offsets = [1, 0, 0], sizes = [1, 1, 128], strides = [1, 1, 1]} : vector<3x3x128xf32> to vector<1x1x128xf32>
    %1451 = vector.extract_strided_slice %1444 {offsets = [1, 0, 0], sizes = [4, 16, 128], strides = [1, 1, 1]} : vector<6x16x128xf32> to vector<4x16x128xf32>
    %1452 = vector.broadcast %1450 : vector<1x1x128xf32> to vector<4x16x128xf32>
    %1453 = arith.mulf %1452, %1451 : vector<4x16x128xf32>
    %1454 = arith.addf %1449, %1453 : vector<4x16x128xf32>
    %1455 = vector.extract_strided_slice %1442 {offsets = [2, 0, 0], sizes = [1, 1, 128], strides = [1, 1, 1]} : vector<3x3x128xf32> to vector<1x1x128xf32>
    %1456 = vector.extract_strided_slice %1444 {offsets = [2, 0, 0], sizes = [4, 16, 128], strides = [1, 1, 1]} : vector<6x16x128xf32> to vector<4x16x128xf32>
    %1457 = vector.broadcast %1455 : vector<1x1x128xf32> to vector<4x16x128xf32>
    %1458 = arith.mulf %1457, %1456 : vector<4x16x128xf32>
    %1459 = arith.addf %1454, %1458 : vector<4x16x128xf32>
    %c9_575 = arith.constant 9 : index
    %c2_576 = arith.constant 2 : index
    %c0_577 = arith.constant 0 : index
    %1460 = vector.load %arg8[%c9_575, %c2_576, %c0_577] : memref<20x20x128xf32, #tpu.memory_space<vmem>>, vector<6x16x128xf32>
    %1461 = vector.extract_strided_slice %1442 {offsets = [0, 1, 0], sizes = [1, 1, 128], strides = [1, 1, 1]} : vector<3x3x128xf32> to vector<1x1x128xf32>
    %1462 = vector.extract_strided_slice %1460 {offsets = [0, 0, 0], sizes = [4, 16, 128], strides = [1, 1, 1]} : vector<6x16x128xf32> to vector<4x16x128xf32>
    %1463 = vector.broadcast %1461 : vector<1x1x128xf32> to vector<4x16x128xf32>
    %1464 = arith.mulf %1463, %1462 : vector<4x16x128xf32>
    %1465 = arith.addf %1459, %1464 : vector<4x16x128xf32>
    %1466 = vector.extract_strided_slice %1442 {offsets = [1, 1, 0], sizes = [1, 1, 128], strides = [1, 1, 1]} : vector<3x3x128xf32> to vector<1x1x128xf32>
    %1467 = vector.extract_strided_slice %1460 {offsets = [1, 0, 0], sizes = [4, 16, 128], strides = [1, 1, 1]} : vector<6x16x128xf32> to vector<4x16x128xf32>
    %1468 = vector.broadcast %1466 : vector<1x1x128xf32> to vector<4x16x128xf32>
    %1469 = arith.mulf %1468, %1467 : vector<4x16x128xf32>
    %1470 = arith.addf %1465, %1469 : vector<4x16x128xf32>
    %1471 = vector.extract_strided_slice %1442 {offsets = [2, 1, 0], sizes = [1, 1, 128], strides = [1, 1, 1]} : vector<3x3x128xf32> to vector<1x1x128xf32>
    %1472 = vector.extract_strided_slice %1460 {offsets = [2, 0, 0], sizes = [4, 16, 128], strides = [1, 1, 1]} : vector<6x16x128xf32> to vector<4x16x128xf32>
    %1473 = vector.broadcast %1471 : vector<1x1x128xf32> to vector<4x16x128xf32>
    %1474 = arith.mulf %1473, %1472 : vector<4x16x128xf32>
    %1475 = arith.addf %1470, %1474 : vector<4x16x128xf32>
    %c9_578 = arith.constant 9 : index
    %c3_579 = arith.constant 3 : index
    %c0_580 = arith.constant 0 : index
    %1476 = vector.load %arg8[%c9_578, %c3_579, %c0_580] : memref<20x20x128xf32, #tpu.memory_space<vmem>>, vector<6x16x128xf32>
    %1477 = vector.extract_strided_slice %1442 {offsets = [0, 2, 0], sizes = [1, 1, 128], strides = [1, 1, 1]} : vector<3x3x128xf32> to vector<1x1x128xf32>
    %1478 = vector.extract_strided_slice %1476 {offsets = [0, 0, 0], sizes = [4, 16, 128], strides = [1, 1, 1]} : vector<6x16x128xf32> to vector<4x16x128xf32>
    %1479 = vector.broadcast %1477 : vector<1x1x128xf32> to vector<4x16x128xf32>
    %1480 = arith.mulf %1479, %1478 : vector<4x16x128xf32>
    %1481 = arith.addf %1475, %1480 : vector<4x16x128xf32>
    %1482 = vector.extract_strided_slice %1442 {offsets = [1, 2, 0], sizes = [1, 1, 128], strides = [1, 1, 1]} : vector<3x3x128xf32> to vector<1x1x128xf32>
    %1483 = vector.extract_strided_slice %1476 {offsets = [1, 0, 0], sizes = [4, 16, 128], strides = [1, 1, 1]} : vector<6x16x128xf32> to vector<4x16x128xf32>
    %1484 = vector.broadcast %1482 : vector<1x1x128xf32> to vector<4x16x128xf32>
    %1485 = arith.mulf %1484, %1483 : vector<4x16x128xf32>
    %1486 = arith.addf %1481, %1485 : vector<4x16x128xf32>
    %1487 = vector.extract_strided_slice %1442 {offsets = [2, 2, 0], sizes = [1, 1, 128], strides = [1, 1, 1]} : vector<3x3x128xf32> to vector<1x1x128xf32>
    %1488 = vector.extract_strided_slice %1476 {offsets = [2, 0, 0], sizes = [4, 16, 128], strides = [1, 1, 1]} : vector<6x16x128xf32> to vector<4x16x128xf32>
    %1489 = vector.broadcast %1487 : vector<1x1x128xf32> to vector<4x16x128xf32>
    %1490 = arith.mulf %1489, %1488 : vector<4x16x128xf32>
    %1491 = arith.addf %1486, %1490 : vector<4x16x128xf32>
    %1492 = vector.shape_cast %1073 : vector<1x128xf32> to vector<1x1x128xf32>
    %1493 = vector.broadcast %1492 : vector<1x1x128xf32> to vector<4x16x128xf32>
    %1494 = arith.addf %1491, %1493 : vector<4x16x128xf32>
    %cst_581 = arith.constant dense<0.000000e+00> : vector<4x16xf32>
    %1495 = vector.multi_reduction <add>, %1494, %cst_581 [2] : vector<4x16x128xf32> to vector<4x16xf32>
    %1496 = vector.shape_cast %1495 : vector<4x16xf32> to vector<4x16x1xf32>
    %1497 = arith.mulf %1494, %1494 : vector<4x16x128xf32>
    %cst_582 = arith.constant dense<0.000000e+00> : vector<4x16xf32>
    %1498 = vector.multi_reduction <add>, %1497, %cst_582 [2] : vector<4x16x128xf32> to vector<4x16xf32>
    %1499 = vector.shape_cast %1498 : vector<4x16xf32> to vector<4x16x1xf32>
    %cst_583 = arith.constant 7.812500e-03 : f32
    %1500 = vector.broadcast %cst_583 : f32 to vector<4x16x1xf32>
    %1501 = arith.mulf %1496, %1500 : vector<4x16x1xf32>
    %cst_584 = arith.constant 7.812500e-03 : f32
    %1502 = vector.broadcast %cst_584 : f32 to vector<4x16x1xf32>
    %1503 = arith.mulf %1499, %1502 : vector<4x16x1xf32>
    %1504 = arith.mulf %1501, %1501 : vector<4x16x1xf32>
    %1505 = arith.subf %1503, %1504 : vector<4x16x1xf32>
    %1506 = vector.broadcast %1501 : vector<4x16x1xf32> to vector<4x16x128xf32>
    %1507 = arith.subf %1494, %1506 : vector<4x16x128xf32>
    %cst_585 = arith.constant 9.99999997E-7 : f32
    %1508 = vector.broadcast %cst_585 : f32 to vector<4x16x1xf32>
    %1509 = arith.addf %1505, %1508 : vector<4x16x1xf32>
    %1510 = math.rsqrt %1509 : vector<4x16x1xf32>
    %1511 = vector.broadcast %1510 : vector<4x16x1xf32> to vector<4x16x128xf32>
    %1512 = arith.mulf %1507, %1511 : vector<4x16x128xf32>
    %1513 = vector.shape_cast %1074 : vector<1x128xf32> to vector<1x1x128xf32>
    %1514 = vector.broadcast %1513 : vector<1x1x128xf32> to vector<4x16x128xf32>
    %1515 = arith.mulf %1512, %1514 : vector<4x16x128xf32>
    %1516 = vector.shape_cast %1075 : vector<1x128xf32> to vector<1x1x128xf32>
    %1517 = vector.broadcast %1516 : vector<1x1x128xf32> to vector<4x16x128xf32>
    %1518 = arith.addf %1515, %1517 : vector<4x16x128xf32>
    %c1_586 = arith.constant 1 : index
    %c0_587 = arith.constant 0 : index
    %c0_588 = arith.constant 0 : index
    %c0_589 = arith.constant 0 : index
    %1519 = vector.load %arg3[%c1_586, %c0_587, %c0_588, %c0_589] : memref<2x3x3x128xf32, #tpu.memory_space<vmem>>, vector<1x3x3x128xf32>
    %1520 = vector.shape_cast %1519 : vector<1x3x3x128xf32> to vector<3x3x128xf32>
    %cst_590 = arith.constant 0.000000e+00 : f32
    %1521 = vector.broadcast %cst_590 : f32 to vector<4x16x128xf32>
    %c9_591 = arith.constant 9 : index
    %c1_592 = arith.constant 1 : index
    %c0_593 = arith.constant 0 : index
    %1522 = vector.load %arg9[%c9_591, %c1_592, %c0_593] : memref<20x20x128xf32, #tpu.memory_space<vmem>>, vector<6x16x128xf32>
    %1523 = vector.extract_strided_slice %1520 {offsets = [0, 0, 0], sizes = [1, 1, 128], strides = [1, 1, 1]} : vector<3x3x128xf32> to vector<1x1x128xf32>
    %1524 = vector.extract_strided_slice %1522 {offsets = [0, 0, 0], sizes = [4, 16, 128], strides = [1, 1, 1]} : vector<6x16x128xf32> to vector<4x16x128xf32>
    %1525 = vector.broadcast %1523 : vector<1x1x128xf32> to vector<4x16x128xf32>
    %1526 = arith.mulf %1525, %1524 : vector<4x16x128xf32>
    %1527 = arith.addf %1521, %1526 : vector<4x16x128xf32>
    %1528 = vector.extract_strided_slice %1520 {offsets = [1, 0, 0], sizes = [1, 1, 128], strides = [1, 1, 1]} : vector<3x3x128xf32> to vector<1x1x128xf32>
    %1529 = vector.extract_strided_slice %1522 {offsets = [1, 0, 0], sizes = [4, 16, 128], strides = [1, 1, 1]} : vector<6x16x128xf32> to vector<4x16x128xf32>
    %1530 = vector.broadcast %1528 : vector<1x1x128xf32> to vector<4x16x128xf32>
    %1531 = arith.mulf %1530, %1529 : vector<4x16x128xf32>
    %1532 = arith.addf %1527, %1531 : vector<4x16x128xf32>
    %1533 = vector.extract_strided_slice %1520 {offsets = [2, 0, 0], sizes = [1, 1, 128], strides = [1, 1, 1]} : vector<3x3x128xf32> to vector<1x1x128xf32>
    %1534 = vector.extract_strided_slice %1522 {offsets = [2, 0, 0], sizes = [4, 16, 128], strides = [1, 1, 1]} : vector<6x16x128xf32> to vector<4x16x128xf32>
    %1535 = vector.broadcast %1533 : vector<1x1x128xf32> to vector<4x16x128xf32>
    %1536 = arith.mulf %1535, %1534 : vector<4x16x128xf32>
    %1537 = arith.addf %1532, %1536 : vector<4x16x128xf32>
    %c9_594 = arith.constant 9 : index
    %c2_595 = arith.constant 2 : index
    %c0_596 = arith.constant 0 : index
    %1538 = vector.load %arg9[%c9_594, %c2_595, %c0_596] : memref<20x20x128xf32, #tpu.memory_space<vmem>>, vector<6x16x128xf32>
    %1539 = vector.extract_strided_slice %1520 {offsets = [0, 1, 0], sizes = [1, 1, 128], strides = [1, 1, 1]} : vector<3x3x128xf32> to vector<1x1x128xf32>
    %1540 = vector.extract_strided_slice %1538 {offsets = [0, 0, 0], sizes = [4, 16, 128], strides = [1, 1, 1]} : vector<6x16x128xf32> to vector<4x16x128xf32>
    %1541 = vector.broadcast %1539 : vector<1x1x128xf32> to vector<4x16x128xf32>
    %1542 = arith.mulf %1541, %1540 : vector<4x16x128xf32>
    %1543 = arith.addf %1537, %1542 : vector<4x16x128xf32>
    %1544 = vector.extract_strided_slice %1520 {offsets = [1, 1, 0], sizes = [1, 1, 128], strides = [1, 1, 1]} : vector<3x3x128xf32> to vector<1x1x128xf32>
    %1545 = vector.extract_strided_slice %1538 {offsets = [1, 0, 0], sizes = [4, 16, 128], strides = [1, 1, 1]} : vector<6x16x128xf32> to vector<4x16x128xf32>
    %1546 = vector.broadcast %1544 : vector<1x1x128xf32> to vector<4x16x128xf32>
    %1547 = arith.mulf %1546, %1545 : vector<4x16x128xf32>
    %1548 = arith.addf %1543, %1547 : vector<4x16x128xf32>
    %1549 = vector.extract_strided_slice %1520 {offsets = [2, 1, 0], sizes = [1, 1, 128], strides = [1, 1, 1]} : vector<3x3x128xf32> to vector<1x1x128xf32>
    %1550 = vector.extract_strided_slice %1538 {offsets = [2, 0, 0], sizes = [4, 16, 128], strides = [1, 1, 1]} : vector<6x16x128xf32> to vector<4x16x128xf32>
    %1551 = vector.broadcast %1549 : vector<1x1x128xf32> to vector<4x16x128xf32>
    %1552 = arith.mulf %1551, %1550 : vector<4x16x128xf32>
    %1553 = arith.addf %1548, %1552 : vector<4x16x128xf32>
    %c9_597 = arith.constant 9 : index
    %c3_598 = arith.constant 3 : index
    %c0_599 = arith.constant 0 : index
    %1554 = vector.load %arg9[%c9_597, %c3_598, %c0_599] : memref<20x20x128xf32, #tpu.memory_space<vmem>>, vector<6x16x128xf32>
    %1555 = vector.extract_strided_slice %1520 {offsets = [0, 2, 0], sizes = [1, 1, 128], strides = [1, 1, 1]} : vector<3x3x128xf32> to vector<1x1x128xf32>
    %1556 = vector.extract_strided_slice %1554 {offsets = [0, 0, 0], sizes = [4, 16, 128], strides = [1, 1, 1]} : vector<6x16x128xf32> to vector<4x16x128xf32>
    %1557 = vector.broadcast %1555 : vector<1x1x128xf32> to vector<4x16x128xf32>
    %1558 = arith.mulf %1557, %1556 : vector<4x16x128xf32>
    %1559 = arith.addf %1553, %1558 : vector<4x16x128xf32>
    %1560 = vector.extract_strided_slice %1520 {offsets = [1, 2, 0], sizes = [1, 1, 128], strides = [1, 1, 1]} : vector<3x3x128xf32> to vector<1x1x128xf32>
    %1561 = vector.extract_strided_slice %1554 {offsets = [1, 0, 0], sizes = [4, 16, 128], strides = [1, 1, 1]} : vector<6x16x128xf32> to vector<4x16x128xf32>
    %1562 = vector.broadcast %1560 : vector<1x1x128xf32> to vector<4x16x128xf32>
    %1563 = arith.mulf %1562, %1561 : vector<4x16x128xf32>
    %1564 = arith.addf %1559, %1563 : vector<4x16x128xf32>
    %1565 = vector.extract_strided_slice %1520 {offsets = [2, 2, 0], sizes = [1, 1, 128], strides = [1, 1, 1]} : vector<3x3x128xf32> to vector<1x1x128xf32>
    %1566 = vector.extract_strided_slice %1554 {offsets = [2, 0, 0], sizes = [4, 16, 128], strides = [1, 1, 1]} : vector<6x16x128xf32> to vector<4x16x128xf32>
    %1567 = vector.broadcast %1565 : vector<1x1x128xf32> to vector<4x16x128xf32>
    %1568 = arith.mulf %1567, %1566 : vector<4x16x128xf32>
    %1569 = arith.addf %1564, %1568 : vector<4x16x128xf32>
    %1570 = vector.shape_cast %1076 : vector<1x128xf32> to vector<1x1x128xf32>
    %1571 = vector.broadcast %1570 : vector<1x1x128xf32> to vector<4x16x128xf32>
    %1572 = arith.addf %1569, %1571 : vector<4x16x128xf32>
    %cst_600 = arith.constant dense<0.000000e+00> : vector<4x16xf32>
    %1573 = vector.multi_reduction <add>, %1572, %cst_600 [2] : vector<4x16x128xf32> to vector<4x16xf32>
    %1574 = vector.shape_cast %1573 : vector<4x16xf32> to vector<4x16x1xf32>
    %1575 = arith.mulf %1572, %1572 : vector<4x16x128xf32>
    %cst_601 = arith.constant dense<0.000000e+00> : vector<4x16xf32>
    %1576 = vector.multi_reduction <add>, %1575, %cst_601 [2] : vector<4x16x128xf32> to vector<4x16xf32>
    %1577 = vector.shape_cast %1576 : vector<4x16xf32> to vector<4x16x1xf32>
    %cst_602 = arith.constant 7.812500e-03 : f32
    %1578 = vector.broadcast %cst_602 : f32 to vector<4x16x1xf32>
    %1579 = arith.mulf %1574, %1578 : vector<4x16x1xf32>
    %cst_603 = arith.constant 7.812500e-03 : f32
    %1580 = vector.broadcast %cst_603 : f32 to vector<4x16x1xf32>
    %1581 = arith.mulf %1577, %1580 : vector<4x16x1xf32>
    %1582 = arith.mulf %1579, %1579 : vector<4x16x1xf32>
    %1583 = arith.subf %1581, %1582 : vector<4x16x1xf32>
    %1584 = vector.broadcast %1579 : vector<4x16x1xf32> to vector<4x16x128xf32>
    %1585 = arith.subf %1572, %1584 : vector<4x16x128xf32>
    %cst_604 = arith.constant 9.99999997E-7 : f32
    %1586 = vector.broadcast %cst_604 : f32 to vector<4x16x1xf32>
    %1587 = arith.addf %1583, %1586 : vector<4x16x1xf32>
    %1588 = math.rsqrt %1587 : vector<4x16x1xf32>
    %1589 = vector.broadcast %1588 : vector<4x16x1xf32> to vector<4x16x128xf32>
    %1590 = arith.mulf %1585, %1589 : vector<4x16x128xf32>
    %1591 = vector.shape_cast %1077 : vector<1x128xf32> to vector<1x1x128xf32>
    %1592 = vector.broadcast %1591 : vector<1x1x128xf32> to vector<4x16x128xf32>
    %1593 = arith.mulf %1590, %1592 : vector<4x16x128xf32>
    %1594 = vector.shape_cast %1078 : vector<1x128xf32> to vector<1x1x128xf32>
    %1595 = vector.broadcast %1594 : vector<1x1x128xf32> to vector<4x16x128xf32>
    %1596 = arith.addf %1593, %1595 : vector<4x16x128xf32>
    %1597 = vector.shape_cast %1518 : vector<4x16x128xf32> to vector<64x128xf32>
    %1598 = vector.shape_cast %1596 : vector<4x16x128xf32> to vector<64x128xf32>
    %1599 = tpu.concatenate %1597, %1598 in 1 : vector<64x128xf32>, vector<64x128xf32> -> vector<64x256xf32>
    %c0_605 = arith.constant 0 : index
    %c0_606 = arith.constant 0 : index
    %1600 = vector.load %arg5[%c0_605, %c0_606] : memref<256x128xf32, #tpu.memory_space<vmem>>, vector<256x128xf32>
    %cst_607 = arith.constant dense<0.000000e+00> : vector<64x128xf32>
    %1601 = tpu.matmul %1599, %1600, %cst_607 {dimension_numbers = #tpu.dot_dimension_numbers<[1], [0], [0], [1], [0, 0, 1, 1], [], []>} : vector<64x256xf32>, vector<256x128xf32>, vector<64x128xf32> -> vector<64x128xf32>
    %c0_608 = arith.constant 0 : index
    %c0_609 = arith.constant 0 : index
    %1602 = vector.load %arg6[%c0_608, %c0_609] : memref<1x128xf32, #tpu.memory_space<vmem>>, vector<1x128xf32>
    %1603 = vector.broadcast %1602 : vector<1x128xf32> to vector<64x128xf32>
    %1604 = arith.addf %1601, %1603 : vector<64x128xf32>
    %cst_610 = arith.constant 5.000000e-01 : f32
    %1605 = vector.broadcast %cst_610 : f32 to vector<64x128xf32>
    %1606 = arith.mulf %1605, %1604 : vector<64x128xf32>
    %cst_611 = arith.constant 4.471500e-02 : f32
    %1607 = vector.broadcast %cst_611 : f32 to vector<64x128xf32>
    %1608 = arith.mulf %1607, %1604 : vector<64x128xf32>
    %1609 = arith.mulf %1608, %1604 : vector<64x128xf32>
    %1610 = arith.mulf %1609, %1604 : vector<64x128xf32>
    %1611 = arith.addf %1604, %1610 : vector<64x128xf32>
    %cst_612 = arith.constant 0.797884583 : f32
    %1612 = vector.broadcast %cst_612 : f32 to vector<64x128xf32>
    %1613 = arith.mulf %1612, %1611 : vector<64x128xf32>
    %1614 = math.tanh %1613 : vector<64x128xf32>
    %cst_613 = arith.constant 1.000000e+00 : f32
    %1615 = vector.broadcast %cst_613 : f32 to vector<64x128xf32>
    %1616 = arith.addf %1615, %1614 : vector<64x128xf32>
    %1617 = arith.mulf %1606, %1616 : vector<64x128xf32>
    %1618 = vector.shape_cast %1617 : vector<64x128xf32> to vector<4x16x128xf32>
    %c0_614 = arith.constant 0 : index
    %c8_615 = arith.constant 8 : index
    %c0_616 = arith.constant 0 : index
    %c0_617 = arith.constant 0 : index
    %1619 = vector.load %arg7[%c0_614, %c8_615, %c0_616, %c0_617] : memref<1x16x16x128xf32, #tpu.memory_space<vmem>>, vector<1x4x16x128xf32>
    %1620 = vector.shape_cast %1619 : vector<1x4x16x128xf32> to vector<4x16x128xf32>
    %1621 = vector.shape_cast %1618 : vector<4x16x128xf32> to vector<1x4x16x128xf32>
    tpu.vector_store %arg7[%c0_614, %c8_615, %c0_616, %c0_617], %1621 {strides = array<i32>} : memref<1x16x16x128xf32, #tpu.memory_space<vmem>>, vector<1x4x16x128xf32>,
    %c0_618 = arith.constant 0 : index
    %c0_619 = arith.constant 0 : index
    %c0_620 = arith.constant 0 : index
    %c0_621 = arith.constant 0 : index
    %1622 = vector.load %arg3[%c0_618, %c0_619, %c0_620, %c0_621] : memref<2x3x3x128xf32, #tpu.memory_space<vmem>>, vector<1x3x3x128xf32>
    %1623 = vector.shape_cast %1622 : vector<1x3x3x128xf32> to vector<3x3x128xf32>
    %cst_622 = arith.constant 0.000000e+00 : f32
    %1624 = vector.broadcast %cst_622 : f32 to vector<4x16x128xf32>
    %c13_623 = arith.constant 13 : index
    %c1_624 = arith.constant 1 : index
    %c0_625 = arith.constant 0 : index
    %1625 = vector.load %arg8[%c13_623, %c1_624, %c0_625] : memref<20x20x128xf32, #tpu.memory_space<vmem>>, vector<6x16x128xf32>
    %1626 = vector.extract_strided_slice %1623 {offsets = [0, 0, 0], sizes = [1, 1, 128], strides = [1, 1, 1]} : vector<3x3x128xf32> to vector<1x1x128xf32>
    %1627 = vector.extract_strided_slice %1625 {offsets = [0, 0, 0], sizes = [4, 16, 128], strides = [1, 1, 1]} : vector<6x16x128xf32> to vector<4x16x128xf32>
    %1628 = vector.broadcast %1626 : vector<1x1x128xf32> to vector<4x16x128xf32>
    %1629 = arith.mulf %1628, %1627 : vector<4x16x128xf32>
    %1630 = arith.addf %1624, %1629 : vector<4x16x128xf32>
    %1631 = vector.extract_strided_slice %1623 {offsets = [1, 0, 0], sizes = [1, 1, 128], strides = [1, 1, 1]} : vector<3x3x128xf32> to vector<1x1x128xf32>
    %1632 = vector.extract_strided_slice %1625 {offsets = [1, 0, 0], sizes = [4, 16, 128], strides = [1, 1, 1]} : vector<6x16x128xf32> to vector<4x16x128xf32>
    %1633 = vector.broadcast %1631 : vector<1x1x128xf32> to vector<4x16x128xf32>
    %1634 = arith.mulf %1633, %1632 : vector<4x16x128xf32>
    %1635 = arith.addf %1630, %1634 : vector<4x16x128xf32>
    %1636 = vector.extract_strided_slice %1623 {offsets = [2, 0, 0], sizes = [1, 1, 128], strides = [1, 1, 1]} : vector<3x3x128xf32> to vector<1x1x128xf32>
    %1637 = vector.extract_strided_slice %1625 {offsets = [2, 0, 0], sizes = [4, 16, 128], strides = [1, 1, 1]} : vector<6x16x128xf32> to vector<4x16x128xf32>
    %1638 = vector.broadcast %1636 : vector<1x1x128xf32> to vector<4x16x128xf32>
    %1639 = arith.mulf %1638, %1637 : vector<4x16x128xf32>
    %1640 = arith.addf %1635, %1639 : vector<4x16x128xf32>
    %c13_626 = arith.constant 13 : index
    %c2_627 = arith.constant 2 : index
    %c0_628 = arith.constant 0 : index
    %1641 = vector.load %arg8[%c13_626, %c2_627, %c0_628] : memref<20x20x128xf32, #tpu.memory_space<vmem>>, vector<6x16x128xf32>
    %1642 = vector.extract_strided_slice %1623 {offsets = [0, 1, 0], sizes = [1, 1, 128], strides = [1, 1, 1]} : vector<3x3x128xf32> to vector<1x1x128xf32>
    %1643 = vector.extract_strided_slice %1641 {offsets = [0, 0, 0], sizes = [4, 16, 128], strides = [1, 1, 1]} : vector<6x16x128xf32> to vector<4x16x128xf32>
    %1644 = vector.broadcast %1642 : vector<1x1x128xf32> to vector<4x16x128xf32>
    %1645 = arith.mulf %1644, %1643 : vector<4x16x128xf32>
    %1646 = arith.addf %1640, %1645 : vector<4x16x128xf32>
    %1647 = vector.extract_strided_slice %1623 {offsets = [1, 1, 0], sizes = [1, 1, 128], strides = [1, 1, 1]} : vector<3x3x128xf32> to vector<1x1x128xf32>
    %1648 = vector.extract_strided_slice %1641 {offsets = [1, 0, 0], sizes = [4, 16, 128], strides = [1, 1, 1]} : vector<6x16x128xf32> to vector<4x16x128xf32>
    %1649 = vector.broadcast %1647 : vector<1x1x128xf32> to vector<4x16x128xf32>
    %1650 = arith.mulf %1649, %1648 : vector<4x16x128xf32>
    %1651 = arith.addf %1646, %1650 : vector<4x16x128xf32>
    %1652 = vector.extract_strided_slice %1623 {offsets = [2, 1, 0], sizes = [1, 1, 128], strides = [1, 1, 1]} : vector<3x3x128xf32> to vector<1x1x128xf32>
    %1653 = vector.extract_strided_slice %1641 {offsets = [2, 0, 0], sizes = [4, 16, 128], strides = [1, 1, 1]} : vector<6x16x128xf32> to vector<4x16x128xf32>
    %1654 = vector.broadcast %1652 : vector<1x1x128xf32> to vector<4x16x128xf32>
    %1655 = arith.mulf %1654, %1653 : vector<4x16x128xf32>
    %1656 = arith.addf %1651, %1655 : vector<4x16x128xf32>
    %c13_629 = arith.constant 13 : index
    %c3_630 = arith.constant 3 : index
    %c0_631 = arith.constant 0 : index
    %1657 = vector.load %arg8[%c13_629, %c3_630, %c0_631] : memref<20x20x128xf32, #tpu.memory_space<vmem>>, vector<6x16x128xf32>
    %1658 = vector.extract_strided_slice %1623 {offsets = [0, 2, 0], sizes = [1, 1, 128], strides = [1, 1, 1]} : vector<3x3x128xf32> to vector<1x1x128xf32>
    %1659 = vector.extract_strided_slice %1657 {offsets = [0, 0, 0], sizes = [4, 16, 128], strides = [1, 1, 1]} : vector<6x16x128xf32> to vector<4x16x128xf32>
    %1660 = vector.broadcast %1658 : vector<1x1x128xf32> to vector<4x16x128xf32>
    %1661 = arith.mulf %1660, %1659 : vector<4x16x128xf32>
    %1662 = arith.addf %1656, %1661 : vector<4x16x128xf32>
    %1663 = vector.extract_strided_slice %1623 {offsets = [1, 2, 0], sizes = [1, 1, 128], strides = [1, 1, 1]} : vector<3x3x128xf32> to vector<1x1x128xf32>
    %1664 = vector.extract_strided_slice %1657 {offsets = [1, 0, 0], sizes = [4, 16, 128], strides = [1, 1, 1]} : vector<6x16x128xf32> to vector<4x16x128xf32>
    %1665 = vector.broadcast %1663 : vector<1x1x128xf32> to vector<4x16x128xf32>
    %1666 = arith.mulf %1665, %1664 : vector<4x16x128xf32>
    %1667 = arith.addf %1662, %1666 : vector<4x16x128xf32>
    %1668 = vector.extract_strided_slice %1623 {offsets = [2, 2, 0], sizes = [1, 1, 128], strides = [1, 1, 1]} : vector<3x3x128xf32> to vector<1x1x128xf32>
    %1669 = vector.extract_strided_slice %1657 {offsets = [2, 0, 0], sizes = [4, 16, 128], strides = [1, 1, 1]} : vector<6x16x128xf32> to vector<4x16x128xf32>
    %1670 = vector.broadcast %1668 : vector<1x1x128xf32> to vector<4x16x128xf32>
    %1671 = arith.mulf %1670, %1669 : vector<4x16x128xf32>
    %1672 = arith.addf %1667, %1671 : vector<4x16x128xf32>
    %1673 = vector.shape_cast %1073 : vector<1x128xf32> to vector<1x1x128xf32>
    %1674 = vector.broadcast %1673 : vector<1x1x128xf32> to vector<4x16x128xf32>
    %1675 = arith.addf %1672, %1674 : vector<4x16x128xf32>
    %cst_632 = arith.constant dense<0.000000e+00> : vector<4x16xf32>
    %1676 = vector.multi_reduction <add>, %1675, %cst_632 [2] : vector<4x16x128xf32> to vector<4x16xf32>
    %1677 = vector.shape_cast %1676 : vector<4x16xf32> to vector<4x16x1xf32>
    %1678 = arith.mulf %1675, %1675 : vector<4x16x128xf32>
    %cst_633 = arith.constant dense<0.000000e+00> : vector<4x16xf32>
    %1679 = vector.multi_reduction <add>, %1678, %cst_633 [2] : vector<4x16x128xf32> to vector<4x16xf32>
    %1680 = vector.shape_cast %1679 : vector<4x16xf32> to vector<4x16x1xf32>
    %cst_634 = arith.constant 7.812500e-03 : f32
    %1681 = vector.broadcast %cst_634 : f32 to vector<4x16x1xf32>
    %1682 = arith.mulf %1677, %1681 : vector<4x16x1xf32>
    %cst_635 = arith.constant 7.812500e-03 : f32
    %1683 = vector.broadcast %cst_635 : f32 to vector<4x16x1xf32>
    %1684 = arith.mulf %1680, %1683 : vector<4x16x1xf32>
    %1685 = arith.mulf %1682, %1682 : vector<4x16x1xf32>
    %1686 = arith.subf %1684, %1685 : vector<4x16x1xf32>
    %1687 = vector.broadcast %1682 : vector<4x16x1xf32> to vector<4x16x128xf32>
    %1688 = arith.subf %1675, %1687 : vector<4x16x128xf32>
    %cst_636 = arith.constant 9.99999997E-7 : f32
    %1689 = vector.broadcast %cst_636 : f32 to vector<4x16x1xf32>
    %1690 = arith.addf %1686, %1689 : vector<4x16x1xf32>
    %1691 = math.rsqrt %1690 : vector<4x16x1xf32>
    %1692 = vector.broadcast %1691 : vector<4x16x1xf32> to vector<4x16x128xf32>
    %1693 = arith.mulf %1688, %1692 : vector<4x16x128xf32>
    %1694 = vector.shape_cast %1074 : vector<1x128xf32> to vector<1x1x128xf32>
    %1695 = vector.broadcast %1694 : vector<1x1x128xf32> to vector<4x16x128xf32>
    %1696 = arith.mulf %1693, %1695 : vector<4x16x128xf32>
    %1697 = vector.shape_cast %1075 : vector<1x128xf32> to vector<1x1x128xf32>
    %1698 = vector.broadcast %1697 : vector<1x1x128xf32> to vector<4x16x128xf32>
    %1699 = arith.addf %1696, %1698 : vector<4x16x128xf32>
    %c1_637 = arith.constant 1 : index
    %c0_638 = arith.constant 0 : index
    %c0_639 = arith.constant 0 : index
    %c0_640 = arith.constant 0 : index
    %1700 = vector.load %arg3[%c1_637, %c0_638, %c0_639, %c0_640] : memref<2x3x3x128xf32, #tpu.memory_space<vmem>>, vector<1x3x3x128xf32>
    %1701 = vector.shape_cast %1700 : vector<1x3x3x128xf32> to vector<3x3x128xf32>
    %cst_641 = arith.constant 0.000000e+00 : f32
    %1702 = vector.broadcast %cst_641 : f32 to vector<4x16x128xf32>
    %c13_642 = arith.constant 13 : index
    %c1_643 = arith.constant 1 : index
    %c0_644 = arith.constant 0 : index
    %1703 = vector.load %arg9[%c13_642, %c1_643, %c0_644] : memref<20x20x128xf32, #tpu.memory_space<vmem>>, vector<6x16x128xf32>
    %1704 = vector.extract_strided_slice %1701 {offsets = [0, 0, 0], sizes = [1, 1, 128], strides = [1, 1, 1]} : vector<3x3x128xf32> to vector<1x1x128xf32>
    %1705 = vector.extract_strided_slice %1703 {offsets = [0, 0, 0], sizes = [4, 16, 128], strides = [1, 1, 1]} : vector<6x16x128xf32> to vector<4x16x128xf32>
    %1706 = vector.broadcast %1704 : vector<1x1x128xf32> to vector<4x16x128xf32>
    %1707 = arith.mulf %1706, %1705 : vector<4x16x128xf32>
    %1708 = arith.addf %1702, %1707 : vector<4x16x128xf32>
    %1709 = vector.extract_strided_slice %1701 {offsets = [1, 0, 0], sizes = [1, 1, 128], strides = [1, 1, 1]} : vector<3x3x128xf32> to vector<1x1x128xf32>
    %1710 = vector.extract_strided_slice %1703 {offsets = [1, 0, 0], sizes = [4, 16, 128], strides = [1, 1, 1]} : vector<6x16x128xf32> to vector<4x16x128xf32>
    %1711 = vector.broadcast %1709 : vector<1x1x128xf32> to vector<4x16x128xf32>
    %1712 = arith.mulf %1711, %1710 : vector<4x16x128xf32>
    %1713 = arith.addf %1708, %1712 : vector<4x16x128xf32>
    %1714 = vector.extract_strided_slice %1701 {offsets = [2, 0, 0], sizes = [1, 1, 128], strides = [1, 1, 1]} : vector<3x3x128xf32> to vector<1x1x128xf32>
    %1715 = vector.extract_strided_slice %1703 {offsets = [2, 0, 0], sizes = [4, 16, 128], strides = [1, 1, 1]} : vector<6x16x128xf32> to vector<4x16x128xf32>
    %1716 = vector.broadcast %1714 : vector<1x1x128xf32> to vector<4x16x128xf32>
    %1717 = arith.mulf %1716, %1715 : vector<4x16x128xf32>
    %1718 = arith.addf %1713, %1717 : vector<4x16x128xf32>
    %c13_645 = arith.constant 13 : index
    %c2_646 = arith.constant 2 : index
    %c0_647 = arith.constant 0 : index
    %1719 = vector.load %arg9[%c13_645, %c2_646, %c0_647] : memref<20x20x128xf32, #tpu.memory_space<vmem>>, vector<6x16x128xf32>
    %1720 = vector.extract_strided_slice %1701 {offsets = [0, 1, 0], sizes = [1, 1, 128], strides = [1, 1, 1]} : vector<3x3x128xf32> to vector<1x1x128xf32>
    %1721 = vector.extract_strided_slice %1719 {offsets = [0, 0, 0], sizes = [4, 16, 128], strides = [1, 1, 1]} : vector<6x16x128xf32> to vector<4x16x128xf32>
    %1722 = vector.broadcast %1720 : vector<1x1x128xf32> to vector<4x16x128xf32>
    %1723 = arith.mulf %1722, %1721 : vector<4x16x128xf32>
    %1724 = arith.addf %1718, %1723 : vector<4x16x128xf32>
    %1725 = vector.extract_strided_slice %1701 {offsets = [1, 1, 0], sizes = [1, 1, 128], strides = [1, 1, 1]} : vector<3x3x128xf32> to vector<1x1x128xf32>
    %1726 = vector.extract_strided_slice %1719 {offsets = [1, 0, 0], sizes = [4, 16, 128], strides = [1, 1, 1]} : vector<6x16x128xf32> to vector<4x16x128xf32>
    %1727 = vector.broadcast %1725 : vector<1x1x128xf32> to vector<4x16x128xf32>
    %1728 = arith.mulf %1727, %1726 : vector<4x16x128xf32>
    %1729 = arith.addf %1724, %1728 : vector<4x16x128xf32>
    %1730 = vector.extract_strided_slice %1701 {offsets = [2, 1, 0], sizes = [1, 1, 128], strides = [1, 1, 1]} : vector<3x3x128xf32> to vector<1x1x128xf32>
    %1731 = vector.extract_strided_slice %1719 {offsets = [2, 0, 0], sizes = [4, 16, 128], strides = [1, 1, 1]} : vector<6x16x128xf32> to vector<4x16x128xf32>
    %1732 = vector.broadcast %1730 : vector<1x1x128xf32> to vector<4x16x128xf32>
    %1733 = arith.mulf %1732, %1731 : vector<4x16x128xf32>
    %1734 = arith.addf %1729, %1733 : vector<4x16x128xf32>
    %c13_648 = arith.constant 13 : index
    %c3_649 = arith.constant 3 : index
    %c0_650 = arith.constant 0 : index
    %1735 = vector.load %arg9[%c13_648, %c3_649, %c0_650] : memref<20x20x128xf32, #tpu.memory_space<vmem>>, vector<6x16x128xf32>
    %1736 = vector.extract_strided_slice %1701 {offsets = [0, 2, 0], sizes = [1, 1, 128], strides = [1, 1, 1]} : vector<3x3x128xf32> to vector<1x1x128xf32>
    %1737 = vector.extract_strided_slice %1735 {offsets = [0, 0, 0], sizes = [4, 16, 128], strides = [1, 1, 1]} : vector<6x16x128xf32> to vector<4x16x128xf32>
    %1738 = vector.broadcast %1736 : vector<1x1x128xf32> to vector<4x16x128xf32>
    %1739 = arith.mulf %1738, %1737 : vector<4x16x128xf32>
    %1740 = arith.addf %1734, %1739 : vector<4x16x128xf32>
    %1741 = vector.extract_strided_slice %1701 {offsets = [1, 2, 0], sizes = [1, 1, 128], strides = [1, 1, 1]} : vector<3x3x128xf32> to vector<1x1x128xf32>
    %1742 = vector.extract_strided_slice %1735 {offsets = [1, 0, 0], sizes = [4, 16, 128], strides = [1, 1, 1]} : vector<6x16x128xf32> to vector<4x16x128xf32>
    %1743 = vector.broadcast %1741 : vector<1x1x128xf32> to vector<4x16x128xf32>
    %1744 = arith.mulf %1743, %1742 : vector<4x16x128xf32>
    %1745 = arith.addf %1740, %1744 : vector<4x16x128xf32>
    %1746 = vector.extract_strided_slice %1701 {offsets = [2, 2, 0], sizes = [1, 1, 128], strides = [1, 1, 1]} : vector<3x3x128xf32> to vector<1x1x128xf32>
    %1747 = vector.extract_strided_slice %1735 {offsets = [2, 0, 0], sizes = [4, 16, 128], strides = [1, 1, 1]} : vector<6x16x128xf32> to vector<4x16x128xf32>
    %1748 = vector.broadcast %1746 : vector<1x1x128xf32> to vector<4x16x128xf32>
    %1749 = arith.mulf %1748, %1747 : vector<4x16x128xf32>
    %1750 = arith.addf %1745, %1749 : vector<4x16x128xf32>
    %1751 = vector.shape_cast %1076 : vector<1x128xf32> to vector<1x1x128xf32>
    %1752 = vector.broadcast %1751 : vector<1x1x128xf32> to vector<4x16x128xf32>
    %1753 = arith.addf %1750, %1752 : vector<4x16x128xf32>
    %cst_651 = arith.constant dense<0.000000e+00> : vector<4x16xf32>
    %1754 = vector.multi_reduction <add>, %1753, %cst_651 [2] : vector<4x16x128xf32> to vector<4x16xf32>
    %1755 = vector.shape_cast %1754 : vector<4x16xf32> to vector<4x16x1xf32>
    %1756 = arith.mulf %1753, %1753 : vector<4x16x128xf32>
    %cst_652 = arith.constant dense<0.000000e+00> : vector<4x16xf32>
    %1757 = vector.multi_reduction <add>, %1756, %cst_652 [2] : vector<4x16x128xf32> to vector<4x16xf32>
    %1758 = vector.shape_cast %1757 : vector<4x16xf32> to vector<4x16x1xf32>
    %cst_653 = arith.constant 7.812500e-03 : f32
    %1759 = vector.broadcast %cst_653 : f32 to vector<4x16x1xf32>
    %1760 = arith.mulf %1755, %1759 : vector<4x16x1xf32>
    %cst_654 = arith.constant 7.812500e-03 : f32
    %1761 = vector.broadcast %cst_654 : f32 to vector<4x16x1xf32>
    %1762 = arith.mulf %1758, %1761 : vector<4x16x1xf32>
    %1763 = arith.mulf %1760, %1760 : vector<4x16x1xf32>
    %1764 = arith.subf %1762, %1763 : vector<4x16x1xf32>
    %1765 = vector.broadcast %1760 : vector<4x16x1xf32> to vector<4x16x128xf32>
    %1766 = arith.subf %1753, %1765 : vector<4x16x128xf32>
    %cst_655 = arith.constant 9.99999997E-7 : f32
    %1767 = vector.broadcast %cst_655 : f32 to vector<4x16x1xf32>
    %1768 = arith.addf %1764, %1767 : vector<4x16x1xf32>
    %1769 = math.rsqrt %1768 : vector<4x16x1xf32>
    %1770 = vector.broadcast %1769 : vector<4x16x1xf32> to vector<4x16x128xf32>
    %1771 = arith.mulf %1766, %1770 : vector<4x16x128xf32>
    %1772 = vector.shape_cast %1077 : vector<1x128xf32> to vector<1x1x128xf32>
    %1773 = vector.broadcast %1772 : vector<1x1x128xf32> to vector<4x16x128xf32>
    %1774 = arith.mulf %1771, %1773 : vector<4x16x128xf32>
    %1775 = vector.shape_cast %1078 : vector<1x128xf32> to vector<1x1x128xf32>
    %1776 = vector.broadcast %1775 : vector<1x1x128xf32> to vector<4x16x128xf32>
    %1777 = arith.addf %1774, %1776 : vector<4x16x128xf32>
    %1778 = vector.shape_cast %1699 : vector<4x16x128xf32> to vector<64x128xf32>
    %1779 = vector.shape_cast %1777 : vector<4x16x128xf32> to vector<64x128xf32>
    %1780 = tpu.concatenate %1778, %1779 in 1 : vector<64x128xf32>, vector<64x128xf32> -> vector<64x256xf32>
    %c0_656 = arith.constant 0 : index
    %c0_657 = arith.constant 0 : index
    %1781 = vector.load %arg5[%c0_656, %c0_657] : memref<256x128xf32, #tpu.memory_space<vmem>>, vector<256x128xf32>
    %cst_658 = arith.constant dense<0.000000e+00> : vector<64x128xf32>
    %1782 = tpu.matmul %1780, %1781, %cst_658 {dimension_numbers = #tpu.dot_dimension_numbers<[1], [0], [0], [1], [0, 0, 1, 1], [], []>} : vector<64x256xf32>, vector<256x128xf32>, vector<64x128xf32> -> vector<64x128xf32>
    %c0_659 = arith.constant 0 : index
    %c0_660 = arith.constant 0 : index
    %1783 = vector.load %arg6[%c0_659, %c0_660] : memref<1x128xf32, #tpu.memory_space<vmem>>, vector<1x128xf32>
    %1784 = vector.broadcast %1783 : vector<1x128xf32> to vector<64x128xf32>
    %1785 = arith.addf %1782, %1784 : vector<64x128xf32>
    %cst_661 = arith.constant 5.000000e-01 : f32
    %1786 = vector.broadcast %cst_661 : f32 to vector<64x128xf32>
    %1787 = arith.mulf %1786, %1785 : vector<64x128xf32>
    %cst_662 = arith.constant 4.471500e-02 : f32
    %1788 = vector.broadcast %cst_662 : f32 to vector<64x128xf32>
    %1789 = arith.mulf %1788, %1785 : vector<64x128xf32>
    %1790 = arith.mulf %1789, %1785 : vector<64x128xf32>
    %1791 = arith.mulf %1790, %1785 : vector<64x128xf32>
    %1792 = arith.addf %1785, %1791 : vector<64x128xf32>
    %cst_663 = arith.constant 0.797884583 : f32
    %1793 = vector.broadcast %cst_663 : f32 to vector<64x128xf32>
    %1794 = arith.mulf %1793, %1792 : vector<64x128xf32>
    %1795 = math.tanh %1794 : vector<64x128xf32>
    %cst_664 = arith.constant 1.000000e+00 : f32
    %1796 = vector.broadcast %cst_664 : f32 to vector<64x128xf32>
    %1797 = arith.addf %1796, %1795 : vector<64x128xf32>
    %1798 = arith.mulf %1787, %1797 : vector<64x128xf32>
    %1799 = vector.shape_cast %1798 : vector<64x128xf32> to vector<4x16x128xf32>
    %c0_665 = arith.constant 0 : index
    %c12_666 = arith.constant 12 : index
    %c0_667 = arith.constant 0 : index
    %c0_668 = arith.constant 0 : index
    %1800 = vector.load %arg7[%c0_665, %c12_666, %c0_667, %c0_668] : memref<1x16x16x128xf32, #tpu.memory_space<vmem>>, vector<1x4x16x128xf32>
    %1801 = vector.shape_cast %1800 : vector<1x4x16x128xf32> to vector<4x16x128xf32>
    %1802 = vector.shape_cast %1799 : vector<4x16x128xf32> to vector<1x4x16x128xf32>
    tpu.vector_store %arg7[%c0_665, %c12_666, %c0_667, %c0_668], %1802 {strides = array<i32>} : memref<1x16x16x128xf32, #tpu.memory_space<vmem>>, vector<1x4x16x128xf32>,
    return
  }
  func.func @transform_0(%arg0: i32) -> (i32, i32, i32, i32) {
    %c0_i32 = arith.constant 0 : i32
    %c0_i32_0 = arith.constant 0 : i32
    %c0_i32_1 = arith.constant 0 : i32
    %c0_i32_2 = arith.constant 0 : i32
    return %arg0, %c0_i32, %c0_i32_0, %c0_i32_1 : i32, i32, i32, i32
  }
  func.func @transform_1(%arg0: i32) -> (i32, i32, i32) {
    %c0_i32 = arith.constant 0 : i32
    %c0_i32_0 = arith.constant 0 : i32
    %c0_i32_1 = arith.constant 0 : i32
    %c0_i32_2 = arith.constant 0 : i32
    return %c0_i32, %c0_i32_0, %c0_i32_1 : i32, i32, i32
  }
  func.func @transform_2(%arg0: i32) -> (i32, i32, i32, i32) {
    %c0_i32 = arith.constant 0 : i32
    %c0_i32_0 = arith.constant 0 : i32
    %c0_i32_1 = arith.constant 0 : i32
    %c0_i32_2 = arith.constant 0 : i32
    %c0_i32_3 = arith.constant 0 : i32
    return %c0_i32, %c0_i32_0, %c0_i32_1, %c0_i32_2 : i32, i32, i32, i32
  }
  func.func @transform_3(%arg0: i32) -> (i32, i32) {
    %c0_i32 = arith.constant 0 : i32
    %c0_i32_0 = arith.constant 0 : i32
    %c0_i32_1 = arith.constant 0 : i32
    return %c0_i32, %c0_i32_0 : i32, i32
  }
  func.func @transform_4(%arg0: i32) -> (i32, i32) {
    %c0_i32 = arith.constant 0 : i32
    %c0_i32_0 = arith.constant 0 : i32
    %c0_i32_1 = arith.constant 0 : i32
    return %c0_i32, %c0_i32_0 : i32, i32
  }
  func.func @transform_5(%arg0: i32) -> (i32, i32) {
    %c0_i32 = arith.constant 0 : i32
    %c0_i32_0 = arith.constant 0 : i32
    %c0_i32_1 = arith.constant 0 : i32
    return %c0_i32, %c0_i32_0 : i32, i32
  }
  func.func @transform_6(%arg0: i32) -> (i32, i32, i32, i32) {
    %c0_i32 = arith.constant 0 : i32
    %c0_i32_0 = arith.constant 0 : i32
    %c0_i32_1 = arith.constant 0 : i32
    %c0_i32_2 = arith.constant 0 : i32
    return %arg0, %c0_i32, %c0_i32_0, %c0_i32_1 : i32, i32, i32, i32
  }
}

</mosaic_0001>

<llo_original>
// kernel: tpu_custom_call.1
$region0: #{tpu_custom_call.1}
  #allocation0 [shape = 'u32[]', space=smem, size = 0x4, offset = 0x4, fixed_abs, tag = 'smem constant byte address 0x4 - core index']
  #allocation1 [shape = 'u32[144,128]{1,0:T(1,128)}', space=vmem, size = 0x12000, scoped, tag = 'internal scratch']
  #allocation2 [shape = 'f32[20,20,128]{2,1,0:T(8,128)}', space=vmem, size = 0x3c000, scoped, tag = 'scratch operand']
  #allocation3 [shape = 'f32[20,20,128]{2,1,0:T(8,128)}', space=vmem, size = 0x3c000, scoped, tag = 'scratch operand']
  %s0 = inlined_call_operand.hbm [shape: f32[2,16,16,128], index: 0, kind: input, shape index: {}]
  %s1 = inlined_call_operand.vmem [shape: f32[5,5,128], index: 1, kind: input, shape index: {}]
  %s2 = inlined_call_operand.vmem [shape: f32[2,3,3,128], index: 2, kind: input, shape index: {}]
  %s3 = inlined_call_operand.vmem [shape: f32[8,128], index: 3, kind: input, shape index: {}]
  %s4 = inlined_call_operand.hbm [shape: f32[256,128], index: 4, kind: input, shape index: {}]
  %s5 = inlined_call_operand.vmem [shape: f32[1,128], index: 5, kind: input, shape index: {}]
  %s6 = inlined_call_operand.hbm [shape: f32[2,16,16,128], index: 6, kind: output, shape index: {}]
  %s7 = sld [smem:[#allocation0]]
  $region65: #{tpu_custom_call.1} parent=0
    _
  %s9 = ssub.s32 1, %s7
  %s10 = scalar_select 0, %s9, %s7
  $region1: #{tpu_custom_call.1} parent=0
    #allocation4 [shape = 'u8[262144]{0}', space=vmem, size = 0x40000, scoped, tag = 'input window, operand 0']
    #allocation5 [shape = 's32[2]{0}', space=sflag, size = 0x8, scoped, tag = 'scoped memory for tpu_custom_call.1']
    #allocation6 [shape = 's32[2]{0}', space=sflag, size = 0x8, scoped, tag = 'scoped memory for tpu_custom_call.1']
    #allocation7 [shape = 'u8[131072]{0}', space=vmem, size = 0x20000, scoped, tag = 'input window, operand 4, single buffered']
    #allocation8 [shape = 's32[1]{0}', space=sflag, size = 0x4, scoped, tag = 'scoped memory for tpu_custom_call.1']
    #allocation9 [shape = 'u8[262144]{0}', space=vmem, size = 0x40000, scoped, tag = 'output window, operand 0']
    %11 = vsyncpa [#allocation5], 0
    %s12 = scalar_lea.sflag [#allocation5], 1
    %13 = vsyncpa %s12, 0
    %14 = vsyncpa [#allocation8], 0
    %15 = vsyncpa [#allocation6], 0
    %s16 = scalar_lea.sflag [#allocation6], 1
    %17 = vsyncpa %s16, 0
    loop: start=0, step=1, limit=4
    $region2: #{tpu_custom_call.1} parent=1 // loop_pre_header
      _
    $region3: #{tpu_custom_call.1} parent=1 // loop_header
      %s19 = sphi 0, %s23
      %p20 = scmp.ge.s32.totalorder %s19, 4
      %s29 = sphi 0, %s31
      %s32 = sphi 0, %s29
      %s33 = sphi 0, %s32
      %s49 = sphi 0, %s33
      %s53 = sphi 0, %s53
      %s55 = sphi 0, %s53
      %s56 = sphi 0, %s55
      %s70 = sphi 0, %s56
      %s74 = sphi 0, %s74
      %s76 = sphi 0, %s74
      %s77 = sphi 0, %s76
      %s91 = sphi 0, %s77
      %s95 = sphi 0, %s95
      %s97 = sphi 0, %s95
      %s98 = sphi 0, %s97
      %s112 = sphi 0, %s98
      %s116 = sphi 0, %s116
      %s118 = sphi 0, %s116
      %s119 = sphi 0, %s118
      %s133 = sphi 0, %s119
      %s137 = sphi 0, %s137
      %s139 = sphi 0, %s137
      %s140 = sphi 0, %s139
      %s154 = sphi 0, %s140
      %s160 = sphi 0, %s162
      %s163 = sphi 0, %s160
      %s164 = sphi 0, %s163
      %s180 = sphi 0, %s164
    $region4: #{tpu_custom_call.1} parent=1 // loop_header_branch
      %22 = sbr.rel (%p20) target = $region8
    $region5: #{tpu_custom_call.1} parent=1 // loop_body
      %s24 = ssub.s32 %s19, 1
      %s25 = ssub.s32 %s19, 2
      %s26 = sadd.s32 %s19, 1
      %s27 = ssub.s32 %s19, %s26
      %p28 = scmp.eq.s32.totalorder %s27, 0
      %s30 = sadd.s32 %s29, 1
      %s31 = scalar_select %p28, %s29, %s30
      %p34 = pneg %p28
      %p35 = scmp.eq.s32.totalorder %s19, 1
      %p36 = por %p34, %p35
      %p37 = scmp.ne.s32.totalorder %s29, %s32
      %p38 = scmp.eq.s32.totalorder %s19, 0
      %p39 = por %p37, %p38
      %p40 = scmp.ne.s32.totalorder %s29, %s32
      %p41 = scmp.eq.s32.totalorder %s24, 1
      %p42 = por %p40, %p41
      %p43 = scmp.ne.s32.totalorder %s32, %s33
      %p44 = scmp.eq.s32.totalorder %s24, 0
      %p45 = por %p43, %p44
      %p46 = scmp.ne.s32.totalorder %s32, %s33
      %p47 = scmp.eq.s32.totalorder %s25, 1
      %p48 = por %p46, %p47
      %p50 = scmp.ne.s32.totalorder %s33, %s49
      %p51 = scmp.eq.s32.totalorder %s25, 0
      %p52 = por %p50, %p51
      %s54 = sadd.s32 %s53, 1
      %p57 = scmp.eq.s32.totalorder %s19, 1
      %p58 = scmp.ne.s32.totalorder %s53, %s55
      %p59 = scmp.eq.s32.totalorder %s19, 0
      %p60 = por %p58, %p59
      %p61 = scmp.ne.s32.totalorder %s53, %s55
      %p62 = scmp.eq.s32.totalorder %s24, 1
      %p63 = por %p61, %p62
      %p64 = scmp.ne.s32.totalorder %s55, %s56
      %p65 = scmp.eq.s32.totalorder %s24, 0
      %p66 = por %p64, %p65
      %p67 = scmp.ne.s32.totalorder %s55, %s56
      %p68 = scmp.eq.s32.totalorder %s25, 1
      %p69 = por %p67, %p68
      %p71 = scmp.ne.s32.totalorder %s56, %s70
      %p72 = scmp.eq.s32.totalorder %s25, 0
      %p73 = por %p71, %p72
      %s75 = sadd.s32 %s74, 1
      %p78 = scmp.eq.s32.totalorder %s19, 1
      %p79 = scmp.ne.s32.totalorder %s74, %s76
      %p80 = scmp.eq.s32.totalorder %s19, 0
      %p81 = por %p79, %p80
      %p82 = scmp.ne.s32.totalorder %s74, %s76
      %p83 = scmp.eq.s32.totalorder %s24, 1
      %p84 = por %p82, %p83
      %p85 = scmp.ne.s32.totalorder %s76, %s77
      %p86 = scmp.eq.s32.totalorder %s24, 0
      %p87 = por %p85, %p86
      %p88 = scmp.ne.s32.totalorder %s76, %s77
      %p89 = scmp.eq.s32.totalorder %s25, 1
      %p90 = por %p88, %p89
      %p92 = scmp.ne.s32.totalorder %s77, %s91
      %p93 = scmp.eq.s32.totalorder %s25, 0
      %p94 = por %p92, %p93
      %s96 = sadd.s32 %s95, 1
      %p99 = scmp.eq.s32.totalorder %s19, 1
      %p100 = scmp.ne.s32.totalorder %s95, %s97
      %p101 = scmp.eq.s32.totalorder %s19, 0
      %p102 = por %p100, %p101
      %p103 = scmp.ne.s32.totalorder %s95, %s97
      %p104 = scmp.eq.s32.totalorder %s24, 1
      %p105 = por %p103, %p104
      %p106 = scmp.ne.s32.totalorder %s97, %s98
      %p107 = scmp.eq.s32.totalorder %s24, 0
      %p108 = por %p106, %p107
      %p109 = scmp.ne.s32.totalorder %s97, %s98
      %p110 = scmp.eq.s32.totalorder %s25, 1
      %p111 = por %p109, %p110
      %p113 = scmp.ne.s32.totalorder %s98, %s112
      %p114 = scmp.eq.s32.totalorder %s25, 0
      %p115 = por %p113, %p114
      %s117 = sadd.s32 %s116, 1
      %p120 = scmp.eq.s32.totalorder %s19, 1
      %p121 = scmp.ne.s32.totalorder %s116, %s118
      %p122 = scmp.eq.s32.totalorder %s19, 0
      %p123 = por %p121, %p122
      %p124 = scmp.ne.s32.totalorder %s116, %s118
      %p125 = scmp.eq.s32.totalorder %s24, 1
      %p126 = por %p124, %p125
      %p127 = scmp.ne.s32.totalorder %s118, %s119
      %p128 = scmp.eq.s32.totalorder %s24, 0
      %p129 = por %p127, %p128
      %p130 = scmp.ne.s32.totalorder %s118, %s119
      %p131 = scmp.eq.s32.totalorder %s25, 1
      %p132 = por %p130, %p131
      %p134 = scmp.ne.s32.totalorder %s119, %s133
      %p135 = scmp.eq.s32.totalorder %s25, 0
      %p136 = por %p134, %p135
      %s138 = sadd.s32 %s137, 1
      %p141 = scmp.eq.s32.totalorder %s19, 1
      %p142 = scmp.ne.s32.totalorder %s137, %s139
      %p143 = scmp.eq.s32.totalorder %s19, 0
      %p144 = por %p142, %p143
      %p145 = scmp.ne.s32.totalorder %s137, %s139
      %p146 = scmp.eq.s32.totalorder %s24, 1
      %p147 = por %p145, %p146
      %p148 = scmp.ne.s32.totalorder %s139, %s140
      %p149 = scmp.eq.s32.totalorder %s24, 0
      %p150 = por %p148, %p149
      %p151 = scmp.ne.s32.totalorder %s139, %s140
      %p152 = scmp.eq.s32.totalorder %s25, 1
      %p153 = por %p151, %p152
      %p155 = scmp.ne.s32.totalorder %s140, %s154
      %p156 = scmp.eq.s32.totalorder %s25, 0
      %p157 = por %p155, %p156
      %s158 = ssub.s32 %s19, %s26
      %p159 = scmp.eq.s32.totalorder %s158, 0
      %s161 = sadd.s32 %s160, 1
      %s162 = scalar_select %p159, %s160, %s161
      %p165 = pneg %p159
      %p166 = scmp.eq.s32.totalorder %s19, 1
      %p167 = por %p165, %p166
      %p168 = scmp.ne.s32.totalorder %s160, %s163
      %p169 = scmp.eq.s32.totalorder %s19, 0
      %p170 = por %p168, %p169
      %p171 = scmp.ne.s32.totalorder %s160, %s163
      %p172 = scmp.eq.s32.totalorder %s24, 1
      %p173 = por %p171, %p172
      %p174 = scmp.ne.s32.totalorder %s163, %s164
      %p175 = scmp.eq.s32.totalorder %s24, 0
      %p176 = por %p174, %p175
      %p177 = scmp.ne.s32.totalorder %s163, %s164
      %p178 = scmp.eq.s32.totalorder %s25, 1
      %p179 = por %p177, %p178
      %p181 = scmp.ne.s32.totalorder %s164, %s180
      %p182 = scmp.eq.s32.totalorder %s25, 0
      %p183 = por %p181, %p182
      %p184 = scmp.le.s32.totalorder 1, %s19
      %p185 = scmp.lt.s32.totalorder %s19, 3
      %p186 = pnand %p184, %p185
      %p187 = pneg %p186
      // Predicated region
      $region9: #{tpu_custom_call.1} parent=5 // pred_check
        _
      $region10: #{tpu_custom_call.1} parent=5 // pred_check_branch
        %189 = sbr.rel (%p186) target = $region12
      $region11: #{tpu_custom_call.1} parent=5 // pred_region
        %s190 = ssub.s32 %s19, 1
        // Predicated region
        $region13: #{tpu_custom_call.1} parent=11 // pred_check
          %p191 = pneg %p66
        $region14: #{tpu_custom_call.1} parent=11 // pred_check_branch
          %193 = sbr.rel (%p191) target = $region16
        $region15: #{tpu_custom_call.1} parent=11 // pred_region
          _
        $region16: #{tpu_custom_call.1} parent=11 // pred_fallthru
          _
        // Predicated region
        $region17: #{tpu_custom_call.1} parent=11 // pred_check
          %p194 = pneg %p87
        $region18: #{tpu_custom_call.1} parent=11 // pred_check_branch
          %196 = sbr.rel (%p194) target = $region20
        $region19: #{tpu_custom_call.1} parent=11 // pred_region
          _
        $region20: #{tpu_custom_call.1} parent=11 // pred_fallthru
          _
        // Predicated region
        $region21: #{tpu_custom_call.1} parent=11 // pred_check
          %p197 = pneg %p108
        $region22: #{tpu_custom_call.1} parent=11 // pred_check_branch
          %199 = sbr.rel (%p197) target = $region24
        $region23: #{tpu_custom_call.1} parent=11 // pred_region
          _
        $region24: #{tpu_custom_call.1} parent=11 // pred_fallthru
          _
        // Predicated region
        $region25: #{tpu_custom_call.1} parent=11 // pred_check
          %p200 = pneg %p129
        $region26: #{tpu_custom_call.1} parent=11 // pred_check_branch
          %202 = sbr.rel (%p200) target = $region28
        $region27: #{tpu_custom_call.1} parent=11 // pred_region
          %s204 = ssub.s32 4096, 4096
          %205 = vsyncadd [#allocation8], %s204
          %s206 = sshll.u32 [#allocation7], 4
          %s207 = int_to_ptr.vmem [resolvable:$true] %s206
          %212 = dma.hbm_to_vmem [thread:$0]  %s4, 4096, %s207, [#allocation8], 128, 128, 8
        $region28: #{tpu_custom_call.1} parent=11 // pred_fallthru
          _
        // Predicated region
        $region29: #{tpu_custom_call.1} parent=11 // pred_check
          %p213 = pneg %p150
        $region30: #{tpu_custom_call.1} parent=11 // pred_check_branch
          %215 = sbr.rel (%p213) target = $region32
        $region31: #{tpu_custom_call.1} parent=11 // pred_region
          _
        $region32: #{tpu_custom_call.1} parent=11 // pred_fallthru
          _
      $region12: #{tpu_custom_call.1} parent=5 // pred_fallthru
        _
      %p216 = scmp.lt.s32.totalorder %s19, 2
      // Predicated region
      $region33: #{tpu_custom_call.1} parent=5 // pred_check
        %p217 = pneg %p216
      $region34: #{tpu_custom_call.1} parent=5 // pred_check_branch
        %219 = sbr.rel (%p217) target = $region36
      $region35: #{tpu_custom_call.1} parent=5 // pred_region
        // Predicated region
        $region37: #{tpu_custom_call.1} parent=35 // pred_check
          %p220 = pneg %p39
        $region38: #{tpu_custom_call.1} parent=35 // pred_check_branch
          %222 = sbr.rel (%p220) target = $region40
        $region39: #{tpu_custom_call.1} parent=35 // pred_region
          %s223 = sand.u32 %s29, 1
          %s224 = scalar_lea.sflag [#allocation5], %s223
          %s225 = sand.u32 %s29, 1
          %s226 = smul.addr %s225, 256
          %s227 = scalar_lea.vmem [#allocation4], %s226
          %s229 = ssub.s32 4096, 4096
          %230 = vsyncadd %s224, %s229
          %s231 = smul.addr %s19, 32
          %s232 = smul.addr %s231, 128
          %s233 = scalar_lea.hbm %s0, %s232
          %s234 = sshll.u32 %s227, 4
          %s235 = int_to_ptr.vmem [resolvable:$true] %s234
          %240 = dma.hbm_to_vmem [thread:$0]  %s233, 4096, %s235, %s224, 128, 128, 8
        $region40: #{tpu_custom_call.1} parent=35 // pred_fallthru
          _
      $region36: #{tpu_custom_call.1} parent=5 // pred_fallthru
        _
      %p241 = scmp.le.s32.totalorder 1, %s19
      %p242 = scmp.lt.s32.totalorder %s19, 3
      %p243 = pnand %p241, %p242
      %p244 = pneg %p243
      // Predicated region
      $region41: #{tpu_custom_call.1} parent=5 // pred_check
        _
      $region42: #{tpu_custom_call.1} parent=5 // pred_check_branch
        %246 = sbr.rel (%p243) target = $region44
      $region43: #{tpu_custom_call.1} parent=5 // pred_region
        %s247 = ssub.s32 %s19, 1
        %s248 = sand.u32 %s32, 1
        %s249 = scalar_lea.sflag [#allocation5], %s248
        %s250 = sand.u32 %s32, 1
        %s251 = smul.addr %s250, 256
        %s252 = scalar_lea.vmem [#allocation4], %s251
        // Predicated region
        $region45: #{tpu_custom_call.1} parent=43 // pred_check
          %p253 = pneg %p45
        $region46: #{tpu_custom_call.1} parent=43 // pred_check_branch
          %255 = sbr.rel (%p253) target = $region48
        $region47: #{tpu_custom_call.1} parent=43 // pred_region
          %256 = dma.done %s249, 4096
        $region48: #{tpu_custom_call.1} parent=43 // pred_fallthru
          _
        // Predicated region
        $region49: #{tpu_custom_call.1} parent=43 // pred_check
          %p257 = pneg %p129
        $region50: #{tpu_custom_call.1} parent=43 // pred_check_branch
          %259 = sbr.rel (%p257) target = $region52
        $region51: #{tpu_custom_call.1} parent=43 // pred_region
          %260 = dma.done [#allocation8], 4096
        $region52: #{tpu_custom_call.1} parent=43 // pred_fallthru
          _
        %s261 = sand.u32 %s32, 1
        %s262 = scalar_lea.sflag [#allocation5], %s261
        %s263 = sand.u32 %s32, 1
        %s264 = smul.addr %s263, 256
        %s265 = scalar_lea.vmem [#allocation4], %s264
        %p266 = pneg %p45
        %p267 = pneg %p42
        %p268 = pneg %p66
        %p269 = pneg %p63
        %p270 = pneg %p87
        %p271 = pneg %p84
        %p272 = pneg %p108
        %p273 = pneg %p105
        %p274 = pneg %p129
        %p275 = pneg %p126
        %p276 = pneg %p150
        %p277 = pneg %p147
        %p278 = pneg %p176
        %p279 = pneg %p173
        %s280 = sand.u32 %s163, 1
        %s281 = scalar_lea.sflag [#allocation6], %s280
        %s282 = sand.u32 %s163, 1
        %s283 = smul.addr %s282, 256
        %s284 = scalar_lea.vmem [#allocation9], %s283
        %285 = vst [vmem:[#allocation2] sm:$0xff] 0.0
        %286 = vst [vmem:[#allocation2 + $0x8] sm:$0xff] 0.0
        %287 = vst [vmem:[#allocation2 + $0x10] sm:$0xf] 0.0
        %288 = vst [vmem:[#allocation2 + $0x18] sm:$0xff] 0.0
        %289 = vst [vmem:[#allocation2 + $0x20] sm:$0xff] 0.0
        %290 = vst [vmem:[#allocation2 + $0x28] sm:$0xf] 0.0
        %s291 = scalar_lea.vmem [#allocation2], 432
        %292 = vst [vmem:[%s291] sm:$0xff] 0.0
        %293 = vst [vmem:[%s291 + $0x8] sm:$0xff] 0.0
        %294 = vst [vmem:[%s291 + $0x10] sm:$0xf] 0.0
        %295 = vst [vmem:[%s291 + $0x18] sm:$0xff] 0.0
        %296 = vst [vmem:[%s291 + $0x20] sm:$0xff] 0.0
        %297 = vst [vmem:[%s291 + $0x28] sm:$0xf] 0.0
        %s298 = scalar_lea.vmem [#allocation2], 48
        %299 = vst [vmem:[%s298] sm:$0x3] 0.0
        %300 = vst [vmem:[%s298 + $0x18] sm:$0x3] 0.0
        %301 = vst [vmem:[%s298 + $0x30] sm:$0x3] 0.0
        %302 = vst [vmem:[%s298 + $0x48] sm:$0x3] 0.0
        %303 = vst [vmem:[%s298 + $0x60] sm:$0x3] 0.0
        %304 = vst [vmem:[%s298 + $0x78] sm:$0x3] 0.0
        %305 = vst [vmem:[%s298 + $0x90] sm:$0x3] 0.0
        %306 = vst [vmem:[%s298 + $0xa8] sm:$0x3] 0.0
        %307 = vst [vmem:[%s298 + $0xc0] sm:$0x3] 0.0
        %308 = vst [vmem:[%s298 + $0xd8] sm:$0x3] 0.0
        %309 = vst [vmem:[%s298 + $0xf0] sm:$0x3] 0.0
        %310 = vst [vmem:[%s298 + $0x108] sm:$0x3] 0.0
        %311 = vst [vmem:[%s298 + $0x120] sm:$0x3] 0.0
        %312 = vst [vmem:[%s298 + $0x138] sm:$0x3] 0.0
        %313 = vst [vmem:[%s298 + $0x150] sm:$0x3] 0.0
        %314 = vst [vmem:[%s298 + $0x168] sm:$0x3] 0.0
        %315 = vst [vmem:[%s298 + $0x12] sm:$0x3] 0.0
        %316 = vst [vmem:[%s298 + $0x2a] sm:$0x3] 0.0
        %317 = vst [vmem:[%s298 + $0x42] sm:$0x3] 0.0
        %318 = vst [vmem:[%s298 + $0x5a] sm:$0x3] 0.0
        %319 = vst [vmem:[%s298 + $0x72] sm:$0x3] 0.0
        %320 = vst [vmem:[%s298 + $0x8a] sm:$0x3] 0.0
        %321 = vst [vmem:[%s298 + $0xa2] sm:$0x3] 0.0
        %322 = vst [vmem:[%s298 + $0xba] sm:$0x3] 0.0
        %323 = vst [vmem:[%s298 + $0xd2] sm:$0x3] 0.0
        %324 = vst [vmem:[%s298 + $0xea] sm:$0x3] 0.0
        %325 = vst [vmem:[%s298 + $0x102] sm:$0x3] 0.0
        %326 = vst [vmem:[%s298 + $0x11a] sm:$0x3] 0.0
        %327 = vst [vmem:[%s298 + $0x132] sm:$0x3] 0.0
        %328 = vst [vmem:[%s298 + $0x14a] sm:$0x3] 0.0
        %329 = vst [vmem:[%s298 + $0x162] sm:$0x3] 0.0
        %330 = vst [vmem:[%s298 + $0x17a] sm:$0x3] 0.0
        %331 = vst [vmem:[#allocation3] sm:$0xff] 0.0
        %332 = vst [vmem:[#allocation3 + $0x8] sm:$0xff] 0.0
        %333 = vst [vmem:[#allocation3 + $0x10] sm:$0xf] 0.0
        %334 = vst [vmem:[#allocation3 + $0x18] sm:$0xff] 0.0
        %335 = vst [vmem:[#allocation3 + $0x20] sm:$0xff] 0.0
        %336 = vst [vmem:[#allocation3 + $0x28] sm:$0xf] 0.0
        %s337 = scalar_lea.vmem [#allocation3], 432
        %338 = vst [vmem:[%s337] sm:$0xff] 0.0
        %339 = vst [vmem:[%s337 + $0x8] sm:$0xff] 0.0
        %340 = vst [vmem:[%s337 + $0x10] sm:$0xf] 0.0
        %341 = vst [vmem:[%s337 + $0x18] sm:$0xff] 0.0
        %342 = vst [vmem:[%s337 + $0x20] sm:$0xff] 0.0
        %343 = vst [vmem:[%s337 + $0x28] sm:$0xf] 0.0
        %s344 = scalar_lea.vmem [#allocation3], 48
        %345 = vst [vmem:[%s344] sm:$0x3] 0.0
        %346 = vst [vmem:[%s344 + $0x18] sm:$0x3] 0.0
        %347 = vst [vmem:[%s344 + $0x30] sm:$0x3] 0.0
        %348 = vst [vmem:[%s344 + $0x48] sm:$0x3] 0.0
        %349 = vst [vmem:[%s344 + $0x60] sm:$0x3] 0.0
        %350 = vst [vmem:[%s344 + $0x78] sm:$0x3] 0.0
        %351 = vst [vmem:[%s344 + $0x90] sm:$0x3] 0.0
        %352 = vst [vmem:[%s344 + $0xa8] sm:$0x3] 0.0
        %353 = vst [vmem:[%s344 + $0xc0] sm:$0x3] 0.0
        %354 = vst [vmem:[%s344 + $0xd8] sm:$0x3] 0.0
        %355 = vst [vmem:[%s344 + $0xf0] sm:$0x3] 0.0
        %356 = vst [vmem:[%s344 + $0x108] sm:$0x3] 0.0
        %357 = vst [vmem:[%s344 + $0x120] sm:$0x3] 0.0
        %358 = vst [vmem:[%s344 + $0x138] sm:$0x3] 0.0
        %359 = vst [vmem:[%s344 + $0x150] sm:$0x3] 0.0
        %360 = vst [vmem:[%s344 + $0x168] sm:$0x3] 0.0
        %361 = vst [vmem:[%s344 + $0x12] sm:$0x3] 0.0
        %362 = vst [vmem:[%s344 + $0x2a] sm:$0x3] 0.0
        %363 = vst [vmem:[%s344 + $0x42] sm:$0x3] 0.0
        %364 = vst [vmem:[%s344 + $0x5a] sm:$0x3] 0.0
        %365 = vst [vmem:[%s344 + $0x72] sm:$0x3] 0.0
        %366 = vst [vmem:[%s344 + $0x8a] sm:$0x3] 0.0
        %367 = vst [vmem:[%s344 + $0xa2] sm:$0x3] 0.0
        %368 = vst [vmem:[%s344 + $0xba] sm:$0x3] 0.0
        %369 = vst [vmem:[%s344 + $0xd2] sm:$0x3] 0.0
        %370 = vst [vmem:[%s344 + $0xea] sm:$0x3] 0.0
        %371 = vst [vmem:[%s344 + $0x102] sm:$0x3] 0.0
        %372 = vst [vmem:[%s344 + $0x11a] sm:$0x3] 0.0
        %373 = vst [vmem:[%s344 + $0x132] sm:$0x3] 0.0
        %374 = vst [vmem:[%s344 + $0x14a] sm:$0x3] 0.0
        %375 = vst [vmem:[%s344 + $0x162] sm:$0x3] 0.0
        %376 = vst [vmem:[%s344 + $0x17a] sm:$0x3] 0.0
        %v377 = vld [vmem:[%s252] sm:$0xff]
        %v378 = vld [vmem:[%s252 + $0x8] sm:$0xff]
        %v379 = vld [vmem:[%s252 + $0x10] sm:$0xff]
        %v380 = vld [vmem:[%s252 + $0x18] sm:$0xff]
        %v381 = vld [vmem:[%s252 + $0x20] sm:$0xff]
        %v382 = vld [vmem:[%s252 + $0x28] sm:$0xff]
        %v383 = vld [vmem:[%s252 + $0x30] sm:$0xff]
        %v384 = vld [vmem:[%s252 + $0x38] sm:$0xff]
        %385 = vst [vmem:[%s298 + $0x2] sm:$0xff] %v377
        %386 = vst [vmem:[%s298 + $0xa] sm:$0xff] %v378
        %387 = vst [vmem:[%s298 + $0x1a] sm:$0xff] %v379
        %388 = vst [vmem:[%s298 + $0x22] sm:$0xff] %v380
        %389 = vst [vmem:[%s298 + $0x32] sm:$0xff] %v381
        %390 = vst [vmem:[%s298 + $0x3a] sm:$0xff] %v382
        %391 = vst [vmem:[%s298 + $0x4a] sm:$0xff] %v383
        %392 = vst [vmem:[%s298 + $0x52] sm:$0xff] %v384
        %s393 = scalar_lea.vmem %s252, 64 [#allocation4]
        %v394 = vld [vmem:[%s393] sm:$0xff]
        %v395 = vld [vmem:[%s393 + $0x8] sm:$0xff]
        %v396 = vld [vmem:[%s393 + $0x10] sm:$0xff]
        %v397 = vld [vmem:[%s393 + $0x18] sm:$0xff]
        %v398 = vld [vmem:[%s393 + $0x20] sm:$0xff]
        %v399 = vld [vmem:[%s393 + $0x28] sm:$0xff]
        %v400 = vld [vmem:[%s393 + $0x30] sm:$0xff]
        %v401 = vld [vmem:[%s393 + $0x38] sm:$0xff]
        %s402 = scalar_lea.vmem [#allocation2], 144
        %403 = vst [vmem:[%s402 + $0x2] sm:$0xff] %v394
        %404 = vst [vmem:[%s402 + $0xa] sm:$0xff] %v395
        %405 = vst [vmem:[%s402 + $0x1a] sm:$0xff] %v396
        %406 = vst [vmem:[%s402 + $0x22] sm:$0xff] %v397
        %407 = vst [vmem:[%s402 + $0x32] sm:$0xff] %v398
        %408 = vst [vmem:[%s402 + $0x3a] sm:$0xff] %v399
        %409 = vst [vmem:[%s402 + $0x4a] sm:$0xff] %v400
        %410 = vst [vmem:[%s402 + $0x52] sm:$0xff] %v401
        %s411 = scalar_lea.vmem %s252, 128 [#allocation4]
        %v412 = vld [vmem:[%s411] sm:$0xff]
        %v413 = vld [vmem:[%s411 + $0x8] sm:$0xff]
        %v414 = vld [vmem:[%s411 + $0x10] sm:$0xff]
        %v415 = vld [vmem:[%s411 + $0x18] sm:$0xff]
        %v416 = vld [vmem:[%s411 + $0x20] sm:$0xff]
        %v417 = vld [vmem:[%s411 + $0x28] sm:$0xff]
        %v418 = vld [vmem:[%s411 + $0x30] sm:$0xff]
        %v419 = vld [vmem:[%s411 + $0x38] sm:$0xff]
        %s420 = scalar_lea.vmem [#allocation2], 240
        %421 = vst [vmem:[%s420 + $0x2] sm:$0xff] %v412
        %422 = vst [vmem:[%s420 + $0xa] sm:$0xff] %v413
        %423 = vst [vmem:[%s420 + $0x1a] sm:$0xff] %v414
        %424 = vst [vmem:[%s420 + $0x22] sm:$0xff] %v415
        %425 = vst [vmem:[%s420 + $0x32] sm:$0xff] %v416
        %426 = vst [vmem:[%s420 + $0x3a] sm:$0xff] %v417
        %427 = vst [vmem:[%s420 + $0x4a] sm:$0xff] %v418
        %428 = vst [vmem:[%s420 + $0x52] sm:$0xff] %v419
        %s429 = scalar_lea.vmem %s252, 192 [#allocation4]
        %v430 = vld [vmem:[%s429] sm:$0xff]
        %v431 = vld [vmem:[%s429 + $0x8] sm:$0xff]
        %v432 = vld [vmem:[%s429 + $0x10] sm:$0xff]
        %v433 = vld [vmem:[%s429 + $0x18] sm:$0xff]
        %v434 = vld [vmem:[%s429 + $0x20] sm:$0xff]
        %v435 = vld [vmem:[%s429 + $0x28] sm:$0xff]
        %v436 = vld [vmem:[%s429 + $0x30] sm:$0xff]
        %v437 = vld [vmem:[%s429 + $0x38] sm:$0xff]
        %s438 = scalar_lea.vmem [#allocation2], 336
        %439 = vst [vmem:[%s438 + $0x2] sm:$0xff] %v430
        %440 = vst [vmem:[%s438 + $0xa] sm:$0xff] %v431
        %441 = vst [vmem:[%s438 + $0x1a] sm:$0xff] %v432
        %442 = vst [vmem:[%s438 + $0x22] sm:$0xff] %v433
        %443 = vst [vmem:[%s438 + $0x32] sm:$0xff] %v434
        %444 = vst [vmem:[%s438 + $0x3a] sm:$0xff] %v435
        %445 = vst [vmem:[%s438 + $0x4a] sm:$0xff] %v436
        %446 = vst [vmem:[%s438 + $0x52] sm:$0xff] %v437
        %v447 = vld [vmem:[%s3] sm:$0xff]
        %v448 = vld [vmem:[%s1] sm:$0x1f]
        %v449 = vld [vmem:[%s1 + $0x8] sm:$0x1f]
        %v450 = vld [vmem:[%s1 + $0x10] sm:$0x1f]
        %v451 = vld [vmem:[%s1 + $0x18] sm:$0x1f]
        %v452 = vld [vmem:[%s1 + $0x20] sm:$0x1f]
        %v453 = vlaneseq
        %v454 = vshrl.u32 %v453, 7
        %v455 = vadd.s32 %v454, 8
        %v456 = vcvt.s32.f32 %v454
        %v457 = vcvt.s32.f32 %v455
        %v458 = vadd.f32 %v456, 0.5
        %v459 = vadd.f32 %v457, 0.5
        %v460 = vmul.f32 %v458, 0.25
        %v461 = vmul.f32 %v459, 0.25
        %v462 = vsub.f32 %v460, 0.5
        %v463 = vsub.f32 %v461, 0.5
        %v464 = vmax.f32 %v462, 0.0
        %v465 = vmax.f32 %v463, 0.0
        %v466 = vmin.f32 %v464, 3.0
        %v467 = vmin.f32 %v465, 3.0
        %v468 = vand.u32 2147483647, %v466
        %v469 = vand.u32 2147483647, %v467
        %v470 = vsub.f32 1.0, %v468
        %v471 = vsub.f32 1.0, %v469
        %v472 = vmax.f32 %v470, 0.0
        %v473 = vmax.f32 %v471, 0.0
        %v474 = vsub.f32 %v466, 1.0
        %v475 = vsub.f32 %v467, 1.0
        %v476 = vand.u32 2147483647, %v474
        %v477 = vand.u32 2147483647, %v475
        %v478 = vsub.f32 1.0, %v476
        %v479 = vsub.f32 1.0, %v477
        %v480 = vmax.f32 %v478, 0.0
        %v481 = vmax.f32 %v479, 0.0
        %v482 = vsub.f32 %v466, 2.0
        %v483 = vsub.f32 %v467, 2.0
        %v484 = vand.u32 2147483647, %v482
        %v485 = vand.u32 2147483647, %v483
        %v486 = vsub.f32 1.0, %v484
        %v487 = vsub.f32 1.0, %v485
        %v488 = vmax.f32 %v486, 0.0
        %v489 = vmax.f32 %v487, 0.0
        %v490 = vsub.f32 %v466, 3.0
        %v491 = vsub.f32 %v467, 3.0
        %v492 = vand.u32 2147483647, %v490
        %v493 = vand.u32 2147483647, %v491
        %v494 = vsub.f32 1.0, %v492
        %v495 = vsub.f32 1.0, %v493
        %v496 = vmax.f32 %v494, 0.0
        %v497 = vmax.f32 %v495, 0.0
        %v498 = vld [vmem:[#allocation2] sm:$0xff]
        %v499 = vld [vmem:[#allocation2 + $0x8] sm:$0xff]
        %v500 = vlaneseq
        %v501 = vshrl.u32 %v500, 7
        %v502 = vsub.s32 0, %v501
        %v503 = vrot.slane %v448, %v502
        %v504 = vmul.f32 %v503, %v498
        %v505 = vmul.f32 %v503, %v499
        %v506 = vadd.f32 %v504, 0.0
        %v507 = vadd.f32 %v505, 0.0
        %v508 = vld [vmem:[#allocation2 + $0x1] sm:$0xff]
        %v509 = vld [vmem:[#allocation2 + $0x9] sm:$0xff]
        %v510 = vlaneseq
        %v511 = vshrl.u32 %v510, 7
        %v512 = vsub.s32 1, %v511
        %v513 = vrot.slane %v448, %v512
        %v514 = vmul.f32 %v513, %v508
        %v515 = vmul.f32 %v513, %v509
        %v516 = vadd.f32 %v506, %v514
        %v517 = vadd.f32 %v507, %v515
        %v518 = vld [vmem:[#allocation2 + $0x2] sm:$0xff]
        %v519 = vld [vmem:[#allocation2 + $0xa] sm:$0xff]
        %v520 = vlaneseq
        %v521 = vshrl.u32 %v520, 7
        %v522 = vsub.s32 2, %v521
        %v523 = vrot.slane %v448, %v522
        %v524 = vmul.f32 %v523, %v518
        %v525 = vmul.f32 %v523, %v519
        %v526 = vadd.f32 %v516, %v524
        %v527 = vadd.f32 %v517, %v525
        %v528 = vld [vmem:[#allocation2 + $0x3] sm:$0xff]
        %v529 = vld [vmem:[#allocation2 + $0xb] sm:$0xff]
        %v530 = vlaneseq
        %v531 = vshrl.u32 %v530, 7
        %v532 = vsub.s32 3, %v531
        %v533 = vrot.slane %v448, %v532
        %v534 = vmul.f32 %v533, %v528
        %v535 = vmul.f32 %v533, %v529
        %v536 = vadd.f32 %v526, %v534
        %v537 = vadd.f32 %v527, %v535
        %v538 = vld [vmem:[#allocation2 + $0x4] sm:$0xff]
        %v539 = vld [vmem:[#allocation2 + $0xc] sm:$0xff]
        %v540 = vlaneseq
        %v541 = vshrl.u32 %v540, 7
        %v542 = vsub.s32 4, %v541
        %v543 = vrot.slane %v448, %v542
        %v544 = vmul.f32 %v543, %v538
        %v545 = vmul.f32 %v543, %v539
        %v546 = vadd.f32 %v536, %v544
        %v547 = vadd.f32 %v537, %v545
        %s548 = scalar_lea.vmem [#allocation2], 24
        %v549 = vld [vmem:[%s548] sm:$0xff]
        %v550 = vld [vmem:[%s548 + $0x8] sm:$0xff]
        %v551 = vlaneseq
        %v552 = vshrl.u32 %v551, 7
        %v553 = vsub.s32 0, %v552
        %v554 = vrot.slane %v449, %v553
        %v555 = vmul.f32 %v554, %v549
        %v556 = vmul.f32 %v554, %v550
        %v557 = vadd.f32 %v546, %v555
        %v558 = vadd.f32 %v547, %v556
        %v559 = vld [vmem:[%s548 + $0x1] sm:$0xff]
        %v560 = vld [vmem:[%s548 + $0x9] sm:$0xff]
        %v561 = vlaneseq
        %v562 = vshrl.u32 %v561, 7
        %v563 = vsub.s32 1, %v562
        %v564 = vrot.slane %v449, %v563
        %v565 = vmul.f32 %v564, %v559
        %v566 = vmul.f32 %v564, %v560
        %v567 = vadd.f32 %v557, %v565
        %v568 = vadd.f32 %v558, %v566
        %v569 = vld [vmem:[%s548 + $0x2] sm:$0xff]
        %v570 = vld [vmem:[%s548 + $0xa] sm:$0xff]
        %v571 = vlaneseq
        %v572 = vshrl.u32 %v571, 7
        %v573 = vsub.s32 2, %v572
        %v574 = vrot.slane %v449, %v573
        %v575 = vmul.f32 %v574, %v569
        %v576 = vmul.f32 %v574, %v570
        %v577 = vadd.f32 %v567, %v575
        %v578 = vadd.f32 %v568, %v576
        %v579 = vld [vmem:[%s548 + $0x3] sm:$0xff]
        %v580 = vld [vmem:[%s548 + $0xb] sm:$0xff]
        %v581 = vlaneseq
        %v582 = vshrl.u32 %v581, 7
        %v583 = vsub.s32 3, %v582
        %v584 = vrot.slane %v449, %v583
        %v585 = vmul.f32 %v584, %v579
        %v586 = vmul.f32 %v584, %v580
        %v587 = vadd.f32 %v577, %v585
        %v588 = vadd.f32 %v578, %v586
        %v589 = vld [vmem:[%s548 + $0x4] sm:$0xff]
        %v590 = vld [vmem:[%s548 + $0xc] sm:$0xff]
        %v591 = vlaneseq
        %v592 = vshrl.u32 %v591, 7
        %v593 = vsub.s32 4, %v592
        %v594 = vrot.slane %v449, %v593
        %v595 = vmul.f32 %v594, %v589
        %v596 = vmul.f32 %v594, %v590
        %v597 = vadd.f32 %v587, %v595
        %v598 = vadd.f32 %v588, %v596
        %v599 = vld [vmem:[%s298] sm:$0xff]
        %v600 = vld [vmem:[%s298 + $0x8] sm:$0xff]
        %v601 = vlaneseq
        %v602 = vshrl.u32 %v601, 7
        %v603 = vsub.s32 0, %v602
        %v604 = vrot.slane %v450, %v603
        %v605 = vmul.f32 %v604, %v599
        %v606 = vmul.f32 %v604, %v600
        %v607 = vadd.f32 %v597, %v605
        %v608 = vadd.f32 %v598, %v606
        %v609 = vld [vmem:[%s298 + $0x1] sm:$0xff]
        %v610 = vld [vmem:[%s298 + $0x9] sm:$0xff]
        %v611 = vlaneseq
        %v612 = vshrl.u32 %v611, 7
        %v613 = vsub.s32 1, %v612
        %v614 = vrot.slane %v450, %v613
        %v615 = vmul.f32 %v614, %v609
        %v616 = vmul.f32 %v614, %v610
        %v617 = vadd.f32 %v607, %v615
        %v618 = vadd.f32 %v608, %v616
        %v619 = vld [vmem:[%s298 + $0x2] sm:$0xff]
        %v620 = vld [vmem:[%s298 + $0xa] sm:$0xff]
        %v621 = vlaneseq
        %v622 = vshrl.u32 %v621, 7
        %v623 = vsub.s32 2, %v622
        %v624 = vrot.slane %v450, %v623
        %v625 = vmul.f32 %v624, %v619
        %v626 = vmul.f32 %v624, %v620
        %v627 = vadd.f32 %v617, %v625
        %v628 = vadd.f32 %v618, %v626
        %v629 = vld [vmem:[%s298 + $0x3] sm:$0xff]
        %v630 = vld [vmem:[%s298 + $0xb] sm:$0xff]
        %v631 = vlaneseq
        %v632 = vshrl.u32 %v631, 7
        %v633 = vsub.s32 3, %v632
        %v634 = vrot.slane %v450, %v633
        %v635 = vmul.f32 %v634, %v629
        %v636 = vmul.f32 %v634, %v630
        %v637 = vadd.f32 %v627, %v635
        %v638 = vadd.f32 %v628, %v636
        %v639 = vld [vmem:[%s298 + $0x4] sm:$0xff]
        %v640 = vld [vmem:[%s298 + $0xc] sm:$0xff]
        %v641 = vlaneseq
        %v642 = vshrl.u32 %v641, 7
        %v643 = vsub.s32 4, %v642
        %v644 = vrot.slane %v450, %v643
        %v645 = vmul.f32 %v644, %v639
        %v646 = vmul.f32 %v644, %v640
        %v647 = vadd.f32 %v637, %v645
        %v648 = vadd.f32 %v638, %v646
        %s649 = scalar_lea.vmem [#allocation2], 72
        %v650 = vld [vmem:[%s649] sm:$0xff]
        %v651 = vld [vmem:[%s649 + $0x8] sm:$0xff]
        %v652 = vlaneseq
        %v653 = vshrl.u32 %v652, 7
        %v654 = vsub.s32 0, %v653
        %v655 = vrot.slane %v451, %v654
        %v656 = vmul.f32 %v655, %v650
        %v657 = vmul.f32 %v655, %v651
        %v658 = vadd.f32 %v647, %v656
        %v659 = vadd.f32 %v648, %v657
        %v660 = vld [vmem:[%s649 + $0x1] sm:$0xff]
        %v661 = vld [vmem:[%s649 + $0x9] sm:$0xff]
        %v662 = vlaneseq
        %v663 = vshrl.u32 %v662, 7
        %v664 = vsub.s32 1, %v663
        %v665 = vrot.slane %v451, %v664
        %v666 = vmul.f32 %v665, %v660
        %v667 = vmul.f32 %v665, %v661
        %v668 = vadd.f32 %v658, %v666
        %v669 = vadd.f32 %v659, %v667
        %v670 = vld [vmem:[%s649 + $0x2] sm:$0xff]
        %v671 = vld [vmem:[%s649 + $0xa] sm:$0xff]
        %v672 = vlaneseq
        %v673 = vshrl.u32 %v672, 7
        %v674 = vsub.s32 2, %v673
        %v675 = vrot.slane %v451, %v674
        %v676 = vmul.f32 %v675, %v670
        %v677 = vmul.f32 %v675, %v671
        %v678 = vadd.f32 %v668, %v676
        %v679 = vadd.f32 %v669, %v677
        %v680 = vld [vmem:[%s649 + $0x3] sm:$0xff]
        %v681 = vld [vmem:[%s649 + $0xb] sm:$0xff]
        %v682 = vlaneseq
        %v683 = vshrl.u32 %v682, 7
        %v684 = vsub.s32 3, %v683
        %v685 = vrot.slane %v451, %v684
        %v686 = vmul.f32 %v685, %v680
        %v687 = vmul.f32 %v685, %v681
        %v688 = vadd.f32 %v678, %v686
        %v689 = vadd.f32 %v679, %v687
        %v690 = vld [vmem:[%s649 + $0x4] sm:$0xff]
        %v691 = vld [vmem:[%s649 + $0xc] sm:$0xff]
        %v692 = vlaneseq
        %v693 = vshrl.u32 %v692, 7
        %v694 = vsub.s32 4, %v693
        %v695 = vrot.slane %v451, %v694
        %v696 = vmul.f32 %v695, %v690
        %v697 = vmul.f32 %v695, %v691
        %v698 = vadd.f32 %v688, %v696
        %v699 = vadd.f32 %v689, %v697
        %s700 = scalar_lea.vmem [#allocation2], 96
        %v701 = vld [vmem:[%s700] sm:$0xff]
        %v702 = vld [vmem:[%s700 + $0x8] sm:$0xff]
        %v703 = vlaneseq
        %v704 = vshrl.u32 %v703, 7
        %v705 = vsub.s32 0, %v704
        %v706 = vrot.slane %v452, %v705
        %v707 = vmul.f32 %v706, %v701
        %v708 = vmul.f32 %v706, %v702
        %v709 = vadd.f32 %v698, %v707
        %v710 = vadd.f32 %v699, %v708
        %v711 = vld [vmem:[%s700 + $0x1] sm:$0xff]
        %v712 = vld [vmem:[%s700 + $0x9] sm:$0xff]
        %v713 = vlaneseq
        %v714 = vshrl.u32 %v713, 7
        %v715 = vsub.s32 1, %v714
        %v716 = vrot.slane %v452, %v715
        %v717 = vmul.f32 %v716, %v711
        %v718 = vmul.f32 %v716, %v712
        %v719 = vadd.f32 %v709, %v717
        %v720 = vadd.f32 %v710, %v718
        %v721 = vld [vmem:[%s700 + $0x2] sm:$0xff]
        %v722 = vld [vmem:[%s700 + $0xa] sm:$0xff]
        %v723 = vlaneseq
        %v724 = vshrl.u32 %v723, 7
        %v725 = vsub.s32 2, %v724
        %v726 = vrot.slane %v452, %v725
        %v727 = vmul.f32 %v726, %v721
        %v728 = vmul.f32 %v726, %v722
        %v729 = vadd.f32 %v719, %v727
        %v730 = vadd.f32 %v720, %v728
        %v731 = vld [vmem:[%s700 + $0x3] sm:$0xff]
        %v732 = vld [vmem:[%s700 + $0xb] sm:$0xff]
        %v733 = vlaneseq
        %v734 = vshrl.u32 %v733, 7
        %v735 = vsub.s32 3, %v734
        %v736 = vrot.slane %v452, %v735
        %v737 = vmul.f32 %v736, %v731
        %v738 = vmul.f32 %v736, %v732
        %v739 = vadd.f32 %v729, %v737
        %v740 = vadd.f32 %v730, %v738
        %v741 = vld [vmem:[%s700 + $0x4] sm:$0xff]
        %v742 = vld [vmem:[%s700 + $0xc] sm:$0xff]
        %v743 = vlaneseq
        %v744 = vshrl.u32 %v743, 7
        %v745 = vsub.s32 4, %v744
        %v746 = vrot.slane %v452, %v745
        %v747 = vmul.f32 %v746, %v741
        %v748 = vmul.f32 %v746, %v742
        %v749 = vadd.f32 %v739, %v747
        %v750 = vadd.f32 %v740, %v748
        %v751 = vlaneseq
        %v752 = vshrl.u32 %v751, 7
        %v753 = vsub.s32 0, %v752
        %v754 = vrot.slane %v749, %v753
        %v755 = vmul.f32 %v472, %v754
        %v756 = vmul.f32 %v473, %v754
        %v757 = vadd.f32 %v755, 0.0
        %v758 = vadd.f32 %v756, 0.0
        %v759 = vlaneseq
        %v760 = vshrl.u32 %v759, 7
        %v761 = vsub.s32 4, %v760
        %v762 = vrot.slane %v749, %v761
        %v763 = vmul.f32 %v480, %v762
        %v764 = vmul.f32 %v481, %v762
        %v765 = vadd.f32 %v757, %v763
        %v766 = vadd.f32 %v758, %v764
        %v767 = vlaneseq
        %v768 = vshrl.u32 %v767, 7
        %v769 = vsub.s32 0, %v768
        %v770 = vrot.slane %v750, %v769
        %v771 = vmul.f32 %v488, %v770
        %v772 = vmul.f32 %v489, %v770
        %v773 = vadd.f32 %v765, %v771
        %v774 = vadd.f32 %v766, %v772
        %v775 = vlaneseq
        %v776 = vshrl.u32 %v775, 7
        %v777 = vsub.s32 4, %v776
        %v778 = vrot.slane %v750, %v777
        %v779 = vmul.f32 %v496, %v778
        %v780 = vmul.f32 %v497, %v778
        %v781 = vadd.f32 %v773, %v779
        %v782 = vadd.f32 %v774, %v780
        %v783 = vmul.f32 %v503, %v701
        %v784 = vmul.f32 %v503, %v702
        %v785 = vadd.f32 %v783, 0.0
        %v786 = vadd.f32 %v784, 0.0
        %v787 = vmul.f32 %v513, %v711
        %v788 = vmul.f32 %v513, %v712
        %v789 = vadd.f32 %v785, %v787
        %v790 = vadd.f32 %v786, %v788
        %v791 = vmul.f32 %v523, %v721
        %v792 = vmul.f32 %v523, %v722
        %v793 = vadd.f32 %v789, %v791
        %v794 = vadd.f32 %v790, %v792
        %v795 = vmul.f32 %v533, %v731
        %v796 = vmul.f32 %v533, %v732
        %v797 = vadd.f32 %v793, %v795
        %v798 = vadd.f32 %v794, %v796
        %v799 = vmul.f32 %v543, %v741
        %v800 = vmul.f32 %v543, %v742
        %v801 = vadd.f32 %v797, %v799
        %v802 = vadd.f32 %v798, %v800
        %s803 = scalar_lea.vmem [#allocation2], 120
        %v804 = vld [vmem:[%s803] sm:$0xff]
        %v805 = vld [vmem:[%s803 + $0x8] sm:$0xff]
        %v806 = vmul.f32 %v554, %v804
        %v807 = vmul.f32 %v554, %v805
        %v808 = vadd.f32 %v801, %v806
        %v809 = vadd.f32 %v802, %v807
        %v810 = vld [vmem:[%s803 + $0x1] sm:$0xff]
        %v811 = vld [vmem:[%s803 + $0x9] sm:$0xff]
        %v812 = vmul.f32 %v564, %v810
        %v813 = vmul.f32 %v564, %v811
        %v814 = vadd.f32 %v808, %v812
        %v815 = vadd.f32 %v809, %v813
        %v816 = vld [vmem:[%s803 + $0x2] sm:$0xff]
        %v817 = vld [vmem:[%s803 + $0xa] sm:$0xff]
        %v818 = vmul.f32 %v574, %v816
        %v819 = vmul.f32 %v574, %v817
        %v820 = vadd.f32 %v814, %v818
        %v821 = vadd.f32 %v815, %v819
        %v822 = vld [vmem:[%s803 + $0x3] sm:$0xff]
        %v823 = vld [vmem:[%s803 + $0xb] sm:$0xff]
        %v824 = vmul.f32 %v584, %v822
        %v825 = vmul.f32 %v584, %v823
        %v826 = vadd.f32 %v820, %v824
        %v827 = vadd.f32 %v821, %v825
        %v828 = vld [vmem:[%s803 + $0x4] sm:$0xff]
        %v829 = vld [vmem:[%s803 + $0xc] sm:$0xff]
        %v830 = vmul.f32 %v594, %v828
        %v831 = vmul.f32 %v594, %v829
        %v832 = vadd.f32 %v826, %v830
        %v833 = vadd.f32 %v827, %v831
        %v834 = vld [vmem:[%s402] sm:$0xff]
        %v835 = vld [vmem:[%s402 + $0x8] sm:$0xff]
        %v836 = vmul.f32 %v604, %v834
        %v837 = vmul.f32 %v604, %v835
        %v838 = vadd.f32 %v832, %v836
        %v839 = vadd.f32 %v833, %v837
        %v840 = vld [vmem:[%s402 + $0x1] sm:$0xff]
        %v841 = vld [vmem:[%s402 + $0x9] sm:$0xff]
        %v842 = vmul.f32 %v614, %v840
        %v843 = vmul.f32 %v614, %v841
        %v844 = vadd.f32 %v838, %v842
        %v845 = vadd.f32 %v839, %v843
        %v846 = vld [vmem:[%s402 + $0x2] sm:$0xff]
        %v847 = vld [vmem:[%s402 + $0xa] sm:$0xff]
        %v848 = vmul.f32 %v624, %v846
        %v849 = vmul.f32 %v624, %v847
        %v850 = vadd.f32 %v844, %v848
        %v851 = vadd.f32 %v845, %v849
        %v852 = vld [vmem:[%s402 + $0x3] sm:$0xff]
        %v853 = vld [vmem:[%s402 + $0xb] sm:$0xff]
        %v854 = vmul.f32 %v634, %v852
        %v855 = vmul.f32 %v634, %v853
        %v856 = vadd.f32 %v850, %v854
        %v857 = vadd.f32 %v851, %v855
        %v858 = vld [vmem:[%s402 + $0x4] sm:$0xff]
        %v859 = vld [vmem:[%s402 + $0xc] sm:$0xff]
        %v860 = vmul.f32 %v644, %v858
        %v861 = vmul.f32 %v644, %v859
        %v862 = vadd.f32 %v856, %v860
        %v863 = vadd.f32 %v857, %v861
        %s864 = scalar_lea.vmem [#allocation2], 168
        %v865 = vld [vmem:[%s864] sm:$0xff]
        %v866 = vld [vmem:[%s864 + $0x8] sm:$0xff]
        %v867 = vmul.f32 %v655, %v865
        %v868 = vmul.f32 %v655, %v866
        %v869 = vadd.f32 %v862, %v867
        %v870 = vadd.f32 %v863, %v868
        %v871 = vld [vmem:[%s864 + $0x1] sm:$0xff]
        %v872 = vld [vmem:[%s864 + $0x9] sm:$0xff]
        %v873 = vmul.f32 %v665, %v871
        %v874 = vmul.f32 %v665, %v872
        %v875 = vadd.f32 %v869, %v873
        %v876 = vadd.f32 %v870, %v874
        %v877 = vld [vmem:[%s864 + $0x2] sm:$0xff]
        %v878 = vld [vmem:[%s864 + $0xa] sm:$0xff]
        %v879 = vmul.f32 %v675, %v877
        %v880 = vmul.f32 %v675, %v878
        %v881 = vadd.f32 %v875, %v879
        %v882 = vadd.f32 %v876, %v880
        %v883 = vld [vmem:[%s864 + $0x3] sm:$0xff]
        %v884 = vld [vmem:[%s864 + $0xb] sm:$0xff]
        %v885 = vmul.f32 %v685, %v883
        %v886 = vmul.f32 %v685, %v884
        %v887 = vadd.f32 %v881, %v885
        %v888 = vadd.f32 %v882, %v886
        %v889 = vld [vmem:[%s864 + $0x4] sm:$0xff]
        %v890 = vld [vmem:[%s864 + $0xc] sm:$0xff]
        %v891 = vmul.f32 %v695, %v889
        %v892 = vmul.f32 %v695, %v890
        %v893 = vadd.f32 %v887, %v891
        %v894 = vadd.f32 %v888, %v892
        %s895 = scalar_lea.vmem [#allocation2], 192
        %v896 = vld [vmem:[%s895] sm:$0xff]
        %v897 = vld [vmem:[%s895 + $0x8] sm:$0xff]
        %v898 = vmul.f32 %v706, %v896
        %v899 = vmul.f32 %v706, %v897
        %v900 = vadd.f32 %v893, %v898
        %v901 = vadd.f32 %v894, %v899
        %v902 = vld [vmem:[%s895 + $0x1] sm:$0xff]
        %v903 = vld [vmem:[%s895 + $0x9] sm:$0xff]
        %v904 = vmul.f32 %v716, %v902
        %v905 = vmul.f32 %v716, %v903
        %v906 = vadd.f32 %v900, %v904
        %v907 = vadd.f32 %v901, %v905
        %v908 = vld [vmem:[%s895 + $0x2] sm:$0xff]
        %v909 = vld [vmem:[%s895 + $0xa] sm:$0xff]
        %v910 = vmul.f32 %v726, %v908
        %v911 = vmul.f32 %v726, %v909
        %v912 = vadd.f32 %v906, %v910
        %v913 = vadd.f32 %v907, %v911
        %v914 = vld [vmem:[%s895 + $0x3] sm:$0xff]
        %v915 = vld [vmem:[%s895 + $0xb] sm:$0xff]
        %v916 = vmul.f32 %v736, %v914
        %v917 = vmul.f32 %v736, %v915
        %v918 = vadd.f32 %v912, %v916
        %v919 = vadd.f32 %v913, %v917
        %v920 = vld [vmem:[%s895 + $0x4] sm:$0xff]
        %v921 = vld [vmem:[%s895 + $0xc] sm:$0xff]
        %v922 = vmul.f32 %v746, %v920
        %v923 = vmul.f32 %v746, %v921
        %v924 = vadd.f32 %v918, %v922
        %v925 = vadd.f32 %v919, %v923
        %v926 = vlaneseq
        %v927 = vshrl.u32 %v926, 7
        %v928 = vsub.s32 0, %v927
        %v929 = vrot.slane %v924, %v928
        %v930 = vmul.f32 %v472, %v929
        %v931 = vmul.f32 %v473, %v929
        %v932 = vadd.f32 %v930, 0.0
        %v933 = vadd.f32 %v931, 0.0
        %v934 = vlaneseq
        %v935 = vshrl.u32 %v934, 7
        %v936 = vsub.s32 4, %v935
        %v937 = vrot.slane %v924, %v936
        %v938 = vmul.f32 %v480, %v937
        %v939 = vmul.f32 %v481, %v937
        %v940 = vadd.f32 %v932, %v938
        %v941 = vadd.f32 %v933, %v939
        %v942 = vlaneseq
        %v943 = vshrl.u32 %v942, 7
        %v944 = vsub.s32 0, %v943
        %v945 = vrot.slane %v925, %v944
        %v946 = vmul.f32 %v488, %v945
        %v947 = vmul.f32 %v489, %v945
        %v948 = vadd.f32 %v940, %v946
        %v949 = vadd.f32 %v941, %v947
        %v950 = vlaneseq
        %v951 = vshrl.u32 %v950, 7
        %v952 = vsub.s32 4, %v951
        %v953 = vrot.slane %v925, %v952
        %v954 = vmul.f32 %v496, %v953
        %v955 = vmul.f32 %v497, %v953
        %v956 = vadd.f32 %v948, %v954
        %v957 = vadd.f32 %v949, %v955
        %v958 = vmul.f32 %v503, %v896
        %v959 = vmul.f32 %v503, %v897
        %v960 = vadd.f32 %v958, 0.0
        %v961 = vadd.f32 %v959, 0.0
        %v962 = vmul.f32 %v513, %v902
        %v963 = vmul.f32 %v513, %v903
        %v964 = vadd.f32 %v960, %v962
        %v965 = vadd.f32 %v961, %v963
        %v966 = vmul.f32 %v523, %v908
        %v967 = vmul.f32 %v523, %v909
        %v968 = vadd.f32 %v964, %v966
        %v969 = vadd.f32 %v965, %v967
        %v970 = vmul.f32 %v533, %v914
        %v971 = vmul.f32 %v533, %v915
        %v972 = vadd.f32 %v968, %v970
        %v973 = vadd.f32 %v969, %v971
        %v974 = vmul.f32 %v543, %v920
        %v975 = vmul.f32 %v543, %v921
        %v976 = vadd.f32 %v972, %v974
        %v977 = vadd.f32 %v973, %v975
        %s978 = scalar_lea.vmem [#allocation2], 216
        %v979 = vld [vmem:[%s978] sm:$0xff]
        %v980 = vld [vmem:[%s978 + $0x8] sm:$0xff]
        %v981 = vmul.f32 %v554, %v979
        %v982 = vmul.f32 %v554, %v980
        %v983 = vadd.f32 %v976, %v981
        %v984 = vadd.f32 %v977, %v982
        %v985 = vld [vmem:[%s978 + $0x1] sm:$0xff]
        %v986 = vld [vmem:[%s978 + $0x9] sm:$0xff]
        %v987 = vmul.f32 %v564, %v985
        %v988 = vmul.f32 %v564, %v986
        %v989 = vadd.f32 %v983, %v987
        %v990 = vadd.f32 %v984, %v988
        %v991 = vld [vmem:[%s978 + $0x2] sm:$0xff]
        %v992 = vld [vmem:[%s978 + $0xa] sm:$0xff]
        %v993 = vmul.f32 %v574, %v991
        %v994 = vmul.f32 %v574, %v992
        %v995 = vadd.f32 %v989, %v993
        %v996 = vadd.f32 %v990, %v994
        %v997 = vld [vmem:[%s978 + $0x3] sm:$0xff]
        %v998 = vld [vmem:[%s978 + $0xb] sm:$0xff]
        %v999 = vmul.f32 %v584, %v997
        %v1000 = vmul.f32 %v584, %v998
        %v1001 = vadd.f32 %v995, %v999
        %v1002 = vadd.f32 %v996, %v1000
        %v1003 = vld [vmem:[%s978 + $0x4] sm:$0xff]
        %v1004 = vld [vmem:[%s978 + $0xc] sm:$0xff]
        %v1005 = vmul.f32 %v594, %v1003
        %v1006 = vmul.f32 %v594, %v1004
        %v1007 = vadd.f32 %v1001, %v1005
        %v1008 = vadd.f32 %v1002, %v1006
        %v1009 = vld [vmem:[%s420] sm:$0xff]
        %v1010 = vld [vmem:[%s420 + $0x8] sm:$0xff]
        %v1011 = vmul.f32 %v604, %v1009
        %v1012 = vmul.f32 %v604, %v1010
        %v1013 = vadd.f32 %v1007, %v1011
        %v1014 = vadd.f32 %v1008, %v1012
        %v1015 = vld [vmem:[%s420 + $0x1] sm:$0xff]
        %v1016 = vld [vmem:[%s420 + $0x9] sm:$0xff]
        %v1017 = vmul.f32 %v614, %v1015
        %v1018 = vmul.f32 %v614, %v1016
        %v1019 = vadd.f32 %v1013, %v1017
        %v1020 = vadd.f32 %v1014, %v1018
        %v1021 = vld [vmem:[%s420 + $0x2] sm:$0xff]
        %v1022 = vld [vmem:[%s420 + $0xa] sm:$0xff]
        %v1023 = vmul.f32 %v624, %v1021
        %v1024 = vmul.f32 %v624, %v1022
        %v1025 = vadd.f32 %v1019, %v1023
        %v1026 = vadd.f32 %v1020, %v1024
        %v1027 = vld [vmem:[%s420 + $0x3] sm:$0xff]
        %v1028 = vld [vmem:[%s420 + $0xb] sm:$0xff]
        %v1029 = vmul.f32 %v634, %v1027
        %v1030 = vmul.f32 %v634, %v1028
        %v1031 = vadd.f32 %v1025, %v1029
        %v1032 = vadd.f32 %v1026, %v1030
        %v1033 = vld [vmem:[%s420 + $0x4] sm:$0xff]
        %v1034 = vld [vmem:[%s420 + $0xc] sm:$0xff]
        %v1035 = vmul.f32 %v644, %v1033
        %v1036 = vmul.f32 %v644, %v1034
        %v1037 = vadd.f32 %v1031, %v1035
        %v1038 = vadd.f32 %v1032, %v1036
        %s1039 = scalar_lea.vmem [#allocation2], 264
        %v1040 = vld [vmem:[%s1039] sm:$0xff]
        %v1041 = vld [vmem:[%s1039 + $0x8] sm:$0xff]
        %v1042 = vmul.f32 %v655, %v1040
        %v1043 = vmul.f32 %v655, %v1041
        %v1044 = vadd.f32 %v1037, %v1042
        %v1045 = vadd.f32 %v1038, %v1043
        %v1046 = vld [vmem:[%s1039 + $0x1] sm:$0xff]
        %v1047 = vld [vmem:[%s1039 + $0x9] sm:$0xff]
        %v1048 = vmul.f32 %v665, %v1046
        %v1049 = vmul.f32 %v665, %v1047
        %v1050 = vadd.f32 %v1044, %v1048
        %v1051 = vadd.f32 %v1045, %v1049
        %v1052 = vld [vmem:[%s1039 + $0x2] sm:$0xff]
        %v1053 = vld [vmem:[%s1039 + $0xa] sm:$0xff]
        %v1054 = vmul.f32 %v675, %v1052
        %v1055 = vmul.f32 %v675, %v1053
        %v1056 = vadd.f32 %v1050, %v1054
        %v1057 = vadd.f32 %v1051, %v1055
        %v1058 = vld [vmem:[%s1039 + $0x3] sm:$0xff]
        %v1059 = vld [vmem:[%s1039 + $0xb] sm:$0xff]
        %v1060 = vmul.f32 %v685, %v1058
        %v1061 = vmul.f32 %v685, %v1059
        %v1062 = vadd.f32 %v1056, %v1060
        %v1063 = vadd.f32 %v1057, %v1061
        %v1064 = vld [vmem:[%s1039 + $0x4] sm:$0xff]
        %v1065 = vld [vmem:[%s1039 + $0xc] sm:$0xff]
        %v1066 = vmul.f32 %v695, %v1064
        %v1067 = vmul.f32 %v695, %v1065
        %v1068 = vadd.f32 %v1062, %v1066
        %v1069 = vadd.f32 %v1063, %v1067
        %s1070 = scalar_lea.vmem [#allocation2], 288
        %v1071 = vld [vmem:[%s1070] sm:$0xff]
        %v1072 = vld [vmem:[%s1070 + $0x8] sm:$0xff]
        %v1073 = vmul.f32 %v706, %v1071
        %v1074 = vmul.f32 %v706, %v1072
        %v1075 = vadd.f32 %v1068, %v1073
        %v1076 = vadd.f32 %v1069, %v1074
        %v1077 = vld [vmem:[%s1070 + $0x1] sm:$0xff]
        %v1078 = vld [vmem:[%s1070 + $0x9] sm:$0xff]
        %v1079 = vmul.f32 %v716, %v1077
        %v1080 = vmul.f32 %v716, %v1078
        %v1081 = vadd.f32 %v1075, %v1079
        %v1082 = vadd.f32 %v1076, %v1080
        %v1083 = vld [vmem:[%s1070 + $0x2] sm:$0xff]
        %v1084 = vld [vmem:[%s1070 + $0xa] sm:$0xff]
        %v1085 = vmul.f32 %v726, %v1083
        %v1086 = vmul.f32 %v726, %v1084
        %v1087 = vadd.f32 %v1081, %v1085
        %v1088 = vadd.f32 %v1082, %v1086
        %v1089 = vld [vmem:[%s1070 + $0x3] sm:$0xff]
        %v1090 = vld [vmem:[%s1070 + $0xb] sm:$0xff]
        %v1091 = vmul.f32 %v736, %v1089
        %v1092 = vmul.f32 %v736, %v1090
        %v1093 = vadd.f32 %v1087, %v1091
        %v1094 = vadd.f32 %v1088, %v1092
        %v1095 = vld [vmem:[%s1070 + $0x4] sm:$0xff]
        %v1096 = vld [vmem:[%s1070 + $0xc] sm:$0xff]
        %v1097 = vmul.f32 %v746, %v1095
        %v1098 = vmul.f32 %v746, %v1096
        %v1099 = vadd.f32 %v1093, %v1097
        %v1100 = vadd.f32 %v1094, %v1098
        %v1101 = vlaneseq
        %v1102 = vshrl.u32 %v1101, 7
        %v1103 = vsub.s32 0, %v1102
        %v1104 = vrot.slane %v1099, %v1103
        %v1105 = vmul.f32 %v472, %v1104
        %v1106 = vmul.f32 %v473, %v1104
        %v1107 = vadd.f32 %v1105, 0.0
        %v1108 = vadd.f32 %v1106, 0.0
        %v1109 = vlaneseq
        %v1110 = vshrl.u32 %v1109, 7
        %v1111 = vsub.s32 4, %v1110
        %v1112 = vrot.slane %v1099, %v1111
        %v1113 = vmul.f32 %v480, %v1112
        %v1114 = vmul.f32 %v481, %v1112
        %v1115 = vadd.f32 %v1107, %v1113
        %v1116 = vadd.f32 %v1108, %v1114
        %v1117 = vlaneseq
        %v1118 = vshrl.u32 %v1117, 7
        %v1119 = vsub.s32 0, %v1118
        %v1120 = vrot.slane %v1100, %v1119
        %v1121 = vmul.f32 %v488, %v1120
        %v1122 = vmul.f32 %v489, %v1120
        %v1123 = vadd.f32 %v1115, %v1121
        %v1124 = vadd.f32 %v1116, %v1122
        %v1125 = vlaneseq
        %v1126 = vshrl.u32 %v1125, 7
        %v1127 = vsub.s32 4, %v1126
        %v1128 = vrot.slane %v1100, %v1127
        %v1129 = vmul.f32 %v496, %v1128
        %v1130 = vmul.f32 %v497, %v1128
        %v1131 = vadd.f32 %v1123, %v1129
        %v1132 = vadd.f32 %v1124, %v1130
        %v1133 = vmul.f32 %v503, %v1071
        %v1134 = vmul.f32 %v503, %v1072
        %v1135 = vadd.f32 %v1133, 0.0
        %v1136 = vadd.f32 %v1134, 0.0
        %v1137 = vmul.f32 %v513, %v1077
        %v1138 = vmul.f32 %v513, %v1078
        %v1139 = vadd.f32 %v1135, %v1137
        %v1140 = vadd.f32 %v1136, %v1138
        %v1141 = vmul.f32 %v523, %v1083
        %v1142 = vmul.f32 %v523, %v1084
        %v1143 = vadd.f32 %v1139, %v1141
        %v1144 = vadd.f32 %v1140, %v1142
        %v1145 = vmul.f32 %v533, %v1089
        %v1146 = vmul.f32 %v533, %v1090
        %v1147 = vadd.f32 %v1143, %v1145
        %v1148 = vadd.f32 %v1144, %v1146
        %v1149 = vmul.f32 %v543, %v1095
        %v1150 = vmul.f32 %v543, %v1096
        %v1151 = vadd.f32 %v1147, %v1149
        %v1152 = vadd.f32 %v1148, %v1150
        %s1153 = scalar_lea.vmem [#allocation2], 312
        %v1154 = vld [vmem:[%s1153] sm:$0xff]
        %v1155 = vld [vmem:[%s1153 + $0x8] sm:$0xff]
        %v1156 = vmul.f32 %v554, %v1154
        %v1157 = vmul.f32 %v554, %v1155
        %v1158 = vadd.f32 %v1151, %v1156
        %v1159 = vadd.f32 %v1152, %v1157
        %v1160 = vld [vmem:[%s1153 + $0x1] sm:$0xff]
        %v1161 = vld [vmem:[%s1153 + $0x9] sm:$0xff]
        %v1162 = vmul.f32 %v564, %v1160
        %v1163 = vmul.f32 %v564, %v1161
        %v1164 = vadd.f32 %v1158, %v1162
        %v1165 = vadd.f32 %v1159, %v1163
        %v1166 = vld [vmem:[%s1153 + $0x2] sm:$0xff]
        %v1167 = vld [vmem:[%s1153 + $0xa] sm:$0xff]
        %v1168 = vmul.f32 %v574, %v1166
        %v1169 = vmul.f32 %v574, %v1167
        %v1170 = vadd.f32 %v1164, %v1168
        %v1171 = vadd.f32 %v1165, %v1169
        %v1172 = vld [vmem:[%s1153 + $0x3] sm:$0xff]
        %v1173 = vld [vmem:[%s1153 + $0xb] sm:$0xff]
        %v1174 = vmul.f32 %v584, %v1172
        %v1175 = vmul.f32 %v584, %v1173
        %v1176 = vadd.f32 %v1170, %v1174
        %v1177 = vadd.f32 %v1171, %v1175
        %v1178 = vld [vmem:[%s1153 + $0x4] sm:$0xff]
        %v1179 = vld [vmem:[%s1153 + $0xc] sm:$0xff]
        %v1180 = vmul.f32 %v594, %v1178
        %v1181 = vmul.f32 %v594, %v1179
        %v1182 = vadd.f32 %v1176, %v1180
        %v1183 = vadd.f32 %v1177, %v1181
        %v1184 = vld [vmem:[%s438] sm:$0xff]
        %v1185 = vld [vmem:[%s438 + $0x8] sm:$0xff]
        %v1186 = vmul.f32 %v604, %v1184
        %v1187 = vmul.f32 %v604, %v1185
        %v1188 = vadd.f32 %v1182, %v1186
        %v1189 = vadd.f32 %v1183, %v1187
        %v1190 = vld [vmem:[%s438 + $0x1] sm:$0xff]
        %v1191 = vld [vmem:[%s438 + $0x9] sm:$0xff]
        %v1192 = vmul.f32 %v614, %v1190
        %v1193 = vmul.f32 %v614, %v1191
        %v1194 = vadd.f32 %v1188, %v1192
        %v1195 = vadd.f32 %v1189, %v1193
        %v1196 = vld [vmem:[%s438 + $0x2] sm:$0xff]
        %v1197 = vld [vmem:[%s438 + $0xa] sm:$0xff]
        %v1198 = vmul.f32 %v624, %v1196
        %v1199 = vmul.f32 %v624, %v1197
        %v1200 = vadd.f32 %v1194, %v1198
        %v1201 = vadd.f32 %v1195, %v1199
        %v1202 = vld [vmem:[%s438 + $0x3] sm:$0xff]
        %v1203 = vld [vmem:[%s438 + $0xb] sm:$0xff]
        %v1204 = vmul.f32 %v634, %v1202
        %v1205 = vmul.f32 %v634, %v1203
        %v1206 = vadd.f32 %v1200, %v1204
        %v1207 = vadd.f32 %v1201, %v1205
        %v1208 = vld [vmem:[%s438 + $0x4] sm:$0xff]
        %v1209 = vld [vmem:[%s438 + $0xc] sm:$0xff]
        %v1210 = vmul.f32 %v644, %v1208
        %v1211 = vmul.f32 %v644, %v1209
        %v1212 = vadd.f32 %v1206, %v1210
        %v1213 = vadd.f32 %v1207, %v1211
        %s1214 = scalar_lea.vmem [#allocation2], 360
        %v1215 = vld [vmem:[%s1214] sm:$0xff]
        %v1216 = vld [vmem:[%s1214 + $0x8] sm:$0xff]
        %v1217 = vmul.f32 %v655, %v1215
        %v1218 = vmul.f32 %v655, %v1216
        %v1219 = vadd.f32 %v1212, %v1217
        %v1220 = vadd.f32 %v1213, %v1218
        %v1221 = vld [vmem:[%s1214 + $0x1] sm:$0xff]
        %v1222 = vld [vmem:[%s1214 + $0x9] sm:$0xff]
        %v1223 = vmul.f32 %v665, %v1221
        %v1224 = vmul.f32 %v665, %v1222
        %v1225 = vadd.f32 %v1219, %v1223
        %v1226 = vadd.f32 %v1220, %v1224
        %v1227 = vld [vmem:[%s1214 + $0x2] sm:$0xff]
        %v1228 = vld [vmem:[%s1214 + $0xa] sm:$0xff]
        %v1229 = vmul.f32 %v675, %v1227
        %v1230 = vmul.f32 %v675, %v1228
        %v1231 = vadd.f32 %v1225, %v1229
        %v1232 = vadd.f32 %v1226, %v1230
        %v1233 = vld [vmem:[%s1214 + $0x3] sm:$0xff]
        %v1234 = vld [vmem:[%s1214 + $0xb] sm:$0xff]
        %v1235 = vmul.f32 %v685, %v1233
        %v1236 = vmul.f32 %v685, %v1234
        %v1237 = vadd.f32 %v1231, %v1235
        %v1238 = vadd.f32 %v1232, %v1236
        %v1239 = vld [vmem:[%s1214 + $0x4] sm:$0xff]
        %v1240 = vld [vmem:[%s1214 + $0xc] sm:$0xff]
        %v1241 = vmul.f32 %v695, %v1239
        %v1242 = vmul.f32 %v695, %v1240
        %v1243 = vadd.f32 %v1237, %v1241
        %v1244 = vadd.f32 %v1238, %v1242
        %s1245 = scalar_lea.vmem [#allocation2], 384
        %v1246 = vld [vmem:[%s1245] sm:$0xff]
        %v1247 = vld [vmem:[%s1245 + $0x8] sm:$0xff]
        %v1248 = vmul.f32 %v706, %v1246
        %v1249 = vmul.f32 %v706, %v1247
        %v1250 = vadd.f32 %v1243, %v1248
        %v1251 = vadd.f32 %v1244, %v1249
        %v1252 = vld [vmem:[%s1245 + $0x1] sm:$0xff]
        %v1253 = vld [vmem:[%s1245 + $0x9] sm:$0xff]
        %v1254 = vmul.f32 %v716, %v1252
        %v1255 = vmul.f32 %v716, %v1253
        %v1256 = vadd.f32 %v1250, %v1254
        %v1257 = vadd.f32 %v1251, %v1255
        %v1258 = vld [vmem:[%s1245 + $0x2] sm:$0xff]
        %v1259 = vld [vmem:[%s1245 + $0xa] sm:$0xff]
        %v1260 = vmul.f32 %v726, %v1258
        %v1261 = vmul.f32 %v726, %v1259
        %v1262 = vadd.f32 %v1256, %v1260
        %v1263 = vadd.f32 %v1257, %v1261
        %v1264 = vld [vmem:[%s1245 + $0x3] sm:$0xff]
        %v1265 = vld [vmem:[%s1245 + $0xb] sm:$0xff]
        %v1266 = vmul.f32 %v736, %v1264
        %v1267 = vmul.f32 %v736, %v1265
        %v1268 = vadd.f32 %v1262, %v1266
        %v1269 = vadd.f32 %v1263, %v1267
        %v1270 = vld [vmem:[%s1245 + $0x4] sm:$0xff]
        %v1271 = vld [vmem:[%s1245 + $0xc] sm:$0xff]
        %v1272 = vmul.f32 %v746, %v1270
        %v1273 = vmul.f32 %v746, %v1271
        %v1274 = vadd.f32 %v1268, %v1272
        %v1275 = vadd.f32 %v1269, %v1273
        %v1276 = vlaneseq
        %v1277 = vshrl.u32 %v1276, 7
        %v1278 = vsub.s32 0, %v1277
        %v1279 = vrot.slane %v1274, %v1278
        %v1280 = vmul.f32 %v472, %v1279
        %v1281 = vmul.f32 %v473, %v1279
        %v1282 = vadd.f32 %v1280, 0.0
        %v1283 = vadd.f32 %v1281, 0.0
        %v1284 = vlaneseq
        %v1285 = vshrl.u32 %v1284, 7
        %v1286 = vsub.s32 4, %v1285
        %v1287 = vrot.slane %v1274, %v1286
        %v1288 = vmul.f32 %v480, %v1287
        %v1289 = vmul.f32 %v481, %v1287
        %v1290 = vadd.f32 %v1282, %v1288
        %v1291 = vadd.f32 %v1283, %v1289
        %v1292 = vlaneseq
        %v1293 = vshrl.u32 %v1292, 7
        %v1294 = vsub.s32 0, %v1293
        %v1295 = vrot.slane %v1275, %v1294
        %v1296 = vmul.f32 %v488, %v1295
        %v1297 = vmul.f32 %v489, %v1295
        %v1298 = vadd.f32 %v1290, %v1296
        %v1299 = vadd.f32 %v1291, %v1297
        %v1300 = vlaneseq
        %v1301 = vshrl.u32 %v1300, 7
        %v1302 = vsub.s32 4, %v1301
        %v1303 = vrot.slane %v1275, %v1302
        %v1304 = vmul.f32 %v496, %v1303
        %v1305 = vmul.f32 %v497, %v1303
        %v1306 = vadd.f32 %v1298, %v1304
        %v1307 = vadd.f32 %v1299, %v1305
        %v1308 = vmul.f32 %v781, 0.875
        %v1309 = vmul.f32 %v782, 0.875
        %v1310 = vmul.f32 %v956, 0.125
        %v1311 = vmul.f32 %v957, 0.125
        %v1312 = vadd.f32 %v1308, %v1310
        %v1313 = vadd.f32 %v1309, %v1311
        %v1314 = vmul.f32 %v781, 0.625
        %v1315 = vmul.f32 %v782, 0.625
        %v1316 = vmul.f32 %v956, 0.375
        %v1317 = vmul.f32 %v957, 0.375
        %v1318 = vadd.f32 %v1314, %v1316
        %v1319 = vadd.f32 %v1315, %v1317
        %v1320 = vlaneseq
        %v1321 = vshrl.u32 %v1320, 7
        %v1322 = vsub.s32 0, %v1321
        %v1323 = vrot.slane %v447, %v1322
        %v1324 = vadd.f32 %v781, %v1323
        %v1325 = vadd.f32 %v782, %v1323
        %v1326 = vadd.f32 %v1312, %v1323
        %v1327 = vadd.f32 %v1313, %v1323
        %v1328 = vadd.f32 %v1318, %v1323
        %v1329 = vadd.f32 %v1319, %v1323
        %v1330 = vld [vmem:[%s252] sm:$0xff]
        %v1331 = vld [vmem:[%s252 + $0x8] sm:$0xff]
        %v1332 = vld [vmem:[%s252 + $0x10] sm:$0xff]
        %v1333 = vld [vmem:[%s252 + $0x18] sm:$0xff]
        %v1334 = vld [vmem:[%s252 + $0x20] sm:$0xff]
        %v1335 = vld [vmem:[%s252 + $0x28] sm:$0xff]
        %v1336 = vld [vmem:[%s252 + $0x30] sm:$0xff]
        %v1337 = vld [vmem:[%s252 + $0x38] sm:$0xff]
        %v1338 = vmul.f32 %v1330, %v1324
        %v1339 = vmul.f32 %v1331, %v1325
        %v1340 = vmul.f32 %v1332, %v1324
        %v1341 = vmul.f32 %v1333, %v1325
        %v1342 = vmul.f32 %v1334, %v1326
        %v1343 = vmul.f32 %v1335, %v1327
        %v1344 = vmul.f32 %v1336, %v1328
        %v1345 = vmul.f32 %v1337, %v1329
        %v1346 = vmul.f32 %v1338, 0.5
        %v1347 = vmul.f32 %v1339, 0.5
        %v1348 = vmul.f32 %v1340, 0.5
        %v1349 = vmul.f32 %v1341, 0.5
        %v1350 = vmul.f32 %v1342, 0.5
        %v1351 = vmul.f32 %v1343, 0.5
        %v1352 = vmul.f32 %v1344, 0.5
        %v1353 = vmul.f32 %v1345, 0.5
        %v1354 = vmul.f32 %v1338, 0.044715
        %v1355 = vmul.f32 %v1339, 0.044715
        %v1356 = vmul.f32 %v1340, 0.044715
        %v1357 = vmul.f32 %v1341, 0.044715
        %v1358 = vmul.f32 %v1342, 0.044715
        %v1359 = vmul.f32 %v1343, 0.044715
        %v1360 = vmul.f32 %v1344, 0.044715
        %v1361 = vmul.f32 %v1345, 0.044715
        %v1362 = vmul.f32 %v1354, %v1338
        %v1363 = vmul.f32 %v1355, %v1339
        %v1364 = vmul.f32 %v1356, %v1340
        %v1365 = vmul.f32 %v1357, %v1341
        %v1366 = vmul.f32 %v1358, %v1342
        %v1367 = vmul.f32 %v1359, %v1343
        %v1368 = vmul.f32 %v1360, %v1344
        %v1369 = vmul.f32 %v1361, %v1345
        %v1370 = vmul.f32 %v1362, %v1338
        %v1371 = vmul.f32 %v1363, %v1339
        %v1372 = vmul.f32 %v1364, %v1340
        %v1373 = vmul.f32 %v1365, %v1341
        %v1374 = vmul.f32 %v1366, %v1342
        %v1375 = vmul.f32 %v1367, %v1343
        %v1376 = vmul.f32 %v1368, %v1344
        %v1377 = vmul.f32 %v1369, %v1345
        %v1378 = vadd.f32 %v1338, %v1370
        %v1379 = vadd.f32 %v1339, %v1371
        %v1380 = vadd.f32 %v1340, %v1372
        %v1381 = vadd.f32 %v1341, %v1373
        %v1382 = vadd.f32 %v1342, %v1374
        %v1383 = vadd.f32 %v1343, %v1375
        %v1384 = vadd.f32 %v1344, %v1376
        %v1385 = vadd.f32 %v1345, %v1377
        %v1386 = vmul.f32 %v1378, 0.7978846
        %v1387 = vmul.f32 %v1379, 0.7978846
        %v1388 = vmul.f32 %v1380, 0.7978846
        %v1389 = vmul.f32 %v1381, 0.7978846
        %v1390 = vmul.f32 %v1382, 0.7978846
        %v1391 = vmul.f32 %v1383, 0.7978846
        %v1392 = vmul.f32 %v1384, 0.7978846
        %v1393 = vmul.f32 %v1385, 0.7978846
        %v1394 = vtanh.pop %v1386
        %v1395 = vtanh.pop %v1387
        %v1396 = vtanh.pop %v1388
        %v1397 = vtanh.pop %v1389
        %v1398 = vtanh.pop %v1390
        %v1399 = vtanh.pop %v1391
        %v1400 = vtanh.pop %v1392
        %v1401 = vtanh.pop %v1393
        %v1402 = vadd.f32 %v1394, 1.0
        %v1403 = vadd.f32 %v1395, 1.0
        %v1404 = vadd.f32 %v1396, 1.0
        %v1405 = vadd.f32 %v1397, 1.0
        %v1406 = vadd.f32 %v1398, 1.0
        %v1407 = vadd.f32 %v1399, 1.0
        %v1408 = vadd.f32 %v1400, 1.0
        %v1409 = vadd.f32 %v1401, 1.0
        %v1410 = vmul.f32 %v1346, %v1402
        %v1411 = vmul.f32 %v1347, %v1403
        %v1412 = vmul.f32 %v1348, %v1404
        %v1413 = vmul.f32 %v1349, %v1405
        %v1414 = vmul.f32 %v1350, %v1406
        %v1415 = vmul.f32 %v1351, %v1407
        %v1416 = vmul.f32 %v1352, %v1408
        %v1417 = vmul.f32 %v1353, %v1409
        %v1418 = vsub.f32 %v1330, %v1324
        %v1419 = vsub.f32 %v1331, %v1325
        %v1420 = vsub.f32 %v1332, %v1324
        %v1421 = vsub.f32 %v1333, %v1325
        %v1422 = vsub.f32 %v1334, %v1326
        %v1423 = vsub.f32 %v1335, %v1327
        %v1424 = vsub.f32 %v1336, %v1328
        %v1425 = vsub.f32 %v1337, %v1329
        %v1426 = vmul.f32 %v1418, 0.5
        %v1427 = vmul.f32 %v1419, 0.5
        %v1428 = vmul.f32 %v1420, 0.5
        %v1429 = vmul.f32 %v1421, 0.5
        %v1430 = vmul.f32 %v1422, 0.5
        %v1431 = vmul.f32 %v1423, 0.5
        %v1432 = vmul.f32 %v1424, 0.5
        %v1433 = vmul.f32 %v1425, 0.5
        %v1434 = vmul.f32 %v1418, 0.044715
        %v1435 = vmul.f32 %v1419, 0.044715
        %v1436 = vmul.f32 %v1420, 0.044715
        %v1437 = vmul.f32 %v1421, 0.044715
        %v1438 = vmul.f32 %v1422, 0.044715
        %v1439 = vmul.f32 %v1423, 0.044715
        %v1440 = vmul.f32 %v1424, 0.044715
        %v1441 = vmul.f32 %v1425, 0.044715
        %v1442 = vmul.f32 %v1434, %v1418
        %v1443 = vmul.f32 %v1435, %v1419
        %v1444 = vmul.f32 %v1436, %v1420
        %v1445 = vmul.f32 %v1437, %v1421
        %v1446 = vmul.f32 %v1438, %v1422
        %v1447 = vmul.f32 %v1439, %v1423
        %v1448 = vmul.f32 %v1440, %v1424
        %v1449 = vmul.f32 %v1441, %v1425
        %v1450 = vmul.f32 %v1442, %v1418
        %v1451 = vmul.f32 %v1443, %v1419
        %v1452 = vmul.f32 %v1444, %v1420
        %v1453 = vmul.f32 %v1445, %v1421
        %v1454 = vmul.f32 %v1446, %v1422
        %v1455 = vmul.f32 %v1447, %v1423
        %v1456 = vmul.f32 %v1448, %v1424
        %v1457 = vmul.f32 %v1449, %v1425
        %v1458 = vadd.f32 %v1418, %v1450
        %v1459 = vadd.f32 %v1419, %v1451
        %v1460 = vadd.f32 %v1420, %v1452
        %v1461 = vadd.f32 %v1421, %v1453
        %v1462 = vadd.f32 %v1422, %v1454
        %v1463 = vadd.f32 %v1423, %v1455
        %v1464 = vadd.f32 %v1424, %v1456
        %v1465 = vadd.f32 %v1425, %v1457
        %v1466 = vmul.f32 %v1458, 0.7978846
        %v1467 = vmul.f32 %v1459, 0.7978846
        %v1468 = vmul.f32 %v1460, 0.7978846
        %v1469 = vmul.f32 %v1461, 0.7978846
        %v1470 = vmul.f32 %v1462, 0.7978846
        %v1471 = vmul.f32 %v1463, 0.7978846
        %v1472 = vmul.f32 %v1464, 0.7978846
        %v1473 = vmul.f32 %v1465, 0.7978846
        %v1474 = vtanh.pop %v1466
        %v1475 = vtanh.pop %v1467
        %v1476 = vtanh.pop %v1468
        %v1477 = vtanh.pop %v1469
        %v1478 = vtanh.pop %v1470
        %v1479 = vtanh.pop %v1471
        %v1480 = vtanh.pop %v1472
        %v1481 = vtanh.pop %v1473
        %v1482 = vadd.f32 %v1474, 1.0
        %v1483 = vadd.f32 %v1475, 1.0
        %v1484 = vadd.f32 %v1476, 1.0
        %v1485 = vadd.f32 %v1477, 1.0
        %v1486 = vadd.f32 %v1478, 1.0
        %v1487 = vadd.f32 %v1479, 1.0
        %v1488 = vadd.f32 %v1480, 1.0
        %v1489 = vadd.f32 %v1481, 1.0
        %v1490 = vmul.f32 %v1426, %v1482
        %v1491 = vmul.f32 %v1427, %v1483
        %v1492 = vmul.f32 %v1428, %v1484
        %v1493 = vmul.f32 %v1429, %v1485
        %v1494 = vmul.f32 %v1430, %v1486
        %v1495 = vmul.f32 %v1431, %v1487
        %v1496 = vmul.f32 %v1432, %v1488
        %v1497 = vmul.f32 %v1433, %v1489
        %1498 = vst [vmem:[%s298 + $0x2] sm:$0xff] %v1410
        %1499 = vst [vmem:[%s298 + $0xa] sm:$0xff] %v1411
        %1500 = vst [vmem:[%s298 + $0x1a] sm:$0xff] %v1412
        %1501 = vst [vmem:[%s298 + $0x22] sm:$0xff] %v1413
        %1502 = vst [vmem:[%s298 + $0x32] sm:$0xff] %v1414
        %1503 = vst [vmem:[%s298 + $0x3a] sm:$0xff] %v1415
        %1504 = vst [vmem:[%s298 + $0x4a] sm:$0xff] %v1416
        %1505 = vst [vmem:[%s298 + $0x52] sm:$0xff] %v1417
        %1506 = vst [vmem:[%s344 + $0x2] sm:$0xff] %v1490
        %1507 = vst [vmem:[%s344 + $0xa] sm:$0xff] %v1491
        %1508 = vst [vmem:[%s344 + $0x1a] sm:$0xff] %v1492
        %1509 = vst [vmem:[%s344 + $0x22] sm:$0xff] %v1493
        %1510 = vst [vmem:[%s344 + $0x32] sm:$0xff] %v1494
        %1511 = vst [vmem:[%s344 + $0x3a] sm:$0xff] %v1495
        %1512 = vst [vmem:[%s344 + $0x4a] sm:$0xff] %v1496
        %1513 = vst [vmem:[%s344 + $0x52] sm:$0xff] %v1497
        %v1514 = vmul.f32 %v781, 0.375
        %v1515 = vmul.f32 %v782, 0.375
        %v1516 = vmul.f32 %v956, 0.625
        %v1517 = vmul.f32 %v957, 0.625
        %v1518 = vadd.f32 %v1514, %v1516
        %v1519 = vadd.f32 %v1515, %v1517
        %v1520 = vmul.f32 %v781, 0.125
        %v1521 = vmul.f32 %v782, 0.125
        %v1522 = vmul.f32 %v956, 0.875
        %v1523 = vmul.f32 %v957, 0.875
        %v1524 = vadd.f32 %v1520, %v1522
        %v1525 = vadd.f32 %v1521, %v1523
        %v1526 = vmul.f32 %v1131, 0.125
        %v1527 = vmul.f32 %v1132, 0.125
        %v1528 = vadd.f32 %v1522, %v1526
        %v1529 = vadd.f32 %v1523, %v1527
        %v1530 = vmul.f32 %v1131, 0.375
        %v1531 = vmul.f32 %v1132, 0.375
        %v1532 = vadd.f32 %v1516, %v1530
        %v1533 = vadd.f32 %v1517, %v1531
        %v1534 = vadd.f32 %v1518, %v1323
        %v1535 = vadd.f32 %v1519, %v1323
        %v1536 = vadd.f32 %v1524, %v1323
        %v1537 = vadd.f32 %v1525, %v1323
        %v1538 = vadd.f32 %v1528, %v1323
        %v1539 = vadd.f32 %v1529, %v1323
        %v1540 = vadd.f32 %v1532, %v1323
        %v1541 = vadd.f32 %v1533, %v1323
        %v1542 = vld [vmem:[%s393] sm:$0xff]
        %v1543 = vld [vmem:[%s393 + $0x8] sm:$0xff]
        %v1544 = vld [vmem:[%s393 + $0x10] sm:$0xff]
        %v1545 = vld [vmem:[%s393 + $0x18] sm:$0xff]
        %v1546 = vld [vmem:[%s393 + $0x20] sm:$0xff]
        %v1547 = vld [vmem:[%s393 + $0x28] sm:$0xff]
        %v1548 = vld [vmem:[%s393 + $0x30] sm:$0xff]
        %v1549 = vld [vmem:[%s393 + $0x38] sm:$0xff]
        %v1550 = vmul.f32 %v1542, %v1534
        %v1551 = vmul.f32 %v1543, %v1535
        %v1552 = vmul.f32 %v1544, %v1536
        %v1553 = vmul.f32 %v1545, %v1537
        %v1554 = vmul.f32 %v1546, %v1538
        %v1555 = vmul.f32 %v1547, %v1539
        %v1556 = vmul.f32 %v1548, %v1540
        %v1557 = vmul.f32 %v1549, %v1541
        %v1558 = vmul.f32 %v1550, 0.5
        %v1559 = vmul.f32 %v1551, 0.5
        %v1560 = vmul.f32 %v1552, 0.5
        %v1561 = vmul.f32 %v1553, 0.5
        %v1562 = vmul.f32 %v1554, 0.5
        %v1563 = vmul.f32 %v1555, 0.5
        %v1564 = vmul.f32 %v1556, 0.5
        %v1565 = vmul.f32 %v1557, 0.5
        %v1566 = vmul.f32 %v1550, 0.044715
        %v1567 = vmul.f32 %v1551, 0.044715
        %v1568 = vmul.f32 %v1552, 0.044715
        %v1569 = vmul.f32 %v1553, 0.044715
        %v1570 = vmul.f32 %v1554, 0.044715
        %v1571 = vmul.f32 %v1555, 0.044715
        %v1572 = vmul.f32 %v1556, 0.044715
        %v1573 = vmul.f32 %v1557, 0.044715
        %v1574 = vmul.f32 %v1566, %v1550
        %v1575 = vmul.f32 %v1567, %v1551
        %v1576 = vmul.f32 %v1568, %v1552
        %v1577 = vmul.f32 %v1569, %v1553
        %v1578 = vmul.f32 %v1570, %v1554
        %v1579 = vmul.f32 %v1571, %v1555
        %v1580 = vmul.f32 %v1572, %v1556
        %v1581 = vmul.f32 %v1573, %v1557
        %v1582 = vmul.f32 %v1574, %v1550
        %v1583 = vmul.f32 %v1575, %v1551
        %v1584 = vmul.f32 %v1576, %v1552
        %v1585 = vmul.f32 %v1577, %v1553
        %v1586 = vmul.f32 %v1578, %v1554
        %v1587 = vmul.f32 %v1579, %v1555
        %v1588 = vmul.f32 %v1580, %v1556
        %v1589 = vmul.f32 %v1581, %v1557
        %v1590 = vadd.f32 %v1550, %v1582
        %v1591 = vadd.f32 %v1551, %v1583
        %v1592 = vadd.f32 %v1552, %v1584
        %v1593 = vadd.f32 %v1553, %v1585
        %v1594 = vadd.f32 %v1554, %v1586
        %v1595 = vadd.f32 %v1555, %v1587
        %v1596 = vadd.f32 %v1556, %v1588
        %v1597 = vadd.f32 %v1557, %v1589
        %v1598 = vmul.f32 %v1590, 0.7978846
        %v1599 = vmul.f32 %v1591, 0.7978846
        %v1600 = vmul.f32 %v1592, 0.7978846
        %v1601 = vmul.f32 %v1593, 0.7978846
        %v1602 = vmul.f32 %v1594, 0.7978846
        %v1603 = vmul.f32 %v1595, 0.7978846
        %v1604 = vmul.f32 %v1596, 0.7978846
        %v1605 = vmul.f32 %v1597, 0.7978846
        %v1606 = vtanh.pop %v1598
        %v1607 = vtanh.pop %v1599
        %v1608 = vtanh.pop %v1600
        %v1609 = vtanh.pop %v1601
        %v1610 = vtanh.pop %v1602
        %v1611 = vtanh.pop %v1603
        %v1612 = vtanh.pop %v1604
        %v1613 = vtanh.pop %v1605
        %v1614 = vadd.f32 %v1606, 1.0
        %v1615 = vadd.f32 %v1607, 1.0
        %v1616 = vadd.f32 %v1608, 1.0
        %v1617 = vadd.f32 %v1609, 1.0
        %v1618 = vadd.f32 %v1610, 1.0
        %v1619 = vadd.f32 %v1611, 1.0
        %v1620 = vadd.f32 %v1612, 1.0
        %v1621 = vadd.f32 %v1613, 1.0
        %v1622 = vmul.f32 %v1558, %v1614
        %v1623 = vmul.f32 %v1559, %v1615
        %v1624 = vmul.f32 %v1560, %v1616
        %v1625 = vmul.f32 %v1561, %v1617
        %v1626 = vmul.f32 %v1562, %v1618
        %v1627 = vmul.f32 %v1563, %v1619
        %v1628 = vmul.f32 %v1564, %v1620
        %v1629 = vmul.f32 %v1565, %v1621
        %v1630 = vsub.f32 %v1542, %v1534
        %v1631 = vsub.f32 %v1543, %v1535
        %v1632 = vsub.f32 %v1544, %v1536
        %v1633 = vsub.f32 %v1545, %v1537
        %v1634 = vsub.f32 %v1546, %v1538
        %v1635 = vsub.f32 %v1547, %v1539
        %v1636 = vsub.f32 %v1548, %v1540
        %v1637 = vsub.f32 %v1549, %v1541
        %v1638 = vmul.f32 %v1630, 0.5
        %v1639 = vmul.f32 %v1631, 0.5
        %v1640 = vmul.f32 %v1632, 0.5
        %v1641 = vmul.f32 %v1633, 0.5
        %v1642 = vmul.f32 %v1634, 0.5
        %v1643 = vmul.f32 %v1635, 0.5
        %v1644 = vmul.f32 %v1636, 0.5
        %v1645 = vmul.f32 %v1637, 0.5
        %v1646 = vmul.f32 %v1630, 0.044715
        %v1647 = vmul.f32 %v1631, 0.044715
        %v1648 = vmul.f32 %v1632, 0.044715
        %v1649 = vmul.f32 %v1633, 0.044715
        %v1650 = vmul.f32 %v1634, 0.044715
        %v1651 = vmul.f32 %v1635, 0.044715
        %v1652 = vmul.f32 %v1636, 0.044715
        %v1653 = vmul.f32 %v1637, 0.044715
        %v1654 = vmul.f32 %v1646, %v1630
        %v1655 = vmul.f32 %v1647, %v1631
        %v1656 = vmul.f32 %v1648, %v1632
        %v1657 = vmul.f32 %v1649, %v1633
        %v1658 = vmul.f32 %v1650, %v1634
        %v1659 = vmul.f32 %v1651, %v1635
        %v1660 = vmul.f32 %v1652, %v1636
        %v1661 = vmul.f32 %v1653, %v1637
        %v1662 = vmul.f32 %v1654, %v1630
        %v1663 = vmul.f32 %v1655, %v1631
        %v1664 = vmul.f32 %v1656, %v1632
        %v1665 = vmul.f32 %v1657, %v1633
        %v1666 = vmul.f32 %v1658, %v1634
        %v1667 = vmul.f32 %v1659, %v1635
        %v1668 = vmul.f32 %v1660, %v1636
        %v1669 = vmul.f32 %v1661, %v1637
        %v1670 = vadd.f32 %v1630, %v1662
        %v1671 = vadd.f32 %v1631, %v1663
        %v1672 = vadd.f32 %v1632, %v1664
        %v1673 = vadd.f32 %v1633, %v1665
        %v1674 = vadd.f32 %v1634, %v1666
        %v1675 = vadd.f32 %v1635, %v1667
        %v1676 = vadd.f32 %v1636, %v1668
        %v1677 = vadd.f32 %v1637, %v1669
        %v1678 = vmul.f32 %v1670, 0.7978846
        %v1679 = vmul.f32 %v1671, 0.7978846
        %v1680 = vmul.f32 %v1672, 0.7978846
        %v1681 = vmul.f32 %v1673, 0.7978846
        %v1682 = vmul.f32 %v1674, 0.7978846
        %v1683 = vmul.f32 %v1675, 0.7978846
        %v1684 = vmul.f32 %v1676, 0.7978846
        %v1685 = vmul.f32 %v1677, 0.7978846
        %v1686 = vtanh.pop %v1678
        %v1687 = vtanh.pop %v1679
        %v1688 = vtanh.pop %v1680
        %v1689 = vtanh.pop %v1681
        %v1690 = vtanh.pop %v1682
        %v1691 = vtanh.pop %v1683
        %v1692 = vtanh.pop %v1684
        %v1693 = vtanh.pop %v1685
        %v1694 = vadd.f32 %v1686, 1.0
        %v1695 = vadd.f32 %v1687, 1.0
        %v1696 = vadd.f32 %v1688, 1.0
        %v1697 = vadd.f32 %v1689, 1.0
        %v1698 = vadd.f32 %v1690, 1.0
        %v1699 = vadd.f32 %v1691, 1.0
        %v1700 = vadd.f32 %v1692, 1.0
        %v1701 = vadd.f32 %v1693, 1.0
        %v1702 = vmul.f32 %v1638, %v1694
        %v1703 = vmul.f32 %v1639, %v1695
        %v1704 = vmul.f32 %v1640, %v1696
        %v1705 = vmul.f32 %v1641, %v1697
        %v1706 = vmul.f32 %v1642, %v1698
        %v1707 = vmul.f32 %v1643, %v1699
        %v1708 = vmul.f32 %v1644, %v1700
        %v1709 = vmul.f32 %v1645, %v1701
        %1710 = vst [vmem:[%s402 + $0x2] sm:$0xff] %v1622
        %1711 = vst [vmem:[%s402 + $0xa] sm:$0xff] %v1623
        %1712 = vst [vmem:[%s402 + $0x1a] sm:$0xff] %v1624
        %1713 = vst [vmem:[%s402 + $0x22] sm:$0xff] %v1625
        %1714 = vst [vmem:[%s402 + $0x32] sm:$0xff] %v1626
        %1715 = vst [vmem:[%s402 + $0x3a] sm:$0xff] %v1627
        %1716 = vst [vmem:[%s402 + $0x4a] sm:$0xff] %v1628
        %1717 = vst [vmem:[%s402 + $0x52] sm:$0xff] %v1629
        %s1718 = scalar_lea.vmem [#allocation3], 144
        %1719 = vst [vmem:[%s1718 + $0x2] sm:$0xff] %v1702
        %1720 = vst [vmem:[%s1718 + $0xa] sm:$0xff] %v1703
        %1721 = vst [vmem:[%s1718 + $0x1a] sm:$0xff] %v1704
        %1722 = vst [vmem:[%s1718 + $0x22] sm:$0xff] %v1705
        %1723 = vst [vmem:[%s1718 + $0x32] sm:$0xff] %v1706
        %1724 = vst [vmem:[%s1718 + $0x3a] sm:$0xff] %v1707
        %1725 = vst [vmem:[%s1718 + $0x4a] sm:$0xff] %v1708
        %1726 = vst [vmem:[%s1718 + $0x52] sm:$0xff] %v1709
        %v1727 = vmul.f32 %v1131, 0.625
        %v1728 = vmul.f32 %v1132, 0.625
        %v1729 = vadd.f32 %v1316, %v1727
        %v1730 = vadd.f32 %v1317, %v1728
        %v1731 = vmul.f32 %v1131, 0.875
        %v1732 = vmul.f32 %v1132, 0.875
        %v1733 = vadd.f32 %v1310, %v1731
        %v1734 = vadd.f32 %v1311, %v1732
        %v1735 = vmul.f32 %v1306, 0.125
        %v1736 = vmul.f32 %v1307, 0.125
        %v1737 = vadd.f32 %v1731, %v1735
        %v1738 = vadd.f32 %v1732, %v1736
        %v1739 = vmul.f32 %v1306, 0.375
        %v1740 = vmul.f32 %v1307, 0.375
        %v1741 = vadd.f32 %v1727, %v1739
        %v1742 = vadd.f32 %v1728, %v1740
        %v1743 = vadd.f32 %v1729, %v1323
        %v1744 = vadd.f32 %v1730, %v1323
        %v1745 = vadd.f32 %v1733, %v1323
        %v1746 = vadd.f32 %v1734, %v1323
        %v1747 = vadd.f32 %v1737, %v1323
        %v1748 = vadd.f32 %v1738, %v1323
        %v1749 = vadd.f32 %v1741, %v1323
        %v1750 = vadd.f32 %v1742, %v1323
        %v1751 = vld [vmem:[%s411] sm:$0xff]
        %v1752 = vld [vmem:[%s411 + $0x8] sm:$0xff]
        %v1753 = vld [vmem:[%s411 + $0x10] sm:$0xff]
        %v1754 = vld [vmem:[%s411 + $0x18] sm:$0xff]
        %v1755 = vld [vmem:[%s411 + $0x20] sm:$0xff]
        %v1756 = vld [vmem:[%s411 + $0x28] sm:$0xff]
        %v1757 = vld [vmem:[%s411 + $0x30] sm:$0xff]
        %v1758 = vld [vmem:[%s411 + $0x38] sm:$0xff]
        %v1759 = vmul.f32 %v1751, %v1743
        %v1760 = vmul.f32 %v1752, %v1744
        %v1761 = vmul.f32 %v1753, %v1745
        %v1762 = vmul.f32 %v1754, %v1746
        %v1763 = vmul.f32 %v1755, %v1747
        %v1764 = vmul.f32 %v1756, %v1748
        %v1765 = vmul.f32 %v1757, %v1749
        %v1766 = vmul.f32 %v1758, %v1750
        %v1767 = vmul.f32 %v1759, 0.5
        %v1768 = vmul.f32 %v1760, 0.5
        %v1769 = vmul.f32 %v1761, 0.5
        %v1770 = vmul.f32 %v1762, 0.5
        %v1771 = vmul.f32 %v1763, 0.5
        %v1772 = vmul.f32 %v1764, 0.5
        %v1773 = vmul.f32 %v1765, 0.5
        %v1774 = vmul.f32 %v1766, 0.5
        %v1775 = vmul.f32 %v1759, 0.044715
        %v1776 = vmul.f32 %v1760, 0.044715
        %v1777 = vmul.f32 %v1761, 0.044715
        %v1778 = vmul.f32 %v1762, 0.044715
        %v1779 = vmul.f32 %v1763, 0.044715
        %v1780 = vmul.f32 %v1764, 0.044715
        %v1781 = vmul.f32 %v1765, 0.044715
        %v1782 = vmul.f32 %v1766, 0.044715
        %v1783 = vmul.f32 %v1775, %v1759
        %v1784 = vmul.f32 %v1776, %v1760
        %v1785 = vmul.f32 %v1777, %v1761
        %v1786 = vmul.f32 %v1778, %v1762
        %v1787 = vmul.f32 %v1779, %v1763
        %v1788 = vmul.f32 %v1780, %v1764
        %v1789 = vmul.f32 %v1781, %v1765
        %v1790 = vmul.f32 %v1782, %v1766
        %v1791 = vmul.f32 %v1783, %v1759
        %v1792 = vmul.f32 %v1784, %v1760
        %v1793 = vmul.f32 %v1785, %v1761
        %v1794 = vmul.f32 %v1786, %v1762
        %v1795 = vmul.f32 %v1787, %v1763
        %v1796 = vmul.f32 %v1788, %v1764
        %v1797 = vmul.f32 %v1789, %v1765
        %v1798 = vmul.f32 %v1790, %v1766
        %v1799 = vadd.f32 %v1759, %v1791
        %v1800 = vadd.f32 %v1760, %v1792
        %v1801 = vadd.f32 %v1761, %v1793
        %v1802 = vadd.f32 %v1762, %v1794
        %v1803 = vadd.f32 %v1763, %v1795
        %v1804 = vadd.f32 %v1764, %v1796
        %v1805 = vadd.f32 %v1765, %v1797
        %v1806 = vadd.f32 %v1766, %v1798
        %v1807 = vmul.f32 %v1799, 0.7978846
        %v1808 = vmul.f32 %v1800, 0.7978846
        %v1809 = vmul.f32 %v1801, 0.7978846
        %v1810 = vmul.f32 %v1802, 0.7978846
        %v1811 = vmul.f32 %v1803, 0.7978846
        %v1812 = vmul.f32 %v1804, 0.7978846
        %v1813 = vmul.f32 %v1805, 0.7978846
        %v1814 = vmul.f32 %v1806, 0.7978846
        %v1815 = vtanh.pop %v1807
        %v1816 = vtanh.pop %v1808
        %v1817 = vtanh.pop %v1809
        %v1818 = vtanh.pop %v1810
        %v1819 = vtanh.pop %v1811
        %v1820 = vtanh.pop %v1812
        %v1821 = vtanh.pop %v1813
        %v1822 = vtanh.pop %v1814
        %v1823 = vadd.f32 %v1815, 1.0
        %v1824 = vadd.f32 %v1816, 1.0
        %v1825 = vadd.f32 %v1817, 1.0
        %v1826 = vadd.f32 %v1818, 1.0
        %v1827 = vadd.f32 %v1819, 1.0
        %v1828 = vadd.f32 %v1820, 1.0
        %v1829 = vadd.f32 %v1821, 1.0
        %v1830 = vadd.f32 %v1822, 1.0
        %v1831 = vmul.f32 %v1767, %v1823
        %v1832 = vmul.f32 %v1768, %v1824
        %v1833 = vmul.f32 %v1769, %v1825
        %v1834 = vmul.f32 %v1770, %v1826
        %v1835 = vmul.f32 %v1771, %v1827
        %v1836 = vmul.f32 %v1772, %v1828
        %v1837 = vmul.f32 %v1773, %v1829
        %v1838 = vmul.f32 %v1774, %v1830
        %v1839 = vsub.f32 %v1751, %v1743
        %v1840 = vsub.f32 %v1752, %v1744
        %v1841 = vsub.f32 %v1753, %v1745
        %v1842 = vsub.f32 %v1754, %v1746
        %v1843 = vsub.f32 %v1755, %v1747
        %v1844 = vsub.f32 %v1756, %v1748
        %v1845 = vsub.f32 %v1757, %v1749
        %v1846 = vsub.f32 %v1758, %v1750
        %v1847 = vmul.f32 %v1839, 0.5
        %v1848 = vmul.f32 %v1840, 0.5
        %v1849 = vmul.f32 %v1841, 0.5
        %v1850 = vmul.f32 %v1842, 0.5
        %v1851 = vmul.f32 %v1843, 0.5
        %v1852 = vmul.f32 %v1844, 0.5
        %v1853 = vmul.f32 %v1845, 0.5
        %v1854 = vmul.f32 %v1846, 0.5
        %v1855 = vmul.f32 %v1839, 0.044715
        %v1856 = vmul.f32 %v1840, 0.044715
        %v1857 = vmul.f32 %v1841, 0.044715
        %v1858 = vmul.f32 %v1842, 0.044715
        %v1859 = vmul.f32 %v1843, 0.044715
        %v1860 = vmul.f32 %v1844, 0.044715
        %v1861 = vmul.f32 %v1845, 0.044715
        %v1862 = vmul.f32 %v1846, 0.044715
        %v1863 = vmul.f32 %v1855, %v1839
        %v1864 = vmul.f32 %v1856, %v1840
        %v1865 = vmul.f32 %v1857, %v1841
        %v1866 = vmul.f32 %v1858, %v1842
        %v1867 = vmul.f32 %v1859, %v1843
        %v1868 = vmul.f32 %v1860, %v1844
        %v1869 = vmul.f32 %v1861, %v1845
        %v1870 = vmul.f32 %v1862, %v1846
        %v1871 = vmul.f32 %v1863, %v1839
        %v1872 = vmul.f32 %v1864, %v1840
        %v1873 = vmul.f32 %v1865, %v1841
        %v1874 = vmul.f32 %v1866, %v1842
        %v1875 = vmul.f32 %v1867, %v1843
        %v1876 = vmul.f32 %v1868, %v1844
        %v1877 = vmul.f32 %v1869, %v1845
        %v1878 = vmul.f32 %v1870, %v1846
        %v1879 = vadd.f32 %v1839, %v1871
        %v1880 = vadd.f32 %v1840, %v1872
        %v1881 = vadd.f32 %v1841, %v1873
        %v1882 = vadd.f32 %v1842, %v1874
        %v1883 = vadd.f32 %v1843, %v1875
        %v1884 = vadd.f32 %v1844, %v1876
        %v1885 = vadd.f32 %v1845, %v1877
        %v1886 = vadd.f32 %v1846, %v1878
        %v1887 = vmul.f32 %v1879, 0.7978846
        %v1888 = vmul.f32 %v1880, 0.7978846
        %v1889 = vmul.f32 %v1881, 0.7978846
        %v1890 = vmul.f32 %v1882, 0.7978846
        %v1891 = vmul.f32 %v1883, 0.7978846
        %v1892 = vmul.f32 %v1884, 0.7978846
        %v1893 = vmul.f32 %v1885, 0.7978846
        %v1894 = vmul.f32 %v1886, 0.7978846
        %v1895 = vtanh.pop %v1887
        %v1896 = vtanh.pop %v1888
        %v1897 = vtanh.pop %v1889
        %v1898 = vtanh.pop %v1890
        %v1899 = vtanh.pop %v1891
        %v1900 = vtanh.pop %v1892
        %v1901 = vtanh.pop %v1893
        %v1902 = vtanh.pop %v1894
        %v1903 = vadd.f32 %v1895, 1.0
        %v1904 = vadd.f32 %v1896, 1.0
        %v1905 = vadd.f32 %v1897, 1.0
        %v1906 = vadd.f32 %v1898, 1.0
        %v1907 = vadd.f32 %v1899, 1.0
        %v1908 = vadd.f32 %v1900, 1.0
        %v1909 = vadd.f32 %v1901, 1.0
        %v1910 = vadd.f32 %v1902, 1.0
        %v1911 = vmul.f32 %v1847, %v1903
        %v1912 = vmul.f32 %v1848, %v1904
        %v1913 = vmul.f32 %v1849, %v1905
        %v1914 = vmul.f32 %v1850, %v1906
        %v1915 = vmul.f32 %v1851, %v1907
        %v1916 = vmul.f32 %v1852, %v1908
        %v1917 = vmul.f32 %v1853, %v1909
        %v1918 = vmul.f32 %v1854, %v1910
        %1919 = vst [vmem:[%s420 + $0x2] sm:$0xff] %v1831
        %1920 = vst [vmem:[%s420 + $0xa] sm:$0xff] %v1832
        %1921 = vst [vmem:[%s420 + $0x1a] sm:$0xff] %v1833
        %1922 = vst [vmem:[%s420 + $0x22] sm:$0xff] %v1834
        %1923 = vst [vmem:[%s420 + $0x32] sm:$0xff] %v1835
        %1924 = vst [vmem:[%s420 + $0x3a] sm:$0xff] %v1836
        %1925 = vst [vmem:[%s420 + $0x4a] sm:$0xff] %v1837
        %1926 = vst [vmem:[%s420 + $0x52] sm:$0xff] %v1838
        %s1927 = scalar_lea.vmem [#allocation3], 240
        %1928 = vst [vmem:[%s1927 + $0x2] sm:$0xff] %v1911
        %1929 = vst [vmem:[%s1927 + $0xa] sm:$0xff] %v1912
        %1930 = vst [vmem:[%s1927 + $0x1a] sm:$0xff] %v1913
        %1931 = vst [vmem:[%s1927 + $0x22] sm:$0xff] %v1914
        %1932 = vst [vmem:[%s1927 + $0x32] sm:$0xff] %v1915
        %1933 = vst [vmem:[%s1927 + $0x3a] sm:$0xff] %v1916
        %1934 = vst [vmem:[%s1927 + $0x4a] sm:$0xff] %v1917
        %1935 = vst [vmem:[%s1927 + $0x52] sm:$0xff] %v1918
        %v1936 = vmul.f32 %v1306, 0.625
        %v1937 = vmul.f32 %v1307, 0.625
        %v1938 = vadd.f32 %v1530, %v1936
        %v1939 = vadd.f32 %v1531, %v1937
        %v1940 = vmul.f32 %v1306, 0.875
        %v1941 = vmul.f32 %v1307, 0.875
        %v1942 = vadd.f32 %v1526, %v1940
        %v1943 = vadd.f32 %v1527, %v1941
        %v1944 = vadd.f32 %v1938, %v1323
        %v1945 = vadd.f32 %v1939, %v1323
        %v1946 = vadd.f32 %v1942, %v1323
        %v1947 = vadd.f32 %v1943, %v1323
        %v1948 = vadd.f32 %v1306, %v1323
        %v1949 = vadd.f32 %v1307, %v1323
        %v1950 = vld [vmem:[%s429] sm:$0xff]
        %v1951 = vld [vmem:[%s429 + $0x8] sm:$0xff]
        %v1952 = vld [vmem:[%s429 + $0x10] sm:$0xff]
        %v1953 = vld [vmem:[%s429 + $0x18] sm:$0xff]
        %v1954 = vld [vmem:[%s429 + $0x20] sm:$0xff]
        %v1955 = vld [vmem:[%s429 + $0x28] sm:$0xff]
        %v1956 = vld [vmem:[%s429 + $0x30] sm:$0xff]
        %v1957 = vld [vmem:[%s429 + $0x38] sm:$0xff]
        %v1958 = vmul.f32 %v1950, %v1944
        %v1959 = vmul.f32 %v1951, %v1945
        %v1960 = vmul.f32 %v1952, %v1946
        %v1961 = vmul.f32 %v1953, %v1947
        %v1962 = vmul.f32 %v1954, %v1948
        %v1963 = vmul.f32 %v1955, %v1949
        %v1964 = vmul.f32 %v1956, %v1948
        %v1965 = vmul.f32 %v1957, %v1949
        %v1966 = vmul.f32 %v1958, 0.5
        %v1967 = vmul.f32 %v1959, 0.5
        %v1968 = vmul.f32 %v1960, 0.5
        %v1969 = vmul.f32 %v1961, 0.5
        %v1970 = vmul.f32 %v1962, 0.5
        %v1971 = vmul.f32 %v1963, 0.5
        %v1972 = vmul.f32 %v1964, 0.5
        %v1973 = vmul.f32 %v1965, 0.5
        %v1974 = vmul.f32 %v1958, 0.044715
        %v1975 = vmul.f32 %v1959, 0.044715
        %v1976 = vmul.f32 %v1960, 0.044715
        %v1977 = vmul.f32 %v1961, 0.044715
        %v1978 = vmul.f32 %v1962, 0.044715
        %v1979 = vmul.f32 %v1963, 0.044715
        %v1980 = vmul.f32 %v1964, 0.044715
        %v1981 = vmul.f32 %v1965, 0.044715
        %v1982 = vmul.f32 %v1974, %v1958
        %v1983 = vmul.f32 %v1975, %v1959
        %v1984 = vmul.f32 %v1976, %v1960
        %v1985 = vmul.f32 %v1977, %v1961
        %v1986 = vmul.f32 %v1978, %v1962
        %v1987 = vmul.f32 %v1979, %v1963
        %v1988 = vmul.f32 %v1980, %v1964
        %v1989 = vmul.f32 %v1981, %v1965
        %v1990 = vmul.f32 %v1982, %v1958
        %v1991 = vmul.f32 %v1983, %v1959
        %v1992 = vmul.f32 %v1984, %v1960
        %v1993 = vmul.f32 %v1985, %v1961
        %v1994 = vmul.f32 %v1986, %v1962
        %v1995 = vmul.f32 %v1987, %v1963
        %v1996 = vmul.f32 %v1988, %v1964
        %v1997 = vmul.f32 %v1989, %v1965
        %v1998 = vadd.f32 %v1958, %v1990
        %v1999 = vadd.f32 %v1959, %v1991
        %v2000 = vadd.f32 %v1960, %v1992
        %v2001 = vadd.f32 %v1961, %v1993
        %v2002 = vadd.f32 %v1962, %v1994
        %v2003 = vadd.f32 %v1963, %v1995
        %v2004 = vadd.f32 %v1964, %v1996
        %v2005 = vadd.f32 %v1965, %v1997
        %v2006 = vmul.f32 %v1998, 0.7978846
        %v2007 = vmul.f32 %v1999, 0.7978846
        %v2008 = vmul.f32 %v2000, 0.7978846
        %v2009 = vmul.f32 %v2001, 0.7978846
        %v2010 = vmul.f32 %v2002, 0.7978846
        %v2011 = vmul.f32 %v2003, 0.7978846
        %v2012 = vmul.f32 %v2004, 0.7978846
        %v2013 = vmul.f32 %v2005, 0.7978846
        %v2014 = vtanh.pop %v2006
        %v2015 = vtanh.pop %v2007
        %v2016 = vtanh.pop %v2008
        %v2017 = vtanh.pop %v2009
        %v2018 = vtanh.pop %v2010
        %v2019 = vtanh.pop %v2011
        %v2020 = vtanh.pop %v2012
        %v2021 = vtanh.pop %v2013
        %v2022 = vadd.f32 %v2014, 1.0
        %v2023 = vadd.f32 %v2015, 1.0
        %v2024 = vadd.f32 %v2016, 1.0
        %v2025 = vadd.f32 %v2017, 1.0
        %v2026 = vadd.f32 %v2018, 1.0
        %v2027 = vadd.f32 %v2019, 1.0
        %v2028 = vadd.f32 %v2020, 1.0
        %v2029 = vadd.f32 %v2021, 1.0
        %v2030 = vmul.f32 %v1966, %v2022
        %v2031 = vmul.f32 %v1967, %v2023
        %v2032 = vmul.f32 %v1968, %v2024
        %v2033 = vmul.f32 %v1969, %v2025
        %v2034 = vmul.f32 %v1970, %v2026
        %v2035 = vmul.f32 %v1971, %v2027
        %v2036 = vmul.f32 %v1972, %v2028
        %v2037 = vmul.f32 %v1973, %v2029
        %v2038 = vsub.f32 %v1950, %v1944
        %v2039 = vsub.f32 %v1951, %v1945
        %v2040 = vsub.f32 %v1952, %v1946
        %v2041 = vsub.f32 %v1953, %v1947
        %v2042 = vsub.f32 %v1954, %v1948
        %v2043 = vsub.f32 %v1955, %v1949
        %v2044 = vsub.f32 %v1956, %v1948
        %v2045 = vsub.f32 %v1957, %v1949
        %v2046 = vmul.f32 %v2038, 0.5
        %v2047 = vmul.f32 %v2039, 0.5
        %v2048 = vmul.f32 %v2040, 0.5
        %v2049 = vmul.f32 %v2041, 0.5
        %v2050 = vmul.f32 %v2042, 0.5
        %v2051 = vmul.f32 %v2043, 0.5
        %v2052 = vmul.f32 %v2044, 0.5
        %v2053 = vmul.f32 %v2045, 0.5
        %v2054 = vmul.f32 %v2038, 0.044715
        %v2055 = vmul.f32 %v2039, 0.044715
        %v2056 = vmul.f32 %v2040, 0.044715
        %v2057 = vmul.f32 %v2041, 0.044715
        %v2058 = vmul.f32 %v2042, 0.044715
        %v2059 = vmul.f32 %v2043, 0.044715
        %v2060 = vmul.f32 %v2044, 0.044715
        %v2061 = vmul.f32 %v2045, 0.044715
        %v2062 = vmul.f32 %v2054, %v2038
        %v2063 = vmul.f32 %v2055, %v2039
        %v2064 = vmul.f32 %v2056, %v2040
        %v2065 = vmul.f32 %v2057, %v2041
        %v2066 = vmul.f32 %v2058, %v2042
        %v2067 = vmul.f32 %v2059, %v2043
        %v2068 = vmul.f32 %v2060, %v2044
        %v2069 = vmul.f32 %v2061, %v2045
        %v2070 = vmul.f32 %v2062, %v2038
        %v2071 = vmul.f32 %v2063, %v2039
        %v2072 = vmul.f32 %v2064, %v2040
        %v2073 = vmul.f32 %v2065, %v2041
        %v2074 = vmul.f32 %v2066, %v2042
        %v2075 = vmul.f32 %v2067, %v2043
        %v2076 = vmul.f32 %v2068, %v2044
        %v2077 = vmul.f32 %v2069, %v2045
        %v2078 = vadd.f32 %v2038, %v2070
        %v2079 = vadd.f32 %v2039, %v2071
        %v2080 = vadd.f32 %v2040, %v2072
        %v2081 = vadd.f32 %v2041, %v2073
        %v2082 = vadd.f32 %v2042, %v2074
        %v2083 = vadd.f32 %v2043, %v2075
        %v2084 = vadd.f32 %v2044, %v2076
        %v2085 = vadd.f32 %v2045, %v2077
        %v2086 = vmul.f32 %v2078, 0.7978846
        %v2087 = vmul.f32 %v2079, 0.7978846
        %v2088 = vmul.f32 %v2080, 0.7978846
        %v2089 = vmul.f32 %v2081, 0.7978846
        %v2090 = vmul.f32 %v2082, 0.7978846
        %v2091 = vmul.f32 %v2083, 0.7978846
        %v2092 = vmul.f32 %v2084, 0.7978846
        %v2093 = vmul.f32 %v2085, 0.7978846
        %v2094 = vtanh.pop %v2086
        %v2095 = vtanh.pop %v2087
        %v2096 = vtanh.pop %v2088
        %v2097 = vtanh.pop %v2089
        %v2098 = vtanh.pop %v2090
        %v2099 = vtanh.pop %v2091
        %v2100 = vtanh.pop %v2092
        %v2101 = vtanh.pop %v2093
        %v2102 = vadd.f32 %v2094, 1.0
        %v2103 = vadd.f32 %v2095, 1.0
        %v2104 = vadd.f32 %v2096, 1.0
        %v2105 = vadd.f32 %v2097, 1.0
        %v2106 = vadd.f32 %v2098, 1.0
        %v2107 = vadd.f32 %v2099, 1.0
        %v2108 = vadd.f32 %v2100, 1.0
        %v2109 = vadd.f32 %v2101, 1.0
        %v2110 = vmul.f32 %v2046, %v2102
        %v2111 = vmul.f32 %v2047, %v2103
        %v2112 = vmul.f32 %v2048, %v2104
        %v2113 = vmul.f32 %v2049, %v2105
        %v2114 = vmul.f32 %v2050, %v2106
        %v2115 = vmul.f32 %v2051, %v2107
        %v2116 = vmul.f32 %v2052, %v2108
        %v2117 = vmul.f32 %v2053, %v2109
        %2118 = vst [vmem:[%s438 + $0x2] sm:$0xff] %v2030
        %2119 = vst [vmem:[%s438 + $0xa] sm:$0xff] %v2031
        %2120 = vst [vmem:[%s438 + $0x1a] sm:$0xff] %v2032
        %2121 = vst [vmem:[%s438 + $0x22] sm:$0xff] %v2033
        %2122 = vst [vmem:[%s438 + $0x32] sm:$0xff] %v2034
        %2123 = vst [vmem:[%s438 + $0x3a] sm:$0xff] %v2035
        %2124 = vst [vmem:[%s438 + $0x4a] sm:$0xff] %v2036
        %2125 = vst [vmem:[%s438 + $0x52] sm:$0xff] %v2037
        %s2126 = scalar_lea.vmem [#allocation3], 336
        %2127 = vst [vmem:[%s2126 + $0x2] sm:$0xff] %v2110
        %2128 = vst [vmem:[%s2126 + $0xa] sm:$0xff] %v2111
        %2129 = vst [vmem:[%s2126 + $0x1a] sm:$0xff] %v2112
        %2130 = vst [vmem:[%s2126 + $0x22] sm:$0xff] %v2113
        %2131 = vst [vmem:[%s2126 + $0x32] sm:$0xff] %v2114
        %2132 = vst [vmem:[%s2126 + $0x3a] sm:$0xff] %v2115
        %2133 = vst [vmem:[%s2126 + $0x4a] sm:$0xff] %v2116
        %2134 = vst [vmem:[%s2126 + $0x52] sm:$0xff] %v2117
        %v2135 = vld [vmem:[%s2] sm:$0x7]
        %v2136 = vld [vmem:[%s2 + $0x4] sm:$0x7]
        %v2137 = vld [vmem:[%s2 + $0x8] sm:$0x7]
        %v2138 = vld [vmem:[%s548 + $0x1] sm:$0xff]
        %v2139 = vld [vmem:[%s548 + $0x9] sm:$0xff]
        %v2140 = vld [vmem:[%s548 + $0x19] sm:$0xff]
        %v2141 = vld [vmem:[%s548 + $0x21] sm:$0xff]
        %v2142 = vld [vmem:[%s548 + $0x31] sm:$0xff]
        %v2143 = vld [vmem:[%s548 + $0x39] sm:$0xff]
        %v2144 = vld [vmem:[%s548 + $0x49] sm:$0xff]
        %v2145 = vld [vmem:[%s548 + $0x51] sm:$0xff]
        %v2146 = vld [vmem:[%s548 + $0x61] sm:$0xff]
        %v2147 = vld [vmem:[%s548 + $0x69] sm:$0xff]
        %v2148 = vld [vmem:[%s548 + $0x79] sm:$0xff]
        %v2149 = vld [vmem:[%s548 + $0x81] sm:$0xff]
        %v2150 = vlaneseq
        %v2151 = vshrl.u32 %v2150, 7
        %v2152 = vsub.s32 0, %v2151
        %v2153 = vrot.slane %v2135, %v2152
        %v2154 = vmul.f32 %v2153, %v2138
        %v2155 = vmul.f32 %v2153, %v2139
        %v2156 = vmul.f32 %v2153, %v2140
        %v2157 = vmul.f32 %v2153, %v2141
        %v2158 = vmul.f32 %v2153, %v2142
        %v2159 = vmul.f32 %v2153, %v2143
        %v2160 = vmul.f32 %v2153, %v2144
        %v2161 = vmul.f32 %v2153, %v2145
        %v2162 = vadd.f32 %v2154, 0.0
        %v2163 = vadd.f32 %v2155, 0.0
        %v2164 = vadd.f32 %v2156, 0.0
        %v2165 = vadd.f32 %v2157, 0.0
        %v2166 = vadd.f32 %v2158, 0.0
        %v2167 = vadd.f32 %v2159, 0.0
        %v2168 = vadd.f32 %v2160, 0.0
        %v2169 = vadd.f32 %v2161, 0.0
        %v2170 = vlaneseq
        %v2171 = vshrl.u32 %v2170, 7
        %v2172 = vsub.s32 0, %v2171
        %v2173 = vrot.slane %v2136, %v2172
        %v2174 = vmul.f32 %v2173, %v2140
        %v2175 = vmul.f32 %v2173, %v2141
        %v2176 = vmul.f32 %v2173, %v2142
        %v2177 = vmul.f32 %v2173, %v2143
        %v2178 = vmul.f32 %v2173, %v2144
        %v2179 = vmul.f32 %v2173, %v2145
        %v2180 = vmul.f32 %v2173, %v2146
        %v2181 = vmul.f32 %v2173, %v2147
        %v2182 = vadd.f32 %v2162, %v2174
        %v2183 = vadd.f32 %v2163, %v2175
        %v2184 = vadd.f32 %v2164, %v2176
        %v2185 = vadd.f32 %v2165, %v2177
        %v2186 = vadd.f32 %v2166, %v2178
        %v2187 = vadd.f32 %v2167, %v2179
        %v2188 = vadd.f32 %v2168, %v2180
        %v2189 = vadd.f32 %v2169, %v2181
        %v2190 = vlaneseq
        %v2191 = vshrl.u32 %v2190, 7
        %v2192 = vsub.s32 0, %v2191
        %v2193 = vrot.slane %v2137, %v2192
        %v2194 = vmul.f32 %v2193, %v2142
        %v2195 = vmul.f32 %v2193, %v2143
        %v2196 = vmul.f32 %v2193, %v2144
        %v2197 = vmul.f32 %v2193, %v2145
        %v2198 = vmul.f32 %v2193, %v2146
        %v2199 = vmul.f32 %v2193, %v2147
        %v2200 = vmul.f32 %v2193, %v2148
        %v2201 = vmul.f32 %v2193, %v2149
        %v2202 = vadd.f32 %v2182, %v2194
        %v2203 = vadd.f32 %v2183, %v2195
        %v2204 = vadd.f32 %v2184, %v2196
        %v2205 = vadd.f32 %v2185, %v2197
        %v2206 = vadd.f32 %v2186, %v2198
        %v2207 = vadd.f32 %v2187, %v2199
        %v2208 = vadd.f32 %v2188, %v2200
        %v2209 = vadd.f32 %v2189, %v2201
        %v2210 = vld [vmem:[%s548 + $0x2] sm:$0xff]
        %v2211 = vld [vmem:[%s548 + $0xa] sm:$0xff]
        %v2212 = vld [vmem:[%s548 + $0x1a] sm:$0xff]
        %v2213 = vld [vmem:[%s548 + $0x22] sm:$0xff]
        %v2214 = vld [vmem:[%s548 + $0x32] sm:$0xff]
        %v2215 = vld [vmem:[%s548 + $0x3a] sm:$0xff]
        %v2216 = vld [vmem:[%s548 + $0x4a] sm:$0xff]
        %v2217 = vld [vmem:[%s548 + $0x52] sm:$0xff]
        %v2218 = vld [vmem:[%s548 + $0x62] sm:$0xff]
        %v2219 = vld [vmem:[%s548 + $0x6a] sm:$0xff]
        %v2220 = vld [vmem:[%s548 + $0x7a] sm:$0xff]
        %v2221 = vld [vmem:[%s548 + $0x82] sm:$0xff]
        %v2222 = vlaneseq
        %v2223 = vshrl.u32 %v2222, 7
        %v2224 = vsub.s32 1, %v2223
        %v2225 = vrot.slane %v2135, %v2224
        %v2226 = vmul.f32 %v2225, %v2210
        %v2227 = vmul.f32 %v2225, %v2211
        %v2228 = vmul.f32 %v2225, %v2212
        %v2229 = vmul.f32 %v2225, %v2213
        %v2230 = vmul.f32 %v2225, %v2214
        %v2231 = vmul.f32 %v2225, %v2215
        %v2232 = vmul.f32 %v2225, %v2216
        %v2233 = vmul.f32 %v2225, %v2217
        %v2234 = vadd.f32 %v2202, %v2226
        %v2235 = vadd.f32 %v2203, %v2227
        %v2236 = vadd.f32 %v2204, %v2228
        %v2237 = vadd.f32 %v2205, %v2229
        %v2238 = vadd.f32 %v2206, %v2230
        %v2239 = vadd.f32 %v2207, %v2231
        %v2240 = vadd.f32 %v2208, %v2232
        %v2241 = vadd.f32 %v2209, %v2233
        %v2242 = vlaneseq
        %v2243 = vshrl.u32 %v2242, 7
        %v2244 = vsub.s32 1, %v2243
        %v2245 = vrot.slane %v2136, %v2244
        %v2246 = vmul.f32 %v2245, %v2212
        %v2247 = vmul.f32 %v2245, %v2213
        %v2248 = vmul.f32 %v2245, %v2214
        %v2249 = vmul.f32 %v2245, %v2215
        %v2250 = vmul.f32 %v2245, %v2216
        %v2251 = vmul.f32 %v2245, %v2217
        %v2252 = vmul.f32 %v2245, %v2218
        %v2253 = vmul.f32 %v2245, %v2219
        %v2254 = vadd.f32 %v2234, %v2246
        %v2255 = vadd.f32 %v2235, %v2247
        %v2256 = vadd.f32 %v2236, %v2248
        %v2257 = vadd.f32 %v2237, %v2249
        %v2258 = vadd.f32 %v2238, %v2250
        %v2259 = vadd.f32 %v2239, %v2251
        %v2260 = vadd.f32 %v2240, %v2252
        %v2261 = vadd.f32 %v2241, %v2253
        %v2262 = vlaneseq
        %v2263 = vshrl.u32 %v2262, 7
        %v2264 = vsub.s32 1, %v2263
        %v2265 = vrot.slane %v2137, %v2264
        %v2266 = vmul.f32 %v2265, %v2214
        %v2267 = vmul.f32 %v2265, %v2215
        %v2268 = vmul.f32 %v2265, %v2216
        %v2269 = vmul.f32 %v2265, %v2217
        %v2270 = vmul.f32 %v2265, %v2218
        %v2271 = vmul.f32 %v2265, %v2219
        %v2272 = vmul.f32 %v2265, %v2220
        %v2273 = vmul.f32 %v2265, %v2221
        %v2274 = vadd.f32 %v2254, %v2266
        %v2275 = vadd.f32 %v2255, %v2267
        %v2276 = vadd.f32 %v2256, %v2268
        %v2277 = vadd.f32 %v2257, %v2269
        %v2278 = vadd.f32 %v2258, %v2270
        %v2279 = vadd.f32 %v2259, %v2271
        %v2280 = vadd.f32 %v2260, %v2272
        %v2281 = vadd.f32 %v2261, %v2273
        %v2282 = vld [vmem:[%s548 + $0x3] sm:$0xff]
        %v2283 = vld [vmem:[%s548 + $0xb] sm:$0xff]
        %v2284 = vld [vmem:[%s548 + $0x1b] sm:$0xff]
        %v2285 = vld [vmem:[%s548 + $0x23] sm:$0xff]
        %v2286 = vld [vmem:[%s548 + $0x33] sm:$0xff]
        %v2287 = vld [vmem:[%s548 + $0x3b] sm:$0xff]
        %v2288 = vld [vmem:[%s548 + $0x4b] sm:$0xff]
        %v2289 = vld [vmem:[%s548 + $0x53] sm:$0xff]
        %v2290 = vld [vmem:[%s548 + $0x63] sm:$0xff]
        %v2291 = vld [vmem:[%s548 + $0x6b] sm:$0xff]
        %v2292 = vld [vmem:[%s548 + $0x7b] sm:$0xff]
        %v2293 = vld [vmem:[%s548 + $0x83] sm:$0xff]
        %v2294 = vlaneseq
        %v2295 = vshrl.u32 %v2294, 7
        %v2296 = vsub.s32 2, %v2295
        %v2297 = vrot.slane %v2135, %v2296
        %v2298 = vmul.f32 %v2297, %v2282
        %v2299 = vmul.f32 %v2297, %v2283
        %v2300 = vmul.f32 %v2297, %v2284
        %v2301 = vmul.f32 %v2297, %v2285
        %v2302 = vmul.f32 %v2297, %v2286
        %v2303 = vmul.f32 %v2297, %v2287
        %v2304 = vmul.f32 %v2297, %v2288
        %v2305 = vmul.f32 %v2297, %v2289
        %v2306 = vadd.f32 %v2274, %v2298
        %v2307 = vadd.f32 %v2275, %v2299
        %v2308 = vadd.f32 %v2276, %v2300
        %v2309 = vadd.f32 %v2277, %v2301
        %v2310 = vadd.f32 %v2278, %v2302
        %v2311 = vadd.f32 %v2279, %v2303
        %v2312 = vadd.f32 %v2280, %v2304
        %v2313 = vadd.f32 %v2281, %v2305
        %v2314 = vlaneseq
        %v2315 = vshrl.u32 %v2314, 7
        %v2316 = vsub.s32 2, %v2315
        %v2317 = vrot.slane %v2136, %v2316
        %v2318 = vmul.f32 %v2317, %v2284
        %v2319 = vmul.f32 %v2317, %v2285
        %v2320 = vmul.f32 %v2317, %v2286
        %v2321 = vmul.f32 %v2317, %v2287
        %v2322 = vmul.f32 %v2317, %v2288
        %v2323 = vmul.f32 %v2317, %v2289
        %v2324 = vmul.f32 %v2317, %v2290
        %v2325 = vmul.f32 %v2317, %v2291
        %v2326 = vadd.f32 %v2306, %v2318
        %v2327 = vadd.f32 %v2307, %v2319
        %v2328 = vadd.f32 %v2308, %v2320
        %v2329 = vadd.f32 %v2309, %v2321
        %v2330 = vadd.f32 %v2310, %v2322
        %v2331 = vadd.f32 %v2311, %v2323
        %v2332 = vadd.f32 %v2312, %v2324
        %v2333 = vadd.f32 %v2313, %v2325
        %v2334 = vlaneseq
        %v2335 = vshrl.u32 %v2334, 7
        %v2336 = vsub.s32 2, %v2335
        %v2337 = vrot.slane %v2137, %v2336
        %v2338 = vmul.f32 %v2337, %v2286
        %v2339 = vmul.f32 %v2337, %v2287
        %v2340 = vmul.f32 %v2337, %v2288
        %v2341 = vmul.f32 %v2337, %v2289
        %v2342 = vmul.f32 %v2337, %v2290
        %v2343 = vmul.f32 %v2337, %v2291
        %v2344 = vmul.f32 %v2337, %v2292
        %v2345 = vmul.f32 %v2337, %v2293
        %v2346 = vadd.f32 %v2326, %v2338
        %v2347 = vadd.f32 %v2327, %v2339
        %v2348 = vadd.f32 %v2328, %v2340
        %v2349 = vadd.f32 %v2329, %v2341
        %v2350 = vadd.f32 %v2330, %v2342
        %v2351 = vadd.f32 %v2331, %v2343
        %v2352 = vadd.f32 %v2332, %v2344
        %v2353 = vadd.f32 %v2333, %v2345
        %v2354 = vlaneseq
        %v2355 = vshrl.u32 %v2354, 7
        %v2356 = vsub.s32 1, %v2355
        %v2357 = vrot.slane %v447, %v2356
        %v2358 = vadd.f32 %v2346, %v2357
        %v2359 = vadd.f32 %v2347, %v2357
        %v2360 = vadd.f32 %v2348, %v2357
        %v2361 = vadd.f32 %v2349, %v2357
        %v2362 = vadd.f32 %v2350, %v2357
        %v2363 = vadd.f32 %v2351, %v2357
        %v2364 = vadd.f32 %v2352, %v2357
        %v2365 = vadd.f32 %v2353, %v2357
        %2366 = vadd.xlane.f32.xlu0 %v2358
        %v2367 = vpop.xlane.xlu0 %2366
        %2368 = vadd.xlane.f32.xlu0 %v2359
        %v2369 = vpop.xlane.xlu0 %2368
        %2370 = vadd.xlane.f32.xlu0 %v2360
        %v2371 = vpop.xlane.xlu0 %2370
        %2372 = vadd.xlane.f32.xlu0 %v2361
        %v2373 = vpop.xlane.xlu0 %2372
        %2374 = vadd.xlane.f32.xlu0 %v2362
        %v2375 = vpop.xlane.xlu0 %2374
        %2376 = vadd.xlane.f32.xlu0 %v2363
        %v2377 = vpop.xlane.xlu0 %2376
        %2378 = vadd.xlane.f32.xlu0 %v2364
        %v2379 = vpop.xlane.xlu0 %2378
        %2380 = vadd.xlane.f32.xlu0 %v2365
        %v2381 = vpop.xlane.xlu0 %2380
        %v2382 = vmul.f32 %v2358, %v2358
        %v2383 = vmul.f32 %v2359, %v2359
        %v2384 = vmul.f32 %v2360, %v2360
        %v2385 = vmul.f32 %v2361, %v2361
        %v2386 = vmul.f32 %v2362, %v2362
        %v2387 = vmul.f32 %v2363, %v2363
        %v2388 = vmul.f32 %v2364, %v2364
        %v2389 = vmul.f32 %v2365, %v2365
        %2390 = vadd.xlane.f32.xlu0 %v2382
        %v2391 = vpop.xlane.xlu0 %2390
        %2392 = vadd.xlane.f32.xlu0 %v2383
        %v2393 = vpop.xlane.xlu0 %2392
        %2394 = vadd.xlane.f32.xlu0 %v2384
        %v2395 = vpop.xlane.xlu0 %2394
        %2396 = vadd.xlane.f32.xlu0 %v2385
        %v2397 = vpop.xlane.xlu0 %2396
        %2398 = vadd.xlane.f32.xlu0 %v2386
        %v2399 = vpop.xlane.xlu0 %2398
        %2400 = vadd.xlane.f32.xlu0 %v2387
        %v2401 = vpop.xlane.xlu0 %2400
        %2402 = vadd.xlane.f32.xlu0 %v2388
        %v2403 = vpop.xlane.xlu0 %2402
        %2404 = vadd.xlane.f32.xlu0 %v2389
        %v2405 = vpop.xlane.xlu0 %2404
        %v2406 = vmul.f32 %v2367, 0.0078125
        %v2407 = vmul.f32 %v2369, 0.0078125
        %v2408 = vmul.f32 %v2371, 0.0078125
        %v2409 = vmul.f32 %v2373, 0.0078125
        %v2410 = vmul.f32 %v2375, 0.0078125
        %v2411 = vmul.f32 %v2377, 0.0078125
        %v2412 = vmul.f32 %v2379, 0.0078125
        %v2413 = vmul.f32 %v2381, 0.0078125
        %v2414 = vmul.f32 %v2391, 0.0078125
        %v2415 = vmul.f32 %v2393, 0.0078125
        %v2416 = vmul.f32 %v2395, 0.0078125
        %v2417 = vmul.f32 %v2397, 0.0078125
        %v2418 = vmul.f32 %v2399, 0.0078125
        %v2419 = vmul.f32 %v2401, 0.0078125
        %v2420 = vmul.f32 %v2403, 0.0078125
        %v2421 = vmul.f32 %v2405, 0.0078125
        %v2422 = vmul.f32 %v2406, %v2406
        %v2423 = vmul.f32 %v2407, %v2407
        %v2424 = vmul.f32 %v2408, %v2408
        %v2425 = vmul.f32 %v2409, %v2409
        %v2426 = vmul.f32 %v2410, %v2410
        %v2427 = vmul.f32 %v2411, %v2411
        %v2428 = vmul.f32 %v2412, %v2412
        %v2429 = vmul.f32 %v2413, %v2413
        %v2430 = vsub.f32 %v2414, %v2422
        %v2431 = vsub.f32 %v2415, %v2423
        %v2432 = vsub.f32 %v2416, %v2424
        %v2433 = vsub.f32 %v2417, %v2425
        %v2434 = vsub.f32 %v2418, %v2426
        %v2435 = vsub.f32 %v2419, %v2427
        %v2436 = vsub.f32 %v2420, %v2428
        %v2437 = vsub.f32 %v2421, %v2429
        %v2438 = vsub.f32 %v2358, %v2406
        %v2439 = vsub.f32 %v2359, %v2407
        %v2440 = vsub.f32 %v2360, %v2408
        %v2441 = vsub.f32 %v2361, %v2409
        %v2442 = vsub.f32 %v2362, %v2410
        %v2443 = vsub.f32 %v2363, %v2411
        %v2444 = vsub.f32 %v2364, %v2412
        %v2445 = vsub.f32 %v2365, %v2413
        %v2446 = vadd.f32 %v2430, 1e-06
        %v2447 = vadd.f32 %v2431, 1e-06
        %v2448 = vadd.f32 %v2432, 1e-06
        %v2449 = vadd.f32 %v2433, 1e-06
        %v2450 = vadd.f32 %v2434, 1e-06
        %v2451 = vadd.f32 %v2435, 1e-06
        %v2452 = vadd.f32 %v2436, 1e-06
        %v2453 = vadd.f32 %v2437, 1e-06
        %v2454 = vrsqrt.pop %v2446
        %v2455 = vrsqrt.pop %v2447
        %v2456 = vrsqrt.pop %v2448
        %v2457 = vrsqrt.pop %v2449
        %v2458 = vrsqrt.pop %v2450
        %v2459 = vrsqrt.pop %v2451
        %v2460 = vrsqrt.pop %v2452
        %v2461 = vrsqrt.pop %v2453
        %v2462 = vmul.f32 %v2438, %v2454
        %v2463 = vmul.f32 %v2439, %v2455
        %v2464 = vmul.f32 %v2440, %v2456
        %v2465 = vmul.f32 %v2441, %v2457
        %v2466 = vmul.f32 %v2442, %v2458
        %v2467 = vmul.f32 %v2443, %v2459
        %v2468 = vmul.f32 %v2444, %v2460
        %v2469 = vmul.f32 %v2445, %v2461
        %v2470 = vlaneseq
        %v2471 = vshrl.u32 %v2470, 7
        %v2472 = vsub.s32 2, %v2471
        %v2473 = vrot.slane %v447, %v2472
        %v2474 = vmul.f32 %v2462, %v2473
        %v2475 = vmul.f32 %v2463, %v2473
        %v2476 = vmul.f32 %v2464, %v2473
        %v2477 = vmul.f32 %v2465, %v2473
        %v2478 = vmul.f32 %v2466, %v2473
        %v2479 = vmul.f32 %v2467, %v2473
        %v2480 = vmul.f32 %v2468, %v2473
        %v2481 = vmul.f32 %v2469, %v2473
        %v2482 = vlaneseq
        %v2483 = vshrl.u32 %v2482, 7
        %v2484 = vsub.s32 3, %v2483
        %v2485 = vrot.slane %v447, %v2484
        %v2486 = vadd.f32 %v2474, %v2485
        %v2487 = vadd.f32 %v2475, %v2485
        %v2488 = vadd.f32 %v2476, %v2485
        %v2489 = vadd.f32 %v2477, %v2485
        %v2490 = vadd.f32 %v2478, %v2485
        %v2491 = vadd.f32 %v2479, %v2485
        %v2492 = vadd.f32 %v2480, %v2485
        %v2493 = vadd.f32 %v2481, %v2485
        %s2494 = scalar_lea.vmem %s2, 12
        %v2495 = vld [vmem:[%s2494] sm:$0x7]
        %v2496 = vld [vmem:[%s2494 + $0x4] sm:$0x7]
        %v2497 = vld [vmem:[%s2494 + $0x8] sm:$0x7]
        %s2498 = scalar_lea.vmem [#allocation3], 24
        %v2499 = vld [vmem:[%s2498 + $0x1] sm:$0xff]
        %v2500 = vld [vmem:[%s2498 + $0x9] sm:$0xff]
        %v2501 = vld [vmem:[%s2498 + $0x19] sm:$0xff]
        %v2502 = vld [vmem:[%s2498 + $0x21] sm:$0xff]
        %v2503 = vld [vmem:[%s2498 + $0x31] sm:$0xff]
        %v2504 = vld [vmem:[%s2498 + $0x39] sm:$0xff]
        %v2505 = vld [vmem:[%s2498 + $0x49] sm:$0xff]
        %v2506 = vld [vmem:[%s2498 + $0x51] sm:$0xff]
        %v2507 = vld [vmem:[%s2498 + $0x61] sm:$0xff]
        %v2508 = vld [vmem:[%s2498 + $0x69] sm:$0xff]
        %v2509 = vld [vmem:[%s2498 + $0x79] sm:$0xff]
        %v2510 = vld [vmem:[%s2498 + $0x81] sm:$0xff]
        %v2511 = vlaneseq
        %v2512 = vshrl.u32 %v2511, 7
        %v2513 = vsub.s32 0, %v2512
        %v2514 = vrot.slane %v2495, %v2513
        %v2515 = vmul.f32 %v2514, %v2499
        %v2516 = vmul.f32 %v2514, %v2500
        %v2517 = vmul.f32 %v2514, %v2501
        %v2518 = vmul.f32 %v2514, %v2502
        %v2519 = vmul.f32 %v2514, %v2503
        %v2520 = vmul.f32 %v2514, %v2504
        %v2521 = vmul.f32 %v2514, %v2505
        %v2522 = vmul.f32 %v2514, %v2506
        %v2523 = vadd.f32 %v2515, 0.0
        %v2524 = vadd.f32 %v2516, 0.0
        %v2525 = vadd.f32 %v2517, 0.0
        %v2526 = vadd.f32 %v2518, 0.0
        %v2527 = vadd.f32 %v2519, 0.0
        %v2528 = vadd.f32 %v2520, 0.0
        %v2529 = vadd.f32 %v2521, 0.0
        %v2530 = vadd.f32 %v2522, 0.0
        %v2531 = vlaneseq
        %v2532 = vshrl.u32 %v2531, 7
        %v2533 = vsub.s32 0, %v2532
        %v2534 = vrot.slane %v2496, %v2533
        %v2535 = vmul.f32 %v2534, %v2501
        %v2536 = vmul.f32 %v2534, %v2502
        %v2537 = vmul.f32 %v2534, %v2503
        %v2538 = vmul.f32 %v2534, %v2504
        %v2539 = vmul.f32 %v2534, %v2505
        %v2540 = vmul.f32 %v2534, %v2506
        %v2541 = vmul.f32 %v2534, %v2507
        %v2542 = vmul.f32 %v2534, %v2508
        %v2543 = vadd.f32 %v2523, %v2535
        %v2544 = vadd.f32 %v2524, %v2536
        %v2545 = vadd.f32 %v2525, %v2537
        %v2546 = vadd.f32 %v2526, %v2538
        %v2547 = vadd.f32 %v2527, %v2539
        %v2548 = vadd.f32 %v2528, %v2540
        %v2549 = vadd.f32 %v2529, %v2541
        %v2550 = vadd.f32 %v2530, %v2542
        %v2551 = vlaneseq
        %v2552 = vshrl.u32 %v2551, 7
        %v2553 = vsub.s32 0, %v2552
        %v2554 = vrot.slane %v2497, %v2553
        %v2555 = vmul.f32 %v2554, %v2503
        %v2556 = vmul.f32 %v2554, %v2504
        %v2557 = vmul.f32 %v2554, %v2505
        %v2558 = vmul.f32 %v2554, %v2506
        %v2559 = vmul.f32 %v2554, %v2507
        %v2560 = vmul.f32 %v2554, %v2508
        %v2561 = vmul.f32 %v2554, %v2509
        %v2562 = vmul.f32 %v2554, %v2510
        %v2563 = vadd.f32 %v2543, %v2555
        %v2564 = vadd.f32 %v2544, %v2556
        %v2565 = vadd.f32 %v2545, %v2557
        %v2566 = vadd.f32 %v2546, %v2558
        %v2567 = vadd.f32 %v2547, %v2559
        %v2568 = vadd.f32 %v2548, %v2560
        %v2569 = vadd.f32 %v2549, %v2561
        %v2570 = vadd.f32 %v2550, %v2562
        %v2571 = vld [vmem:[%s2498 + $0x2] sm:$0xff]
        %v2572 = vld [vmem:[%s2498 + $0xa] sm:$0xff]
        %v2573 = vld [vmem:[%s2498 + $0x1a] sm:$0xff]
        %v2574 = vld [vmem:[%s2498 + $0x22] sm:$0xff]
        %v2575 = vld [vmem:[%s2498 + $0x32] sm:$0xff]
        %v2576 = vld [vmem:[%s2498 + $0x3a] sm:$0xff]
        %v2577 = vld [vmem:[%s2498 + $0x4a] sm:$0xff]
        %v2578 = vld [vmem:[%s2498 + $0x52] sm:$0xff]
        %v2579 = vld [vmem:[%s2498 + $0x62] sm:$0xff]
        %v2580 = vld [vmem:[%s2498 + $0x6a] sm:$0xff]
        %v2581 = vld [vmem:[%s2498 + $0x7a] sm:$0xff]
        %v2582 = vld [vmem:[%s2498 + $0x82] sm:$0xff]
        %v2583 = vlaneseq
        %v2584 = vshrl.u32 %v2583, 7
        %v2585 = vsub.s32 1, %v2584
        %v2586 = vrot.slane %v2495, %v2585
        %v2587 = vmul.f32 %v2586, %v2571
        %v2588 = vmul.f32 %v2586, %v2572
        %v2589 = vmul.f32 %v2586, %v2573
        %v2590 = vmul.f32 %v2586, %v2574
        %v2591 = vmul.f32 %v2586, %v2575
        %v2592 = vmul.f32 %v2586, %v2576
        %v2593 = vmul.f32 %v2586, %v2577
        %v2594 = vmul.f32 %v2586, %v2578
        %v2595 = vadd.f32 %v2563, %v2587
        %v2596 = vadd.f32 %v2564, %v2588
        %v2597 = vadd.f32 %v2565, %v2589
        %v2598 = vadd.f32 %v2566, %v2590
        %v2599 = vadd.f32 %v2567, %v2591
        %v2600 = vadd.f32 %v2568, %v2592
        %v2601 = vadd.f32 %v2569, %v2593
        %v2602 = vadd.f32 %v2570, %v2594
        %v2603 = vlaneseq
        %v2604 = vshrl.u32 %v2603, 7
        %v2605 = vsub.s32 1, %v2604
        %v2606 = vrot.slane %v2496, %v2605
        %v2607 = vmul.f32 %v2606, %v2573
        %v2608 = vmul.f32 %v2606, %v2574
        %v2609 = vmul.f32 %v2606, %v2575
        %v2610 = vmul.f32 %v2606, %v2576
        %v2611 = vmul.f32 %v2606, %v2577
        %v2612 = vmul.f32 %v2606, %v2578
        %v2613 = vmul.f32 %v2606, %v2579
        %v2614 = vmul.f32 %v2606, %v2580
        %v2615 = vadd.f32 %v2595, %v2607
        %v2616 = vadd.f32 %v2596, %v2608
        %v2617 = vadd.f32 %v2597, %v2609
        %v2618 = vadd.f32 %v2598, %v2610
        %v2619 = vadd.f32 %v2599, %v2611
        %v2620 = vadd.f32 %v2600, %v2612
        %v2621 = vadd.f32 %v2601, %v2613
        %v2622 = vadd.f32 %v2602, %v2614
        %v2623 = vlaneseq
        %v2624 = vshrl.u32 %v2623, 7
        %v2625 = vsub.s32 1, %v2624
        %v2626 = vrot.slane %v2497, %v2625
        %v2627 = vmul.f32 %v2626, %v2575
        %v2628 = vmul.f32 %v2626, %v2576
        %v2629 = vmul.f32 %v2626, %v2577
        %v2630 = vmul.f32 %v2626, %v2578
        %v2631 = vmul.f32 %v2626, %v2579
        %v2632 = vmul.f32 %v2626, %v2580
        %v2633 = vmul.f32 %v2626, %v2581
        %v2634 = vmul.f32 %v2626, %v2582
        %v2635 = vadd.f32 %v2615, %v2627
        %v2636 = vadd.f32 %v2616, %v2628
        %v2637 = vadd.f32 %v2617, %v2629
        %v2638 = vadd.f32 %v2618, %v2630
        %v2639 = vadd.f32 %v2619, %v2631
        %v2640 = vadd.f32 %v2620, %v2632
        %v2641 = vadd.f32 %v2621, %v2633
        %v2642 = vadd.f32 %v2622, %v2634
        %v2643 = vld [vmem:[%s2498 + $0x3] sm:$0xff]
        %v2644 = vld [vmem:[%s2498 + $0xb] sm:$0xff]
        %v2645 = vld [vmem:[%s2498 + $0x1b] sm:$0xff]
        %v2646 = vld [vmem:[%s2498 + $0x23] sm:$0xff]
        %v2647 = vld [vmem:[%s2498 + $0x33] sm:$0xff]
        %v2648 = vld [vmem:[%s2498 + $0x3b] sm:$0xff]
        %v2649 = vld [vmem:[%s2498 + $0x4b] sm:$0xff]
        %v2650 = vld [vmem:[%s2498 + $0x53] sm:$0xff]
        %v2651 = vld [vmem:[%s2498 + $0x63] sm:$0xff]
        %v2652 = vld [vmem:[%s2498 + $0x6b] sm:$0xff]
        %v2653 = vld [vmem:[%s2498 + $0x7b] sm:$0xff]
        %v2654 = vld [vmem:[%s2498 + $0x83] sm:$0xff]
        %v2655 = vlaneseq
        %v2656 = vshrl.u32 %v2655, 7
        %v2657 = vsub.s32 2, %v2656
        %v2658 = vrot.slane %v2495, %v2657
        %v2659 = vmul.f32 %v2658, %v2643
        %v2660 = vmul.f32 %v2658, %v2644
        %v2661 = vmul.f32 %v2658, %v2645
        %v2662 = vmul.f32 %v2658, %v2646
        %v2663 = vmul.f32 %v2658, %v2647
        %v2664 = vmul.f32 %v2658, %v2648
        %v2665 = vmul.f32 %v2658, %v2649
        %v2666 = vmul.f32 %v2658, %v2650
        %v2667 = vadd.f32 %v2635, %v2659
        %v2668 = vadd.f32 %v2636, %v2660
        %v2669 = vadd.f32 %v2637, %v2661
        %v2670 = vadd.f32 %v2638, %v2662
        %v2671 = vadd.f32 %v2639, %v2663
        %v2672 = vadd.f32 %v2640, %v2664
        %v2673 = vadd.f32 %v2641, %v2665
        %v2674 = vadd.f32 %v2642, %v2666
        %v2675 = vlaneseq
        %v2676 = vshrl.u32 %v2675, 7
        %v2677 = vsub.s32 2, %v2676
        %v2678 = vrot.slane %v2496, %v2677
        %v2679 = vmul.f32 %v2678, %v2645
        %v2680 = vmul.f32 %v2678, %v2646
        %v2681 = vmul.f32 %v2678, %v2647
        %v2682 = vmul.f32 %v2678, %v2648
        %v2683 = vmul.f32 %v2678, %v2649
        %v2684 = vmul.f32 %v2678, %v2650
        %v2685 = vmul.f32 %v2678, %v2651
        %v2686 = vmul.f32 %v2678, %v2652
        %v2687 = vadd.f32 %v2667, %v2679
        %v2688 = vadd.f32 %v2668, %v2680
        %v2689 = vadd.f32 %v2669, %v2681
        %v2690 = vadd.f32 %v2670, %v2682
        %v2691 = vadd.f32 %v2671, %v2683
        %v2692 = vadd.f32 %v2672, %v2684
        %v2693 = vadd.f32 %v2673, %v2685
        %v2694 = vadd.f32 %v2674, %v2686
        %v2695 = vlaneseq
        %v2696 = vshrl.u32 %v2695, 7
        %v2697 = vsub.s32 2, %v2696
        %v2698 = vrot.slane %v2497, %v2697
        %v2699 = vmul.f32 %v2698, %v2647
        %v2700 = vmul.f32 %v2698, %v2648
        %v2701 = vmul.f32 %v2698, %v2649
        %v2702 = vmul.f32 %v2698, %v2650
        %v2703 = vmul.f32 %v2698, %v2651
        %v2704 = vmul.f32 %v2698, %v2652
        %v2705 = vmul.f32 %v2698, %v2653
        %v2706 = vmul.f32 %v2698, %v2654
        %v2707 = vadd.f32 %v2687, %v2699
        %v2708 = vadd.f32 %v2688, %v2700
        %v2709 = vadd.f32 %v2689, %v2701
        %v2710 = vadd.f32 %v2690, %v2702
        %v2711 = vadd.f32 %v2691, %v2703
        %v2712 = vadd.f32 %v2692, %v2704
        %v2713 = vadd.f32 %v2693, %v2705
        %v2714 = vadd.f32 %v2694, %v2706
        %v2715 = vlaneseq
        %v2716 = vshrl.u32 %v2715, 7
        %v2717 = vsub.s32 4, %v2716
        %v2718 = vrot.slane %v447, %v2717
        %v2719 = vadd.f32 %v2707, %v2718
        %v2720 = vadd.f32 %v2708, %v2718
        %v2721 = vadd.f32 %v2709, %v2718
        %v2722 = vadd.f32 %v2710, %v2718
        %v2723 = vadd.f32 %v2711, %v2718
        %v2724 = vadd.f32 %v2712, %v2718
        %v2725 = vadd.f32 %v2713, %v2718
        %v2726 = vadd.f32 %v2714, %v2718
        %2727 = vadd.xlane.f32.xlu0 %v2719
        %v2728 = vpop.xlane.xlu0 %2727
        %2729 = vadd.xlane.f32.xlu0 %v2720
        %v2730 = vpop.xlane.xlu0 %2729
        %2731 = vadd.xlane.f32.xlu0 %v2721
        %v2732 = vpop.xlane.xlu0 %2731
        %2733 = vadd.xlane.f32.xlu0 %v2722
        %v2734 = vpop.xlane.xlu0 %2733
        %2735 = vadd.xlane.f32.xlu0 %v2723
        %v2736 = vpop.xlane.xlu0 %2735
        %2737 = vadd.xlane.f32.xlu0 %v2724
        %v2738 = vpop.xlane.xlu0 %2737
        %2739 = vadd.xlane.f32.xlu0 %v2725
        %v2740 = vpop.xlane.xlu0 %2739
        %2741 = vadd.xlane.f32.xlu0 %v2726
        %v2742 = vpop.xlane.xlu0 %2741
        %v2743 = vmul.f32 %v2719, %v2719
        %v2744 = vmul.f32 %v2720, %v2720
        %v2745 = vmul.f32 %v2721, %v2721
        %v2746 = vmul.f32 %v2722, %v2722
        %v2747 = vmul.f32 %v2723, %v2723
        %v2748 = vmul.f32 %v2724, %v2724
        %v2749 = vmul.f32 %v2725, %v2725
        %v2750 = vmul.f32 %v2726, %v2726
        %2751 = vadd.xlane.f32.xlu0 %v2743
        %v2752 = vpop.xlane.xlu0 %2751
        %2753 = vadd.xlane.f32.xlu0 %v2744
        %v2754 = vpop.xlane.xlu0 %2753
        %2755 = vadd.xlane.f32.xlu0 %v2745
        %v2756 = vpop.xlane.xlu0 %2755
        %2757 = vadd.xlane.f32.xlu0 %v2746
        %v2758 = vpop.xlane.xlu0 %2757
        %2759 = vadd.xlane.f32.xlu0 %v2747
        %v2760 = vpop.xlane.xlu0 %2759
        %2761 = vadd.xlane.f32.xlu0 %v2748
        %v2762 = vpop.xlane.xlu0 %2761
        %2763 = vadd.xlane.f32.xlu0 %v2749
        %v2764 = vpop.xlane.xlu0 %2763
        %2765 = vadd.xlane.f32.xlu0 %v2750
        %v2766 = vpop.xlane.xlu0 %2765
        %v2767 = vmul.f32 %v2728, 0.0078125
        %v2768 = vmul.f32 %v2730, 0.0078125
        %v2769 = vmul.f32 %v2732, 0.0078125
        %v2770 = vmul.f32 %v2734, 0.0078125
        %v2771 = vmul.f32 %v2736, 0.0078125
        %v2772 = vmul.f32 %v2738, 0.0078125
        %v2773 = vmul.f32 %v2740, 0.0078125
        %v2774 = vmul.f32 %v2742, 0.0078125
        %v2775 = vmul.f32 %v2752, 0.0078125
        %v2776 = vmul.f32 %v2754, 0.0078125
        %v2777 = vmul.f32 %v2756, 0.0078125
        %v2778 = vmul.f32 %v2758, 0.0078125
        %v2779 = vmul.f32 %v2760, 0.0078125
        %v2780 = vmul.f32 %v2762, 0.0078125
        %v2781 = vmul.f32 %v2764, 0.0078125
        %v2782 = vmul.f32 %v2766, 0.0078125
        %v2783 = vmul.f32 %v2767, %v2767
        %v2784 = vmul.f32 %v2768, %v2768
        %v2785 = vmul.f32 %v2769, %v2769
        %v2786 = vmul.f32 %v2770, %v2770
        %v2787 = vmul.f32 %v2771, %v2771
        %v2788 = vmul.f32 %v2772, %v2772
        %v2789 = vmul.f32 %v2773, %v2773
        %v2790 = vmul.f32 %v2774, %v2774
        %v2791 = vsub.f32 %v2775, %v2783
        %v2792 = vsub.f32 %v2776, %v2784
        %v2793 = vsub.f32 %v2777, %v2785
        %v2794 = vsub.f32 %v2778, %v2786
        %v2795 = vsub.f32 %v2779, %v2787
        %v2796 = vsub.f32 %v2780, %v2788
        %v2797 = vsub.f32 %v2781, %v2789
        %v2798 = vsub.f32 %v2782, %v2790
        %v2799 = vsub.f32 %v2719, %v2767
        %v2800 = vsub.f32 %v2720, %v2768
        %v2801 = vsub.f32 %v2721, %v2769
        %v2802 = vsub.f32 %v2722, %v2770
        %v2803 = vsub.f32 %v2723, %v2771
        %v2804 = vsub.f32 %v2724, %v2772
        %v2805 = vsub.f32 %v2725, %v2773
        %v2806 = vsub.f32 %v2726, %v2774
        %v2807 = vadd.f32 %v2791, 1e-06
        %v2808 = vadd.f32 %v2792, 1e-06
        %v2809 = vadd.f32 %v2793, 1e-06
        %v2810 = vadd.f32 %v2794, 1e-06
        %v2811 = vadd.f32 %v2795, 1e-06
        %v2812 = vadd.f32 %v2796, 1e-06
        %v2813 = vadd.f32 %v2797, 1e-06
        %v2814 = vadd.f32 %v2798, 1e-06
        %v2815 = vrsqrt.pop %v2807
        %v2816 = vrsqrt.pop %v2808
        %v2817 = vrsqrt.pop %v2809
        %v2818 = vrsqrt.pop %v2810
        %v2819 = vrsqrt.pop %v2811
        %v2820 = vrsqrt.pop %v2812
        %v2821 = vrsqrt.pop %v2813
        %v2822 = vrsqrt.pop %v2814
        %v2823 = vmul.f32 %v2799, %v2815
        %v2824 = vmul.f32 %v2800, %v2816
        %v2825 = vmul.f32 %v2801, %v2817
        %v2826 = vmul.f32 %v2802, %v2818
        %v2827 = vmul.f32 %v2803, %v2819
        %v2828 = vmul.f32 %v2804, %v2820
        %v2829 = vmul.f32 %v2805, %v2821
        %v2830 = vmul.f32 %v2806, %v2822
        %v2831 = vlaneseq
        %v2832 = vshrl.u32 %v2831, 7
        %v2833 = vsub.s32 5, %v2832
        %v2834 = vrot.slane %v447, %v2833
        %v2835 = vmul.f32 %v2823, %v2834
        %v2836 = vmul.f32 %v2824, %v2834
        %v2837 = vmul.f32 %v2825, %v2834
        %v2838 = vmul.f32 %v2826, %v2834
        %v2839 = vmul.f32 %v2827, %v2834
        %v2840 = vmul.f32 %v2828, %v2834
        %v2841 = vmul.f32 %v2829, %v2834
        %v2842 = vmul.f32 %v2830, %v2834
        %v2843 = vlaneseq
        %v2844 = vshrl.u32 %v2843, 7
        %v2845 = vsub.s32 6, %v2844
        %v2846 = vrot.slane %v447, %v2845
        %v2847 = vadd.f32 %v2835, %v2846
        %v2848 = vadd.f32 %v2836, %v2846
        %v2849 = vadd.f32 %v2837, %v2846
        %v2850 = vadd.f32 %v2838, %v2846
        %v2851 = vadd.f32 %v2839, %v2846
        %v2852 = vadd.f32 %v2840, %v2846
        %v2853 = vadd.f32 %v2841, %v2846
        %v2854 = vadd.f32 %v2842, %v2846
        %v2855 = vld [vmem:[#allocation7] sm:$0xff]
        %v2856 = vld [vmem:[#allocation7 + $0x8] sm:$0xff]
        %v2857 = vld [vmem:[#allocation7 + $0x10] sm:$0xff]
        %v2858 = vld [vmem:[#allocation7 + $0x18] sm:$0xff]
        %v2859 = vld [vmem:[#allocation7 + $0x20] sm:$0xff]
        %v2860 = vld [vmem:[#allocation7 + $0x28] sm:$0xff]
        %v2861 = vld [vmem:[#allocation7 + $0x30] sm:$0xff]
        %v2862 = vld [vmem:[#allocation7 + $0x38] sm:$0xff]
        %v2863 = vld [vmem:[#allocation7 + $0x40] sm:$0xff]
        %v2864 = vld [vmem:[#allocation7 + $0x48] sm:$0xff]
        %v2865 = vld [vmem:[#allocation7 + $0x50] sm:$0xff]
        %v2866 = vld [vmem:[#allocation7 + $0x58] sm:$0xff]
        %v2867 = vld [vmem:[#allocation7 + $0x60] sm:$0xff]
        %v2868 = vld [vmem:[#allocation7 + $0x68] sm:$0xff]
        %v2869 = vld [vmem:[#allocation7 + $0x70] sm:$0xff]
        %v2870 = vld [vmem:[#allocation7 + $0x78] sm:$0xff]
        %v2871 = vld [vmem:[#allocation7 + $0x80] sm:$0xff]
        %v2872 = vld [vmem:[#allocation7 + $0x88] sm:$0xff]
        %v2873 = vld [vmem:[#allocation7 + $0x90] sm:$0xff]
        %v2874 = vld [vmem:[#allocation7 + $0x98] sm:$0xff]
        %v2875 = vld [vmem:[#allocation7 + $0xa0] sm:$0xff]
        %v2876 = vld [vmem:[#allocation7 + $0xa8] sm:$0xff]
        %v2877 = vld [vmem:[#allocation7 + $0xb0] sm:$0xff]
        %v2878 = vld [vmem:[#allocation7 + $0xb8] sm:$0xff]
        %v2879 = vld [vmem:[#allocation7 + $0xc0] sm:$0xff]
        %v2880 = vld [vmem:[#allocation7 + $0xc8] sm:$0xff]
        %v2881 = vld [vmem:[#allocation7 + $0xd0] sm:$0xff]
        %v2882 = vld [vmem:[#allocation7 + $0xd8] sm:$0xff]
        %v2883 = vld [vmem:[#allocation7 + $0xe0] sm:$0xff]
        %v2884 = vld [vmem:[#allocation7 + $0xe8] sm:$0xff]
        %v2885 = vld [vmem:[#allocation7 + $0xf0] sm:$0xff]
        %v2886 = vld [vmem:[#allocation7 + $0xf8] sm:$0xff]
        %v2887 = vld [vmem:[%s5] sm:$0x1]
        %v2889 = vlaneseq
        %v2890 = vshrl.u32 %v2889, 7
        %v2891 = vsub.s32 0, %v2890
        %v2892 = vrot.slane %v2887, %v2891
        %2894 = vmatprep.subr.mxu0 0.0
        %2895 = vmatpush1.msra.mxu0 %v2855
        %2896 = vmatprep.subr.mxu0 0.0
        %2897 = vmatpush1.msra.mxu0 %v2856
        %2898 = vmatprep.subr.mxu0 0.0
        %2899 = vmatpush1.msra.mxu0 %v2857
        %2900 = vmatprep.subr.mxu0 0.0
        %2901 = vmatpush1.msra.mxu0 %v2858
        %2902 = vmatprep.subr.mxu0 0.0
        %2903 = vmatpush1.msra.mxu0 %v2859
        %2904 = vmatprep.subr.mxu0 0.0
        %2905 = vmatpush1.msra.mxu0 %v2860
        %2906 = vmatprep.subr.mxu0 0.0
        %2907 = vmatpush1.msra.mxu0 %v2861
        %2908 = vmatprep.subr.mxu0 0.0
        %2909 = vmatpush1.msra.mxu0 %v2862
        %2910 = vmatprep.subr.mxu0 0.0
        %2911 = vmatpush1.msra.mxu0 %v2863
        %2912 = vmatprep.subr.mxu0 0.0
        %2913 = vmatpush1.msra.mxu0 %v2864
        %2914 = vmatprep.subr.mxu0 0.0
        %2915 = vmatpush1.msra.mxu0 %v2865
        %2916 = vmatprep.subr.mxu0 0.0
        %2917 = vmatpush1.msra.mxu0 %v2866
        %2918 = vmatprep.subr.mxu0 0.0
        %2919 = vmatpush1.msra.mxu0 %v2867
        %2920 = vmatprep.subr.mxu0 0.0
        %2921 = vmatpush1.msra.mxu0 %v2868
        %2922 = vmatprep.subr.mxu0 0.0
        %2923 = vmatpush1.msra.mxu0 %v2869
        %2924 = vmatprep.subr.mxu0 0.0
        %2925 = vmatpush1.msra.mxu0 %v2870
        %2926 = vmatprep.subr.mxu0 0.0
        %2927 = vmatpush1.msra.mxu0 %v2871
        %2928 = vmatprep.subr.mxu0 0.0
        %2929 = vmatpush1.msra.mxu0 %v2872
        %2930 = vmatprep.subr.mxu0 0.0
        %2931 = vmatpush1.msra.mxu0 %v2873
        %2932 = vmatprep.subr.mxu0 0.0
        %2933 = vmatpush1.msra.mxu0 %v2874
        %2934 = vmatprep.subr.mxu0 0.0
        %2935 = vmatpush1.msra.mxu0 %v2875
        %2936 = vmatprep.subr.mxu0 0.0
        %2937 = vmatpush1.msra.mxu0 %v2876
        %2938 = vmatprep.subr.mxu0 0.0
        %2939 = vmatpush1.msra.mxu0 %v2877
        %2940 = vmatprep.subr.mxu0 0.0
        %2941 = vmatpush1.msra.mxu0 %v2878
        %2942 = vmatprep.subr.mxu0 0.0
        %2943 = vmatpush1.msra.mxu0 %v2879
        %2944 = vmatprep.subr.mxu0 0.0
        %2945 = vmatpush1.msra.mxu0 %v2880
        %2946 = vmatprep.subr.mxu0 0.0
        %2947 = vmatpush1.msra.mxu0 %v2881
        %2948 = vmatprep.subr.mxu0 0.0
        %2949 = vmatpush1.msra.mxu0 %v2882
        %2950 = vmatprep.subr.mxu0 0.0
        %2951 = vmatpush1.msra.mxu0 %v2883
        %2952 = vmatprep.subr.mxu0 0.0
        %2953 = vmatpush1.msra.mxu0 %v2884
        %2954 = vmatprep.subr.mxu0 0.0
        %2955 = vmatpush1.msra.mxu0 %v2885
        %2956 = vmatprep.subr.mxu0 0.0
        %2957 = vmatpush1.msra.mxu0 %v2886
        %2958 = vmatprep.mubr.f32.mxu0 %v2847
        %2959 = vmatmul.mubr.f32.gmra.mrb[0].mxu0 %v2486
        %v2960 = vpop.f32.mrb[0].mxu0
        %v2961 = vadd.f32 %v2892, %v2960
        %v2962 = vpop.f32.mrb[0].mxu0
        %2963 = vmatprep.mubr.f32.mxu0 %v2848
        %2964 = vmatmul.mubr.f32.gmra.mrb[0].mxu0 %v2487
        %v2965 = vpop.f32.mrb[0].mxu0
        %v2966 = vadd.f32 %v2892, %v2965
        %v2967 = vpop.f32.mrb[0].mxu0
        %2968 = vmatprep.mubr.f32.mxu0 %v2849
        %2969 = vmatmul.mubr.f32.gmra.mrb[0].mxu0 %v2488
        %v2970 = vpop.f32.mrb[0].mxu0
        %v2971 = vadd.f32 %v2892, %v2970
        %v2972 = vpop.f32.mrb[0].mxu0
        %2973 = vmatprep.mubr.f32.mxu0 %v2850
        %2974 = vmatmul.mubr.f32.gmra.mrb[0].mxu0 %v2489
        %v2975 = vpop.f32.mrb[0].mxu0
        %v2976 = vadd.f32 %v2892, %v2975
        %v2977 = vpop.f32.mrb[0].mxu0
        %2978 = vmatprep.mubr.f32.mxu0 %v2851
        %2979 = vmatmul.mubr.f32.gmra.mrb[0].mxu0 %v2490
        %v2980 = vpop.f32.mrb[0].mxu0
        %v2981 = vadd.f32 %v2892, %v2980
        %v2982 = vpop.f32.mrb[0].mxu0
        %2983 = vmatprep.mubr.f32.mxu0 %v2852
        %2984 = vmatmul.mubr.f32.gmra.mrb[0].mxu0 %v2491
        %v2985 = vpop.f32.mrb[0].mxu0
        %v2986 = vadd.f32 %v2892, %v2985
        %v2987 = vpop.f32.mrb[0].mxu0
        %2988 = vmatprep.mubr.f32.mxu0 %v2853
        %2989 = vmatmul.mubr.f32.gmra.mrb[0].mxu0 %v2492
        %v2990 = vpop.f32.mrb[0].mxu0
        %v2991 = vadd.f32 %v2892, %v2990
        %v2992 = vpop.f32.mrb[0].mxu0
        %2993 = vmatprep.mubr.f32.mxu0 %v2854
        %2994 = vmatmul.mubr.f32.gmra.mrb[0].mxu0 %v2493
        %v2995 = vpop.f32.mrb[0].mxu0
        %v2996 = vadd.f32 %v2892, %v2995
        %v2997 = vpop.f32.mrb[0].mxu0
        %2998 = vdwg.mxu0
        %v2999 = vmul.f32 %v2961, 0.5
        %v3000 = vmul.f32 %v2966, 0.5
        %v3001 = vmul.f32 %v2971, 0.5
        %v3002 = vmul.f32 %v2976, 0.5
        %v3003 = vmul.f32 %v2981, 0.5
        %v3004 = vmul.f32 %v2986, 0.5
        %v3005 = vmul.f32 %v2991, 0.5
        %v3006 = vmul.f32 %v2996, 0.5
        %v3007 = vmul.f32 %v2961, 0.044715
        %v3008 = vmul.f32 %v2966, 0.044715
        %v3009 = vmul.f32 %v2971, 0.044715
        %v3010 = vmul.f32 %v2976, 0.044715
        %v3011 = vmul.f32 %v2981, 0.044715
        %v3012 = vmul.f32 %v2986, 0.044715
        %v3013 = vmul.f32 %v2991, 0.044715
        %v3014 = vmul.f32 %v2996, 0.044715
        %v3015 = vmul.f32 %v3007, %v2961
        %v3016 = vmul.f32 %v3008, %v2966
        %v3017 = vmul.f32 %v3009, %v2971
        %v3018 = vmul.f32 %v3010, %v2976
        %v3019 = vmul.f32 %v3011, %v2981
        %v3020 = vmul.f32 %v3012, %v2986
        %v3021 = vmul.f32 %v3013, %v2991
        %v3022 = vmul.f32 %v3014, %v2996
        %v3023 = vmul.f32 %v3015, %v2961
        %v3024 = vmul.f32 %v3016, %v2966
        %v3025 = vmul.f32 %v3017, %v2971
        %v3026 = vmul.f32 %v3018, %v2976
        %v3027 = vmul.f32 %v3019, %v2981
        %v3028 = vmul.f32 %v3020, %v2986
        %v3029 = vmul.f32 %v3021, %v2991
        %v3030 = vmul.f32 %v3022, %v2996
        %v3031 = vadd.f32 %v2961, %v3023
        %v3032 = vadd.f32 %v2966, %v3024
        %v3033 = vadd.f32 %v2971, %v3025
        %v3034 = vadd.f32 %v2976, %v3026
        %v3035 = vadd.f32 %v2981, %v3027
        %v3036 = vadd.f32 %v2986, %v3028
        %v3037 = vadd.f32 %v2991, %v3029
        %v3038 = vadd.f32 %v2996, %v3030
        %v3039 = vmul.f32 %v3031, 0.7978846
        %v3040 = vmul.f32 %v3032, 0.7978846
        %v3041 = vmul.f32 %v3033, 0.7978846
        %v3042 = vmul.f32 %v3034, 0.7978846
        %v3043 = vmul.f32 %v3035, 0.7978846
        %v3044 = vmul.f32 %v3036, 0.7978846
        %v3045 = vmul.f32 %v3037, 0.7978846
        %v3046 = vmul.f32 %v3038, 0.7978846
        %v3047 = vtanh.pop %v3039
        %v3048 = vtanh.pop %v3040
        %v3049 = vtanh.pop %v3041
        %v3050 = vtanh.pop %v3042
        %v3051 = vtanh.pop %v3043
        %v3052 = vtanh.pop %v3044
        %v3053 = vtanh.pop %v3045
        %v3054 = vtanh.pop %v3046
        %v3055 = vadd.f32 %v3047, 1.0
        %v3056 = vadd.f32 %v3048, 1.0
        %v3057 = vadd.f32 %v3049, 1.0
        %v3058 = vadd.f32 %v3050, 1.0
        %v3059 = vadd.f32 %v3051, 1.0
        %v3060 = vadd.f32 %v3052, 1.0
        %v3061 = vadd.f32 %v3053, 1.0
        %v3062 = vadd.f32 %v3054, 1.0
        %v3063 = vmul.f32 %v2999, %v3055
        %v3064 = vmul.f32 %v3000, %v3056
        %v3065 = vmul.f32 %v3001, %v3057
        %v3066 = vmul.f32 %v3002, %v3058
        %v3067 = vmul.f32 %v3003, %v3059
        %v3068 = vmul.f32 %v3004, %v3060
        %v3069 = vmul.f32 %v3005, %v3061
        %v3070 = vmul.f32 %v3006, %v3062
        %3071 = vst [vmem:[%s284] sm:$0xff] %v3063
        %3072 = vst [vmem:[%s284 + $0x8] sm:$0xff] %v3064
        %3073 = vst [vmem:[%s284 + $0x10] sm:$0xff] %v3065
        %3074 = vst [vmem:[%s284 + $0x18] sm:$0xff] %v3066
        %3075 = vst [vmem:[%s284 + $0x20] sm:$0xff] %v3067
        %3076 = vst [vmem:[%s284 + $0x28] sm:$0xff] %v3068
        %3077 = vst [vmem:[%s284 + $0x30] sm:$0xff] %v3069
        %3078 = vst [vmem:[%s284 + $0x38] sm:$0xff] %v3070
        %v3079 = vld [vmem:[%s2] sm:$0x7]
        %v3080 = vld [vmem:[%s2 + $0x4] sm:$0x7]
        %v3081 = vld [vmem:[%s2 + $0x8] sm:$0x7]
        %v3082 = vld [vmem:[%s803 + $0x1] sm:$0xff]
        %v3083 = vld [vmem:[%s803 + $0x9] sm:$0xff]
        %v3084 = vld [vmem:[%s803 + $0x19] sm:$0xff]
        %v3085 = vld [vmem:[%s803 + $0x21] sm:$0xff]
        %v3086 = vld [vmem:[%s803 + $0x31] sm:$0xff]
        %v3087 = vld [vmem:[%s803 + $0x39] sm:$0xff]
        %v3088 = vld [vmem:[%s803 + $0x49] sm:$0xff]
        %v3089 = vld [vmem:[%s803 + $0x51] sm:$0xff]
        %v3090 = vld [vmem:[%s803 + $0x61] sm:$0xff]
        %v3091 = vld [vmem:[%s803 + $0x69] sm:$0xff]
        %v3092 = vld [vmem:[%s803 + $0x79] sm:$0xff]
        %v3093 = vld [vmem:[%s803 + $0x81] sm:$0xff]
        %v3094 = vlaneseq
        %v3095 = vshrl.u32 %v3094, 7
        %v3096 = vsub.s32 0, %v3095
        %v3097 = vrot.slane %v3079, %v3096
        %v3098 = vmul.f32 %v3097, %v3082
        %v3099 = vmul.f32 %v3097, %v3083
        %v3100 = vmul.f32 %v3097, %v3084
        %v3101 = vmul.f32 %v3097, %v3085
        %v3102 = vmul.f32 %v3097, %v3086
        %v3103 = vmul.f32 %v3097, %v3087
        %v3104 = vmul.f32 %v3097, %v3088
        %v3105 = vmul.f32 %v3097, %v3089
        %v3106 = vadd.f32 %v3098, 0.0
        %v3107 = vadd.f32 %v3099, 0.0
        %v3108 = vadd.f32 %v3100, 0.0
        %v3109 = vadd.f32 %v3101, 0.0
        %v3110 = vadd.f32 %v3102, 0.0
        %v3111 = vadd.f32 %v3103, 0.0
        %v3112 = vadd.f32 %v3104, 0.0
        %v3113 = vadd.f32 %v3105, 0.0
        %v3114 = vlaneseq
        %v3115 = vshrl.u32 %v3114, 7
        %v3116 = vsub.s32 0, %v3115
        %v3117 = vrot.slane %v3080, %v3116
        %v3118 = vmul.f32 %v3117, %v3084
        %v3119 = vmul.f32 %v3117, %v3085
        %v3120 = vmul.f32 %v3117, %v3086
        %v3121 = vmul.f32 %v3117, %v3087
        %v3122 = vmul.f32 %v3117, %v3088
        %v3123 = vmul.f32 %v3117, %v3089
        %v3124 = vmul.f32 %v3117, %v3090
        %v3125 = vmul.f32 %v3117, %v3091
        %v3126 = vadd.f32 %v3106, %v3118
        %v3127 = vadd.f32 %v3107, %v3119
        %v3128 = vadd.f32 %v3108, %v3120
        %v3129 = vadd.f32 %v3109, %v3121
        %v3130 = vadd.f32 %v3110, %v3122
        %v3131 = vadd.f32 %v3111, %v3123
        %v3132 = vadd.f32 %v3112, %v3124
        %v3133 = vadd.f32 %v3113, %v3125
        %v3134 = vlaneseq
        %v3135 = vshrl.u32 %v3134, 7
        %v3136 = vsub.s32 0, %v3135
        %v3137 = vrot.slane %v3081, %v3136
        %v3138 = vmul.f32 %v3137, %v3086
        %v3139 = vmul.f32 %v3137, %v3087
        %v3140 = vmul.f32 %v3137, %v3088
        %v3141 = vmul.f32 %v3137, %v3089
        %v3142 = vmul.f32 %v3137, %v3090
        %v3143 = vmul.f32 %v3137, %v3091
        %v3144 = vmul.f32 %v3137, %v3092
        %v3145 = vmul.f32 %v3137, %v3093
        %v3146 = vadd.f32 %v3126, %v3138
        %v3147 = vadd.f32 %v3127, %v3139
        %v3148 = vadd.f32 %v3128, %v3140
        %v3149 = vadd.f32 %v3129, %v3141
        %v3150 = vadd.f32 %v3130, %v3142
        %v3151 = vadd.f32 %v3131, %v3143
        %v3152 = vadd.f32 %v3132, %v3144
        %v3153 = vadd.f32 %v3133, %v3145
        %v3154 = vld [vmem:[%s803 + $0x2] sm:$0xff]
        %v3155 = vld [vmem:[%s803 + $0xa] sm:$0xff]
        %v3156 = vld [vmem:[%s803 + $0x1a] sm:$0xff]
        %v3157 = vld [vmem:[%s803 + $0x22] sm:$0xff]
        %v3158 = vld [vmem:[%s803 + $0x32] sm:$0xff]
        %v3159 = vld [vmem:[%s803 + $0x3a] sm:$0xff]
        %v3160 = vld [vmem:[%s803 + $0x4a] sm:$0xff]
        %v3161 = vld [vmem:[%s803 + $0x52] sm:$0xff]
        %v3162 = vld [vmem:[%s803 + $0x62] sm:$0xff]
        %v3163 = vld [vmem:[%s803 + $0x6a] sm:$0xff]
        %v3164 = vld [vmem:[%s803 + $0x7a] sm:$0xff]
        %v3165 = vld [vmem:[%s803 + $0x82] sm:$0xff]
        %v3166 = vlaneseq
        %v3167 = vshrl.u32 %v3166, 7
        %v3168 = vsub.s32 1, %v3167
        %v3169 = vrot.slane %v3079, %v3168
        %v3170 = vmul.f32 %v3169, %v3154
        %v3171 = vmul.f32 %v3169, %v3155
        %v3172 = vmul.f32 %v3169, %v3156
        %v3173 = vmul.f32 %v3169, %v3157
        %v3174 = vmul.f32 %v3169, %v3158
        %v3175 = vmul.f32 %v3169, %v3159
        %v3176 = vmul.f32 %v3169, %v3160
        %v3177 = vmul.f32 %v3169, %v3161
        %v3178 = vadd.f32 %v3146, %v3170
        %v3179 = vadd.f32 %v3147, %v3171
        %v3180 = vadd.f32 %v3148, %v3172
        %v3181 = vadd.f32 %v3149, %v3173
        %v3182 = vadd.f32 %v3150, %v3174
        %v3183 = vadd.f32 %v3151, %v3175
        %v3184 = vadd.f32 %v3152, %v3176
        %v3185 = vadd.f32 %v3153, %v3177
        %v3186 = vlaneseq
        %v3187 = vshrl.u32 %v3186, 7
        %v3188 = vsub.s32 1, %v3187
        %v3189 = vrot.slane %v3080, %v3188
        %v3190 = vmul.f32 %v3189, %v3156
        %v3191 = vmul.f32 %v3189, %v3157
        %v3192 = vmul.f32 %v3189, %v3158
        %v3193 = vmul.f32 %v3189, %v3159
        %v3194 = vmul.f32 %v3189, %v3160
        %v3195 = vmul.f32 %v3189, %v3161
        %v3196 = vmul.f32 %v3189, %v3162
        %v3197 = vmul.f32 %v3189, %v3163
        %v3198 = vadd.f32 %v3178, %v3190
        %v3199 = vadd.f32 %v3179, %v3191
        %v3200 = vadd.f32 %v3180, %v3192
        %v3201 = vadd.f32 %v3181, %v3193
        %v3202 = vadd.f32 %v3182, %v3194
        %v3203 = vadd.f32 %v3183, %v3195
        %v3204 = vadd.f32 %v3184, %v3196
        %v3205 = vadd.f32 %v3185, %v3197
        %v3206 = vlaneseq
        %v3207 = vshrl.u32 %v3206, 7
        %v3208 = vsub.s32 1, %v3207
        %v3209 = vrot.slane %v3081, %v3208
        %v3210 = vmul.f32 %v3209, %v3158
        %v3211 = vmul.f32 %v3209, %v3159
        %v3212 = vmul.f32 %v3209, %v3160
        %v3213 = vmul.f32 %v3209, %v3161
        %v3214 = vmul.f32 %v3209, %v3162
        %v3215 = vmul.f32 %v3209, %v3163
        %v3216 = vmul.f32 %v3209, %v3164
        %v3217 = vmul.f32 %v3209, %v3165
        %v3218 = vadd.f32 %v3198, %v3210
        %v3219 = vadd.f32 %v3199, %v3211
        %v3220 = vadd.f32 %v3200, %v3212
        %v3221 = vadd.f32 %v3201, %v3213
        %v3222 = vadd.f32 %v3202, %v3214
        %v3223 = vadd.f32 %v3203, %v3215
        %v3224 = vadd.f32 %v3204, %v3216
        %v3225 = vadd.f32 %v3205, %v3217
        %v3226 = vld [vmem:[%s803 + $0x3] sm:$0xff]
        %v3227 = vld [vmem:[%s803 + $0xb] sm:$0xff]
        %v3228 = vld [vmem:[%s803 + $0x1b] sm:$0xff]
        %v3229 = vld [vmem:[%s803 + $0x23] sm:$0xff]
        %v3230 = vld [vmem:[%s803 + $0x33] sm:$0xff]
        %v3231 = vld [vmem:[%s803 + $0x3b] sm:$0xff]
        %v3232 = vld [vmem:[%s803 + $0x4b] sm:$0xff]
        %v3233 = vld [vmem:[%s803 + $0x53] sm:$0xff]
        %v3234 = vld [vmem:[%s803 + $0x63] sm:$0xff]
        %v3235 = vld [vmem:[%s803 + $0x6b] sm:$0xff]
        %v3236 = vld [vmem:[%s803 + $0x7b] sm:$0xff]
        %v3237 = vld [vmem:[%s803 + $0x83] sm:$0xff]
        %v3238 = vlaneseq
        %v3239 = vshrl.u32 %v3238, 7
        %v3240 = vsub.s32 2, %v3239
        %v3241 = vrot.slane %v3079, %v3240
        %v3242 = vmul.f32 %v3241, %v3226
        %v3243 = vmul.f32 %v3241, %v3227
        %v3244 = vmul.f32 %v3241, %v3228
        %v3245 = vmul.f32 %v3241, %v3229
        %v3246 = vmul.f32 %v3241, %v3230
        %v3247 = vmul.f32 %v3241, %v3231
        %v3248 = vmul.f32 %v3241, %v3232
        %v3249 = vmul.f32 %v3241, %v3233
        %v3250 = vadd.f32 %v3218, %v3242
        %v3251 = vadd.f32 %v3219, %v3243
        %v3252 = vadd.f32 %v3220, %v3244
        %v3253 = vadd.f32 %v3221, %v3245
        %v3254 = vadd.f32 %v3222, %v3246
        %v3255 = vadd.f32 %v3223, %v3247
        %v3256 = vadd.f32 %v3224, %v3248
        %v3257 = vadd.f32 %v3225, %v3249
        %v3258 = vlaneseq
        %v3259 = vshrl.u32 %v3258, 7
        %v3260 = vsub.s32 2, %v3259
        %v3261 = vrot.slane %v3080, %v3260
        %v3262 = vmul.f32 %v3261, %v3228
        %v3263 = vmul.f32 %v3261, %v3229
        %v3264 = vmul.f32 %v3261, %v3230
        %v3265 = vmul.f32 %v3261, %v3231
        %v3266 = vmul.f32 %v3261, %v3232
        %v3267 = vmul.f32 %v3261, %v3233
        %v3268 = vmul.f32 %v3261, %v3234
        %v3269 = vmul.f32 %v3261, %v3235
        %v3270 = vadd.f32 %v3250, %v3262
        %v3271 = vadd.f32 %v3251, %v3263
        %v3272 = vadd.f32 %v3252, %v3264
        %v3273 = vadd.f32 %v3253, %v3265
        %v3274 = vadd.f32 %v3254, %v3266
        %v3275 = vadd.f32 %v3255, %v3267
        %v3276 = vadd.f32 %v3256, %v3268
        %v3277 = vadd.f32 %v3257, %v3269
        %v3278 = vlaneseq
        %v3279 = vshrl.u32 %v3278, 7
        %v3280 = vsub.s32 2, %v3279
        %v3281 = vrot.slane %v3081, %v3280
        %v3282 = vmul.f32 %v3281, %v3230
        %v3283 = vmul.f32 %v3281, %v3231
        %v3284 = vmul.f32 %v3281, %v3232
        %v3285 = vmul.f32 %v3281, %v3233
        %v3286 = vmul.f32 %v3281, %v3234
        %v3287 = vmul.f32 %v3281, %v3235
        %v3288 = vmul.f32 %v3281, %v3236
        %v3289 = vmul.f32 %v3281, %v3237
        %v3290 = vadd.f32 %v3270, %v3282
        %v3291 = vadd.f32 %v3271, %v3283
        %v3292 = vadd.f32 %v3272, %v3284
        %v3293 = vadd.f32 %v3273, %v3285
        %v3294 = vadd.f32 %v3274, %v3286
        %v3295 = vadd.f32 %v3275, %v3287
        %v3296 = vadd.f32 %v3276, %v3288
        %v3297 = vadd.f32 %v3277, %v3289
        %v3298 = vadd.f32 %v3290, %v2357
        %v3299 = vadd.f32 %v3291, %v2357
        %v3300 = vadd.f32 %v3292, %v2357
        %v3301 = vadd.f32 %v3293, %v2357
        %v3302 = vadd.f32 %v3294, %v2357
        %v3303 = vadd.f32 %v3295, %v2357
        %v3304 = vadd.f32 %v3296, %v2357
        %v3305 = vadd.f32 %v3297, %v2357
        %3306 = vadd.xlane.f32.xlu0 %v3298
        %v3307 = vpop.xlane.xlu0 %3306
        %3308 = vadd.xlane.f32.xlu0 %v3299
        %v3309 = vpop.xlane.xlu0 %3308
        %3310 = vadd.xlane.f32.xlu0 %v3300
        %v3311 = vpop.xlane.xlu0 %3310
        %3312 = vadd.xlane.f32.xlu0 %v3301
        %v3313 = vpop.xlane.xlu0 %3312
        %3314 = vadd.xlane.f32.xlu0 %v3302
        %v3315 = vpop.xlane.xlu0 %3314
        %3316 = vadd.xlane.f32.xlu0 %v3303
        %v3317 = vpop.xlane.xlu0 %3316
        %3318 = vadd.xlane.f32.xlu0 %v3304
        %v3319 = vpop.xlane.xlu0 %3318
        %3320 = vadd.xlane.f32.xlu0 %v3305
        %v3321 = vpop.xlane.xlu0 %3320
        %v3322 = vmul.f32 %v3298, %v3298
        %v3323 = vmul.f32 %v3299, %v3299
        %v3324 = vmul.f32 %v3300, %v3300
        %v3325 = vmul.f32 %v3301, %v3301
        %v3326 = vmul.f32 %v3302, %v3302
        %v3327 = vmul.f32 %v3303, %v3303
        %v3328 = vmul.f32 %v3304, %v3304
        %v3329 = vmul.f32 %v3305, %v3305
        %3330 = vadd.xlane.f32.xlu0 %v3322
        %v3331 = vpop.xlane.xlu0 %3330
        %3332 = vadd.xlane.f32.xlu0 %v3323
        %v3333 = vpop.xlane.xlu0 %3332
        %3334 = vadd.xlane.f32.xlu0 %v3324
        %v3335 = vpop.xlane.xlu0 %3334
        %3336 = vadd.xlane.f32.xlu0 %v3325
        %v3337 = vpop.xlane.xlu0 %3336
        %3338 = vadd.xlane.f32.xlu0 %v3326
        %v3339 = vpop.xlane.xlu0 %3338
        %3340 = vadd.xlane.f32.xlu0 %v3327
        %v3341 = vpop.xlane.xlu0 %3340
        %3342 = vadd.xlane.f32.xlu0 %v3328
        %v3343 = vpop.xlane.xlu0 %3342
        %3344 = vadd.xlane.f32.xlu0 %v3329
        %v3345 = vpop.xlane.xlu0 %3344
        %v3346 = vmul.f32 %v3307, 0.0078125
        %v3347 = vmul.f32 %v3309, 0.0078125
        %v3348 = vmul.f32 %v3311, 0.0078125
        %v3349 = vmul.f32 %v3313, 0.0078125
        %v3350 = vmul.f32 %v3315, 0.0078125
        %v3351 = vmul.f32 %v3317, 0.0078125
        %v3352 = vmul.f32 %v3319, 0.0078125
        %v3353 = vmul.f32 %v3321, 0.0078125
        %v3354 = vmul.f32 %v3331, 0.0078125
        %v3355 = vmul.f32 %v3333, 0.0078125
        %v3356 = vmul.f32 %v3335, 0.0078125
        %v3357 = vmul.f32 %v3337, 0.0078125
        %v3358 = vmul.f32 %v3339, 0.0078125
        %v3359 = vmul.f32 %v3341, 0.0078125
        %v3360 = vmul.f32 %v3343, 0.0078125
        %v3361 = vmul.f32 %v3345, 0.0078125
        %v3362 = vmul.f32 %v3346, %v3346
        %v3363 = vmul.f32 %v3347, %v3347
        %v3364 = vmul.f32 %v3348, %v3348
        %v3365 = vmul.f32 %v3349, %v3349
        %v3366 = vmul.f32 %v3350, %v3350
        %v3367 = vmul.f32 %v3351, %v3351
        %v3368 = vmul.f32 %v3352, %v3352
        %v3369 = vmul.f32 %v3353, %v3353
        %v3370 = vsub.f32 %v3354, %v3362
        %v3371 = vsub.f32 %v3355, %v3363
        %v3372 = vsub.f32 %v3356, %v3364
        %v3373 = vsub.f32 %v3357, %v3365
        %v3374 = vsub.f32 %v3358, %v3366
        %v3375 = vsub.f32 %v3359, %v3367
        %v3376 = vsub.f32 %v3360, %v3368
        %v3377 = vsub.f32 %v3361, %v3369
        %v3378 = vsub.f32 %v3298, %v3346
        %v3379 = vsub.f32 %v3299, %v3347
        %v3380 = vsub.f32 %v3300, %v3348
        %v3381 = vsub.f32 %v3301, %v3349
        %v3382 = vsub.f32 %v3302, %v3350
        %v3383 = vsub.f32 %v3303, %v3351
        %v3384 = vsub.f32 %v3304, %v3352
        %v3385 = vsub.f32 %v3305, %v3353
        %v3386 = vadd.f32 %v3370, 1e-06
        %v3387 = vadd.f32 %v3371, 1e-06
        %v3388 = vadd.f32 %v3372, 1e-06
        %v3389 = vadd.f32 %v3373, 1e-06
        %v3390 = vadd.f32 %v3374, 1e-06
        %v3391 = vadd.f32 %v3375, 1e-06
        %v3392 = vadd.f32 %v3376, 1e-06
        %v3393 = vadd.f32 %v3377, 1e-06
        %v3394 = vrsqrt.pop %v3386
        %v3395 = vrsqrt.pop %v3387
        %v3396 = vrsqrt.pop %v3388
        %v3397 = vrsqrt.pop %v3389
        %v3398 = vrsqrt.pop %v3390
        %v3399 = vrsqrt.pop %v3391
        %v3400 = vrsqrt.pop %v3392
        %v3401 = vrsqrt.pop %v3393
        %v3402 = vmul.f32 %v3378, %v3394
        %v3403 = vmul.f32 %v3379, %v3395
        %v3404 = vmul.f32 %v3380, %v3396
        %v3405 = vmul.f32 %v3381, %v3397
        %v3406 = vmul.f32 %v3382, %v3398
        %v3407 = vmul.f32 %v3383, %v3399
        %v3408 = vmul.f32 %v3384, %v3400
        %v3409 = vmul.f32 %v3385, %v3401
        %v3410 = vmul.f32 %v3402, %v2473
        %v3411 = vmul.f32 %v3403, %v2473
        %v3412 = vmul.f32 %v3404, %v2473
        %v3413 = vmul.f32 %v3405, %v2473
        %v3414 = vmul.f32 %v3406, %v2473
        %v3415 = vmul.f32 %v3407, %v2473
        %v3416 = vmul.f32 %v3408, %v2473
        %v3417 = vmul.f32 %v3409, %v2473
        %v3418 = vadd.f32 %v3410, %v2485
        %v3419 = vadd.f32 %v3411, %v2485
        %v3420 = vadd.f32 %v3412, %v2485
        %v3421 = vadd.f32 %v3413, %v2485
        %v3422 = vadd.f32 %v3414, %v2485
        %v3423 = vadd.f32 %v3415, %v2485
        %v3424 = vadd.f32 %v3416, %v2485
        %v3425 = vadd.f32 %v3417, %v2485
        %v3426 = vld [vmem:[%s2494] sm:$0x7]
        %v3427 = vld [vmem:[%s2494 + $0x4] sm:$0x7]
        %v3428 = vld [vmem:[%s2494 + $0x8] sm:$0x7]
        %s3429 = scalar_lea.vmem [#allocation3], 120
        %v3430 = vld [vmem:[%s3429 + $0x1] sm:$0xff]
        %v3431 = vld [vmem:[%s3429 + $0x9] sm:$0xff]
        %v3432 = vld [vmem:[%s3429 + $0x19] sm:$0xff]
        %v3433 = vld [vmem:[%s3429 + $0x21] sm:$0xff]
        %v3434 = vld [vmem:[%s3429 + $0x31] sm:$0xff]
        %v3435 = vld [vmem:[%s3429 + $0x39] sm:$0xff]
        %v3436 = vld [vmem:[%s3429 + $0x49] sm:$0xff]
        %v3437 = vld [vmem:[%s3429 + $0x51] sm:$0xff]
        %v3438 = vld [vmem:[%s3429 + $0x61] sm:$0xff]
        %v3439 = vld [vmem:[%s3429 + $0x69] sm:$0xff]
        %v3440 = vld [vmem:[%s3429 + $0x79] sm:$0xff]
        %v3441 = vld [vmem:[%s3429 + $0x81] sm:$0xff]
        %v3442 = vlaneseq
        %v3443 = vshrl.u32 %v3442, 7
        %v3444 = vsub.s32 0, %v3443
        %v3445 = vrot.slane %v3426, %v3444
        %v3446 = vmul.f32 %v3445, %v3430
        %v3447 = vmul.f32 %v3445, %v3431
        %v3448 = vmul.f32 %v3445, %v3432
        %v3449 = vmul.f32 %v3445, %v3433
        %v3450 = vmul.f32 %v3445, %v3434
        %v3451 = vmul.f32 %v3445, %v3435
        %v3452 = vmul.f32 %v3445, %v3436
        %v3453 = vmul.f32 %v3445, %v3437
        %v3454 = vadd.f32 %v3446, 0.0
        %v3455 = vadd.f32 %v3447, 0.0
        %v3456 = vadd.f32 %v3448, 0.0
        %v3457 = vadd.f32 %v3449, 0.0
        %v3458 = vadd.f32 %v3450, 0.0
        %v3459 = vadd.f32 %v3451, 0.0
        %v3460 = vadd.f32 %v3452, 0.0
        %v3461 = vadd.f32 %v3453, 0.0
        %v3462 = vlaneseq
        %v3463 = vshrl.u32 %v3462, 7
        %v3464 = vsub.s32 0, %v3463
        %v3465 = vrot.slane %v3427, %v3464
        %v3466 = vmul.f32 %v3465, %v3432
        %v3467 = vmul.f32 %v3465, %v3433
        %v3468 = vmul.f32 %v3465, %v3434
        %v3469 = vmul.f32 %v3465, %v3435
        %v3470 = vmul.f32 %v3465, %v3436
        %v3471 = vmul.f32 %v3465, %v3437
        %v3472 = vmul.f32 %v3465, %v3438
        %v3473 = vmul.f32 %v3465, %v3439
        %v3474 = vadd.f32 %v3454, %v3466
        %v3475 = vadd.f32 %v3455, %v3467
        %v3476 = vadd.f32 %v3456, %v3468
        %v3477 = vadd.f32 %v3457, %v3469
        %v3478 = vadd.f32 %v3458, %v3470
        %v3479 = vadd.f32 %v3459, %v3471
        %v3480 = vadd.f32 %v3460, %v3472
        %v3481 = vadd.f32 %v3461, %v3473
        %v3482 = vlaneseq
        %v3483 = vshrl.u32 %v3482, 7
        %v3484 = vsub.s32 0, %v3483
        %v3485 = vrot.slane %v3428, %v3484
        %v3486 = vmul.f32 %v3485, %v3434
        %v3487 = vmul.f32 %v3485, %v3435
        %v3488 = vmul.f32 %v3485, %v3436
        %v3489 = vmul.f32 %v3485, %v3437
        %v3490 = vmul.f32 %v3485, %v3438
        %v3491 = vmul.f32 %v3485, %v3439
        %v3492 = vmul.f32 %v3485, %v3440
        %v3493 = vmul.f32 %v3485, %v3441
        %v3494 = vadd.f32 %v3474, %v3486
        %v3495 = vadd.f32 %v3475, %v3487
        %v3496 = vadd.f32 %v3476, %v3488
        %v3497 = vadd.f32 %v3477, %v3489
        %v3498 = vadd.f32 %v3478, %v3490
        %v3499 = vadd.f32 %v3479, %v3491
        %v3500 = vadd.f32 %v3480, %v3492
        %v3501 = vadd.f32 %v3481, %v3493
        %v3502 = vld [vmem:[%s3429 + $0x2] sm:$0xff]
        %v3503 = vld [vmem:[%s3429 + $0xa] sm:$0xff]
        %v3504 = vld [vmem:[%s3429 + $0x1a] sm:$0xff]
        %v3505 = vld [vmem:[%s3429 + $0x22] sm:$0xff]
        %v3506 = vld [vmem:[%s3429 + $0x32] sm:$0xff]
        %v3507 = vld [vmem:[%s3429 + $0x3a] sm:$0xff]
        %v3508 = vld [vmem:[%s3429 + $0x4a] sm:$0xff]
        %v3509 = vld [vmem:[%s3429 + $0x52] sm:$0xff]
        %v3510 = vld [vmem:[%s3429 + $0x62] sm:$0xff]
        %v3511 = vld [vmem:[%s3429 + $0x6a] sm:$0xff]
        %v3512 = vld [vmem:[%s3429 + $0x7a] sm:$0xff]
        %v3513 = vld [vmem:[%s3429 + $0x82] sm:$0xff]
        %v3514 = vlaneseq
        %v3515 = vshrl.u32 %v3514, 7
        %v3516 = vsub.s32 1, %v3515
        %v3517 = vrot.slane %v3426, %v3516
        %v3518 = vmul.f32 %v3517, %v3502
        %v3519 = vmul.f32 %v3517, %v3503
        %v3520 = vmul.f32 %v3517, %v3504
        %v3521 = vmul.f32 %v3517, %v3505
        %v3522 = vmul.f32 %v3517, %v3506
        %v3523 = vmul.f32 %v3517, %v3507
        %v3524 = vmul.f32 %v3517, %v3508
        %v3525 = vmul.f32 %v3517, %v3509
        %v3526 = vadd.f32 %v3494, %v3518
        %v3527 = vadd.f32 %v3495, %v3519
        %v3528 = vadd.f32 %v3496, %v3520
        %v3529 = vadd.f32 %v3497, %v3521
        %v3530 = vadd.f32 %v3498, %v3522
        %v3531 = vadd.f32 %v3499, %v3523
        %v3532 = vadd.f32 %v3500, %v3524
        %v3533 = vadd.f32 %v3501, %v3525
        %v3534 = vlaneseq
        %v3535 = vshrl.u32 %v3534, 7
        %v3536 = vsub.s32 1, %v3535
        %v3537 = vrot.slane %v3427, %v3536
        %v3538 = vmul.f32 %v3537, %v3504
        %v3539 = vmul.f32 %v3537, %v3505
        %v3540 = vmul.f32 %v3537, %v3506
        %v3541 = vmul.f32 %v3537, %v3507
        %v3542 = vmul.f32 %v3537, %v3508
        %v3543 = vmul.f32 %v3537, %v3509
        %v3544 = vmul.f32 %v3537, %v3510
        %v3545 = vmul.f32 %v3537, %v3511
        %v3546 = vadd.f32 %v3526, %v3538
        %v3547 = vadd.f32 %v3527, %v3539
        %v3548 = vadd.f32 %v3528, %v3540
        %v3549 = vadd.f32 %v3529, %v3541
        %v3550 = vadd.f32 %v3530, %v3542
        %v3551 = vadd.f32 %v3531, %v3543
        %v3552 = vadd.f32 %v3532, %v3544
        %v3553 = vadd.f32 %v3533, %v3545
        %v3554 = vlaneseq
        %v3555 = vshrl.u32 %v3554, 7
        %v3556 = vsub.s32 1, %v3555
        %v3557 = vrot.slane %v3428, %v3556
        %v3558 = vmul.f32 %v3557, %v3506
        %v3559 = vmul.f32 %v3557, %v3507
        %v3560 = vmul.f32 %v3557, %v3508
        %v3561 = vmul.f32 %v3557, %v3509
        %v3562 = vmul.f32 %v3557, %v3510
        %v3563 = vmul.f32 %v3557, %v3511
        %v3564 = vmul.f32 %v3557, %v3512
        %v3565 = vmul.f32 %v3557, %v3513
        %v3566 = vadd.f32 %v3546, %v3558
        %v3567 = vadd.f32 %v3547, %v3559
        %v3568 = vadd.f32 %v3548, %v3560
        %v3569 = vadd.f32 %v3549, %v3561
        %v3570 = vadd.f32 %v3550, %v3562
        %v3571 = vadd.f32 %v3551, %v3563
        %v3572 = vadd.f32 %v3552, %v3564
        %v3573 = vadd.f32 %v3553, %v3565
        %v3574 = vld [vmem:[%s3429 + $0x3] sm:$0xff]
        %v3575 = vld [vmem:[%s3429 + $0xb] sm:$0xff]
        %v3576 = vld [vmem:[%s3429 + $0x1b] sm:$0xff]
        %v3577 = vld [vmem:[%s3429 + $0x23] sm:$0xff]
        %v3578 = vld [vmem:[%s3429 + $0x33] sm:$0xff]
        %v3579 = vld [vmem:[%s3429 + $0x3b] sm:$0xff]
        %v3580 = vld [vmem:[%s3429 + $0x4b] sm:$0xff]
        %v3581 = vld [vmem:[%s3429 + $0x53] sm:$0xff]
        %v3582 = vld [vmem:[%s3429 + $0x63] sm:$0xff]
        %v3583 = vld [vmem:[%s3429 + $0x6b] sm:$0xff]
        %v3584 = vld [vmem:[%s3429 + $0x7b] sm:$0xff]
        %v3585 = vld [vmem:[%s3429 + $0x83] sm:$0xff]
        %v3586 = vlaneseq
        %v3587 = vshrl.u32 %v3586, 7
        %v3588 = vsub.s32 2, %v3587
        %v3589 = vrot.slane %v3426, %v3588
        %v3590 = vmul.f32 %v3589, %v3574
        %v3591 = vmul.f32 %v3589, %v3575
        %v3592 = vmul.f32 %v3589, %v3576
        %v3593 = vmul.f32 %v3589, %v3577
        %v3594 = vmul.f32 %v3589, %v3578
        %v3595 = vmul.f32 %v3589, %v3579
        %v3596 = vmul.f32 %v3589, %v3580
        %v3597 = vmul.f32 %v3589, %v3581
        %v3598 = vadd.f32 %v3566, %v3590
        %v3599 = vadd.f32 %v3567, %v3591
        %v3600 = vadd.f32 %v3568, %v3592
        %v3601 = vadd.f32 %v3569, %v3593
        %v3602 = vadd.f32 %v3570, %v3594
        %v3603 = vadd.f32 %v3571, %v3595
        %v3604 = vadd.f32 %v3572, %v3596
        %v3605 = vadd.f32 %v3573, %v3597
        %v3606 = vlaneseq
        %v3607 = vshrl.u32 %v3606, 7
        %v3608 = vsub.s32 2, %v3607
        %v3609 = vrot.slane %v3427, %v3608
        %v3610 = vmul.f32 %v3609, %v3576
        %v3611 = vmul.f32 %v3609, %v3577
        %v3612 = vmul.f32 %v3609, %v3578
        %v3613 = vmul.f32 %v3609, %v3579
        %v3614 = vmul.f32 %v3609, %v3580
        %v3615 = vmul.f32 %v3609, %v3581
        %v3616 = vmul.f32 %v3609, %v3582
        %v3617 = vmul.f32 %v3609, %v3583
        %v3618 = vadd.f32 %v3598, %v3610
        %v3619 = vadd.f32 %v3599, %v3611
        %v3620 = vadd.f32 %v3600, %v3612
        %v3621 = vadd.f32 %v3601, %v3613
        %v3622 = vadd.f32 %v3602, %v3614
        %v3623 = vadd.f32 %v3603, %v3615
        %v3624 = vadd.f32 %v3604, %v3616
        %v3625 = vadd.f32 %v3605, %v3617
        %v3626 = vlaneseq
        %v3627 = vshrl.u32 %v3626, 7
        %v3628 = vsub.s32 2, %v3627
        %v3629 = vrot.slane %v3428, %v3628
        %v3630 = vmul.f32 %v3629, %v3578
        %v3631 = vmul.f32 %v3629, %v3579
        %v3632 = vmul.f32 %v3629, %v3580
        %v3633 = vmul.f32 %v3629, %v3581
        %v3634 = vmul.f32 %v3629, %v3582
        %v3635 = vmul.f32 %v3629, %v3583
        %v3636 = vmul.f32 %v3629, %v3584
        %v3637 = vmul.f32 %v3629, %v3585
        %v3638 = vadd.f32 %v3618, %v3630
        %v3639 = vadd.f32 %v3619, %v3631
        %v3640 = vadd.f32 %v3620, %v3632
        %v3641 = vadd.f32 %v3621, %v3633
        %v3642 = vadd.f32 %v3622, %v3634
        %v3643 = vadd.f32 %v3623, %v3635
        %v3644 = vadd.f32 %v3624, %v3636
        %v3645 = vadd.f32 %v3625, %v3637
        %v3646 = vadd.f32 %v3638, %v2718
        %v3647 = vadd.f32 %v3639, %v2718
        %v3648 = vadd.f32 %v3640, %v2718
        %v3649 = vadd.f32 %v3641, %v2718
        %v3650 = vadd.f32 %v3642, %v2718
        %v3651 = vadd.f32 %v3643, %v2718
        %v3652 = vadd.f32 %v3644, %v2718
        %v3653 = vadd.f32 %v3645, %v2718
        %3654 = vadd.xlane.f32.xlu0 %v3646
        %v3655 = vpop.xlane.xlu0 %3654
        %3656 = vadd.xlane.f32.xlu0 %v3647
        %v3657 = vpop.xlane.xlu0 %3656
        %3658 = vadd.xlane.f32.xlu0 %v3648
        %v3659 = vpop.xlane.xlu0 %3658
        %3660 = vadd.xlane.f32.xlu0 %v3649
        %v3661 = vpop.xlane.xlu0 %3660
        %3662 = vadd.xlane.f32.xlu0 %v3650
        %v3663 = vpop.xlane.xlu0 %3662
        %3664 = vadd.xlane.f32.xlu0 %v3651
        %v3665 = vpop.xlane.xlu0 %3664
        %3666 = vadd.xlane.f32.xlu0 %v3652
        %v3667 = vpop.xlane.xlu0 %3666
        %3668 = vadd.xlane.f32.xlu0 %v3653
        %v3669 = vpop.xlane.xlu0 %3668
        %v3670 = vmul.f32 %v3646, %v3646
        %v3671 = vmul.f32 %v3647, %v3647
        %v3672 = vmul.f32 %v3648, %v3648
        %v3673 = vmul.f32 %v3649, %v3649
        %v3674 = vmul.f32 %v3650, %v3650
        %v3675 = vmul.f32 %v3651, %v3651
        %v3676 = vmul.f32 %v3652, %v3652
        %v3677 = vmul.f32 %v3653, %v3653
        %3678 = vadd.xlane.f32.xlu0 %v3670
        %v3679 = vpop.xlane.xlu0 %3678
        %3680 = vadd.xlane.f32.xlu0 %v3671
        %v3681 = vpop.xlane.xlu0 %3680
        %3682 = vadd.xlane.f32.xlu0 %v3672
        %v3683 = vpop.xlane.xlu0 %3682
        %3684 = vadd.xlane.f32.xlu0 %v3673
        %v3685 = vpop.xlane.xlu0 %3684
        %3686 = vadd.xlane.f32.xlu0 %v3674
        %v3687 = vpop.xlane.xlu0 %3686
        %3688 = vadd.xlane.f32.xlu0 %v3675
        %v3689 = vpop.xlane.xlu0 %3688
        %3690 = vadd.xlane.f32.xlu0 %v3676
        %v3691 = vpop.xlane.xlu0 %3690
        %3692 = vadd.xlane.f32.xlu0 %v3677
        %v3693 = vpop.xlane.xlu0 %3692
        %v3694 = vmul.f32 %v3655, 0.0078125
        %v3695 = vmul.f32 %v3657, 0.0078125
        %v3696 = vmul.f32 %v3659, 0.0078125
        %v3697 = vmul.f32 %v3661, 0.0078125
        %v3698 = vmul.f32 %v3663, 0.0078125
        %v3699 = vmul.f32 %v3665, 0.0078125
        %v3700 = vmul.f32 %v3667, 0.0078125
        %v3701 = vmul.f32 %v3669, 0.0078125
        %v3702 = vmul.f32 %v3679, 0.0078125
        %v3703 = vmul.f32 %v3681, 0.0078125
        %v3704 = vmul.f32 %v3683, 0.0078125
        %v3705 = vmul.f32 %v3685, 0.0078125
        %v3706 = vmul.f32 %v3687, 0.0078125
        %v3707 = vmul.f32 %v3689, 0.0078125
        %v3708 = vmul.f32 %v3691, 0.0078125
        %v3709 = vmul.f32 %v3693, 0.0078125
        %v3710 = vmul.f32 %v3694, %v3694
        %v3711 = vmul.f32 %v3695, %v3695
        %v3712 = vmul.f32 %v3696, %v3696
        %v3713 = vmul.f32 %v3697, %v3697
        %v3714 = vmul.f32 %v3698, %v3698
        %v3715 = vmul.f32 %v3699, %v3699
        %v3716 = vmul.f32 %v3700, %v3700
        %v3717 = vmul.f32 %v3701, %v3701
        %v3718 = vsub.f32 %v3702, %v3710
        %v3719 = vsub.f32 %v3703, %v3711
        %v3720 = vsub.f32 %v3704, %v3712
        %v3721 = vsub.f32 %v3705, %v3713
        %v3722 = vsub.f32 %v3706, %v3714
        %v3723 = vsub.f32 %v3707, %v3715
        %v3724 = vsub.f32 %v3708, %v3716
        %v3725 = vsub.f32 %v3709, %v3717
        %v3726 = vsub.f32 %v3646, %v3694
        %v3727 = vsub.f32 %v3647, %v3695
        %v3728 = vsub.f32 %v3648, %v3696
        %v3729 = vsub.f32 %v3649, %v3697
        %v3730 = vsub.f32 %v3650, %v3698
        %v3731 = vsub.f32 %v3651, %v3699
        %v3732 = vsub.f32 %v3652, %v3700
        %v3733 = vsub.f32 %v3653, %v3701
        %v3734 = vadd.f32 %v3718, 1e-06
        %v3735 = vadd.f32 %v3719, 1e-06
        %v3736 = vadd.f32 %v3720, 1e-06
        %v3737 = vadd.f32 %v3721, 1e-06
        %v3738 = vadd.f32 %v3722, 1e-06
        %v3739 = vadd.f32 %v3723, 1e-06
        %v3740 = vadd.f32 %v3724, 1e-06
        %v3741 = vadd.f32 %v3725, 1e-06
        %v3742 = vrsqrt.pop %v3734
        %v3743 = vrsqrt.pop %v3735
        %v3744 = vrsqrt.pop %v3736
        %v3745 = vrsqrt.pop %v3737
        %v3746 = vrsqrt.pop %v3738
        %v3747 = vrsqrt.pop %v3739
        %v3748 = vrsqrt.pop %v3740
        %v3749 = vrsqrt.pop %v3741
        %v3750 = vmul.f32 %v3726, %v3742
        %v3751 = vmul.f32 %v3727, %v3743
        %v3752 = vmul.f32 %v3728, %v3744
        %v3753 = vmul.f32 %v3729, %v3745
        %v3754 = vmul.f32 %v3730, %v3746
        %v3755 = vmul.f32 %v3731, %v3747
        %v3756 = vmul.f32 %v3732, %v3748
        %v3757 = vmul.f32 %v3733, %v3749
        %v3758 = vmul.f32 %v3750, %v2834
        %v3759 = vmul.f32 %v3751, %v2834
        %v3760 = vmul.f32 %v3752, %v2834
        %v3761 = vmul.f32 %v3753, %v2834
        %v3762 = vmul.f32 %v3754, %v2834
        %v3763 = vmul.f32 %v3755, %v2834
        %v3764 = vmul.f32 %v3756, %v2834
        %v3765 = vmul.f32 %v3757, %v2834
        %v3766 = vadd.f32 %v3758, %v2846
        %v3767 = vadd.f32 %v3759, %v2846
        %v3768 = vadd.f32 %v3760, %v2846
        %v3769 = vadd.f32 %v3761, %v2846
        %v3770 = vadd.f32 %v3762, %v2846
        %v3771 = vadd.f32 %v3763, %v2846
        %v3772 = vadd.f32 %v3764, %v2846
        %v3773 = vadd.f32 %v3765, %v2846
        %v3774 = vld [vmem:[#allocation7] sm:$0xff]
        %v3775 = vld [vmem:[#allocation7 + $0x8] sm:$0xff]
        %v3776 = vld [vmem:[#allocation7 + $0x10] sm:$0xff]
        %v3777 = vld [vmem:[#allocation7 + $0x18] sm:$0xff]
        %v3778 = vld [vmem:[#allocation7 + $0x20] sm:$0xff]
        %v3779 = vld [vmem:[#allocation7 + $0x28] sm:$0xff]
        %v3780 = vld [vmem:[#allocation7 + $0x30] sm:$0xff]
        %v3781 = vld [vmem:[#allocation7 + $0x38] sm:$0xff]
        %v3782 = vld [vmem:[#allocation7 + $0x40] sm:$0xff]
        %v3783 = vld [vmem:[#allocation7 + $0x48] sm:$0xff]
        %v3784 = vld [vmem:[#allocation7 + $0x50] sm:$0xff]
        %v3785 = vld [vmem:[#allocation7 + $0x58] sm:$0xff]
        %v3786 = vld [vmem:[#allocation7 + $0x60] sm:$0xff]
        %v3787 = vld [vmem:[#allocation7 + $0x68] sm:$0xff]
        %v3788 = vld [vmem:[#allocation7 + $0x70] sm:$0xff]
        %v3789 = vld [vmem:[#allocation7 + $0x78] sm:$0xff]
        %v3790 = vld [vmem:[#allocation7 + $0x80] sm:$0xff]
        %v3791 = vld [vmem:[#allocation7 + $0x88] sm:$0xff]
        %v3792 = vld [vmem:[#allocation7 + $0x90] sm:$0xff]
        %v3793 = vld [vmem:[#allocation7 + $0x98] sm:$0xff]
        %v3794 = vld [vmem:[#allocation7 + $0xa0] sm:$0xff]
        %v3795 = vld [vmem:[#allocation7 + $0xa8] sm:$0xff]
        %v3796 = vld [vmem:[#allocation7 + $0xb0] sm:$0xff]
        %v3797 = vld [vmem:[#allocation7 + $0xb8] sm:$0xff]
        %v3798 = vld [vmem:[#allocation7 + $0xc0] sm:$0xff]
        %v3799 = vld [vmem:[#allocation7 + $0xc8] sm:$0xff]
        %v3800 = vld [vmem:[#allocation7 + $0xd0] sm:$0xff]
        %v3801 = vld [vmem:[#allocation7 + $0xd8] sm:$0xff]
        %v3802 = vld [vmem:[#allocation7 + $0xe0] sm:$0xff]
        %v3803 = vld [vmem:[#allocation7 + $0xe8] sm:$0xff]
        %v3804 = vld [vmem:[#allocation7 + $0xf0] sm:$0xff]
        %v3805 = vld [vmem:[#allocation7 + $0xf8] sm:$0xff]
        %v3806 = vld [vmem:[%s5] sm:$0x1]
        %v3808 = vlaneseq
        %v3809 = vshrl.u32 %v3808, 7
        %v3810 = vsub.s32 0, %v3809
        %v3811 = vrot.slane %v3806, %v3810
        %3813 = vmatprep.subr.mxu0 0.0
        %3814 = vmatpush1.msra.mxu0 %v3774
        %3815 = vmatprep.subr.mxu0 0.0
        %3816 = vmatpush1.msra.mxu0 %v3775
        %3817 = vmatprep.subr.mxu0 0.0
        %3818 = vmatpush1.msra.mxu0 %v3776
        %3819 = vmatprep.subr.mxu0 0.0
        %3820 = vmatpush1.msra.mxu0 %v3777
        %3821 = vmatprep.subr.mxu0 0.0
        %3822 = vmatpush1.msra.mxu0 %v3778
        %3823 = vmatprep.subr.mxu0 0.0
        %3824 = vmatpush1.msra.mxu0 %v3779
        %3825 = vmatprep.subr.mxu0 0.0
        %3826 = vmatpush1.msra.mxu0 %v3780
        %3827 = vmatprep.subr.mxu0 0.0
        %3828 = vmatpush1.msra.mxu0 %v3781
        %3829 = vmatprep.subr.mxu0 0.0
        %3830 = vmatpush1.msra.mxu0 %v3782
        %3831 = vmatprep.subr.mxu0 0.0
        %3832 = vmatpush1.msra.mxu0 %v3783
        %3833 = vmatprep.subr.mxu0 0.0
        %3834 = vmatpush1.msra.mxu0 %v3784
        %3835 = vmatprep.subr.mxu0 0.0
        %3836 = vmatpush1.msra.mxu0 %v3785
        %3837 = vmatprep.subr.mxu0 0.0
        %3838 = vmatpush1.msra.mxu0 %v3786
        %3839 = vmatprep.subr.mxu0 0.0
        %3840 = vmatpush1.msra.mxu0 %v3787
        %3841 = vmatprep.subr.mxu0 0.0
        %3842 = vmatpush1.msra.mxu0 %v3788
        %3843 = vmatprep.subr.mxu0 0.0
        %3844 = vmatpush1.msra.mxu0 %v3789
        %3845 = vmatprep.subr.mxu0 0.0
        %3846 = vmatpush1.msra.mxu0 %v3790
        %3847 = vmatprep.subr.mxu0 0.0
        %3848 = vmatpush1.msra.mxu0 %v3791
        %3849 = vmatprep.subr.mxu0 0.0
        %3850 = vmatpush1.msra.mxu0 %v3792
        %3851 = vmatprep.subr.mxu0 0.0
        %3852 = vmatpush1.msra.mxu0 %v3793
        %3853 = vmatprep.subr.mxu0 0.0
        %3854 = vmatpush1.msra.mxu0 %v3794
        %3855 = vmatprep.subr.mxu0 0.0
        %3856 = vmatpush1.msra.mxu0 %v3795
        %3857 = vmatprep.subr.mxu0 0.0
        %3858 = vmatpush1.msra.mxu0 %v3796
        %3859 = vmatprep.subr.mxu0 0.0
        %3860 = vmatpush1.msra.mxu0 %v3797
        %3861 = vmatprep.subr.mxu0 0.0
        %3862 = vmatpush1.msra.mxu0 %v3798
        %3863 = vmatprep.subr.mxu0 0.0
        %3864 = vmatpush1.msra.mxu0 %v3799
        %3865 = vmatprep.subr.mxu0 0.0
        %3866 = vmatpush1.msra.mxu0 %v3800
        %3867 = vmatprep.subr.mxu0 0.0
        %3868 = vmatpush1.msra.mxu0 %v3801
        %3869 = vmatprep.subr.mxu0 0.0
        %3870 = vmatpush1.msra.mxu0 %v3802
        %3871 = vmatprep.subr.mxu0 0.0
        %3872 = vmatpush1.msra.mxu0 %v3803
        %3873 = vmatprep.subr.mxu0 0.0
        %3874 = vmatpush1.msra.mxu0 %v3804
        %3875 = vmatprep.subr.mxu0 0.0
        %3876 = vmatpush1.msra.mxu0 %v3805
        %3877 = vmatprep.mubr.f32.mxu0 %v3766
        %3878 = vmatmul.mubr.f32.gmra.mrb[0].mxu0 %v3418
        %v3879 = vpop.f32.mrb[0].mxu0
        %v3880 = vadd.f32 %v3811, %v3879
        %v3881 = vpop.f32.mrb[0].mxu0
        %3882 = vmatprep.mubr.f32.mxu0 %v3767
        %3883 = vmatmul.mubr.f32.gmra.mrb[0].mxu0 %v3419
        %v3884 = vpop.f32.mrb[0].mxu0
        %v3885 = vadd.f32 %v3811, %v3884
        %v3886 = vpop.f32.mrb[0].mxu0
        %3887 = vmatprep.mubr.f32.mxu0 %v3768
        %3888 = vmatmul.mubr.f32.gmra.mrb[0].mxu0 %v3420
        %v3889 = vpop.f32.mrb[0].mxu0
        %v3890 = vadd.f32 %v3811, %v3889
        %v3891 = vpop.f32.mrb[0].mxu0
        %3892 = vmatprep.mubr.f32.mxu0 %v3769
        %3893 = vmatmul.mubr.f32.gmra.mrb[0].mxu0 %v3421
        %v3894 = vpop.f32.mrb[0].mxu0
        %v3895 = vadd.f32 %v3811, %v3894
        %v3896 = vpop.f32.mrb[0].mxu0
        %3897 = vmatprep.mubr.f32.mxu0 %v3770
        %3898 = vmatmul.mubr.f32.gmra.mrb[0].mxu0 %v3422
        %v3899 = vpop.f32.mrb[0].mxu0
        %v3900 = vadd.f32 %v3811, %v3899
        %v3901 = vpop.f32.mrb[0].mxu0
        %3902 = vmatprep.mubr.f32.mxu0 %v3771
        %3903 = vmatmul.mubr.f32.gmra.mrb[0].mxu0 %v3423
        %v3904 = vpop.f32.mrb[0].mxu0
        %v3905 = vadd.f32 %v3811, %v3904
        %v3906 = vpop.f32.mrb[0].mxu0
        %3907 = vmatprep.mubr.f32.mxu0 %v3772
        %3908 = vmatmul.mubr.f32.gmra.mrb[0].mxu0 %v3424
        %v3909 = vpop.f32.mrb[0].mxu0
        %v3910 = vadd.f32 %v3811, %v3909
        %v3911 = vpop.f32.mrb[0].mxu0
        %3912 = vmatprep.mubr.f32.mxu0 %v3773
        %3913 = vmatmul.mubr.f32.gmra.mrb[0].mxu0 %v3425
        %v3914 = vpop.f32.mrb[0].mxu0
        %v3915 = vadd.f32 %v3811, %v3914
        %v3916 = vpop.f32.mrb[0].mxu0
        %3917 = vdwg.mxu0
        %v3918 = vmul.f32 %v3880, 0.5
        %v3919 = vmul.f32 %v3885, 0.5
        %v3920 = vmul.f32 %v3890, 0.5
        %v3921 = vmul.f32 %v3895, 0.5
        %v3922 = vmul.f32 %v3900, 0.5
        %v3923 = vmul.f32 %v3905, 0.5
        %v3924 = vmul.f32 %v3910, 0.5
        %v3925 = vmul.f32 %v3915, 0.5
        %v3926 = vmul.f32 %v3880, 0.044715
        %v3927 = vmul.f32 %v3885, 0.044715
        %v3928 = vmul.f32 %v3890, 0.044715
        %v3929 = vmul.f32 %v3895, 0.044715
        %v3930 = vmul.f32 %v3900, 0.044715
        %v3931 = vmul.f32 %v3905, 0.044715
        %v3932 = vmul.f32 %v3910, 0.044715
        %v3933 = vmul.f32 %v3915, 0.044715
        %v3934 = vmul.f32 %v3926, %v3880
        %v3935 = vmul.f32 %v3927, %v3885
        %v3936 = vmul.f32 %v3928, %v3890
        %v3937 = vmul.f32 %v3929, %v3895
        %v3938 = vmul.f32 %v3930, %v3900
        %v3939 = vmul.f32 %v3931, %v3905
        %v3940 = vmul.f32 %v3932, %v3910
        %v3941 = vmul.f32 %v3933, %v3915
        %v3942 = vmul.f32 %v3934, %v3880
        %v3943 = vmul.f32 %v3935, %v3885
        %v3944 = vmul.f32 %v3936, %v3890
        %v3945 = vmul.f32 %v3937, %v3895
        %v3946 = vmul.f32 %v3938, %v3900
        %v3947 = vmul.f32 %v3939, %v3905
        %v3948 = vmul.f32 %v3940, %v3910
        %v3949 = vmul.f32 %v3941, %v3915
        %v3950 = vadd.f32 %v3880, %v3942
        %v3951 = vadd.f32 %v3885, %v3943
        %v3952 = vadd.f32 %v3890, %v3944
        %v3953 = vadd.f32 %v3895, %v3945
        %v3954 = vadd.f32 %v3900, %v3946
        %v3955 = vadd.f32 %v3905, %v3947
        %v3956 = vadd.f32 %v3910, %v3948
        %v3957 = vadd.f32 %v3915, %v3949
        %v3958 = vmul.f32 %v3950, 0.7978846
        %v3959 = vmul.f32 %v3951, 0.7978846
        %v3960 = vmul.f32 %v3952, 0.7978846
        %v3961 = vmul.f32 %v3953, 0.7978846
        %v3962 = vmul.f32 %v3954, 0.7978846
        %v3963 = vmul.f32 %v3955, 0.7978846
        %v3964 = vmul.f32 %v3956, 0.7978846
        %v3965 = vmul.f32 %v3957, 0.7978846
        %v3966 = vtanh.pop %v3958
        %v3967 = vtanh.pop %v3959
        %v3968 = vtanh.pop %v3960
        %v3969 = vtanh.pop %v3961
        %v3970 = vtanh.pop %v3962
        %v3971 = vtanh.pop %v3963
        %v3972 = vtanh.pop %v3964
        %v3973 = vtanh.pop %v3965
        %v3974 = vadd.f32 %v3966, 1.0
        %v3975 = vadd.f32 %v3967, 1.0
        %v3976 = vadd.f32 %v3968, 1.0
        %v3977 = vadd.f32 %v3969, 1.0
        %v3978 = vadd.f32 %v3970, 1.0
        %v3979 = vadd.f32 %v3971, 1.0
        %v3980 = vadd.f32 %v3972, 1.0
        %v3981 = vadd.f32 %v3973, 1.0
        %v3982 = vmul.f32 %v3918, %v3974
        %v3983 = vmul.f32 %v3919, %v3975
        %v3984 = vmul.f32 %v3920, %v3976
        %v3985 = vmul.f32 %v3921, %v3977
        %v3986 = vmul.f32 %v3922, %v3978
        %v3987 = vmul.f32 %v3923, %v3979
        %v3988 = vmul.f32 %v3924, %v3980
        %v3989 = vmul.f32 %v3925, %v3981
        %s3990 = scalar_lea.vmem %s284, 64 [#allocation9]
        %3991 = vst [vmem:[%s3990] sm:$0xff] %v3982
        %3992 = vst [vmem:[%s3990 + $0x8] sm:$0xff] %v3983
        %3993 = vst [vmem:[%s3990 + $0x10] sm:$0xff] %v3984
        %3994 = vst [vmem:[%s3990 + $0x18] sm:$0xff] %v3985
        %3995 = vst [vmem:[%s3990 + $0x20] sm:$0xff] %v3986
        %3996 = vst [vmem:[%s3990 + $0x28] sm:$0xff] %v3987
        %3997 = vst [vmem:[%s3990 + $0x30] sm:$0xff] %v3988
        %3998 = vst [vmem:[%s3990 + $0x38] sm:$0xff] %v3989
        %v3999 = vld [vmem:[%s2] sm:$0x7]
        %v4000 = vld [vmem:[%s2 + $0x4] sm:$0x7]
        %v4001 = vld [vmem:[%s2 + $0x8] sm:$0x7]
        %v4002 = vld [vmem:[%s978 + $0x1] sm:$0xff]
        %v4003 = vld [vmem:[%s978 + $0x9] sm:$0xff]
        %v4004 = vld [vmem:[%s978 + $0x19] sm:$0xff]
        %v4005 = vld [vmem:[%s978 + $0x21] sm:$0xff]
        %v4006 = vld [vmem:[%s978 + $0x31] sm:$0xff]
        %v4007 = vld [vmem:[%s978 + $0x39] sm:$0xff]
        %v4008 = vld [vmem:[%s978 + $0x49] sm:$0xff]
        %v4009 = vld [vmem:[%s978 + $0x51] sm:$0xff]
        %v4010 = vld [vmem:[%s978 + $0x61] sm:$0xff]
        %v4011 = vld [vmem:[%s978 + $0x69] sm:$0xff]
        %v4012 = vld [vmem:[%s978 + $0x79] sm:$0xff]
        %v4013 = vld [vmem:[%s978 + $0x81] sm:$0xff]
        %v4014 = vlaneseq
        %v4015 = vshrl.u32 %v4014, 7
        %v4016 = vsub.s32 0, %v4015
        %v4017 = vrot.slane %v3999, %v4016
        %v4018 = vmul.f32 %v4017, %v4002
        %v4019 = vmul.f32 %v4017, %v4003
        %v4020 = vmul.f32 %v4017, %v4004
        %v4021 = vmul.f32 %v4017, %v4005
        %v4022 = vmul.f32 %v4017, %v4006
        %v4023 = vmul.f32 %v4017, %v4007
        %v4024 = vmul.f32 %v4017, %v4008
        %v4025 = vmul.f32 %v4017, %v4009
        %v4026 = vadd.f32 %v4018, 0.0
        %v4027 = vadd.f32 %v4019, 0.0
        %v4028 = vadd.f32 %v4020, 0.0
        %v4029 = vadd.f32 %v4021, 0.0
        %v4030 = vadd.f32 %v4022, 0.0
        %v4031 = vadd.f32 %v4023, 0.0
        %v4032 = vadd.f32 %v4024, 0.0
        %v4033 = vadd.f32 %v4025, 0.0
        %v4034 = vlaneseq
        %v4035 = vshrl.u32 %v4034, 7
        %v4036 = vsub.s32 0, %v4035
        %v4037 = vrot.slane %v4000, %v4036
        %v4038 = vmul.f32 %v4037, %v4004
        %v4039 = vmul.f32 %v4037, %v4005
        %v4040 = vmul.f32 %v4037, %v4006
        %v4041 = vmul.f32 %v4037, %v4007
        %v4042 = vmul.f32 %v4037, %v4008
        %v4043 = vmul.f32 %v4037, %v4009
        %v4044 = vmul.f32 %v4037, %v4010
        %v4045 = vmul.f32 %v4037, %v4011
        %v4046 = vadd.f32 %v4026, %v4038
        %v4047 = vadd.f32 %v4027, %v4039
        %v4048 = vadd.f32 %v4028, %v4040
        %v4049 = vadd.f32 %v4029, %v4041
        %v4050 = vadd.f32 %v4030, %v4042
        %v4051 = vadd.f32 %v4031, %v4043
        %v4052 = vadd.f32 %v4032, %v4044
        %v4053 = vadd.f32 %v4033, %v4045
        %v4054 = vlaneseq
        %v4055 = vshrl.u32 %v4054, 7
        %v4056 = vsub.s32 0, %v4055
        %v4057 = vrot.slane %v4001, %v4056
        %v4058 = vmul.f32 %v4057, %v4006
        %v4059 = vmul.f32 %v4057, %v4007
        %v4060 = vmul.f32 %v4057, %v4008
        %v4061 = vmul.f32 %v4057, %v4009
        %v4062 = vmul.f32 %v4057, %v4010
        %v4063 = vmul.f32 %v4057, %v4011
        %v4064 = vmul.f32 %v4057, %v4012
        %v4065 = vmul.f32 %v4057, %v4013
        %v4066 = vadd.f32 %v4046, %v4058
        %v4067 = vadd.f32 %v4047, %v4059
        %v4068 = vadd.f32 %v4048, %v4060
        %v4069 = vadd.f32 %v4049, %v4061
        %v4070 = vadd.f32 %v4050, %v4062
        %v4071 = vadd.f32 %v4051, %v4063
        %v4072 = vadd.f32 %v4052, %v4064
        %v4073 = vadd.f32 %v4053, %v4065
        %v4074 = vld [vmem:[%s978 + $0x2] sm:$0xff]
        %v4075 = vld [vmem:[%s978 + $0xa] sm:$0xff]
        %v4076 = vld [vmem:[%s978 + $0x1a] sm:$0xff]
        %v4077 = vld [vmem:[%s978 + $0x22] sm:$0xff]
        %v4078 = vld [vmem:[%s978 + $0x32] sm:$0xff]
        %v4079 = vld [vmem:[%s978 + $0x3a] sm:$0xff]
        %v4080 = vld [vmem:[%s978 + $0x4a] sm:$0xff]
        %v4081 = vld [vmem:[%s978 + $0x52] sm:$0xff]
        %v4082 = vld [vmem:[%s978 + $0x62] sm:$0xff]
        %v4083 = vld [vmem:[%s978 + $0x6a] sm:$0xff]
        %v4084 = vld [vmem:[%s978 + $0x7a] sm:$0xff]
        %v4085 = vld [vmem:[%s978 + $0x82] sm:$0xff]
        %v4086 = vlaneseq
        %v4087 = vshrl.u32 %v4086, 7
        %v4088 = vsub.s32 1, %v4087
        %v4089 = vrot.slane %v3999, %v4088
        %v4090 = vmul.f32 %v4089, %v4074
        %v4091 = vmul.f32 %v4089, %v4075
        %v4092 = vmul.f32 %v4089, %v4076
        %v4093 = vmul.f32 %v4089, %v4077
        %v4094 = vmul.f32 %v4089, %v4078
        %v4095 = vmul.f32 %v4089, %v4079
        %v4096 = vmul.f32 %v4089, %v4080
        %v4097 = vmul.f32 %v4089, %v4081
        %v4098 = vadd.f32 %v4066, %v4090
        %v4099 = vadd.f32 %v4067, %v4091
        %v4100 = vadd.f32 %v4068, %v4092
        %v4101 = vadd.f32 %v4069, %v4093
        %v4102 = vadd.f32 %v4070, %v4094
        %v4103 = vadd.f32 %v4071, %v4095
        %v4104 = vadd.f32 %v4072, %v4096
        %v4105 = vadd.f32 %v4073, %v4097
        %v4106 = vlaneseq
        %v4107 = vshrl.u32 %v4106, 7
        %v4108 = vsub.s32 1, %v4107
        %v4109 = vrot.slane %v4000, %v4108
        %v4110 = vmul.f32 %v4109, %v4076
        %v4111 = vmul.f32 %v4109, %v4077
        %v4112 = vmul.f32 %v4109, %v4078
        %v4113 = vmul.f32 %v4109, %v4079
        %v4114 = vmul.f32 %v4109, %v4080
        %v4115 = vmul.f32 %v4109, %v4081
        %v4116 = vmul.f32 %v4109, %v4082
        %v4117 = vmul.f32 %v4109, %v4083
        %v4118 = vadd.f32 %v4098, %v4110
        %v4119 = vadd.f32 %v4099, %v4111
        %v4120 = vadd.f32 %v4100, %v4112
        %v4121 = vadd.f32 %v4101, %v4113
        %v4122 = vadd.f32 %v4102, %v4114
        %v4123 = vadd.f32 %v4103, %v4115
        %v4124 = vadd.f32 %v4104, %v4116
        %v4125 = vadd.f32 %v4105, %v4117
        %v4126 = vlaneseq
        %v4127 = vshrl.u32 %v4126, 7
        %v4128 = vsub.s32 1, %v4127
        %v4129 = vrot.slane %v4001, %v4128
        %v4130 = vmul.f32 %v4129, %v4078
        %v4131 = vmul.f32 %v4129, %v4079
        %v4132 = vmul.f32 %v4129, %v4080
        %v4133 = vmul.f32 %v4129, %v4081
        %v4134 = vmul.f32 %v4129, %v4082
        %v4135 = vmul.f32 %v4129, %v4083
        %v4136 = vmul.f32 %v4129, %v4084
        %v4137 = vmul.f32 %v4129, %v4085
        %v4138 = vadd.f32 %v4118, %v4130
        %v4139 = vadd.f32 %v4119, %v4131
        %v4140 = vadd.f32 %v4120, %v4132
        %v4141 = vadd.f32 %v4121, %v4133
        %v4142 = vadd.f32 %v4122, %v4134
        %v4143 = vadd.f32 %v4123, %v4135
        %v4144 = vadd.f32 %v4124, %v4136
        %v4145 = vadd.f32 %v4125, %v4137
        %v4146 = vld [vmem:[%s978 + $0x3] sm:$0xff]
        %v4147 = vld [vmem:[%s978 + $0xb] sm:$0xff]
        %v4148 = vld [vmem:[%s978 + $0x1b] sm:$0xff]
        %v4149 = vld [vmem:[%s978 + $0x23] sm:$0xff]
        %v4150 = vld [vmem:[%s978 + $0x33] sm:$0xff]
        %v4151 = vld [vmem:[%s978 + $0x3b] sm:$0xff]
        %v4152 = vld [vmem:[%s978 + $0x4b] sm:$0xff]
        %v4153 = vld [vmem:[%s978 + $0x53] sm:$0xff]
        %v4154 = vld [vmem:[%s978 + $0x63] sm:$0xff]
        %v4155 = vld [vmem:[%s978 + $0x6b] sm:$0xff]
        %v4156 = vld [vmem:[%s978 + $0x7b] sm:$0xff]
        %v4157 = vld [vmem:[%s978 + $0x83] sm:$0xff]
        %v4158 = vlaneseq
        %v4159 = vshrl.u32 %v4158, 7
        %v4160 = vsub.s32 2, %v4159
        %v4161 = vrot.slane %v3999, %v4160
        %v4162 = vmul.f32 %v4161, %v4146
        %v4163 = vmul.f32 %v4161, %v4147
        %v4164 = vmul.f32 %v4161, %v4148
        %v4165 = vmul.f32 %v4161, %v4149
        %v4166 = vmul.f32 %v4161, %v4150
        %v4167 = vmul.f32 %v4161, %v4151
        %v4168 = vmul.f32 %v4161, %v4152
        %v4169 = vmul.f32 %v4161, %v4153
        %v4170 = vadd.f32 %v4138, %v4162
        %v4171 = vadd.f32 %v4139, %v4163
        %v4172 = vadd.f32 %v4140, %v4164
        %v4173 = vadd.f32 %v4141, %v4165
        %v4174 = vadd.f32 %v4142, %v4166
        %v4175 = vadd.f32 %v4143, %v4167
        %v4176 = vadd.f32 %v4144, %v4168
        %v4177 = vadd.f32 %v4145, %v4169
        %v4178 = vlaneseq
        %v4179 = vshrl.u32 %v4178, 7
        %v4180 = vsub.s32 2, %v4179
        %v4181 = vrot.slane %v4000, %v4180
        %v4182 = vmul.f32 %v4181, %v4148
        %v4183 = vmul.f32 %v4181, %v4149
        %v4184 = vmul.f32 %v4181, %v4150
        %v4185 = vmul.f32 %v4181, %v4151
        %v4186 = vmul.f32 %v4181, %v4152
        %v4187 = vmul.f32 %v4181, %v4153
        %v4188 = vmul.f32 %v4181, %v4154
        %v4189 = vmul.f32 %v4181, %v4155
        %v4190 = vadd.f32 %v4170, %v4182
        %v4191 = vadd.f32 %v4171, %v4183
        %v4192 = vadd.f32 %v4172, %v4184
        %v4193 = vadd.f32 %v4173, %v4185
        %v4194 = vadd.f32 %v4174, %v4186
        %v4195 = vadd.f32 %v4175, %v4187
        %v4196 = vadd.f32 %v4176, %v4188
        %v4197 = vadd.f32 %v4177, %v4189
        %v4198 = vlaneseq
        %v4199 = vshrl.u32 %v4198, 7
        %v4200 = vsub.s32 2, %v4199
        %v4201 = vrot.slane %v4001, %v4200
        %v4202 = vmul.f32 %v4201, %v4150
        %v4203 = vmul.f32 %v4201, %v4151
        %v4204 = vmul.f32 %v4201, %v4152
        %v4205 = vmul.f32 %v4201, %v4153
        %v4206 = vmul.f32 %v4201, %v4154
        %v4207 = vmul.f32 %v4201, %v4155
        %v4208 = vmul.f32 %v4201, %v4156
        %v4209 = vmul.f32 %v4201, %v4157
        %v4210 = vadd.f32 %v4190, %v4202
        %v4211 = vadd.f32 %v4191, %v4203
        %v4212 = vadd.f32 %v4192, %v4204
        %v4213 = vadd.f32 %v4193, %v4205
        %v4214 = vadd.f32 %v4194, %v4206
        %v4215 = vadd.f32 %v4195, %v4207
        %v4216 = vadd.f32 %v4196, %v4208
        %v4217 = vadd.f32 %v4197, %v4209
        %v4218 = vadd.f32 %v4210, %v2357
        %v4219 = vadd.f32 %v4211, %v2357
        %v4220 = vadd.f32 %v4212, %v2357
        %v4221 = vadd.f32 %v4213, %v2357
        %v4222 = vadd.f32 %v4214, %v2357
        %v4223 = vadd.f32 %v4215, %v2357
        %v4224 = vadd.f32 %v4216, %v2357
        %v4225 = vadd.f32 %v4217, %v2357
        %4226 = vadd.xlane.f32.xlu0 %v4218
        %v4227 = vpop.xlane.xlu0 %4226
        %4228 = vadd.xlane.f32.xlu0 %v4219
        %v4229 = vpop.xlane.xlu0 %4228
        %4230 = vadd.xlane.f32.xlu0 %v4220
        %v4231 = vpop.xlane.xlu0 %4230
        %4232 = vadd.xlane.f32.xlu0 %v4221
        %v4233 = vpop.xlane.xlu0 %4232
        %4234 = vadd.xlane.f32.xlu0 %v4222
        %v4235 = vpop.xlane.xlu0 %4234
        %4236 = vadd.xlane.f32.xlu0 %v4223
        %v4237 = vpop.xlane.xlu0 %4236
        %4238 = vadd.xlane.f32.xlu0 %v4224
        %v4239 = vpop.xlane.xlu0 %4238
        %4240 = vadd.xlane.f32.xlu0 %v4225
        %v4241 = vpop.xlane.xlu0 %4240
        %v4242 = vmul.f32 %v4218, %v4218
        %v4243 = vmul.f32 %v4219, %v4219
        %v4244 = vmul.f32 %v4220, %v4220
        %v4245 = vmul.f32 %v4221, %v4221
        %v4246 = vmul.f32 %v4222, %v4222
        %v4247 = vmul.f32 %v4223, %v4223
        %v4248 = vmul.f32 %v4224, %v4224
        %v4249 = vmul.f32 %v4225, %v4225
        %4250 = vadd.xlane.f32.xlu0 %v4242
        %v4251 = vpop.xlane.xlu0 %4250
        %4252 = vadd.xlane.f32.xlu0 %v4243
        %v4253 = vpop.xlane.xlu0 %4252
        %4254 = vadd.xlane.f32.xlu0 %v4244
        %v4255 = vpop.xlane.xlu0 %4254
        %4256 = vadd.xlane.f32.xlu0 %v4245
        %v4257 = vpop.xlane.xlu0 %4256
        %4258 = vadd.xlane.f32.xlu0 %v4246
        %v4259 = vpop.xlane.xlu0 %4258
        %4260 = vadd.xlane.f32.xlu0 %v4247
        %v4261 = vpop.xlane.xlu0 %4260
        %4262 = vadd.xlane.f32.xlu0 %v4248
        %v4263 = vpop.xlane.xlu0 %4262
        %4264 = vadd.xlane.f32.xlu0 %v4249
        %v4265 = vpop.xlane.xlu0 %4264
        %v4266 = vmul.f32 %v4227, 0.0078125
        %v4267 = vmul.f32 %v4229, 0.0078125
        %v4268 = vmul.f32 %v4231, 0.0078125
        %v4269 = vmul.f32 %v4233, 0.0078125
        %v4270 = vmul.f32 %v4235, 0.0078125
        %v4271 = vmul.f32 %v4237, 0.0078125
        %v4272 = vmul.f32 %v4239, 0.0078125
        %v4273 = vmul.f32 %v4241, 0.0078125
        %v4274 = vmul.f32 %v4251, 0.0078125
        %v4275 = vmul.f32 %v4253, 0.0078125
        %v4276 = vmul.f32 %v4255, 0.0078125
        %v4277 = vmul.f32 %v4257, 0.0078125
        %v4278 = vmul.f32 %v4259, 0.0078125
        %v4279 = vmul.f32 %v4261, 0.0078125
        %v4280 = vmul.f32 %v4263, 0.0078125
        %v4281 = vmul.f32 %v4265, 0.0078125
        %v4282 = vmul.f32 %v4266, %v4266
        %v4283 = vmul.f32 %v4267, %v4267
        %v4284 = vmul.f32 %v4268, %v4268
        %v4285 = vmul.f32 %v4269, %v4269
        %v4286 = vmul.f32 %v4270, %v4270
        %v4287 = vmul.f32 %v4271, %v4271
        %v4288 = vmul.f32 %v4272, %v4272
        %v4289 = vmul.f32 %v4273, %v4273
        %v4290 = vsub.f32 %v4274, %v4282
        %v4291 = vsub.f32 %v4275, %v4283
        %v4292 = vsub.f32 %v4276, %v4284
        %v4293 = vsub.f32 %v4277, %v4285
        %v4294 = vsub.f32 %v4278, %v4286
        %v4295 = vsub.f32 %v4279, %v4287
        %v4296 = vsub.f32 %v4280, %v4288
        %v4297 = vsub.f32 %v4281, %v4289
        %v4298 = vsub.f32 %v4218, %v4266
        %v4299 = vsub.f32 %v4219, %v4267
        %v4300 = vsub.f32 %v4220, %v4268
        %v4301 = vsub.f32 %v4221, %v4269
        %v4302 = vsub.f32 %v4222, %v4270
        %v4303 = vsub.f32 %v4223, %v4271
        %v4304 = vsub.f32 %v4224, %v4272
        %v4305 = vsub.f32 %v4225, %v4273
        %v4306 = vadd.f32 %v4290, 1e-06
        %v4307 = vadd.f32 %v4291, 1e-06
        %v4308 = vadd.f32 %v4292, 1e-06
        %v4309 = vadd.f32 %v4293, 1e-06
        %v4310 = vadd.f32 %v4294, 1e-06
        %v4311 = vadd.f32 %v4295, 1e-06
        %v4312 = vadd.f32 %v4296, 1e-06
        %v4313 = vadd.f32 %v4297, 1e-06
        %v4314 = vrsqrt.pop %v4306
        %v4315 = vrsqrt.pop %v4307
        %v4316 = vrsqrt.pop %v4308
        %v4317 = vrsqrt.pop %v4309
        %v4318 = vrsqrt.pop %v4310
        %v4319 = vrsqrt.pop %v4311
        %v4320 = vrsqrt.pop %v4312
        %v4321 = vrsqrt.pop %v4313
        %v4322 = vmul.f32 %v4298, %v4314
        %v4323 = vmul.f32 %v4299, %v4315
        %v4324 = vmul.f32 %v4300, %v4316
        %v4325 = vmul.f32 %v4301, %v4317
        %v4326 = vmul.f32 %v4302, %v4318
        %v4327 = vmul.f32 %v4303, %v4319
        %v4328 = vmul.f32 %v4304, %v4320
        %v4329 = vmul.f32 %v4305, %v4321
        %v4330 = vmul.f32 %v4322, %v2473
        %v4331 = vmul.f32 %v4323, %v2473
        %v4332 = vmul.f32 %v4324, %v2473
        %v4333 = vmul.f32 %v4325, %v2473
        %v4334 = vmul.f32 %v4326, %v2473
        %v4335 = vmul.f32 %v4327, %v2473
        %v4336 = vmul.f32 %v4328, %v2473
        %v4337 = vmul.f32 %v4329, %v2473
        %v4338 = vadd.f32 %v4330, %v2485
        %v4339 = vadd.f32 %v4331, %v2485
        %v4340 = vadd.f32 %v4332, %v2485
        %v4341 = vadd.f32 %v4333, %v2485
        %v4342 = vadd.f32 %v4334, %v2485
        %v4343 = vadd.f32 %v4335, %v2485
        %v4344 = vadd.f32 %v4336, %v2485
        %v4345 = vadd.f32 %v4337, %v2485
        %v4346 = vld [vmem:[%s2494] sm:$0x7]
        %v4347 = vld [vmem:[%s2494 + $0x4] sm:$0x7]
        %v4348 = vld [vmem:[%s2494 + $0x8] sm:$0x7]
        %s4349 = scalar_lea.vmem [#allocation3], 216
        %v4350 = vld [vmem:[%s4349 + $0x1] sm:$0xff]
        %v4351 = vld [vmem:[%s4349 + $0x9] sm:$0xff]
        %v4352 = vld [vmem:[%s4349 + $0x19] sm:$0xff]
        %v4353 = vld [vmem:[%s4349 + $0x21] sm:$0xff]
        %v4354 = vld [vmem:[%s4349 + $0x31] sm:$0xff]
        %v4355 = vld [vmem:[%s4349 + $0x39] sm:$0xff]
        %v4356 = vld [vmem:[%s4349 + $0x49] sm:$0xff]
        %v4357 = vld [vmem:[%s4349 + $0x51] sm:$0xff]
        %v4358 = vld [vmem:[%s4349 + $0x61] sm:$0xff]
        %v4359 = vld [vmem:[%s4349 + $0x69] sm:$0xff]
        %v4360 = vld [vmem:[%s4349 + $0x79] sm:$0xff]
        %v4361 = vld [vmem:[%s4349 + $0x81] sm:$0xff]
        %v4362 = vlaneseq
        %v4363 = vshrl.u32 %v4362, 7
        %v4364 = vsub.s32 0, %v4363
        %v4365 = vrot.slane %v4346, %v4364
        %v4366 = vmul.f32 %v4365, %v4350
        %v4367 = vmul.f32 %v4365, %v4351
        %v4368 = vmul.f32 %v4365, %v4352
        %v4369 = vmul.f32 %v4365, %v4353
        %v4370 = vmul.f32 %v4365, %v4354
        %v4371 = vmul.f32 %v4365, %v4355
        %v4372 = vmul.f32 %v4365, %v4356
        %v4373 = vmul.f32 %v4365, %v4357
        %v4374 = vadd.f32 %v4366, 0.0
        %v4375 = vadd.f32 %v4367, 0.0
        %v4376 = vadd.f32 %v4368, 0.0
        %v4377 = vadd.f32 %v4369, 0.0
        %v4378 = vadd.f32 %v4370, 0.0
        %v4379 = vadd.f32 %v4371, 0.0
        %v4380 = vadd.f32 %v4372, 0.0
        %v4381 = vadd.f32 %v4373, 0.0
        %v4382 = vlaneseq
        %v4383 = vshrl.u32 %v4382, 7
        %v4384 = vsub.s32 0, %v4383
        %v4385 = vrot.slane %v4347, %v4384
        %v4386 = vmul.f32 %v4385, %v4352
        %v4387 = vmul.f32 %v4385, %v4353
        %v4388 = vmul.f32 %v4385, %v4354
        %v4389 = vmul.f32 %v4385, %v4355
        %v4390 = vmul.f32 %v4385, %v4356
        %v4391 = vmul.f32 %v4385, %v4357
        %v4392 = vmul.f32 %v4385, %v4358
        %v4393 = vmul.f32 %v4385, %v4359
        %v4394 = vadd.f32 %v4374, %v4386
        %v4395 = vadd.f32 %v4375, %v4387
        %v4396 = vadd.f32 %v4376, %v4388
        %v4397 = vadd.f32 %v4377, %v4389
        %v4398 = vadd.f32 %v4378, %v4390
        %v4399 = vadd.f32 %v4379, %v4391
        %v4400 = vadd.f32 %v4380, %v4392
        %v4401 = vadd.f32 %v4381, %v4393
        %v4402 = vlaneseq
        %v4403 = vshrl.u32 %v4402, 7
        %v4404 = vsub.s32 0, %v4403
        %v4405 = vrot.slane %v4348, %v4404
        %v4406 = vmul.f32 %v4405, %v4354
        %v4407 = vmul.f32 %v4405, %v4355
        %v4408 = vmul.f32 %v4405, %v4356
        %v4409 = vmul.f32 %v4405, %v4357
        %v4410 = vmul.f32 %v4405, %v4358
        %v4411 = vmul.f32 %v4405, %v4359
        %v4412 = vmul.f32 %v4405, %v4360
        %v4413 = vmul.f32 %v4405, %v4361
        %v4414 = vadd.f32 %v4394, %v4406
        %v4415 = vadd.f32 %v4395, %v4407
        %v4416 = vadd.f32 %v4396, %v4408
        %v4417 = vadd.f32 %v4397, %v4409
        %v4418 = vadd.f32 %v4398, %v4410
        %v4419 = vadd.f32 %v4399, %v4411
        %v4420 = vadd.f32 %v4400, %v4412
        %v4421 = vadd.f32 %v4401, %v4413
        %v4422 = vld [vmem:[%s4349 + $0x2] sm:$0xff]
        %v4423 = vld [vmem:[%s4349 + $0xa] sm:$0xff]
        %v4424 = vld [vmem:[%s4349 + $0x1a] sm:$0xff]
        %v4425 = vld [vmem:[%s4349 + $0x22] sm:$0xff]
        %v4426 = vld [vmem:[%s4349 + $0x32] sm:$0xff]
        %v4427 = vld [vmem:[%s4349 + $0x3a] sm:$0xff]
        %v4428 = vld [vmem:[%s4349 + $0x4a] sm:$0xff]
        %v4429 = vld [vmem:[%s4349 + $0x52] sm:$0xff]
        %v4430 = vld [vmem:[%s4349 + $0x62] sm:$0xff]
        %v4431 = vld [vmem:[%s4349 + $0x6a] sm:$0xff]
        %v4432 = vld [vmem:[%s4349 + $0x7a] sm:$0xff]
        %v4433 = vld [vmem:[%s4349 + $0x82] sm:$0xff]
        %v4434 = vlaneseq
        %v4435 = vshrl.u32 %v4434, 7
        %v4436 = vsub.s32 1, %v4435
        %v4437 = vrot.slane %v4346, %v4436
        %v4438 = vmul.f32 %v4437, %v4422
        %v4439 = vmul.f32 %v4437, %v4423
        %v4440 = vmul.f32 %v4437, %v4424
        %v4441 = vmul.f32 %v4437, %v4425
        %v4442 = vmul.f32 %v4437, %v4426
        %v4443 = vmul.f32 %v4437, %v4427
        %v4444 = vmul.f32 %v4437, %v4428
        %v4445 = vmul.f32 %v4437, %v4429
        %v4446 = vadd.f32 %v4414, %v4438
        %v4447 = vadd.f32 %v4415, %v4439
        %v4448 = vadd.f32 %v4416, %v4440
        %v4449 = vadd.f32 %v4417, %v4441
        %v4450 = vadd.f32 %v4418, %v4442
        %v4451 = vadd.f32 %v4419, %v4443
        %v4452 = vadd.f32 %v4420, %v4444
        %v4453 = vadd.f32 %v4421, %v4445
        %v4454 = vlaneseq
        %v4455 = vshrl.u32 %v4454, 7
        %v4456 = vsub.s32 1, %v4455
        %v4457 = vrot.slane %v4347, %v4456
        %v4458 = vmul.f32 %v4457, %v4424
        %v4459 = vmul.f32 %v4457, %v4425
        %v4460 = vmul.f32 %v4457, %v4426
        %v4461 = vmul.f32 %v4457, %v4427
        %v4462 = vmul.f32 %v4457, %v4428
        %v4463 = vmul.f32 %v4457, %v4429
        %v4464 = vmul.f32 %v4457, %v4430
        %v4465 = vmul.f32 %v4457, %v4431
        %v4466 = vadd.f32 %v4446, %v4458
        %v4467 = vadd.f32 %v4447, %v4459
        %v4468 = vadd.f32 %v4448, %v4460
        %v4469 = vadd.f32 %v4449, %v4461
        %v4470 = vadd.f32 %v4450, %v4462
        %v4471 = vadd.f32 %v4451, %v4463
        %v4472 = vadd.f32 %v4452, %v4464
        %v4473 = vadd.f32 %v4453, %v4465
        %v4474 = vlaneseq
        %v4475 = vshrl.u32 %v4474, 7
        %v4476 = vsub.s32 1, %v4475
        %v4477 = vrot.slane %v4348, %v4476
        %v4478 = vmul.f32 %v4477, %v4426
        %v4479 = vmul.f32 %v4477, %v4427
        %v4480 = vmul.f32 %v4477, %v4428
        %v4481 = vmul.f32 %v4477, %v4429
        %v4482 = vmul.f32 %v4477, %v4430
        %v4483 = vmul.f32 %v4477, %v4431
        %v4484 = vmul.f32 %v4477, %v4432
        %v4485 = vmul.f32 %v4477, %v4433
        %v4486 = vadd.f32 %v4466, %v4478
        %v4487 = vadd.f32 %v4467, %v4479
        %v4488 = vadd.f32 %v4468, %v4480
        %v4489 = vadd.f32 %v4469, %v4481
        %v4490 = vadd.f32 %v4470, %v4482
        %v4491 = vadd.f32 %v4471, %v4483
        %v4492 = vadd.f32 %v4472, %v4484
        %v4493 = vadd.f32 %v4473, %v4485
        %v4494 = vld [vmem:[%s4349 + $0x3] sm:$0xff]
        %v4495 = vld [vmem:[%s4349 + $0xb] sm:$0xff]
        %v4496 = vld [vmem:[%s4349 + $0x1b] sm:$0xff]
        %v4497 = vld [vmem:[%s4349 + $0x23] sm:$0xff]
        %v4498 = vld [vmem:[%s4349 + $0x33] sm:$0xff]
        %v4499 = vld [vmem:[%s4349 + $0x3b] sm:$0xff]
        %v4500 = vld [vmem:[%s4349 + $0x4b] sm:$0xff]
        %v4501 = vld [vmem:[%s4349 + $0x53] sm:$0xff]
        %v4502 = vld [vmem:[%s4349 + $0x63] sm:$0xff]
        %v4503 = vld [vmem:[%s4349 + $0x6b] sm:$0xff]
        %v4504 = vld [vmem:[%s4349 + $0x7b] sm:$0xff]
        %v4505 = vld [vmem:[%s4349 + $0x83] sm:$0xff]
        %v4506 = vlaneseq
        %v4507 = vshrl.u32 %v4506, 7
        %v4508 = vsub.s32 2, %v4507
        %v4509 = vrot.slane %v4346, %v4508
        %v4510 = vmul.f32 %v4509, %v4494
        %v4511 = vmul.f32 %v4509, %v4495
        %v4512 = vmul.f32 %v4509, %v4496
        %v4513 = vmul.f32 %v4509, %v4497
        %v4514 = vmul.f32 %v4509, %v4498
        %v4515 = vmul.f32 %v4509, %v4499
        %v4516 = vmul.f32 %v4509, %v4500
        %v4517 = vmul.f32 %v4509, %v4501
        %v4518 = vadd.f32 %v4486, %v4510
        %v4519 = vadd.f32 %v4487, %v4511
        %v4520 = vadd.f32 %v4488, %v4512
        %v4521 = vadd.f32 %v4489, %v4513
        %v4522 = vadd.f32 %v4490, %v4514
        %v4523 = vadd.f32 %v4491, %v4515
        %v4524 = vadd.f32 %v4492, %v4516
        %v4525 = vadd.f32 %v4493, %v4517
        %v4526 = vlaneseq
        %v4527 = vshrl.u32 %v4526, 7
        %v4528 = vsub.s32 2, %v4527
        %v4529 = vrot.slane %v4347, %v4528
        %v4530 = vmul.f32 %v4529, %v4496
        %v4531 = vmul.f32 %v4529, %v4497
        %v4532 = vmul.f32 %v4529, %v4498
        %v4533 = vmul.f32 %v4529, %v4499
        %v4534 = vmul.f32 %v4529, %v4500
        %v4535 = vmul.f32 %v4529, %v4501
        %v4536 = vmul.f32 %v4529, %v4502
        %v4537 = vmul.f32 %v4529, %v4503
        %v4538 = vadd.f32 %v4518, %v4530
        %v4539 = vadd.f32 %v4519, %v4531
        %v4540 = vadd.f32 %v4520, %v4532
        %v4541 = vadd.f32 %v4521, %v4533
        %v4542 = vadd.f32 %v4522, %v4534
        %v4543 = vadd.f32 %v4523, %v4535
        %v4544 = vadd.f32 %v4524, %v4536
        %v4545 = vadd.f32 %v4525, %v4537
        %v4546 = vlaneseq
        %v4547 = vshrl.u32 %v4546, 7
        %v4548 = vsub.s32 2, %v4547
        %v4549 = vrot.slane %v4348, %v4548
        %v4550 = vmul.f32 %v4549, %v4498
        %v4551 = vmul.f32 %v4549, %v4499
        %v4552 = vmul.f32 %v4549, %v4500
        %v4553 = vmul.f32 %v4549, %v4501
        %v4554 = vmul.f32 %v4549, %v4502
        %v4555 = vmul.f32 %v4549, %v4503
        %v4556 = vmul.f32 %v4549, %v4504
        %v4557 = vmul.f32 %v4549, %v4505
        %v4558 = vadd.f32 %v4538, %v4550
        %v4559 = vadd.f32 %v4539, %v4551
        %v4560 = vadd.f32 %v4540, %v4552
        %v4561 = vadd.f32 %v4541, %v4553
        %v4562 = vadd.f32 %v4542, %v4554
        %v4563 = vadd.f32 %v4543, %v4555
        %v4564 = vadd.f32 %v4544, %v4556
        %v4565 = vadd.f32 %v4545, %v4557
        %v4566 = vadd.f32 %v4558, %v2718
        %v4567 = vadd.f32 %v4559, %v2718
        %v4568 = vadd.f32 %v4560, %v2718
        %v4569 = vadd.f32 %v4561, %v2718
        %v4570 = vadd.f32 %v4562, %v2718
        %v4571 = vadd.f32 %v4563, %v2718
        %v4572 = vadd.f32 %v4564, %v2718
        %v4573 = vadd.f32 %v4565, %v2718
        %4574 = vadd.xlane.f32.xlu0 %v4566
        %v4575 = vpop.xlane.xlu0 %4574
        %4576 = vadd.xlane.f32.xlu0 %v4567
        %v4577 = vpop.xlane.xlu0 %4576
        %4578 = vadd.xlane.f32.xlu0 %v4568
        %v4579 = vpop.xlane.xlu0 %4578
        %4580 = vadd.xlane.f32.xlu0 %v4569
        %v4581 = vpop.xlane.xlu0 %4580
        %4582 = vadd.xlane.f32.xlu0 %v4570
        %v4583 = vpop.xlane.xlu0 %4582
        %4584 = vadd.xlane.f32.xlu0 %v4571
        %v4585 = vpop.xlane.xlu0 %4584
        %4586 = vadd.xlane.f32.xlu0 %v4572
        %v4587 = vpop.xlane.xlu0 %4586
        %4588 = vadd.xlane.f32.xlu0 %v4573
        %v4589 = vpop.xlane.xlu0 %4588
        %v4590 = vmul.f32 %v4566, %v4566
        %v4591 = vmul.f32 %v4567, %v4567
        %v4592 = vmul.f32 %v4568, %v4568
        %v4593 = vmul.f32 %v4569, %v4569
        %v4594 = vmul.f32 %v4570, %v4570
        %v4595 = vmul.f32 %v4571, %v4571
        %v4596 = vmul.f32 %v4572, %v4572
        %v4597 = vmul.f32 %v4573, %v4573
        %4598 = vadd.xlane.f32.xlu0 %v4590
        %v4599 = vpop.xlane.xlu0 %4598
        %4600 = vadd.xlane.f32.xlu0 %v4591
        %v4601 = vpop.xlane.xlu0 %4600
        %4602 = vadd.xlane.f32.xlu0 %v4592
        %v4603 = vpop.xlane.xlu0 %4602
        %4604 = vadd.xlane.f32.xlu0 %v4593
        %v4605 = vpop.xlane.xlu0 %4604
        %4606 = vadd.xlane.f32.xlu0 %v4594
        %v4607 = vpop.xlane.xlu0 %4606
        %4608 = vadd.xlane.f32.xlu0 %v4595
        %v4609 = vpop.xlane.xlu0 %4608
        %4610 = vadd.xlane.f32.xlu0 %v4596
        %v4611 = vpop.xlane.xlu0 %4610
        %4612 = vadd.xlane.f32.xlu0 %v4597
        %v4613 = vpop.xlane.xlu0 %4612
        %v4614 = vmul.f32 %v4575, 0.0078125
        %v4615 = vmul.f32 %v4577, 0.0078125
        %v4616 = vmul.f32 %v4579, 0.0078125
        %v4617 = vmul.f32 %v4581, 0.0078125
        %v4618 = vmul.f32 %v4583, 0.0078125
        %v4619 = vmul.f32 %v4585, 0.0078125
        %v4620 = vmul.f32 %v4587, 0.0078125
        %v4621 = vmul.f32 %v4589, 0.0078125
        %v4622 = vmul.f32 %v4599, 0.0078125
        %v4623 = vmul.f32 %v4601, 0.0078125
        %v4624 = vmul.f32 %v4603, 0.0078125
        %v4625 = vmul.f32 %v4605, 0.0078125
        %v4626 = vmul.f32 %v4607, 0.0078125
        %v4627 = vmul.f32 %v4609, 0.0078125
        %v4628 = vmul.f32 %v4611, 0.0078125
        %v4629 = vmul.f32 %v4613, 0.0078125
        %v4630 = vmul.f32 %v4614, %v4614
        %v4631 = vmul.f32 %v4615, %v4615
        %v4632 = vmul.f32 %v4616, %v4616
        %v4633 = vmul.f32 %v4617, %v4617
        %v4634 = vmul.f32 %v4618, %v4618
        %v4635 = vmul.f32 %v4619, %v4619
        %v4636 = vmul.f32 %v4620, %v4620
        %v4637 = vmul.f32 %v4621, %v4621
        %v4638 = vsub.f32 %v4622, %v4630
        %v4639 = vsub.f32 %v4623, %v4631
        %v4640 = vsub.f32 %v4624, %v4632
        %v4641 = vsub.f32 %v4625, %v4633
        %v4642 = vsub.f32 %v4626, %v4634
        %v4643 = vsub.f32 %v4627, %v4635
        %v4644 = vsub.f32 %v4628, %v4636
        %v4645 = vsub.f32 %v4629, %v4637
        %v4646 = vsub.f32 %v4566, %v4614
        %v4647 = vsub.f32 %v4567, %v4615
        %v4648 = vsub.f32 %v4568, %v4616
        %v4649 = vsub.f32 %v4569, %v4617
        %v4650 = vsub.f32 %v4570, %v4618
        %v4651 = vsub.f32 %v4571, %v4619
        %v4652 = vsub.f32 %v4572, %v4620
        %v4653 = vsub.f32 %v4573, %v4621
        %v4654 = vadd.f32 %v4638, 1e-06
        %v4655 = vadd.f32 %v4639, 1e-06
        %v4656 = vadd.f32 %v4640, 1e-06
        %v4657 = vadd.f32 %v4641, 1e-06
        %v4658 = vadd.f32 %v4642, 1e-06
        %v4659 = vadd.f32 %v4643, 1e-06
        %v4660 = vadd.f32 %v4644, 1e-06
        %v4661 = vadd.f32 %v4645, 1e-06
        %v4662 = vrsqrt.pop %v4654
        %v4663 = vrsqrt.pop %v4655
        %v4664 = vrsqrt.pop %v4656
        %v4665 = vrsqrt.pop %v4657
        %v4666 = vrsqrt.pop %v4658
        %v4667 = vrsqrt.pop %v4659
        %v4668 = vrsqrt.pop %v4660
        %v4669 = vrsqrt.pop %v4661
        %v4670 = vmul.f32 %v4646, %v4662
        %v4671 = vmul.f32 %v4647, %v4663
        %v4672 = vmul.f32 %v4648, %v4664
        %v4673 = vmul.f32 %v4649, %v4665
        %v4674 = vmul.f32 %v4650, %v4666
        %v4675 = vmul.f32 %v4651, %v4667
        %v4676 = vmul.f32 %v4652, %v4668
        %v4677 = vmul.f32 %v4653, %v4669
        %v4678 = vmul.f32 %v4670, %v2834
        %v4679 = vmul.f32 %v4671, %v2834
        %v4680 = vmul.f32 %v4672, %v2834
        %v4681 = vmul.f32 %v4673, %v2834
        %v4682 = vmul.f32 %v4674, %v2834
        %v4683 = vmul.f32 %v4675, %v2834
        %v4684 = vmul.f32 %v4676, %v2834
        %v4685 = vmul.f32 %v4677, %v2834
        %v4686 = vadd.f32 %v4678, %v2846
        %v4687 = vadd.f32 %v4679, %v2846
        %v4688 = vadd.f32 %v4680, %v2846
        %v4689 = vadd.f32 %v4681, %v2846
        %v4690 = vadd.f32 %v4682, %v2846
        %v4691 = vadd.f32 %v4683, %v2846
        %v4692 = vadd.f32 %v4684, %v2846
        %v4693 = vadd.f32 %v4685, %v2846
        %v4694 = vld [vmem:[#allocation7] sm:$0xff]
        %v4695 = vld [vmem:[#allocation7 + $0x8] sm:$0xff]
        %v4696 = vld [vmem:[#allocation7 + $0x10] sm:$0xff]
        %v4697 = vld [vmem:[#allocation7 + $0x18] sm:$0xff]
        %v4698 = vld [vmem:[#allocation7 + $0x20] sm:$0xff]
        %v4699 = vld [vmem:[#allocation7 + $0x28] sm:$0xff]
        %v4700 = vld [vmem:[#allocation7 + $0x30] sm:$0xff]
        %v4701 = vld [vmem:[#allocation7 + $0x38] sm:$0xff]
        %v4702 = vld [vmem:[#allocation7 + $0x40] sm:$0xff]
        %v4703 = vld [vmem:[#allocation7 + $0x48] sm:$0xff]
        %v4704 = vld [vmem:[#allocation7 + $0x50] sm:$0xff]
        %v4705 = vld [vmem:[#allocation7 + $0x58] sm:$0xff]
        %v4706 = vld [vmem:[#allocation7 + $0x60] sm:$0xff]
        %v4707 = vld [vmem:[#allocation7 + $0x68] sm:$0xff]
        %v4708 = vld [vmem:[#allocation7 + $0x70] sm:$0xff]
        %v4709 = vld [vmem:[#allocation7 + $0x78] sm:$0xff]
        %v4710 = vld [vmem:[#allocation7 + $0x80] sm:$0xff]
        %v4711 = vld [vmem:[#allocation7 + $0x88] sm:$0xff]
        %v4712 = vld [vmem:[#allocation7 + $0x90] sm:$0xff]
        %v4713 = vld [vmem:[#allocation7 + $0x98] sm:$0xff]
        %v4714 = vld [vmem:[#allocation7 + $0xa0] sm:$0xff]
        %v4715 = vld [vmem:[#allocation7 + $0xa8] sm:$0xff]
        %v4716 = vld [vmem:[#allocation7 + $0xb0] sm:$0xff]
        %v4717 = vld [vmem:[#allocation7 + $0xb8] sm:$0xff]
        %v4718 = vld [vmem:[#allocation7 + $0xc0] sm:$0xff]
        %v4719 = vld [vmem:[#allocation7 + $0xc8] sm:$0xff]
        %v4720 = vld [vmem:[#allocation7 + $0xd0] sm:$0xff]
        %v4721 = vld [vmem:[#allocation7 + $0xd8] sm:$0xff]
        %v4722 = vld [vmem:[#allocation7 + $0xe0] sm:$0xff]
        %v4723 = vld [vmem:[#allocation7 + $0xe8] sm:$0xff]
        %v4724 = vld [vmem:[#allocation7 + $0xf0] sm:$0xff]
        %v4725 = vld [vmem:[#allocation7 + $0xf8] sm:$0xff]
        %v4726 = vld [vmem:[%s5] sm:$0x1]
        %v4728 = vlaneseq
        %v4729 = vshrl.u32 %v4728, 7
        %v4730 = vsub.s32 0, %v4729
        %v4731 = vrot.slane %v4726, %v4730
        %4733 = vmatprep.subr.mxu0 0.0
        %4734 = vmatpush1.msra.mxu0 %v4694
        %4735 = vmatprep.subr.mxu0 0.0
        %4736 = vmatpush1.msra.mxu0 %v4695
        %4737 = vmatprep.subr.mxu0 0.0
        %4738 = vmatpush1.msra.mxu0 %v4696
        %4739 = vmatprep.subr.mxu0 0.0
        %4740 = vmatpush1.msra.mxu0 %v4697
        %4741 = vmatprep.subr.mxu0 0.0
        %4742 = vmatpush1.msra.mxu0 %v4698
        %4743 = vmatprep.subr.mxu0 0.0
        %4744 = vmatpush1.msra.mxu0 %v4699
        %4745 = vmatprep.subr.mxu0 0.0
        %4746 = vmatpush1.msra.mxu0 %v4700
        %4747 = vmatprep.subr.mxu0 0.0
        %4748 = vmatpush1.msra.mxu0 %v4701
        %4749 = vmatprep.subr.mxu0 0.0
        %4750 = vmatpush1.msra.mxu0 %v4702
        %4751 = vmatprep.subr.mxu0 0.0
        %4752 = vmatpush1.msra.mxu0 %v4703
        %4753 = vmatprep.subr.mxu0 0.0
        %4754 = vmatpush1.msra.mxu0 %v4704
        %4755 = vmatprep.subr.mxu0 0.0
        %4756 = vmatpush1.msra.mxu0 %v4705
        %4757 = vmatprep.subr.mxu0 0.0
        %4758 = vmatpush1.msra.mxu0 %v4706
        %4759 = vmatprep.subr.mxu0 0.0
        %4760 = vmatpush1.msra.mxu0 %v4707
        %4761 = vmatprep.subr.mxu0 0.0
        %4762 = vmatpush1.msra.mxu0 %v4708
        %4763 = vmatprep.subr.mxu0 0.0
        %4764 = vmatpush1.msra.mxu0 %v4709
        %4765 = vmatprep.subr.mxu0 0.0
        %4766 = vmatpush1.msra.mxu0 %v4710
        %4767 = vmatprep.subr.mxu0 0.0
        %4768 = vmatpush1.msra.mxu0 %v4711
        %4769 = vmatprep.subr.mxu0 0.0
        %4770 = vmatpush1.msra.mxu0 %v4712
        %4771 = vmatprep.subr.mxu0 0.0
        %4772 = vmatpush1.msra.mxu0 %v4713
        %4773 = vmatprep.subr.mxu0 0.0
        %4774 = vmatpush1.msra.mxu0 %v4714
        %4775 = vmatprep.subr.mxu0 0.0
        %4776 = vmatpush1.msra.mxu0 %v4715
        %4777 = vmatprep.subr.mxu0 0.0
        %4778 = vmatpush1.msra.mxu0 %v4716
        %4779 = vmatprep.subr.mxu0 0.0
        %4780 = vmatpush1.msra.mxu0 %v4717
        %4781 = vmatprep.subr.mxu0 0.0
        %4782 = vmatpush1.msra.mxu0 %v4718
        %4783 = vmatprep.subr.mxu0 0.0
        %4784 = vmatpush1.msra.mxu0 %v4719
        %4785 = vmatprep.subr.mxu0 0.0
        %4786 = vmatpush1.msra.mxu0 %v4720
        %4787 = vmatprep.subr.mxu0 0.0
        %4788 = vmatpush1.msra.mxu0 %v4721
        %4789 = vmatprep.subr.mxu0 0.0
        %4790 = vmatpush1.msra.mxu0 %v4722
        %4791 = vmatprep.subr.mxu0 0.0
        %4792 = vmatpush1.msra.mxu0 %v4723
        %4793 = vmatprep.subr.mxu0 0.0
        %4794 = vmatpush1.msra.mxu0 %v4724
        %4795 = vmatprep.subr.mxu0 0.0
        %4796 = vmatpush1.msra.mxu0 %v4725
        %4797 = vmatprep.mubr.f32.mxu0 %v4686
        %4798 = vmatmul.mubr.f32.gmra.mrb[0].mxu0 %v4338
        %v4799 = vpop.f32.mrb[0].mxu0
        %v4800 = vadd.f32 %v4731, %v4799
        %v4801 = vpop.f32.mrb[0].mxu0
        %4802 = vmatprep.mubr.f32.mxu0 %v4687
        %4803 = vmatmul.mubr.f32.gmra.mrb[0].mxu0 %v4339
        %v4804 = vpop.f32.mrb[0].mxu0
        %v4805 = vadd.f32 %v4731, %v4804
        %v4806 = vpop.f32.mrb[0].mxu0
        %4807 = vmatprep.mubr.f32.mxu0 %v4688
        %4808 = vmatmul.mubr.f32.gmra.mrb[0].mxu0 %v4340
        %v4809 = vpop.f32.mrb[0].mxu0
        %v4810 = vadd.f32 %v4731, %v4809
        %v4811 = vpop.f32.mrb[0].mxu0
        %4812 = vmatprep.mubr.f32.mxu0 %v4689
        %4813 = vmatmul.mubr.f32.gmra.mrb[0].mxu0 %v4341
        %v4814 = vpop.f32.mrb[0].mxu0
        %v4815 = vadd.f32 %v4731, %v4814
        %v4816 = vpop.f32.mrb[0].mxu0
        %4817 = vmatprep.mubr.f32.mxu0 %v4690
        %4818 = vmatmul.mubr.f32.gmra.mrb[0].mxu0 %v4342
        %v4819 = vpop.f32.mrb[0].mxu0
        %v4820 = vadd.f32 %v4731, %v4819
        %v4821 = vpop.f32.mrb[0].mxu0
        %4822 = vmatprep.mubr.f32.mxu0 %v4691
        %4823 = vmatmul.mubr.f32.gmra.mrb[0].mxu0 %v4343
        %v4824 = vpop.f32.mrb[0].mxu0
        %v4825 = vadd.f32 %v4731, %v4824
        %v4826 = vpop.f32.mrb[0].mxu0
        %4827 = vmatprep.mubr.f32.mxu0 %v4692
        %4828 = vmatmul.mubr.f32.gmra.mrb[0].mxu0 %v4344
        %v4829 = vpop.f32.mrb[0].mxu0
        %v4830 = vadd.f32 %v4731, %v4829
        %v4831 = vpop.f32.mrb[0].mxu0
        %4832 = vmatprep.mubr.f32.mxu0 %v4693
        %4833 = vmatmul.mubr.f32.gmra.mrb[0].mxu0 %v4345
        %v4834 = vpop.f32.mrb[0].mxu0
        %v4835 = vadd.f32 %v4731, %v4834
        %v4836 = vpop.f32.mrb[0].mxu0
        %4837 = vdwg.mxu0
        %v4838 = vmul.f32 %v4800, 0.5
        %v4839 = vmul.f32 %v4805, 0.5
        %v4840 = vmul.f32 %v4810, 0.5
        %v4841 = vmul.f32 %v4815, 0.5
        %v4842 = vmul.f32 %v4820, 0.5
        %v4843 = vmul.f32 %v4825, 0.5
        %v4844 = vmul.f32 %v4830, 0.5
        %v4845 = vmul.f32 %v4835, 0.5
        %v4846 = vmul.f32 %v4800, 0.044715
        %v4847 = vmul.f32 %v4805, 0.044715
        %v4848 = vmul.f32 %v4810, 0.044715
        %v4849 = vmul.f32 %v4815, 0.044715
        %v4850 = vmul.f32 %v4820, 0.044715
        %v4851 = vmul.f32 %v4825, 0.044715
        %v4852 = vmul.f32 %v4830, 0.044715
        %v4853 = vmul.f32 %v4835, 0.044715
        %v4854 = vmul.f32 %v4846, %v4800
        %v4855 = vmul.f32 %v4847, %v4805
        %v4856 = vmul.f32 %v4848, %v4810
        %v4857 = vmul.f32 %v4849, %v4815
        %v4858 = vmul.f32 %v4850, %v4820
        %v4859 = vmul.f32 %v4851, %v4825
        %v4860 = vmul.f32 %v4852, %v4830
        %v4861 = vmul.f32 %v4853, %v4835
        %v4862 = vmul.f32 %v4854, %v4800
        %v4863 = vmul.f32 %v4855, %v4805
        %v4864 = vmul.f32 %v4856, %v4810
        %v4865 = vmul.f32 %v4857, %v4815
        %v4866 = vmul.f32 %v4858, %v4820
        %v4867 = vmul.f32 %v4859, %v4825
        %v4868 = vmul.f32 %v4860, %v4830
        %v4869 = vmul.f32 %v4861, %v4835
        %v4870 = vadd.f32 %v4800, %v4862
        %v4871 = vadd.f32 %v4805, %v4863
        %v4872 = vadd.f32 %v4810, %v4864
        %v4873 = vadd.f32 %v4815, %v4865
        %v4874 = vadd.f32 %v4820, %v4866
        %v4875 = vadd.f32 %v4825, %v4867
        %v4876 = vadd.f32 %v4830, %v4868
        %v4877 = vadd.f32 %v4835, %v4869
        %v4878 = vmul.f32 %v4870, 0.7978846
        %v4879 = vmul.f32 %v4871, 0.7978846
        %v4880 = vmul.f32 %v4872, 0.7978846
        %v4881 = vmul.f32 %v4873, 0.7978846
        %v4882 = vmul.f32 %v4874, 0.7978846
        %v4883 = vmul.f32 %v4875, 0.7978846
        %v4884 = vmul.f32 %v4876, 0.7978846
        %v4885 = vmul.f32 %v4877, 0.7978846
        %v4886 = vtanh.pop %v4878
        %v4887 = vtanh.pop %v4879
        %v4888 = vtanh.pop %v4880
        %v4889 = vtanh.pop %v4881
        %v4890 = vtanh.pop %v4882
        %v4891 = vtanh.pop %v4883
        %v4892 = vtanh.pop %v4884
        %v4893 = vtanh.pop %v4885
        %v4894 = vadd.f32 %v4886, 1.0
        %v4895 = vadd.f32 %v4887, 1.0
        %v4896 = vadd.f32 %v4888, 1.0
        %v4897 = vadd.f32 %v4889, 1.0
        %v4898 = vadd.f32 %v4890, 1.0
        %v4899 = vadd.f32 %v4891, 1.0
        %v4900 = vadd.f32 %v4892, 1.0
        %v4901 = vadd.f32 %v4893, 1.0
        %v4902 = vmul.f32 %v4838, %v4894
        %v4903 = vmul.f32 %v4839, %v4895
        %v4904 = vmul.f32 %v4840, %v4896
        %v4905 = vmul.f32 %v4841, %v4897
        %v4906 = vmul.f32 %v4842, %v4898
        %v4907 = vmul.f32 %v4843, %v4899
        %v4908 = vmul.f32 %v4844, %v4900
        %v4909 = vmul.f32 %v4845, %v4901
        %s4910 = scalar_lea.vmem %s284, 128 [#allocation9]
        %4911 = vst [vmem:[%s4910] sm:$0xff] %v4902
        %4912 = vst [vmem:[%s4910 + $0x8] sm:$0xff] %v4903
        %4913 = vst [vmem:[%s4910 + $0x10] sm:$0xff] %v4904
        %4914 = vst [vmem:[%s4910 + $0x18] sm:$0xff] %v4905
        %4915 = vst [vmem:[%s4910 + $0x20] sm:$0xff] %v4906
        %4916 = vst [vmem:[%s4910 + $0x28] sm:$0xff] %v4907
        %4917 = vst [vmem:[%s4910 + $0x30] sm:$0xff] %v4908
        %4918 = vst [vmem:[%s4910 + $0x38] sm:$0xff] %v4909
        %v4919 = vld [vmem:[%s2] sm:$0x7]
        %v4920 = vld [vmem:[%s2 + $0x4] sm:$0x7]
        %v4921 = vld [vmem:[%s2 + $0x8] sm:$0x7]
        %v4922 = vld [vmem:[%s1153 + $0x1] sm:$0xff]
        %v4923 = vld [vmem:[%s1153 + $0x9] sm:$0xff]
        %v4924 = vld [vmem:[%s1153 + $0x19] sm:$0xff]
        %v4925 = vld [vmem:[%s1153 + $0x21] sm:$0xff]
        %v4926 = vld [vmem:[%s1153 + $0x31] sm:$0xff]
        %v4927 = vld [vmem:[%s1153 + $0x39] sm:$0xff]
        %v4928 = vld [vmem:[%s1153 + $0x49] sm:$0xff]
        %v4929 = vld [vmem:[%s1153 + $0x51] sm:$0xff]
        %v4930 = vld [vmem:[%s1153 + $0x61] sm:$0xff]
        %v4931 = vld [vmem:[%s1153 + $0x69] sm:$0xff]
        %v4932 = vld [vmem:[%s1153 + $0x79] sm:$0xff]
        %v4933 = vld [vmem:[%s1153 + $0x81] sm:$0xff]
        %v4934 = vlaneseq
        %v4935 = vshrl.u32 %v4934, 7
        %v4936 = vsub.s32 0, %v4935
        %v4937 = vrot.slane %v4919, %v4936
        %v4938 = vmul.f32 %v4937, %v4922
        %v4939 = vmul.f32 %v4937, %v4923
        %v4940 = vmul.f32 %v4937, %v4924
        %v4941 = vmul.f32 %v4937, %v4925
        %v4942 = vmul.f32 %v4937, %v4926
        %v4943 = vmul.f32 %v4937, %v4927
        %v4944 = vmul.f32 %v4937, %v4928
        %v4945 = vmul.f32 %v4937, %v4929
        %v4946 = vadd.f32 %v4938, 0.0
        %v4947 = vadd.f32 %v4939, 0.0
        %v4948 = vadd.f32 %v4940, 0.0
        %v4949 = vadd.f32 %v4941, 0.0
        %v4950 = vadd.f32 %v4942, 0.0
        %v4951 = vadd.f32 %v4943, 0.0
        %v4952 = vadd.f32 %v4944, 0.0
        %v4953 = vadd.f32 %v4945, 0.0
        %v4954 = vlaneseq
        %v4955 = vshrl.u32 %v4954, 7
        %v4956 = vsub.s32 0, %v4955
        %v4957 = vrot.slane %v4920, %v4956
        %v4958 = vmul.f32 %v4957, %v4924
        %v4959 = vmul.f32 %v4957, %v4925
        %v4960 = vmul.f32 %v4957, %v4926
        %v4961 = vmul.f32 %v4957, %v4927
        %v4962 = vmul.f32 %v4957, %v4928
        %v4963 = vmul.f32 %v4957, %v4929
        %v4964 = vmul.f32 %v4957, %v4930
        %v4965 = vmul.f32 %v4957, %v4931
        %v4966 = vadd.f32 %v4946, %v4958
        %v4967 = vadd.f32 %v4947, %v4959
        %v4968 = vadd.f32 %v4948, %v4960
        %v4969 = vadd.f32 %v4949, %v4961
        %v4970 = vadd.f32 %v4950, %v4962
        %v4971 = vadd.f32 %v4951, %v4963
        %v4972 = vadd.f32 %v4952, %v4964
        %v4973 = vadd.f32 %v4953, %v4965
        %v4974 = vlaneseq
        %v4975 = vshrl.u32 %v4974, 7
        %v4976 = vsub.s32 0, %v4975
        %v4977 = vrot.slane %v4921, %v4976
        %v4978 = vmul.f32 %v4977, %v4926
        %v4979 = vmul.f32 %v4977, %v4927
        %v4980 = vmul.f32 %v4977, %v4928
        %v4981 = vmul.f32 %v4977, %v4929
        %v4982 = vmul.f32 %v4977, %v4930
        %v4983 = vmul.f32 %v4977, %v4931
        %v4984 = vmul.f32 %v4977, %v4932
        %v4985 = vmul.f32 %v4977, %v4933
        %v4986 = vadd.f32 %v4966, %v4978
        %v4987 = vadd.f32 %v4967, %v4979
        %v4988 = vadd.f32 %v4968, %v4980
        %v4989 = vadd.f32 %v4969, %v4981
        %v4990 = vadd.f32 %v4970, %v4982
        %v4991 = vadd.f32 %v4971, %v4983
        %v4992 = vadd.f32 %v4972, %v4984
        %v4993 = vadd.f32 %v4973, %v4985
        %v4994 = vld [vmem:[%s1153 + $0x2] sm:$0xff]
        %v4995 = vld [vmem:[%s1153 + $0xa] sm:$0xff]
        %v4996 = vld [vmem:[%s1153 + $0x1a] sm:$0xff]
        %v4997 = vld [vmem:[%s1153 + $0x22] sm:$0xff]
        %v4998 = vld [vmem:[%s1153 + $0x32] sm:$0xff]
        %v4999 = vld [vmem:[%s1153 + $0x3a] sm:$0xff]
        %v5000 = vld [vmem:[%s1153 + $0x4a] sm:$0xff]
        %v5001 = vld [vmem:[%s1153 + $0x52] sm:$0xff]
        %v5002 = vld [vmem:[%s1153 + $0x62] sm:$0xff]
        %v5003 = vld [vmem:[%s1153 + $0x6a] sm:$0xff]
        %v5004 = vld [vmem:[%s1153 + $0x7a] sm:$0xff]
        %v5005 = vld [vmem:[%s1153 + $0x82] sm:$0xff]
        %v5006 = vlaneseq
        %v5007 = vshrl.u32 %v5006, 7
        %v5008 = vsub.s32 1, %v5007
        %v5009 = vrot.slane %v4919, %v5008
        %v5010 = vmul.f32 %v5009, %v4994
        %v5011 = vmul.f32 %v5009, %v4995
        %v5012 = vmul.f32 %v5009, %v4996
        %v5013 = vmul.f32 %v5009, %v4997
        %v5014 = vmul.f32 %v5009, %v4998
        %v5015 = vmul.f32 %v5009, %v4999
        %v5016 = vmul.f32 %v5009, %v5000
        %v5017 = vmul.f32 %v5009, %v5001
        %v5018 = vadd.f32 %v4986, %v5010
        %v5019 = vadd.f32 %v4987, %v5011
        %v5020 = vadd.f32 %v4988, %v5012
        %v5021 = vadd.f32 %v4989, %v5013
        %v5022 = vadd.f32 %v4990, %v5014
        %v5023 = vadd.f32 %v4991, %v5015
        %v5024 = vadd.f32 %v4992, %v5016
        %v5025 = vadd.f32 %v4993, %v5017
        %v5026 = vlaneseq
        %v5027 = vshrl.u32 %v5026, 7
        %v5028 = vsub.s32 1, %v5027
        %v5029 = vrot.slane %v4920, %v5028
        %v5030 = vmul.f32 %v5029, %v4996
        %v5031 = vmul.f32 %v5029, %v4997
        %v5032 = vmul.f32 %v5029, %v4998
        %v5033 = vmul.f32 %v5029, %v4999
        %v5034 = vmul.f32 %v5029, %v5000
        %v5035 = vmul.f32 %v5029, %v5001
        %v5036 = vmul.f32 %v5029, %v5002
        %v5037 = vmul.f32 %v5029, %v5003
        %v5038 = vadd.f32 %v5018, %v5030
        %v5039 = vadd.f32 %v5019, %v5031
        %v5040 = vadd.f32 %v5020, %v5032
        %v5041 = vadd.f32 %v5021, %v5033
        %v5042 = vadd.f32 %v5022, %v5034
        %v5043 = vadd.f32 %v5023, %v5035
        %v5044 = vadd.f32 %v5024, %v5036
        %v5045 = vadd.f32 %v5025, %v5037
        %v5046 = vlaneseq
        %v5047 = vshrl.u32 %v5046, 7
        %v5048 = vsub.s32 1, %v5047
        %v5049 = vrot.slane %v4921, %v5048
        %v5050 = vmul.f32 %v5049, %v4998
        %v5051 = vmul.f32 %v5049, %v4999
        %v5052 = vmul.f32 %v5049, %v5000
        %v5053 = vmul.f32 %v5049, %v5001
        %v5054 = vmul.f32 %v5049, %v5002
        %v5055 = vmul.f32 %v5049, %v5003
        %v5056 = vmul.f32 %v5049, %v5004
        %v5057 = vmul.f32 %v5049, %v5005
        %v5058 = vadd.f32 %v5038, %v5050
        %v5059 = vadd.f32 %v5039, %v5051
        %v5060 = vadd.f32 %v5040, %v5052
        %v5061 = vadd.f32 %v5041, %v5053
        %v5062 = vadd.f32 %v5042, %v5054
        %v5063 = vadd.f32 %v5043, %v5055
        %v5064 = vadd.f32 %v5044, %v5056
        %v5065 = vadd.f32 %v5045, %v5057
        %v5066 = vld [vmem:[%s1153 + $0x3] sm:$0xff]
        %v5067 = vld [vmem:[%s1153 + $0xb] sm:$0xff]
        %v5068 = vld [vmem:[%s1153 + $0x1b] sm:$0xff]
        %v5069 = vld [vmem:[%s1153 + $0x23] sm:$0xff]
        %v5070 = vld [vmem:[%s1153 + $0x33] sm:$0xff]
        %v5071 = vld [vmem:[%s1153 + $0x3b] sm:$0xff]
        %v5072 = vld [vmem:[%s1153 + $0x4b] sm:$0xff]
        %v5073 = vld [vmem:[%s1153 + $0x53] sm:$0xff]
        %v5074 = vld [vmem:[%s1153 + $0x63] sm:$0xff]
        %v5075 = vld [vmem:[%s1153 + $0x6b] sm:$0xff]
        %v5076 = vld [vmem:[%s1153 + $0x7b] sm:$0xff]
        %v5077 = vld [vmem:[%s1153 + $0x83] sm:$0xff]
        %v5078 = vlaneseq
        %v5079 = vshrl.u32 %v5078, 7
        %v5080 = vsub.s32 2, %v5079
        %v5081 = vrot.slane %v4919, %v5080
        %v5082 = vmul.f32 %v5081, %v5066
        %v5083 = vmul.f32 %v5081, %v5067
        %v5084 = vmul.f32 %v5081, %v5068
        %v5085 = vmul.f32 %v5081, %v5069
        %v5086 = vmul.f32 %v5081, %v5070
        %v5087 = vmul.f32 %v5081, %v5071
        %v5088 = vmul.f32 %v5081, %v5072
        %v5089 = vmul.f32 %v5081, %v5073
        %v5090 = vadd.f32 %v5058, %v5082
        %v5091 = vadd.f32 %v5059, %v5083
        %v5092 = vadd.f32 %v5060, %v5084
        %v5093 = vadd.f32 %v5061, %v5085
        %v5094 = vadd.f32 %v5062, %v5086
        %v5095 = vadd.f32 %v5063, %v5087
        %v5096 = vadd.f32 %v5064, %v5088
        %v5097 = vadd.f32 %v5065, %v5089
        %v5098 = vlaneseq
        %v5099 = vshrl.u32 %v5098, 7
        %v5100 = vsub.s32 2, %v5099
        %v5101 = vrot.slane %v4920, %v5100
        %v5102 = vmul.f32 %v5101, %v5068
        %v5103 = vmul.f32 %v5101, %v5069
        %v5104 = vmul.f32 %v5101, %v5070
        %v5105 = vmul.f32 %v5101, %v5071
        %v5106 = vmul.f32 %v5101, %v5072
        %v5107 = vmul.f32 %v5101, %v5073
        %v5108 = vmul.f32 %v5101, %v5074
        %v5109 = vmul.f32 %v5101, %v5075
        %v5110 = vadd.f32 %v5090, %v5102
        %v5111 = vadd.f32 %v5091, %v5103
        %v5112 = vadd.f32 %v5092, %v5104
        %v5113 = vadd.f32 %v5093, %v5105
        %v5114 = vadd.f32 %v5094, %v5106
        %v5115 = vadd.f32 %v5095, %v5107
        %v5116 = vadd.f32 %v5096, %v5108
        %v5117 = vadd.f32 %v5097, %v5109
        %v5118 = vlaneseq
        %v5119 = vshrl.u32 %v5118, 7
        %v5120 = vsub.s32 2, %v5119
        %v5121 = vrot.slane %v4921, %v5120
        %v5122 = vmul.f32 %v5121, %v5070
        %v5123 = vmul.f32 %v5121, %v5071
        %v5124 = vmul.f32 %v5121, %v5072
        %v5125 = vmul.f32 %v5121, %v5073
        %v5126 = vmul.f32 %v5121, %v5074
        %v5127 = vmul.f32 %v5121, %v5075
        %v5128 = vmul.f32 %v5121, %v5076
        %v5129 = vmul.f32 %v5121, %v5077
        %v5130 = vadd.f32 %v5110, %v5122
        %v5131 = vadd.f32 %v5111, %v5123
        %v5132 = vadd.f32 %v5112, %v5124
        %v5133 = vadd.f32 %v5113, %v5125
        %v5134 = vadd.f32 %v5114, %v5126
        %v5135 = vadd.f32 %v5115, %v5127
        %v5136 = vadd.f32 %v5116, %v5128
        %v5137 = vadd.f32 %v5117, %v5129
        %v5138 = vadd.f32 %v5130, %v2357
        %v5139 = vadd.f32 %v5131, %v2357
        %v5140 = vadd.f32 %v5132, %v2357
        %v5141 = vadd.f32 %v5133, %v2357
        %v5142 = vadd.f32 %v5134, %v2357
        %v5143 = vadd.f32 %v5135, %v2357
        %v5144 = vadd.f32 %v5136, %v2357
        %v5145 = vadd.f32 %v5137, %v2357
        %5146 = vadd.xlane.f32.xlu0 %v5138
        %v5147 = vpop.xlane.xlu0 %5146
        %5148 = vadd.xlane.f32.xlu0 %v5139
        %v5149 = vpop.xlane.xlu0 %5148
        %5150 = vadd.xlane.f32.xlu0 %v5140
        %v5151 = vpop.xlane.xlu0 %5150
        %5152 = vadd.xlane.f32.xlu0 %v5141
        %v5153 = vpop.xlane.xlu0 %5152
        %5154 = vadd.xlane.f32.xlu0 %v5142
        %v5155 = vpop.xlane.xlu0 %5154
        %5156 = vadd.xlane.f32.xlu0 %v5143
        %v5157 = vpop.xlane.xlu0 %5156
        %5158 = vadd.xlane.f32.xlu0 %v5144
        %v5159 = vpop.xlane.xlu0 %5158
        %5160 = vadd.xlane.f32.xlu0 %v5145
        %v5161 = vpop.xlane.xlu0 %5160
        %v5162 = vmul.f32 %v5138, %v5138
        %v5163 = vmul.f32 %v5139, %v5139
        %v5164 = vmul.f32 %v5140, %v5140
        %v5165 = vmul.f32 %v5141, %v5141
        %v5166 = vmul.f32 %v5142, %v5142
        %v5167 = vmul.f32 %v5143, %v5143
        %v5168 = vmul.f32 %v5144, %v5144
        %v5169 = vmul.f32 %v5145, %v5145
        %5170 = vadd.xlane.f32.xlu0 %v5162
        %v5171 = vpop.xlane.xlu0 %5170
        %5172 = vadd.xlane.f32.xlu0 %v5163
        %v5173 = vpop.xlane.xlu0 %5172
        %5174 = vadd.xlane.f32.xlu0 %v5164
        %v5175 = vpop.xlane.xlu0 %5174
        %5176 = vadd.xlane.f32.xlu0 %v5165
        %v5177 = vpop.xlane.xlu0 %5176
        %5178 = vadd.xlane.f32.xlu0 %v5166
        %v5179 = vpop.xlane.xlu0 %5178
        %5180 = vadd.xlane.f32.xlu0 %v5167
        %v5181 = vpop.xlane.xlu0 %5180
        %5182 = vadd.xlane.f32.xlu0 %v5168
        %v5183 = vpop.xlane.xlu0 %5182
        %5184 = vadd.xlane.f32.xlu0 %v5169
        %v5185 = vpop.xlane.xlu0 %5184
        %v5186 = vmul.f32 %v5147, 0.0078125
        %v5187 = vmul.f32 %v5149, 0.0078125
        %v5188 = vmul.f32 %v5151, 0.0078125
        %v5189 = vmul.f32 %v5153, 0.0078125
        %v5190 = vmul.f32 %v5155, 0.0078125
        %v5191 = vmul.f32 %v5157, 0.0078125
        %v5192 = vmul.f32 %v5159, 0.0078125
        %v5193 = vmul.f32 %v5161, 0.0078125
        %v5194 = vmul.f32 %v5171, 0.0078125
        %v5195 = vmul.f32 %v5173, 0.0078125
        %v5196 = vmul.f32 %v5175, 0.0078125
        %v5197 = vmul.f32 %v5177, 0.0078125
        %v5198 = vmul.f32 %v5179, 0.0078125
        %v5199 = vmul.f32 %v5181, 0.0078125
        %v5200 = vmul.f32 %v5183, 0.0078125
        %v5201 = vmul.f32 %v5185, 0.0078125
        %v5202 = vmul.f32 %v5186, %v5186
        %v5203 = vmul.f32 %v5187, %v5187
        %v5204 = vmul.f32 %v5188, %v5188
        %v5205 = vmul.f32 %v5189, %v5189
        %v5206 = vmul.f32 %v5190, %v5190
        %v5207 = vmul.f32 %v5191, %v5191
        %v5208 = vmul.f32 %v5192, %v5192
        %v5209 = vmul.f32 %v5193, %v5193
        %v5210 = vsub.f32 %v5194, %v5202
        %v5211 = vsub.f32 %v5195, %v5203
        %v5212 = vsub.f32 %v5196, %v5204
        %v5213 = vsub.f32 %v5197, %v5205
        %v5214 = vsub.f32 %v5198, %v5206
        %v5215 = vsub.f32 %v5199, %v5207
        %v5216 = vsub.f32 %v5200, %v5208
        %v5217 = vsub.f32 %v5201, %v5209
        %v5218 = vsub.f32 %v5138, %v5186
        %v5219 = vsub.f32 %v5139, %v5187
        %v5220 = vsub.f32 %v5140, %v5188
        %v5221 = vsub.f32 %v5141, %v5189
        %v5222 = vsub.f32 %v5142, %v5190
        %v5223 = vsub.f32 %v5143, %v5191
        %v5224 = vsub.f32 %v5144, %v5192
        %v5225 = vsub.f32 %v5145, %v5193
        %v5226 = vadd.f32 %v5210, 1e-06
        %v5227 = vadd.f32 %v5211, 1e-06
        %v5228 = vadd.f32 %v5212, 1e-06
        %v5229 = vadd.f32 %v5213, 1e-06
        %v5230 = vadd.f32 %v5214, 1e-06
        %v5231 = vadd.f32 %v5215, 1e-06
        %v5232 = vadd.f32 %v5216, 1e-06
        %v5233 = vadd.f32 %v5217, 1e-06
        %v5234 = vrsqrt.pop %v5226
        %v5235 = vrsqrt.pop %v5227
        %v5236 = vrsqrt.pop %v5228
        %v5237 = vrsqrt.pop %v5229
        %v5238 = vrsqrt.pop %v5230
        %v5239 = vrsqrt.pop %v5231
        %v5240 = vrsqrt.pop %v5232
        %v5241 = vrsqrt.pop %v5233
        %v5242 = vmul.f32 %v5218, %v5234
        %v5243 = vmul.f32 %v5219, %v5235
        %v5244 = vmul.f32 %v5220, %v5236
        %v5245 = vmul.f32 %v5221, %v5237
        %v5246 = vmul.f32 %v5222, %v5238
        %v5247 = vmul.f32 %v5223, %v5239
        %v5248 = vmul.f32 %v5224, %v5240
        %v5249 = vmul.f32 %v5225, %v5241
        %v5250 = vmul.f32 %v5242, %v2473
        %v5251 = vmul.f32 %v5243, %v2473
        %v5252 = vmul.f32 %v5244, %v2473
        %v5253 = vmul.f32 %v5245, %v2473
        %v5254 = vmul.f32 %v5246, %v2473
        %v5255 = vmul.f32 %v5247, %v2473
        %v5256 = vmul.f32 %v5248, %v2473
        %v5257 = vmul.f32 %v5249, %v2473
        %v5258 = vadd.f32 %v5250, %v2485
        %v5259 = vadd.f32 %v5251, %v2485
        %v5260 = vadd.f32 %v5252, %v2485
        %v5261 = vadd.f32 %v5253, %v2485
        %v5262 = vadd.f32 %v5254, %v2485
        %v5263 = vadd.f32 %v5255, %v2485
        %v5264 = vadd.f32 %v5256, %v2485
        %v5265 = vadd.f32 %v5257, %v2485
        %v5266 = vld [vmem:[%s2494] sm:$0x7]
        %v5267 = vld [vmem:[%s2494 + $0x4] sm:$0x7]
        %v5268 = vld [vmem:[%s2494 + $0x8] sm:$0x7]
        %s5269 = scalar_lea.vmem [#allocation3], 312
        %v5270 = vld [vmem:[%s5269 + $0x1] sm:$0xff]
        %v5271 = vld [vmem:[%s5269 + $0x9] sm:$0xff]
        %v5272 = vld [vmem:[%s5269 + $0x19] sm:$0xff]
        %v5273 = vld [vmem:[%s5269 + $0x21] sm:$0xff]
        %v5274 = vld [vmem:[%s5269 + $0x31] sm:$0xff]
        %v5275 = vld [vmem:[%s5269 + $0x39] sm:$0xff]
        %v5276 = vld [vmem:[%s5269 + $0x49] sm:$0xff]
        %v5277 = vld [vmem:[%s5269 + $0x51] sm:$0xff]
        %v5278 = vld [vmem:[%s5269 + $0x61] sm:$0xff]
        %v5279 = vld [vmem:[%s5269 + $0x69] sm:$0xff]
        %v5280 = vld [vmem:[%s5269 + $0x79] sm:$0xff]
        %v5281 = vld [vmem:[%s5269 + $0x81] sm:$0xff]
        %v5282 = vlaneseq
        %v5283 = vshrl.u32 %v5282, 7
        %v5284 = vsub.s32 0, %v5283
        %v5285 = vrot.slane %v5266, %v5284
        %v5286 = vmul.f32 %v5285, %v5270
        %v5287 = vmul.f32 %v5285, %v5271
        %v5288 = vmul.f32 %v5285, %v5272
        %v5289 = vmul.f32 %v5285, %v5273
        %v5290 = vmul.f32 %v5285, %v5274
        %v5291 = vmul.f32 %v5285, %v5275
        %v5292 = vmul.f32 %v5285, %v5276
        %v5293 = vmul.f32 %v5285, %v5277
        %v5294 = vadd.f32 %v5286, 0.0
        %v5295 = vadd.f32 %v5287, 0.0
        %v5296 = vadd.f32 %v5288, 0.0
        %v5297 = vadd.f32 %v5289, 0.0
        %v5298 = vadd.f32 %v5290, 0.0
        %v5299 = vadd.f32 %v5291, 0.0
        %v5300 = vadd.f32 %v5292, 0.0
        %v5301 = vadd.f32 %v5293, 0.0
        %v5302 = vlaneseq
        %v5303 = vshrl.u32 %v5302, 7
        %v5304 = vsub.s32 0, %v5303
        %v5305 = vrot.slane %v5267, %v5304
        %v5306 = vmul.f32 %v5305, %v5272
        %v5307 = vmul.f32 %v5305, %v5273
        %v5308 = vmul.f32 %v5305, %v5274
        %v5309 = vmul.f32 %v5305, %v5275
        %v5310 = vmul.f32 %v5305, %v5276
        %v5311 = vmul.f32 %v5305, %v5277
        %v5312 = vmul.f32 %v5305, %v5278
        %v5313 = vmul.f32 %v5305, %v5279
        %v5314 = vadd.f32 %v5294, %v5306
        %v5315 = vadd.f32 %v5295, %v5307
        %v5316 = vadd.f32 %v5296, %v5308
        %v5317 = vadd.f32 %v5297, %v5309
        %v5318 = vadd.f32 %v5298, %v5310
        %v5319 = vadd.f32 %v5299, %v5311
        %v5320 = vadd.f32 %v5300, %v5312
        %v5321 = vadd.f32 %v5301, %v5313
        %v5322 = vlaneseq
        %v5323 = vshrl.u32 %v5322, 7
        %v5324 = vsub.s32 0, %v5323
        %v5325 = vrot.slane %v5268, %v5324
        %v5326 = vmul.f32 %v5325, %v5274
        %v5327 = vmul.f32 %v5325, %v5275
        %v5328 = vmul.f32 %v5325, %v5276
        %v5329 = vmul.f32 %v5325, %v5277
        %v5330 = vmul.f32 %v5325, %v5278
        %v5331 = vmul.f32 %v5325, %v5279
        %v5332 = vmul.f32 %v5325, %v5280
        %v5333 = vmul.f32 %v5325, %v5281
        %v5334 = vadd.f32 %v5314, %v5326
        %v5335 = vadd.f32 %v5315, %v5327
        %v5336 = vadd.f32 %v5316, %v5328
        %v5337 = vadd.f32 %v5317, %v5329
        %v5338 = vadd.f32 %v5318, %v5330
        %v5339 = vadd.f32 %v5319, %v5331
        %v5340 = vadd.f32 %v5320, %v5332
        %v5341 = vadd.f32 %v5321, %v5333
        %v5342 = vld [vmem:[%s5269 + $0x2] sm:$0xff]
        %v5343 = vld [vmem:[%s5269 + $0xa] sm:$0xff]
        %v5344 = vld [vmem:[%s5269 + $0x1a] sm:$0xff]
        %v5345 = vld [vmem:[%s5269 + $0x22] sm:$0xff]
        %v5346 = vld [vmem:[%s5269 + $0x32] sm:$0xff]
        %v5347 = vld [vmem:[%s5269 + $0x3a] sm:$0xff]
        %v5348 = vld [vmem:[%s5269 + $0x4a] sm:$0xff]
        %v5349 = vld [vmem:[%s5269 + $0x52] sm:$0xff]
        %v5350 = vld [vmem:[%s5269 + $0x62] sm:$0xff]
        %v5351 = vld [vmem:[%s5269 + $0x6a] sm:$0xff]
        %v5352 = vld [vmem:[%s5269 + $0x7a] sm:$0xff]
        %v5353 = vld [vmem:[%s5269 + $0x82] sm:$0xff]
        %v5354 = vlaneseq
        %v5355 = vshrl.u32 %v5354, 7
        %v5356 = vsub.s32 1, %v5355
        %v5357 = vrot.slane %v5266, %v5356
        %v5358 = vmul.f32 %v5357, %v5342
        %v5359 = vmul.f32 %v5357, %v5343
        %v5360 = vmul.f32 %v5357, %v5344
        %v5361 = vmul.f32 %v5357, %v5345
        %v5362 = vmul.f32 %v5357, %v5346
        %v5363 = vmul.f32 %v5357, %v5347
        %v5364 = vmul.f32 %v5357, %v5348
        %v5365 = vmul.f32 %v5357, %v5349
        %v5366 = vadd.f32 %v5334, %v5358
        %v5367 = vadd.f32 %v5335, %v5359
        %v5368 = vadd.f32 %v5336, %v5360
        %v5369 = vadd.f32 %v5337, %v5361
        %v5370 = vadd.f32 %v5338, %v5362
        %v5371 = vadd.f32 %v5339, %v5363
        %v5372 = vadd.f32 %v5340, %v5364
        %v5373 = vadd.f32 %v5341, %v5365
        %v5374 = vlaneseq
        %v5375 = vshrl.u32 %v5374, 7
        %v5376 = vsub.s32 1, %v5375
        %v5377 = vrot.slane %v5267, %v5376
        %v5378 = vmul.f32 %v5377, %v5344
        %v5379 = vmul.f32 %v5377, %v5345
        %v5380 = vmul.f32 %v5377, %v5346
        %v5381 = vmul.f32 %v5377, %v5347
        %v5382 = vmul.f32 %v5377, %v5348
        %v5383 = vmul.f32 %v5377, %v5349
        %v5384 = vmul.f32 %v5377, %v5350
        %v5385 = vmul.f32 %v5377, %v5351
        %v5386 = vadd.f32 %v5366, %v5378
        %v5387 = vadd.f32 %v5367, %v5379
        %v5388 = vadd.f32 %v5368, %v5380
        %v5389 = vadd.f32 %v5369, %v5381
        %v5390 = vadd.f32 %v5370, %v5382
        %v5391 = vadd.f32 %v5371, %v5383
        %v5392 = vadd.f32 %v5372, %v5384
        %v5393 = vadd.f32 %v5373, %v5385
        %v5394 = vlaneseq
        %v5395 = vshrl.u32 %v5394, 7
        %v5396 = vsub.s32 1, %v5395
        %v5397 = vrot.slane %v5268, %v5396
        %v5398 = vmul.f32 %v5397, %v5346
        %v5399 = vmul.f32 %v5397, %v5347
        %v5400 = vmul.f32 %v5397, %v5348
        %v5401 = vmul.f32 %v5397, %v5349
        %v5402 = vmul.f32 %v5397, %v5350
        %v5403 = vmul.f32 %v5397, %v5351
        %v5404 = vmul.f32 %v5397, %v5352
        %v5405 = vmul.f32 %v5397, %v5353
        %v5406 = vadd.f32 %v5386, %v5398
        %v5407 = vadd.f32 %v5387, %v5399
        %v5408 = vadd.f32 %v5388, %v5400
        %v5409 = vadd.f32 %v5389, %v5401
        %v5410 = vadd.f32 %v5390, %v5402
        %v5411 = vadd.f32 %v5391, %v5403
        %v5412 = vadd.f32 %v5392, %v5404
        %v5413 = vadd.f32 %v5393, %v5405
        %v5414 = vld [vmem:[%s5269 + $0x3] sm:$0xff]
        %v5415 = vld [vmem:[%s5269 + $0xb] sm:$0xff]
        %v5416 = vld [vmem:[%s5269 + $0x1b] sm:$0xff]
        %v5417 = vld [vmem:[%s5269 + $0x23] sm:$0xff]
        %v5418 = vld [vmem:[%s5269 + $0x33] sm:$0xff]
        %v5419 = vld [vmem:[%s5269 + $0x3b] sm:$0xff]
        %v5420 = vld [vmem:[%s5269 + $0x4b] sm:$0xff]
        %v5421 = vld [vmem:[%s5269 + $0x53] sm:$0xff]
        %v5422 = vld [vmem:[%s5269 + $0x63] sm:$0xff]
        %v5423 = vld [vmem:[%s5269 + $0x6b] sm:$0xff]
        %v5424 = vld [vmem:[%s5269 + $0x7b] sm:$0xff]
        %v5425 = vld [vmem:[%s5269 + $0x83] sm:$0xff]
        %v5426 = vlaneseq
        %v5427 = vshrl.u32 %v5426, 7
        %v5428 = vsub.s32 2, %v5427
        %v5429 = vrot.slane %v5266, %v5428
        %v5430 = vmul.f32 %v5429, %v5414
        %v5431 = vmul.f32 %v5429, %v5415
        %v5432 = vmul.f32 %v5429, %v5416
        %v5433 = vmul.f32 %v5429, %v5417
        %v5434 = vmul.f32 %v5429, %v5418
        %v5435 = vmul.f32 %v5429, %v5419
        %v5436 = vmul.f32 %v5429, %v5420
        %v5437 = vmul.f32 %v5429, %v5421
        %v5438 = vadd.f32 %v5406, %v5430
        %v5439 = vadd.f32 %v5407, %v5431
        %v5440 = vadd.f32 %v5408, %v5432
        %v5441 = vadd.f32 %v5409, %v5433
        %v5442 = vadd.f32 %v5410, %v5434
        %v5443 = vadd.f32 %v5411, %v5435
        %v5444 = vadd.f32 %v5412, %v5436
        %v5445 = vadd.f32 %v5413, %v5437
        %v5446 = vlaneseq
        %v5447 = vshrl.u32 %v5446, 7
        %v5448 = vsub.s32 2, %v5447
        %v5449 = vrot.slane %v5267, %v5448
        %v5450 = vmul.f32 %v5449, %v5416
        %v5451 = vmul.f32 %v5449, %v5417
        %v5452 = vmul.f32 %v5449, %v5418
        %v5453 = vmul.f32 %v5449, %v5419
        %v5454 = vmul.f32 %v5449, %v5420
        %v5455 = vmul.f32 %v5449, %v5421
        %v5456 = vmul.f32 %v5449, %v5422
        %v5457 = vmul.f32 %v5449, %v5423
        %v5458 = vadd.f32 %v5438, %v5450
        %v5459 = vadd.f32 %v5439, %v5451
        %v5460 = vadd.f32 %v5440, %v5452
        %v5461 = vadd.f32 %v5441, %v5453
        %v5462 = vadd.f32 %v5442, %v5454
        %v5463 = vadd.f32 %v5443, %v5455
        %v5464 = vadd.f32 %v5444, %v5456
        %v5465 = vadd.f32 %v5445, %v5457
        %v5466 = vlaneseq
        %v5467 = vshrl.u32 %v5466, 7
        %v5468 = vsub.s32 2, %v5467
        %v5469 = vrot.slane %v5268, %v5468
        %v5470 = vmul.f32 %v5469, %v5418
        %v5471 = vmul.f32 %v5469, %v5419
        %v5472 = vmul.f32 %v5469, %v5420
        %v5473 = vmul.f32 %v5469, %v5421
        %v5474 = vmul.f32 %v5469, %v5422
        %v5475 = vmul.f32 %v5469, %v5423
        %v5476 = vmul.f32 %v5469, %v5424
        %v5477 = vmul.f32 %v5469, %v5425
        %v5478 = vadd.f32 %v5458, %v5470
        %v5479 = vadd.f32 %v5459, %v5471
        %v5480 = vadd.f32 %v5460, %v5472
        %v5481 = vadd.f32 %v5461, %v5473
        %v5482 = vadd.f32 %v5462, %v5474
        %v5483 = vadd.f32 %v5463, %v5475
        %v5484 = vadd.f32 %v5464, %v5476
        %v5485 = vadd.f32 %v5465, %v5477
        %v5486 = vadd.f32 %v5478, %v2718
        %v5487 = vadd.f32 %v5479, %v2718
        %v5488 = vadd.f32 %v5480, %v2718
        %v5489 = vadd.f32 %v5481, %v2718
        %v5490 = vadd.f32 %v5482, %v2718
        %v5491 = vadd.f32 %v5483, %v2718
        %v5492 = vadd.f32 %v5484, %v2718
        %v5493 = vadd.f32 %v5485, %v2718
        %5494 = vadd.xlane.f32.xlu0 %v5486
        %v5495 = vpop.xlane.xlu0 %5494
        %5496 = vadd.xlane.f32.xlu0 %v5487
        %v5497 = vpop.xlane.xlu0 %5496
        %5498 = vadd.xlane.f32.xlu0 %v5488
        %v5499 = vpop.xlane.xlu0 %5498
        %5500 = vadd.xlane.f32.xlu0 %v5489
        %v5501 = vpop.xlane.xlu0 %5500
        %5502 = vadd.xlane.f32.xlu0 %v5490
        %v5503 = vpop.xlane.xlu0 %5502
        %5504 = vadd.xlane.f32.xlu0 %v5491
        %v5505 = vpop.xlane.xlu0 %5504
        %5506 = vadd.xlane.f32.xlu0 %v5492
        %v5507 = vpop.xlane.xlu0 %5506
        %5508 = vadd.xlane.f32.xlu0 %v5493
        %v5509 = vpop.xlane.xlu0 %5508
        %v5510 = vmul.f32 %v5486, %v5486
        %v5511 = vmul.f32 %v5487, %v5487
        %v5512 = vmul.f32 %v5488, %v5488
        %v5513 = vmul.f32 %v5489, %v5489
        %v5514 = vmul.f32 %v5490, %v5490
        %v5515 = vmul.f32 %v5491, %v5491
        %v5516 = vmul.f32 %v5492, %v5492
        %v5517 = vmul.f32 %v5493, %v5493
        %5518 = vadd.xlane.f32.xlu0 %v5510
        %v5519 = vpop.xlane.xlu0 %5518
        %5520 = vadd.xlane.f32.xlu0 %v5511
        %v5521 = vpop.xlane.xlu0 %5520
        %5522 = vadd.xlane.f32.xlu0 %v5512
        %v5523 = vpop.xlane.xlu0 %5522
        %5524 = vadd.xlane.f32.xlu0 %v5513
        %v5525 = vpop.xlane.xlu0 %5524
        %5526 = vadd.xlane.f32.xlu0 %v5514
        %v5527 = vpop.xlane.xlu0 %5526
        %5528 = vadd.xlane.f32.xlu0 %v5515
        %v5529 = vpop.xlane.xlu0 %5528
        %5530 = vadd.xlane.f32.xlu0 %v5516
        %v5531 = vpop.xlane.xlu0 %5530
        %5532 = vadd.xlane.f32.xlu0 %v5517
        %v5533 = vpop.xlane.xlu0 %5532
        %v5534 = vmul.f32 %v5495, 0.0078125
        %v5535 = vmul.f32 %v5497, 0.0078125
        %v5536 = vmul.f32 %v5499, 0.0078125
        %v5537 = vmul.f32 %v5501, 0.0078125
        %v5538 = vmul.f32 %v5503, 0.0078125
        %v5539 = vmul.f32 %v5505, 0.0078125
        %v5540 = vmul.f32 %v5507, 0.0078125
        %v5541 = vmul.f32 %v5509, 0.0078125
        %v5542 = vmul.f32 %v5519, 0.0078125
        %v5543 = vmul.f32 %v5521, 0.0078125
        %v5544 = vmul.f32 %v5523, 0.0078125
        %v5545 = vmul.f32 %v5525, 0.0078125
        %v5546 = vmul.f32 %v5527, 0.0078125
        %v5547 = vmul.f32 %v5529, 0.0078125
        %v5548 = vmul.f32 %v5531, 0.0078125
        %v5549 = vmul.f32 %v5533, 0.0078125
        %v5550 = vmul.f32 %v5534, %v5534
        %v5551 = vmul.f32 %v5535, %v5535
        %v5552 = vmul.f32 %v5536, %v5536
        %v5553 = vmul.f32 %v5537, %v5537
        %v5554 = vmul.f32 %v5538, %v5538
        %v5555 = vmul.f32 %v5539, %v5539
        %v5556 = vmul.f32 %v5540, %v5540
        %v5557 = vmul.f32 %v5541, %v5541
        %v5558 = vsub.f32 %v5542, %v5550
        %v5559 = vsub.f32 %v5543, %v5551
        %v5560 = vsub.f32 %v5544, %v5552
        %v5561 = vsub.f32 %v5545, %v5553
        %v5562 = vsub.f32 %v5546, %v5554
        %v5563 = vsub.f32 %v5547, %v5555
        %v5564 = vsub.f32 %v5548, %v5556
        %v5565 = vsub.f32 %v5549, %v5557
        %v5566 = vsub.f32 %v5486, %v5534
        %v5567 = vsub.f32 %v5487, %v5535
        %v5568 = vsub.f32 %v5488, %v5536
        %v5569 = vsub.f32 %v5489, %v5537
        %v5570 = vsub.f32 %v5490, %v5538
        %v5571 = vsub.f32 %v5491, %v5539
        %v5572 = vsub.f32 %v5492, %v5540
        %v5573 = vsub.f32 %v5493, %v5541
        %v5574 = vadd.f32 %v5558, 1e-06
        %v5575 = vadd.f32 %v5559, 1e-06
        %v5576 = vadd.f32 %v5560, 1e-06
        %v5577 = vadd.f32 %v5561, 1e-06
        %v5578 = vadd.f32 %v5562, 1e-06
        %v5579 = vadd.f32 %v5563, 1e-06
        %v5580 = vadd.f32 %v5564, 1e-06
        %v5581 = vadd.f32 %v5565, 1e-06
        %v5582 = vrsqrt.pop %v5574
        %v5583 = vrsqrt.pop %v5575
        %v5584 = vrsqrt.pop %v5576
        %v5585 = vrsqrt.pop %v5577
        %v5586 = vrsqrt.pop %v5578
        %v5587 = vrsqrt.pop %v5579
        %v5588 = vrsqrt.pop %v5580
        %v5589 = vrsqrt.pop %v5581
        %v5590 = vmul.f32 %v5566, %v5582
        %v5591 = vmul.f32 %v5567, %v5583
        %v5592 = vmul.f32 %v5568, %v5584
        %v5593 = vmul.f32 %v5569, %v5585
        %v5594 = vmul.f32 %v5570, %v5586
        %v5595 = vmul.f32 %v5571, %v5587
        %v5596 = vmul.f32 %v5572, %v5588
        %v5597 = vmul.f32 %v5573, %v5589
        %v5598 = vmul.f32 %v5590, %v2834
        %v5599 = vmul.f32 %v5591, %v2834
        %v5600 = vmul.f32 %v5592, %v2834
        %v5601 = vmul.f32 %v5593, %v2834
        %v5602 = vmul.f32 %v5594, %v2834
        %v5603 = vmul.f32 %v5595, %v2834
        %v5604 = vmul.f32 %v5596, %v2834
        %v5605 = vmul.f32 %v5597, %v2834
        %v5606 = vadd.f32 %v5598, %v2846
        %v5607 = vadd.f32 %v5599, %v2846
        %v5608 = vadd.f32 %v5600, %v2846
        %v5609 = vadd.f32 %v5601, %v2846
        %v5610 = vadd.f32 %v5602, %v2846
        %v5611 = vadd.f32 %v5603, %v2846
        %v5612 = vadd.f32 %v5604, %v2846
        %v5613 = vadd.f32 %v5605, %v2846
        %v5614 = vld [vmem:[#allocation7] sm:$0xff]
        %v5615 = vld [vmem:[#allocation7 + $0x8] sm:$0xff]
        %v5616 = vld [vmem:[#allocation7 + $0x10] sm:$0xff]
        %v5617 = vld [vmem:[#allocation7 + $0x18] sm:$0xff]
        %v5618 = vld [vmem:[#allocation7 + $0x20] sm:$0xff]
        %v5619 = vld [vmem:[#allocation7 + $0x28] sm:$0xff]
        %v5620 = vld [vmem:[#allocation7 + $0x30] sm:$0xff]
        %v5621 = vld [vmem:[#allocation7 + $0x38] sm:$0xff]
        %v5622 = vld [vmem:[#allocation7 + $0x40] sm:$0xff]
        %v5623 = vld [vmem:[#allocation7 + $0x48] sm:$0xff]
        %v5624 = vld [vmem:[#allocation7 + $0x50] sm:$0xff]
        %v5625 = vld [vmem:[#allocation7 + $0x58] sm:$0xff]
        %v5626 = vld [vmem:[#allocation7 + $0x60] sm:$0xff]
        %v5627 = vld [vmem:[#allocation7 + $0x68] sm:$0xff]
        %v5628 = vld [vmem:[#allocation7 + $0x70] sm:$0xff]
        %v5629 = vld [vmem:[#allocation7 + $0x78] sm:$0xff]
        %v5630 = vld [vmem:[#allocation7 + $0x80] sm:$0xff]
        %v5631 = vld [vmem:[#allocation7 + $0x88] sm:$0xff]
        %v5632 = vld [vmem:[#allocation7 + $0x90] sm:$0xff]
        %v5633 = vld [vmem:[#allocation7 + $0x98] sm:$0xff]
        %v5634 = vld [vmem:[#allocation7 + $0xa0] sm:$0xff]
        %v5635 = vld [vmem:[#allocation7 + $0xa8] sm:$0xff]
        %v5636 = vld [vmem:[#allocation7 + $0xb0] sm:$0xff]
        %v5637 = vld [vmem:[#allocation7 + $0xb8] sm:$0xff]
        %v5638 = vld [vmem:[#allocation7 + $0xc0] sm:$0xff]
        %v5639 = vld [vmem:[#allocation7 + $0xc8] sm:$0xff]
        %v5640 = vld [vmem:[#allocation7 + $0xd0] sm:$0xff]
        %v5641 = vld [vmem:[#allocation7 + $0xd8] sm:$0xff]
        %v5642 = vld [vmem:[#allocation7 + $0xe0] sm:$0xff]
        %v5643 = vld [vmem:[#allocation7 + $0xe8] sm:$0xff]
        %v5644 = vld [vmem:[#allocation7 + $0xf0] sm:$0xff]
        %v5645 = vld [vmem:[#allocation7 + $0xf8] sm:$0xff]
        %v5646 = vld [vmem:[%s5] sm:$0x1]
        %v5648 = vlaneseq
        %v5649 = vshrl.u32 %v5648, 7
        %v5650 = vsub.s32 0, %v5649
        %v5651 = vrot.slane %v5646, %v5650
        %5653 = vmatprep.subr.mxu0 0.0
        %5654 = vmatpush1.msra.mxu0 %v5614
        %5655 = vmatprep.subr.mxu0 0.0
        %5656 = vmatpush1.msra.mxu0 %v5615
        %5657 = vmatprep.subr.mxu0 0.0
        %5658 = vmatpush1.msra.mxu0 %v5616
        %5659 = vmatprep.subr.mxu0 0.0
        %5660 = vmatpush1.msra.mxu0 %v5617
        %5661 = vmatprep.subr.mxu0 0.0
        %5662 = vmatpush1.msra.mxu0 %v5618
        %5663 = vmatprep.subr.mxu0 0.0
        %5664 = vmatpush1.msra.mxu0 %v5619
        %5665 = vmatprep.subr.mxu0 0.0
        %5666 = vmatpush1.msra.mxu0 %v5620
        %5667 = vmatprep.subr.mxu0 0.0
        %5668 = vmatpush1.msra.mxu0 %v5621
        %5669 = vmatprep.subr.mxu0 0.0
        %5670 = vmatpush1.msra.mxu0 %v5622
        %5671 = vmatprep.subr.mxu0 0.0
        %5672 = vmatpush1.msra.mxu0 %v5623
        %5673 = vmatprep.subr.mxu0 0.0
        %5674 = vmatpush1.msra.mxu0 %v5624
        %5675 = vmatprep.subr.mxu0 0.0
        %5676 = vmatpush1.msra.mxu0 %v5625
        %5677 = vmatprep.subr.mxu0 0.0
        %5678 = vmatpush1.msra.mxu0 %v5626
        %5679 = vmatprep.subr.mxu0 0.0
        %5680 = vmatpush1.msra.mxu0 %v5627
        %5681 = vmatprep.subr.mxu0 0.0
        %5682 = vmatpush1.msra.mxu0 %v5628
        %5683 = vmatprep.subr.mxu0 0.0
        %5684 = vmatpush1.msra.mxu0 %v5629
        %5685 = vmatprep.subr.mxu0 0.0
        %5686 = vmatpush1.msra.mxu0 %v5630
        %5687 = vmatprep.subr.mxu0 0.0
        %5688 = vmatpush1.msra.mxu0 %v5631
        %5689 = vmatprep.subr.mxu0 0.0
        %5690 = vmatpush1.msra.mxu0 %v5632
        %5691 = vmatprep.subr.mxu0 0.0
        %5692 = vmatpush1.msra.mxu0 %v5633
        %5693 = vmatprep.subr.mxu0 0.0
        %5694 = vmatpush1.msra.mxu0 %v5634
        %5695 = vmatprep.subr.mxu0 0.0
        %5696 = vmatpush1.msra.mxu0 %v5635
        %5697 = vmatprep.subr.mxu0 0.0
        %5698 = vmatpush1.msra.mxu0 %v5636
        %5699 = vmatprep.subr.mxu0 0.0
        %5700 = vmatpush1.msra.mxu0 %v5637
        %5701 = vmatprep.subr.mxu0 0.0
        %5702 = vmatpush1.msra.mxu0 %v5638
        %5703 = vmatprep.subr.mxu0 0.0
        %5704 = vmatpush1.msra.mxu0 %v5639
        %5705 = vmatprep.subr.mxu0 0.0
        %5706 = vmatpush1.msra.mxu0 %v5640
        %5707 = vmatprep.subr.mxu0 0.0
        %5708 = vmatpush1.msra.mxu0 %v5641
        %5709 = vmatprep.subr.mxu0 0.0
        %5710 = vmatpush1.msra.mxu0 %v5642
        %5711 = vmatprep.subr.mxu0 0.0
        %5712 = vmatpush1.msra.mxu0 %v5643
        %5713 = vmatprep.subr.mxu0 0.0
        %5714 = vmatpush1.msra.mxu0 %v5644
        %5715 = vmatprep.subr.mxu0 0.0
        %5716 = vmatpush1.msra.mxu0 %v5645
        %5717 = vmatprep.mubr.f32.mxu0 %v5606
        %5718 = vmatmul.mubr.f32.gmra.mrb[0].mxu0 %v5258
        %v5719 = vpop.f32.mrb[0].mxu0
        %v5720 = vadd.f32 %v5651, %v5719
        %v5721 = vpop.f32.mrb[0].mxu0
        %5722 = vmatprep.mubr.f32.mxu0 %v5607
        %5723 = vmatmul.mubr.f32.gmra.mrb[0].mxu0 %v5259
        %v5724 = vpop.f32.mrb[0].mxu0
        %v5725 = vadd.f32 %v5651, %v5724
        %v5726 = vpop.f32.mrb[0].mxu0
        %5727 = vmatprep.mubr.f32.mxu0 %v5608
        %5728 = vmatmul.mubr.f32.gmra.mrb[0].mxu0 %v5260
        %v5729 = vpop.f32.mrb[0].mxu0
        %v5730 = vadd.f32 %v5651, %v5729
        %v5731 = vpop.f32.mrb[0].mxu0
        %5732 = vmatprep.mubr.f32.mxu0 %v5609
        %5733 = vmatmul.mubr.f32.gmra.mrb[0].mxu0 %v5261
        %v5734 = vpop.f32.mrb[0].mxu0
        %v5735 = vadd.f32 %v5651, %v5734
        %v5736 = vpop.f32.mrb[0].mxu0
        %5737 = vmatprep.mubr.f32.mxu0 %v5610
        %5738 = vmatmul.mubr.f32.gmra.mrb[0].mxu0 %v5262
        %v5739 = vpop.f32.mrb[0].mxu0
        %v5740 = vadd.f32 %v5651, %v5739
        %v5741 = vpop.f32.mrb[0].mxu0
        %5742 = vmatprep.mubr.f32.mxu0 %v5611
        %5743 = vmatmul.mubr.f32.gmra.mrb[0].mxu0 %v5263
        %v5744 = vpop.f32.mrb[0].mxu0
        %v5745 = vadd.f32 %v5651, %v5744
        %v5746 = vpop.f32.mrb[0].mxu0
        %5747 = vmatprep.mubr.f32.mxu0 %v5612
        %5748 = vmatmul.mubr.f32.gmra.mrb[0].mxu0 %v5264
        %v5749 = vpop.f32.mrb[0].mxu0
        %v5750 = vadd.f32 %v5651, %v5749
        %v5751 = vpop.f32.mrb[0].mxu0
        %5752 = vmatprep.mubr.f32.mxu0 %v5613
        %5753 = vmatmul.mubr.f32.gmra.mrb[0].mxu0 %v5265
        %v5754 = vpop.f32.mrb[0].mxu0
        %v5755 = vadd.f32 %v5651, %v5754
        %v5756 = vpop.f32.mrb[0].mxu0
        %5757 = vdwg.mxu0
        %v5758 = vmul.f32 %v5720, 0.5
        %v5759 = vmul.f32 %v5725, 0.5
        %v5760 = vmul.f32 %v5730, 0.5
        %v5761 = vmul.f32 %v5735, 0.5
        %v5762 = vmul.f32 %v5740, 0.5
        %v5763 = vmul.f32 %v5745, 0.5
        %v5764 = vmul.f32 %v5750, 0.5
        %v5765 = vmul.f32 %v5755, 0.5
        %v5766 = vmul.f32 %v5720, 0.044715
        %v5767 = vmul.f32 %v5725, 0.044715
        %v5768 = vmul.f32 %v5730, 0.044715
        %v5769 = vmul.f32 %v5735, 0.044715
        %v5770 = vmul.f32 %v5740, 0.044715
        %v5771 = vmul.f32 %v5745, 0.044715
        %v5772 = vmul.f32 %v5750, 0.044715
        %v5773 = vmul.f32 %v5755, 0.044715
        %v5774 = vmul.f32 %v5766, %v5720
        %v5775 = vmul.f32 %v5767, %v5725
        %v5776 = vmul.f32 %v5768, %v5730
        %v5777 = vmul.f32 %v5769, %v5735
        %v5778 = vmul.f32 %v5770, %v5740
        %v5779 = vmul.f32 %v5771, %v5745
        %v5780 = vmul.f32 %v5772, %v5750
        %v5781 = vmul.f32 %v5773, %v5755
        %v5782 = vmul.f32 %v5774, %v5720
        %v5783 = vmul.f32 %v5775, %v5725
        %v5784 = vmul.f32 %v5776, %v5730
        %v5785 = vmul.f32 %v5777, %v5735
        %v5786 = vmul.f32 %v5778, %v5740
        %v5787 = vmul.f32 %v5779, %v5745
        %v5788 = vmul.f32 %v5780, %v5750
        %v5789 = vmul.f32 %v5781, %v5755
        %v5790 = vadd.f32 %v5720, %v5782
        %v5791 = vadd.f32 %v5725, %v5783
        %v5792 = vadd.f32 %v5730, %v5784
        %v5793 = vadd.f32 %v5735, %v5785
        %v5794 = vadd.f32 %v5740, %v5786
        %v5795 = vadd.f32 %v5745, %v5787
        %v5796 = vadd.f32 %v5750, %v5788
        %v5797 = vadd.f32 %v5755, %v5789
        %v5798 = vmul.f32 %v5790, 0.7978846
        %v5799 = vmul.f32 %v5791, 0.7978846
        %v5800 = vmul.f32 %v5792, 0.7978846
        %v5801 = vmul.f32 %v5793, 0.7978846
        %v5802 = vmul.f32 %v5794, 0.7978846
        %v5803 = vmul.f32 %v5795, 0.7978846
        %v5804 = vmul.f32 %v5796, 0.7978846
        %v5805 = vmul.f32 %v5797, 0.7978846
        %v5806 = vtanh.pop %v5798
        %v5807 = vtanh.pop %v5799
        %v5808 = vtanh.pop %v5800
        %v5809 = vtanh.pop %v5801
        %v5810 = vtanh.pop %v5802
        %v5811 = vtanh.pop %v5803
        %v5812 = vtanh.pop %v5804
        %v5813 = vtanh.pop %v5805
        %v5814 = vadd.f32 %v5806, 1.0
        %v5815 = vadd.f32 %v5807, 1.0
        %v5816 = vadd.f32 %v5808, 1.0
        %v5817 = vadd.f32 %v5809, 1.0
        %v5818 = vadd.f32 %v5810, 1.0
        %v5819 = vadd.f32 %v5811, 1.0
        %v5820 = vadd.f32 %v5812, 1.0
        %v5821 = vadd.f32 %v5813, 1.0
        %v5822 = vmul.f32 %v5758, %v5814
        %v5823 = vmul.f32 %v5759, %v5815
        %v5824 = vmul.f32 %v5760, %v5816
        %v5825 = vmul.f32 %v5761, %v5817
        %v5826 = vmul.f32 %v5762, %v5818
        %v5827 = vmul.f32 %v5763, %v5819
        %v5828 = vmul.f32 %v5764, %v5820
        %v5829 = vmul.f32 %v5765, %v5821
        %s5830 = scalar_lea.vmem %s284, 192 [#allocation9]
        %5831 = vst [vmem:[%s5830] sm:$0xff] %v5822
        %5832 = vst [vmem:[%s5830 + $0x8] sm:$0xff] %v5823
        %5833 = vst [vmem:[%s5830 + $0x10] sm:$0xff] %v5824
        %5834 = vst [vmem:[%s5830 + $0x18] sm:$0xff] %v5825
        %5835 = vst [vmem:[%s5830 + $0x20] sm:$0xff] %v5826
        %5836 = vst [vmem:[%s5830 + $0x28] sm:$0xff] %v5827
        %5837 = vst [vmem:[%s5830 + $0x30] sm:$0xff] %v5828
        %5838 = vst [vmem:[%s5830 + $0x38] sm:$0xff] %v5829
        %s5839 = sand.u32 %s163, 1
        %s5840 = scalar_lea.sflag [#allocation6], %s5839
        %s5841 = sand.u32 %s163, 1
        %s5842 = smul.addr %s5841, 256
        %s5843 = scalar_lea.vmem [#allocation9], %s5842
        // Predicated region
        $region53: #{tpu_custom_call.1} parent=43 // pred_check
          %p5844 = pneg %p173
        $region54: #{tpu_custom_call.1} parent=43 // pred_check_branch
          %5846 = sbr.rel (%p5844) target = $region56
        $region55: #{tpu_custom_call.1} parent=43 // pred_region
          %s5848 = ssub.s32 4096, 4096
          %5849 = vsyncadd %s5840, %s5848
          %s5850 = smul.addr %s24, 32
          %s5851 = smul.addr %s5850, 128
          %s5852 = scalar_lea.hbm %s6, %s5851
          %s5853 = sshll.u32 %s5843, 4
          %s5854 = int_to_ptr.vmem [resolvable:$true] %s5853
          %5859 = dma.vmem_to_hbm [thread:$0]  %s5854, 4096, %s5852, %s5840, 128, 128, 8
        $region56: #{tpu_custom_call.1} parent=43 // pred_fallthru
          _
      $region44: #{tpu_custom_call.1} parent=5 // pred_fallthru
        _
      %p5860 = scmp.le.s32.totalorder 2, %s19
      // Predicated region
      $region57: #{tpu_custom_call.1} parent=5 // pred_check
        %p5861 = pneg %p5860
      $region58: #{tpu_custom_call.1} parent=5 // pred_check_branch
        %5863 = sbr.rel (%p5861) target = $region60
      $region59: #{tpu_custom_call.1} parent=5 // pred_region
        %s5864 = ssub.s32 %s19, 2
        // Predicated region
        $region61: #{tpu_custom_call.1} parent=59 // pred_check
          %p5865 = pneg %p179
        $region62: #{tpu_custom_call.1} parent=59 // pred_check_branch
          %5867 = sbr.rel (%p5865) target = $region64
        $region63: #{tpu_custom_call.1} parent=59 // pred_region
          %s5868 = sand.u32 %s164, 1
          %s5869 = scalar_lea.sflag [#allocation6], %s5868
          %s5870 = sand.u32 %s164, 1
          %s5871 = smul.addr %s5870, 256
          %s5872 = scalar_lea.vmem [#allocation9], %s5871
          %5873 = dma.done %s5869, 4096
        $region64: #{tpu_custom_call.1} parent=59 // pred_fallthru
          _
      $region60: #{tpu_custom_call.1} parent=5 // pred_fallthru
        _
    $region6: #{tpu_custom_call.1} parent=1 // loop_footer
      %s23 = sadd.s32 1, %s19
    $region7: #{tpu_custom_call.1} parent=1 // loop_footer_branch
      %18 = sbr.rel target = $region3
    $region8: #{tpu_custom_call.1} parent=1 // loop_exit
      _
    %5874 = vsyncpa [#allocation5], 1
    %s5875 = scalar_lea.sflag [#allocation5], 1
    %5876 = vsyncpa %s5875, 1
    %5877 = vsyncpa [#allocation8], 1
    %5878 = vsyncpa [#allocation6], 1
    %s5879 = scalar_lea.sflag [#allocation6], 1
    %5880 = vsyncpa %s5879, 1

</llo_original>
